<compile_context>
chip_gen: v7x
topology: tpu7x:2x2x1
jax: 0.10.0
libtpu: 0.0.40
codegen_flags: <defaults>
</compile_context>

<pallas_src>
import math

import jax
import jax.numpy as jnp
from jax import lax
from jax.experimental import pallas as pl
from jax.experimental.pallas import tpu as pltpu


# ----------------------------------------------------------------------------
# small helpers
# ----------------------------------------------------------------------------
def _round_up(x, m):
    return (x + m - 1) // m * m


def _pick_tm(M, target):
    """Row tile: multiple of 8; aim for >=2 grid steps when possible."""
    if M <= 8:
        return _round_up(M, 8)
    if M < 2 * target:
        return _round_up((M + 1) // 2, 8)
    return target


# ----------------------------------------------------------------------------
# fused matmul + BN (+ReLU) (+L2-normalize) kernel
# ----------------------------------------------------------------------------
def _matmul_bn_kernel(relu: bool, normalize: bool):
    def kernel(x_ref, w_ref, scale_ref, bias_ref, o_ref):
        # bf16 x bf16 -> f32 on the MXU; epilogue in f32.
        y = jnp.dot(x_ref[...], w_ref[...], preferred_element_type=jnp.float32)
        y = y * scale_ref[...] + bias_ref[...]          # (tm,Cout)*(1,Cout)+(1,Cout)
        if relu:
            y = jnp.maximum(y, 0.0)
        if normalize:
            ssq = jnp.sum(y * y, axis=-1, keepdims=True)
            y = y * lax.rsqrt(ssq + 1e-12)              # EUP rsqrt, eps-safe
        o_ref[...] = y.astype(o_ref.dtype)
    return kernel


def fused_matmul_bn(x2d, w, scale, bias, *, relu=False, normalize=False,
                    tm_target=512):
    """x2d: (M, K), w: (K, Cout) bf16, scale/bias: (1, Cout) f32 -> (M, Cout) f32."""
    M, K = x2d.shape
    Cout = w.shape[1]
    if x2d.dtype != jnp.bfloat16:
        x2d = x2d.astype(jnp.bfloat16)
    if w.dtype != jnp.bfloat16:
        w = w.astype(jnp.bfloat16)

    tm = _pick_tm(M, tm_target)
    Mp = _round_up(M, tm)
    if Mp != M:
        x2d = jnp.pad(x2d, ((0, Mp - M), (0, 0)))

    out = pl.pallas_call(
        _matmul_bn_kernel(relu, normalize),
        out_shape=jax.ShapeDtypeStruct((Mp, Cout), jnp.float32),
        grid=(Mp // tm,),
        in_specs=[
            pl.BlockSpec((tm, K), lambda i: (i, 0)),
            pl.BlockSpec((K, Cout), lambda i: (0, 0)),
            pl.BlockSpec((1, Cout), lambda i: (0, 0)),
            pl.BlockSpec((1, Cout), lambda i: (0, 0)),
        ],
        out_specs=pl.BlockSpec((tm, Cout), lambda i: (i, 0)),
        compiler_params=pltpu.CompilerParams(dimension_semantics=("parallel",)),
    )(x2d, w, scale, bias)
    return out if Mp == M else out[:M]


# ----------------------------------------------------------------------------
# 2x2 max-pool: vertical pair-max kernel + horizontal pair-max kernel
# ----------------------------------------------------------------------------
def _vmax_kernel(a_ref, b_ref, o_ref):
    o_ref[...] = jnp.maximum(a_ref[...], b_ref[...])


def _hmax_kernel(unit: int, tp: int):
    def kernel(x_ref, o_ref):
        xv = x_ref[...]                                   # (tm, tp*2*unit)
        parts = []
        for p in range(tp):                               # small, unrolled
            a = xv[:, (2 * p) * unit:(2 * p + 1) * unit]
            b = xv[:, (2 * p + 1) * unit:(2 * p + 2) * unit]
            parts.append(jnp.maximum(a, b))
        o_ref[...] = parts[0] if tp == 1 else jnp.concatenate(parts, axis=-1)
    return kernel


def _pick_tp(Wo, C, lane_target):
    max_tp = max(1, min(Wo, lane_target // (2 * C)))
    for tp in range(max_tp, 0, -1):
        if Wo % tp == 0 and (tp * C) % 128 == 0:
            return tp
    return Wo   # whole row -> block equals full lane extent (always legal)


def maxpool2x2(x, *, row_target=256, lane_target=2048):
    """x: (N, H, W, C) -> (N, H/2, W/2, C)."""
    N, H, W, C = x.shape
    assert H % 2 == 0 and W % 2 == 0, "maxpool2x2 requires even H and W"
    Ho, Wo = H // 2, W // 2
    rows = N * Ho

    tm = _pick_tm(rows, row_target)
    Rp = _round_up(rows, tm)

    # ---- vertical max over adjacent image rows (lane-dense blocks) --------
    half = W * C                               # lanes per image row
    xv = x.reshape(rows, 2 * half)
    if Rp != rows:
        xv = jnp.pad(xv, ((0, Rp - rows), (0, 0)))
    tl = half
    if tl > lane_target:
        for cand in (2048, 1024, 512, 256, 128):
            if half % cand == 0:
                tl = cand
                break
    nl = half // tl
    v = pl.pallas_call(
        _vmax_kernel,
        out_shape=jax.ShapeDtypeStruct((Rp, half), x.dtype),
        grid=(Rp // tm, nl),
        in_specs=[
            pl.BlockSpec((tm, tl), lambda i, j: (i, j)),
            pl.BlockSpec((tm, tl), lambda i, j: (i, j + nl)),
        ],
        out_specs=pl.BlockSpec((tm, tl), lambda i, j: (i, j)),
        compiler_params=pltpu.CompilerParams(
            dimension_semantics=("parallel", "parallel")),
    )(xv, xv)

    # ---- horizontal max over adjacent column pairs -------------------------
    # v rows are pooled image rows; lanes are (w, c) with column pairs adjacent.
    tp = _pick_tp(Wo, C, lane_target)
    o = pl.pallas_call(
        _hmax_kernel(C, tp),
        out_shape=jax.ShapeDtypeStruct((Rp, Wo * C), x.dtype),
        grid=(Rp // tm, Wo // tp),
        in_specs=[pl.BlockSpec((tm, tp * 2 * C), lambda i, j: (i, j))],
        out_specs=pl.BlockSpec((tm, tp * C), lambda i, j: (i, j)),
        compiler_params=pltpu.CompilerParams(
            dimension_semantics=("parallel", "parallel")),
    )(v)
    if Rp != rows:
        o = o[:rows]
    return o.reshape(N, Ho, Wo, C)


# ----------------------------------------------------------------------------
# conv wrappers (im2col in bf16 + fused matmul)
# ----------------------------------------------------------------------------
def _im2col3x3(x):
    """x: (N,H,W,C) -> (N*H*W, 9*C); tap order (dy,dx) row-major, then channel."""
    N, H, W, C = x.shape
    xp = jnp.pad(x, ((0, 0), (1, 1), (1, 1), (0, 0)))
    cols = []
    for dy in range(3):
        for dx in range(3):
            cols.append(xp[:, dy:dy + H, dx:dx + W, :])
    return jnp.concatenate(cols, axis=-1).reshape(N * H * W, 9 * C)


def conv3x3_bn(x, p, *, relu):
    """3x3 conv (pad=1, stride=1) + folded BN (+ReLU). x: (N,H,W,Cin) f32."""
    N, H, W, _ = x.shape
    xc = _im2col3x3(x.astype(jnp.bfloat16))        # bf16 im2col (half HBM traffic)
    y = fused_matmul_bn(xc, p["w"], p["scale"], p["bias"], relu=relu)
    return y.reshape(N, H, W, -1)


def conv1x1_bn(x, p, *, relu=False, normalize=False):
    """1x1 conv + folded BN (+ReLU) (+channel L2 normalize)."""
    N, H, W, C = x.shape
    y = fused_matmul_bn(x.reshape(N * H * W, C), p["w"], p["scale"], p["bias"],
                        relu=relu, normalize=normalize)
    return y.reshape(N, H, W, -1)


def double_conv(x, p_a, p_b):
    """(conv3x3 => BN => ReLU) * 2 — the `inconv` / `down` body."""
    return conv3x3_bn(conv3x3_bn(x, p_a, relu=True), p_b, relu=True)


# ----------------------------------------------------------------------------
# Deterministic parameter construction (synthetic, matches module shapes)
# ----------------------------------------------------------------------------
DET_H = 65


def _init_conv_bn(key, cin, cout, ksize, pad_cout_to=None):
    kw, kb, kg, kbe, km, kv = jax.random.split(key, 6)
    fan_in = cin * ksize * ksize
    w = jax.random.normal(kw, (ksize, ksize, cin, cout), jnp.float32)
    w = w * (1.0 / math.sqrt(fan_in))
    conv_b = 0.05 * jax.random.normal(kb, (cout,), jnp.float32)
    gamma = 1.0 + 0.1 * jax.random.normal(kg, (cout,), jnp.float32)
    beta = 0.1 * jax.random.normal(kbe, (cout,), jnp.float32)
    mean = 0.1 * jax.random.normal(km, (cout,), jnp.float32)
    var = 1.0 + 0.1 * jax.random.uniform(kv, (cout,), jnp.float32)
    eps = 1e-5
    scale = gamma / jnp.sqrt(var + eps)
    bias = (conv_b - mean) * scale + beta
    wm = w.reshape(ksize * ksize * cin, cout)      # rows = (dy,dx,cin) row-major
    if pad_cout_to is not None and pad_cout_to > cout:
        pc = pad_cout_to - cout                    # zero-pad Cout for lane density
        wm = jnp.pad(wm, ((0, 0), (0, pc)))
        scale = jnp.pad(scale, (0, pc))
        bias = jnp.pad(bias, (0, pc))
    return {"w": wm.astype(jnp.bfloat16),
            "scale": scale.reshape(1, -1).astype(jnp.float32),
            "bias": bias.reshape(1, -1).astype(jnp.float32)}


def init_params(key):
    c1, c2, c3, c4, c5, d1 = 64, 64, 128, 128, 256, 256
    specs = {
        "inc_a": (1, c1, 3, None),    "inc_b": (c1, c1, 3, None),
        "down1_a": (c1, c2, 3, None), "down1_b": (c2, c2, 3, None),
        "down2_a": (c2, c3, 3, None), "down2_b": (c3, c3, 3, None),
        "down3_a": (c3, c4, 3, None), "down3_b": (c4, c4, 3, None),
        "convPa": (c4, c5, 3, None),  "convPb": (c5, DET_H, 1, 128),
        "convDa": (c4, c5, 3, None),  "convDb": (c5, d1, 1, None),
    }
    keys = jax.random.split(key, len(specs))
    params = {name: _init_conv_bn(k, ci, co, ks, pad)
              for k, (name, (ci, co, ks, pad)) in zip(keys, specs.items())}
    # Fuse the two 3x3 heads (convPa | convDa) into a single 512-wide matmul.
    pa, da = params.pop("convPa"), params.pop("convDa")
    params["headPD"] = {
        "w": jnp.concatenate([pa["w"], da["w"]], axis=1),
        "scale": jnp.concatenate([pa["scale"], da["scale"]], axis=1),
        "bias": jnp.concatenate([pa["bias"], da["bias"]], axis=1),
    }
    return params


# ----------------------------------------------------------------------------
# Full forward (equivalent of SuperPointNet_gauss2.forward)
# ----------------------------------------------------------------------------
def superpoint_forward(params, x_nchw):
    """x_nchw: (N,1,H,W) -> (semi (N,65,H/8,W/8), desc (N,256,H/8,W/8))."""
    x = jnp.transpose(x_nchw, (0, 2, 3, 1))                      # NCHW -> NHWC

    x1 = double_conv(x, params["inc_a"], params["inc_b"])        # (N,H,W,64)
    x2 = double_conv(maxpool2x2(x1), params["down1_a"], params["down1_b"])
    x3 = double_conv(maxpool2x2(x2), params["down2_a"], params["down2_b"])
    x4 = double_conv(maxpool2x2(x3), params["down3_a"], params["down3_b"])

    # fused detector + descriptor 3x3 heads (one im2col, one matmul, split)
    head = conv3x3_bn(x4, params["headPD"], relu=True)           # (N,h,w,512)
    cPa, cDa = head[..., :256], head[..., 256:]

    semi = conv1x1_bn(cPa, params["convPb"])[..., :DET_H]        # Cout 65 padded->128
    desc = conv1x1_bn(cDa, params["convDb"], normalize=True)

    semi = jnp.transpose(semi, (0, 3, 1, 2))                     # NHWC -> NCHW
    desc = jnp.transpose(desc, (0, 3, 1, 2))
    return semi, desc


if __name__ == "__main__":
    key = jax.random.PRNGKey(0)
    kx, kp = jax.random.split(key)
    params = init_params(kp)

    # small shapes consistent with the module: N=2, 1 channel, 16x16 patch
    x = jax.random.normal(kx, (2, 1, 16, 16), jnp.float32)

    semi, desc = jax.jit(superpoint_forward)(params, x)
    jax.block_until_ready((semi, desc))

    assert semi.shape == (2, 65, 2, 2), semi.shape
    assert desc.shape == (2, 256, 2, 2), desc.shape
    # descriptor is L2-normalized over the channel axis
    norms = jnp.linalg.norm(desc, axis=1)
    assert bool(jnp.all(jnp.abs(norms - 1.0) < 2e-3)), norms
    print("KERNEL_OK")
</pallas_src>

<mosaic_0001>
module attributes {stable_mosaic.version = 11 : i64} {
  func.func @kernel(%arg0: i32, %arg1: memref<256x9xbf16, #tpu.memory_space<vmem>>, %arg2: memref<9x64xbf16, #tpu.memory_space<vmem>>, %arg3: memref<1x64xf32, #tpu.memory_space<vmem>>, %arg4: memref<1x64xf32, #tpu.memory_space<vmem>>, %arg5: memref<256x64xf32, #tpu.memory_space<vmem>>) attributes {dimension_semantics = [#tpu.dimension_semantics<parallel>], iteration_bounds = array<i64: 2>, scalar_prefetch = 0 : i64, scratch_operands = 0 : i64, tpu.core_type = #tpu.core_type<tc>, window_params = [{transform_indices = @transform_0, window_bounds = array<i64: 256, 9>}, {pipeline_mode = #tpu.pipeline_mode<synchronous>, transform_indices = @transform_1, window_bounds = array<i64: 9, 64>}, {pipeline_mode = #tpu.pipeline_mode<synchronous>, transform_indices = @transform_2, window_bounds = array<i64: 1, 64>}, {pipeline_mode = #tpu.pipeline_mode<synchronous>, transform_indices = @transform_3, window_bounds = array<i64: 1, 64>}, {transform_indices = @transform_4, window_bounds = array<i64: 256, 64>}]} {
    %c0 = arith.constant 0 : index
    %c0_0 = arith.constant 0 : index
    %0 = vector.load %arg1[%c0, %c0_0] : memref<256x9xbf16, #tpu.memory_space<vmem>>, vector<256x9xbf16>
    %c0_1 = arith.constant 0 : index
    %c0_2 = arith.constant 0 : index
    %1 = vector.load %arg2[%c0_1, %c0_2] : memref<9x64xbf16, #tpu.memory_space<vmem>>, vector<9x64xbf16>
    %cst = arith.constant dense<0.000000e+00> : vector<256x64xf32>
    %2 = tpu.matmul %0, %1, %cst {dimension_numbers = #tpu.dot_dimension_numbers<[1], [0], [0], [1], [0, 0, 1, 1], [], []>} : vector<256x9xbf16>, vector<9x64xbf16>, vector<256x64xf32> -> vector<256x64xf32>
    %c0_3 = arith.constant 0 : index
    %c0_4 = arith.constant 0 : index
    %3 = vector.load %arg3[%c0_3, %c0_4] : memref<1x64xf32, #tpu.memory_space<vmem>>, vector<1x64xf32>
    %4 = vector.broadcast %3 : vector<1x64xf32> to vector<256x64xf32>
    %5 = arith.mulf %2, %4 : vector<256x64xf32>
    %c0_5 = arith.constant 0 : index
    %c0_6 = arith.constant 0 : index
    %6 = vector.load %arg4[%c0_5, %c0_6] : memref<1x64xf32, #tpu.memory_space<vmem>>, vector<1x64xf32>
    %7 = vector.broadcast %6 : vector<1x64xf32> to vector<256x64xf32>
    %8 = arith.addf %5, %7 : vector<256x64xf32>
    %cst_7 = arith.constant 0.000000e+00 : f32
    %9 = vector.broadcast %cst_7 : f32 to vector<256x64xf32>
    %10 = arith.maximumf %8, %9 : vector<256x64xf32>
    %c0_8 = arith.constant 0 : index
    %c0_9 = arith.constant 0 : index
    %11 = vector.load %arg5[%c0_8, %c0_9] : memref<256x64xf32, #tpu.memory_space<vmem>>, vector<256x64xf32>
    tpu.vector_store %arg5[%c0_8, %c0_9], %10 {strides = array<i32>} : memref<256x64xf32, #tpu.memory_space<vmem>>, vector<256x64xf32>,
    return
  }
  func.func @transform_0(%arg0: i32) -> (i32, i32) {
    %c0_i32 = arith.constant 0 : i32
    %c0_i32_0 = arith.constant 0 : i32
    return %arg0, %c0_i32 : i32, i32
  }
  func.func @transform_1(%arg0: i32) -> (i32, i32) {
    %c0_i32 = arith.constant 0 : i32
    %c0_i32_0 = arith.constant 0 : i32
    %c0_i32_1 = arith.constant 0 : i32
    return %c0_i32, %c0_i32_0 : i32, i32
  }
  func.func @transform_2(%arg0: i32) -> (i32, i32) {
    %c0_i32 = arith.constant 0 : i32
    %c0_i32_0 = arith.constant 0 : i32
    %c0_i32_1 = arith.constant 0 : i32
    return %c0_i32, %c0_i32_0 : i32, i32
  }
  func.func @transform_3(%arg0: i32) -> (i32, i32) {
    %c0_i32 = arith.constant 0 : i32
    %c0_i32_0 = arith.constant 0 : i32
    %c0_i32_1 = arith.constant 0 : i32
    return %c0_i32, %c0_i32_0 : i32, i32
  }
  func.func @transform_4(%arg0: i32) -> (i32, i32) {
    %c0_i32 = arith.constant 0 : i32
    %c0_i32_0 = arith.constant 0 : i32
    return %arg0, %c0_i32 : i32, i32
  }
}

module attributes {stable_mosaic.version = 11 : i64} {
  func.func @kernel(%arg0: i32, %arg1: memref<256x576xbf16, #tpu.memory_space<vmem>>, %arg2: memref<576x64xbf16, #tpu.memory_space<vmem>>, %arg3: memref<1x64xf32, #tpu.memory_space<vmem>>, %arg4: memref<1x64xf32, #tpu.memory_space<vmem>>, %arg5: memref<256x64xf32, #tpu.memory_space<vmem>>) attributes {dimension_semantics = [#tpu.dimension_semantics<parallel>], iteration_bounds = array<i64: 2>, scalar_prefetch = 0 : i64, scratch_operands = 0 : i64, tpu.core_type = #tpu.core_type<tc>, window_params = [{transform_indices = @transform_0, window_bounds = array<i64: 256, 576>}, {pipeline_mode = #tpu.pipeline_mode<synchronous>, transform_indices = @transform_1, window_bounds = array<i64: 576, 64>}, {pipeline_mode = #tpu.pipeline_mode<synchronous>, transform_indices = @transform_2, window_bounds = array<i64: 1, 64>}, {pipeline_mode = #tpu.pipeline_mode<synchronous>, transform_indices = @transform_3, window_bounds = array<i64: 1, 64>}, {transform_indices = @transform_4, window_bounds = array<i64: 256, 64>}]} {
    %c0 = arith.constant 0 : index
    %c0_0 = arith.constant 0 : index
    %0 = vector.load %arg1[%c0, %c0_0] : memref<256x576xbf16, #tpu.memory_space<vmem>>, vector<256x576xbf16>
    %c0_1 = arith.constant 0 : index
    %c0_2 = arith.constant 0 : index
    %1 = vector.load %arg2[%c0_1, %c0_2] : memref<576x64xbf16, #tpu.memory_space<vmem>>, vector<576x64xbf16>
    %cst = arith.constant dense<0.000000e+00> : vector<256x64xf32>
    %2 = tpu.matmul %0, %1, %cst {dimension_numbers = #tpu.dot_dimension_numbers<[1], [0], [0], [1], [0, 0, 1, 1], [], []>} : vector<256x576xbf16>, vector<576x64xbf16>, vector<256x64xf32> -> vector<256x64xf32>
    %c0_3 = arith.constant 0 : index
    %c0_4 = arith.constant 0 : index
    %3 = vector.load %arg3[%c0_3, %c0_4] : memref<1x64xf32, #tpu.memory_space<vmem>>, vector<1x64xf32>
    %4 = vector.broadcast %3 : vector<1x64xf32> to vector<256x64xf32>
    %5 = arith.mulf %2, %4 : vector<256x64xf32>
    %c0_5 = arith.constant 0 : index
    %c0_6 = arith.constant 0 : index
    %6 = vector.load %arg4[%c0_5, %c0_6] : memref<1x64xf32, #tpu.memory_space<vmem>>, vector<1x64xf32>
    %7 = vector.broadcast %6 : vector<1x64xf32> to vector<256x64xf32>
    %8 = arith.addf %5, %7 : vector<256x64xf32>
    %cst_7 = arith.constant 0.000000e+00 : f32
    %9 = vector.broadcast %cst_7 : f32 to vector<256x64xf32>
    %10 = arith.maximumf %8, %9 : vector<256x64xf32>
    %c0_8 = arith.constant 0 : index
    %c0_9 = arith.constant 0 : index
    %11 = vector.load %arg5[%c0_8, %c0_9] : memref<256x64xf32, #tpu.memory_space<vmem>>, vector<256x64xf32>
    tpu.vector_store %arg5[%c0_8, %c0_9], %10 {strides = array<i32>} : memref<256x64xf32, #tpu.memory_space<vmem>>, vector<256x64xf32>,
    return
  }
  func.func @transform_0(%arg0: i32) -> (i32, i32) {
    %c0_i32 = arith.constant 0 : i32
    %c0_i32_0 = arith.constant 0 : i32
    return %arg0, %c0_i32 : i32, i32
  }
  func.func @transform_1(%arg0: i32) -> (i32, i32) {
    %c0_i32 = arith.constant 0 : i32
    %c0_i32_0 = arith.constant 0 : i32
    %c0_i32_1 = arith.constant 0 : i32
    return %c0_i32, %c0_i32_0 : i32, i32
  }
  func.func @transform_2(%arg0: i32) -> (i32, i32) {
    %c0_i32 = arith.constant 0 : i32
    %c0_i32_0 = arith.constant 0 : i32
    %c0_i32_1 = arith.constant 0 : i32
    return %c0_i32, %c0_i32_0 : i32, i32
  }
  func.func @transform_3(%arg0: i32) -> (i32, i32) {
    %c0_i32 = arith.constant 0 : i32
    %c0_i32_0 = arith.constant 0 : i32
    %c0_i32_1 = arith.constant 0 : i32
    return %c0_i32, %c0_i32_0 : i32, i32
  }
  func.func @transform_4(%arg0: i32) -> (i32, i32) {
    %c0_i32 = arith.constant 0 : i32
    %c0_i32_0 = arith.constant 0 : i32
    return %arg0, %c0_i32 : i32, i32
  }
}

module attributes {stable_mosaic.version = 11 : i64} {
  func.func @_vmax_kernel(%arg0: i32, %arg1: i32, %arg2: memref<8x1024xf32, #tpu.memory_space<vmem>>, %arg3: memref<8x1024xf32, #tpu.memory_space<vmem>>, %arg4: memref<8x1024xf32, #tpu.memory_space<vmem>>) attributes {dimension_semantics = [#tpu.dimension_semantics<parallel>, #tpu.dimension_semantics<parallel>], iteration_bounds = array<i64: 2, 1>, scalar_prefetch = 0 : i64, scratch_operands = 0 : i64, tpu.core_type = #tpu.core_type<tc>, window_params = [{transform_indices = @transform_0, window_bounds = array<i64: 8, 1024>}, {transform_indices = @transform_1, window_bounds = array<i64: 8, 1024>}, {transform_indices = @transform_2, window_bounds = array<i64: 8, 1024>}]} {
    %c0 = arith.constant 0 : index
    %c0_0 = arith.constant 0 : index
    %0 = vector.load %arg2[%c0, %c0_0] : memref<8x1024xf32, #tpu.memory_space<vmem>>, vector<8x1024xf32>
    %c0_1 = arith.constant 0 : index
    %c0_2 = arith.constant 0 : index
    %1 = vector.load %arg3[%c0_1, %c0_2] : memref<8x1024xf32, #tpu.memory_space<vmem>>, vector<8x1024xf32>
    %2 = arith.maximumf %0, %1 : vector<8x1024xf32>
    %c0_3 = arith.constant 0 : index
    %c0_4 = arith.constant 0 : index
    %3 = vector.load %arg4[%c0_3, %c0_4] : memref<8x1024xf32, #tpu.memory_space<vmem>>, vector<8x1024xf32>
    tpu.vector_store %arg4[%c0_3, %c0_4], %2 {strides = array<i32>} : memref<8x1024xf32, #tpu.memory_space<vmem>>, vector<8x1024xf32>,
    return
  }
  func.func @transform_0(%arg0: i32, %arg1: i32) -> (i32, i32) {
    %c0_i32 = arith.constant 0 : i32
    return %arg0, %arg1 : i32, i32
  }
  func.func @transform_1(%arg0: i32, %arg1: i32) -> (i32, i32) {
    %c1_i32 = arith.constant 1 : i32
    %0 = arith.addi %arg1, %c1_i32 : i32
    %c0_i32 = arith.constant 0 : i32
    return %arg0, %0 : i32, i32
  }
  func.func @transform_2(%arg0: i32, %arg1: i32) -> (i32, i32) {
    %c0_i32 = arith.constant 0 : i32
    return %arg0, %arg1 : i32, i32
  }
}

module attributes {stable_mosaic.version = 11 : i64} {
  func.func @kernel(%arg0: i32, %arg1: i32, %arg2: memref<8x1024xf32, #tpu.memory_space<vmem>>, %arg3: memref<8x512xf32, #tpu.memory_space<vmem>>) attributes {dimension_semantics = [#tpu.dimension_semantics<parallel>, #tpu.dimension_semantics<parallel>], iteration_bounds = array<i64: 2, 1>, scalar_prefetch = 0 : i64, scratch_operands = 0 : i64, tpu.core_type = #tpu.core_type<tc>, window_params = [{transform_indices = @transform_0, window_bounds = array<i64: 8, 1024>}, {transform_indices = @transform_1, window_bounds = array<i64: 8, 512>}]} {
    %c0 = arith.constant 0 : index
    %c0_0 = arith.constant 0 : index
    %0 = vector.load %arg2[%c0, %c0_0] : memref<8x1024xf32, #tpu.memory_space<vmem>>, vector<8x1024xf32>
    %1 = vector.extract_strided_slice %0 {offsets = [0, 0], sizes = [8, 64], strides = [1, 1]} : vector<8x1024xf32> to vector<8x64xf32>
    %2 = vector.extract_strided_slice %0 {offsets = [0, 64], sizes = [8, 64], strides = [1, 1]} : vector<8x1024xf32> to vector<8x64xf32>
    %3 = arith.maximumf %1, %2 : vector<8x64xf32>
    %4 = vector.extract_strided_slice %0 {offsets = [0, 128], sizes = [8, 64], strides = [1, 1]} : vector<8x1024xf32> to vector<8x64xf32>
    %5 = vector.extract_strided_slice %0 {offsets = [0, 192], sizes = [8, 64], strides = [1, 1]} : vector<8x1024xf32> to vector<8x64xf32>
    %6 = arith.maximumf %4, %5 : vector<8x64xf32>
    %7 = vector.extract_strided_slice %0 {offsets = [0, 256], sizes = [8, 64], strides = [1, 1]} : vector<8x1024xf32> to vector<8x64xf32>
    %8 = vector.extract_strided_slice %0 {offsets = [0, 320], sizes = [8, 64], strides = [1, 1]} : vector<8x1024xf32> to vector<8x64xf32>
    %9 = arith.maximumf %7, %8 : vector<8x64xf32>
    %10 = vector.extract_strided_slice %0 {offsets = [0, 384], sizes = [8, 64], strides = [1, 1]} : vector<8x1024xf32> to vector<8x64xf32>
    %11 = vector.extract_strided_slice %0 {offsets = [0, 448], sizes = [8, 64], strides = [1, 1]} : vector<8x1024xf32> to vector<8x64xf32>
    %12 = arith.maximumf %10, %11 : vector<8x64xf32>
    %13 = vector.extract_strided_slice %0 {offsets = [0, 512], sizes = [8, 64], strides = [1, 1]} : vector<8x1024xf32> to vector<8x64xf32>
    %14 = vector.extract_strided_slice %0 {offsets = [0, 576], sizes = [8, 64], strides = [1, 1]} : vector<8x1024xf32> to vector<8x64xf32>
    %15 = arith.maximumf %13, %14 : vector<8x64xf32>
    %16 = vector.extract_strided_slice %0 {offsets = [0, 640], sizes = [8, 64], strides = [1, 1]} : vector<8x1024xf32> to vector<8x64xf32>
    %17 = vector.extract_strided_slice %0 {offsets = [0, 704], sizes = [8, 64], strides = [1, 1]} : vector<8x1024xf32> to vector<8x64xf32>
    %18 = arith.maximumf %16, %17 : vector<8x64xf32>
    %19 = vector.extract_strided_slice %0 {offsets = [0, 768], sizes = [8, 64], strides = [1, 1]} : vector<8x1024xf32> to vector<8x64xf32>
    %20 = vector.extract_strided_slice %0 {offsets = [0, 832], sizes = [8, 64], strides = [1, 1]} : vector<8x1024xf32> to vector<8x64xf32>
    %21 = arith.maximumf %19, %20 : vector<8x64xf32>
    %22 = vector.extract_strided_slice %0 {offsets = [0, 896], sizes = [8, 64], strides = [1, 1]} : vector<8x1024xf32> to vector<8x64xf32>
    %23 = vector.extract_strided_slice %0 {offsets = [0, 960], sizes = [8, 64], strides = [1, 1]} : vector<8x1024xf32> to vector<8x64xf32>
    %24 = arith.maximumf %22, %23 : vector<8x64xf32>
    %25 = tpu.concatenate %3, %6, %9, %12, %15, %18, %21, %24 in 1 : vector<8x64xf32>, vector<8x64xf32>, vector<8x64xf32>, vector<8x64xf32>, vector<8x64xf32>, vector<8x64xf32>, vector<8x64xf32>, vector<8x64xf32> -> vector<8x512xf32>
    %c0_1 = arith.constant 0 : index
    %c0_2 = arith.constant 0 : index
    %26 = vector.load %arg3[%c0_1, %c0_2] : memref<8x512xf32, #tpu.memory_space<vmem>>, vector<8x512xf32>
    tpu.vector_store %arg3[%c0_1, %c0_2], %25 {strides = array<i32>} : memref<8x512xf32, #tpu.memory_space<vmem>>, vector<8x512xf32>,
    return
  }
  func.func @transform_0(%arg0: i32, %arg1: i32) -> (i32, i32) {
    %c0_i32 = arith.constant 0 : i32
    return %arg0, %arg1 : i32, i32
  }
  func.func @transform_1(%arg0: i32, %arg1: i32) -> (i32, i32) {
    %c0_i32 = arith.constant 0 : i32
    return %arg0, %arg1 : i32, i32
  }
}

module attributes {stable_mosaic.version = 11 : i64} {
  func.func @kernel(%arg0: i32, %arg1: memref<64x576xbf16, #tpu.memory_space<vmem>>, %arg2: memref<576x64xbf16, #tpu.memory_space<vmem>>, %arg3: memref<1x64xf32, #tpu.memory_space<vmem>>, %arg4: memref<1x64xf32, #tpu.memory_space<vmem>>, %arg5: memref<64x64xf32, #tpu.memory_space<vmem>>) attributes {dimension_semantics = [#tpu.dimension_semantics<parallel>], iteration_bounds = array<i64: 2>, scalar_prefetch = 0 : i64, scratch_operands = 0 : i64, tpu.core_type = #tpu.core_type<tc>, window_params = [{transform_indices = @transform_0, window_bounds = array<i64: 64, 576>}, {pipeline_mode = #tpu.pipeline_mode<synchronous>, transform_indices = @transform_1, window_bounds = array<i64: 576, 64>}, {pipeline_mode = #tpu.pipeline_mode<synchronous>, transform_indices = @transform_2, window_bounds = array<i64: 1, 64>}, {pipeline_mode = #tpu.pipeline_mode<synchronous>, transform_indices = @transform_3, window_bounds = array<i64: 1, 64>}, {transform_indices = @transform_4, window_bounds = array<i64: 64, 64>}]} {
    %c0 = arith.constant 0 : index
    %c0_0 = arith.constant 0 : index
    %0 = vector.load %arg1[%c0, %c0_0] : memref<64x576xbf16, #tpu.memory_space<vmem>>, vector<64x576xbf16>
    %c0_1 = arith.constant 0 : index
    %c0_2 = arith.constant 0 : index
    %1 = vector.load %arg2[%c0_1, %c0_2] : memref<576x64xbf16, #tpu.memory_space<vmem>>, vector<576x64xbf16>
    %cst = arith.constant dense<0.000000e+00> : vector<64x64xf32>
    %2 = tpu.matmul %0, %1, %cst {dimension_numbers = #tpu.dot_dimension_numbers<[1], [0], [0], [1], [0, 0, 1, 1], [], []>} : vector<64x576xbf16>, vector<576x64xbf16>, vector<64x64xf32> -> vector<64x64xf32>
    %c0_3 = arith.constant 0 : index
    %c0_4 = arith.constant 0 : index
    %3 = vector.load %arg3[%c0_3, %c0_4] : memref<1x64xf32, #tpu.memory_space<vmem>>, vector<1x64xf32>
    %4 = vector.broadcast %3 : vector<1x64xf32> to vector<64x64xf32>
    %5 = arith.mulf %2, %4 : vector<64x64xf32>
    %c0_5 = arith.constant 0 : index
    %c0_6 = arith.constant 0 : index
    %6 = vector.load %arg4[%c0_5, %c0_6] : memref<1x64xf32, #tpu.memory_space<vmem>>, vector<1x64xf32>
    %7 = vector.broadcast %6 : vector<1x64xf32> to vector<64x64xf32>
    %8 = arith.addf %5, %7 : vector<64x64xf32>
    %cst_7 = arith.constant 0.000000e+00 : f32
    %9 = vector.broadcast %cst_7 : f32 to vector<64x64xf32>
    %10 = arith.maximumf %8, %9 : vector<64x64xf32>
    %c0_8 = arith.constant 0 : index
    %c0_9 = arith.constant 0 : index
    %11 = vector.load %arg5[%c0_8, %c0_9] : memref<64x64xf32, #tpu.memory_space<vmem>>, vector<64x64xf32>
    tpu.vector_store %arg5[%c0_8, %c0_9], %10 {strides = array<i32>} : memref<64x64xf32, #tpu.memory_space<vmem>>, vector<64x64xf32>,
    return
  }
  func.func @transform_0(%arg0: i32) -> (i32, i32) {
    %c0_i32 = arith.constant 0 : i32
    %c0_i32_0 = arith.constant 0 : i32
    return %arg0, %c0_i32 : i32, i32
  }
  func.func @transform_1(%arg0: i32) -> (i32, i32) {
    %c0_i32 = arith.constant 0 : i32
    %c0_i32_0 = arith.constant 0 : i32
    %c0_i32_1 = arith.constant 0 : i32
    return %c0_i32, %c0_i32_0 : i32, i32
  }
  func.func @transform_2(%arg0: i32) -> (i32, i32) {
    %c0_i32 = arith.constant 0 : i32
    %c0_i32_0 = arith.constant 0 : i32
    %c0_i32_1 = arith.constant 0 : i32
    return %c0_i32, %c0_i32_0 : i32, i32
  }
  func.func @transform_3(%arg0: i32) -> (i32, i32) {
    %c0_i32 = arith.constant 0 : i32
    %c0_i32_0 = arith.constant 0 : i32
    %c0_i32_1 = arith.constant 0 : i32
    return %c0_i32, %c0_i32_0 : i32, i32
  }
  func.func @transform_4(%arg0: i32) -> (i32, i32) {
    %c0_i32 = arith.constant 0 : i32
    %c0_i32_0 = arith.constant 0 : i32
    return %arg0, %c0_i32 : i32, i32
  }
}

module attributes {stable_mosaic.version = 11 : i64} {
  func.func @kernel(%arg0: i32, %arg1: i32, %arg2: memref<8x512xf32, #tpu.memory_space<vmem>>, %arg3: memref<8x256xf32, #tpu.memory_space<vmem>>) attributes {dimension_semantics = [#tpu.dimension_semantics<parallel>, #tpu.dimension_semantics<parallel>], iteration_bounds = array<i64: 1, 1>, scalar_prefetch = 0 : i64, scratch_operands = 0 : i64, tpu.core_type = #tpu.core_type<tc>, window_params = [{transform_indices = @transform_0, window_bounds = array<i64: 8, 512>}, {transform_indices = @transform_1, window_bounds = array<i64: 8, 256>}]} {
    %c0 = arith.constant 0 : index
    %c0_0 = arith.constant 0 : index
    %0 = vector.load %arg2[%c0, %c0_0] : memref<8x512xf32, #tpu.memory_space<vmem>>, vector<8x512xf32>
    %1 = vector.extract_strided_slice %0 {offsets = [0, 0], sizes = [8, 64], strides = [1, 1]} : vector<8x512xf32> to vector<8x64xf32>
    %2 = vector.extract_strided_slice %0 {offsets = [0, 64], sizes = [8, 64], strides = [1, 1]} : vector<8x512xf32> to vector<8x64xf32>
    %3 = arith.maximumf %1, %2 : vector<8x64xf32>
    %4 = vector.extract_strided_slice %0 {offsets = [0, 128], sizes = [8, 64], strides = [1, 1]} : vector<8x512xf32> to vector<8x64xf32>
    %5 = vector.extract_strided_slice %0 {offsets = [0, 192], sizes = [8, 64], strides = [1, 1]} : vector<8x512xf32> to vector<8x64xf32>
    %6 = arith.maximumf %4, %5 : vector<8x64xf32>
    %7 = vector.extract_strided_slice %0 {offsets = [0, 256], sizes = [8, 64], strides = [1, 1]} : vector<8x512xf32> to vector<8x64xf32>
    %8 = vector.extract_strided_slice %0 {offsets = [0, 320], sizes = [8, 64], strides = [1, 1]} : vector<8x512xf32> to vector<8x64xf32>
    %9 = arith.maximumf %7, %8 : vector<8x64xf32>
    %10 = vector.extract_strided_slice %0 {offsets = [0, 384], sizes = [8, 64], strides = [1, 1]} : vector<8x512xf32> to vector<8x64xf32>
    %11 = vector.extract_strided_slice %0 {offsets = [0, 448], sizes = [8, 64], strides = [1, 1]} : vector<8x512xf32> to vector<8x64xf32>
    %12 = arith.maximumf %10, %11 : vector<8x64xf32>
    %13 = tpu.concatenate %3, %6, %9, %12 in 1 : vector<8x64xf32>, vector<8x64xf32>, vector<8x64xf32>, vector<8x64xf32> -> vector<8x256xf32>
    %c0_1 = arith.constant 0 : index
    %c0_2 = arith.constant 0 : index
    %14 = vector.load %arg3[%c0_1, %c0_2] : memref<8x256xf32, #tpu.memory_space<vmem>>, vector<8x256xf32>
    tpu.vector_store %arg3[%c0_1, %c0_2], %13 {strides = array<i32>} : memref<8x256xf32, #tpu.memory_space<vmem>>, vector<8x256xf32>,
    return
  }
  func.func @transform_0(%arg0: i32, %arg1: i32) -> (i32, i32) {
    %c0_i32 = arith.constant 0 : i32
    return %arg0, %arg1 : i32, i32
  }
  func.func @transform_1(%arg0: i32, %arg1: i32) -> (i32, i32) {
    %c0_i32 = arith.constant 0 : i32
    return %arg0, %arg1 : i32, i32
  }
}

module attributes {stable_mosaic.version = 11 : i64} {
  func.func @_vmax_kernel(%arg0: i32, %arg1: i32, %arg2: memref<8x512xf32, #tpu.memory_space<vmem>>, %arg3: memref<8x512xf32, #tpu.memory_space<vmem>>, %arg4: memref<8x512xf32, #tpu.memory_space<vmem>>) attributes {dimension_semantics = [#tpu.dimension_semantics<parallel>, #tpu.dimension_semantics<parallel>], iteration_bounds = array<i64: 1, 1>, scalar_prefetch = 0 : i64, scratch_operands = 0 : i64, tpu.core_type = #tpu.core_type<tc>, window_params = [{transform_indices = @transform_0, window_bounds = array<i64: 8, 512>}, {transform_indices = @transform_1, window_bounds = array<i64: 8, 512>}, {transform_indices = @transform_2, window_bounds = array<i64: 8, 512>}]} {
    %c0 = arith.constant 0 : index
    %c0_0 = arith.constant 0 : index
    %0 = vector.load %arg2[%c0, %c0_0] : memref<8x512xf32, #tpu.memory_space<vmem>>, vector<8x512xf32>
    %c0_1 = arith.constant 0 : index
    %c0_2 = arith.constant 0 : index
    %1 = vector.load %arg3[%c0_1, %c0_2] : memref<8x512xf32, #tpu.memory_space<vmem>>, vector<8x512xf32>
    %2 = arith.maximumf %0, %1 : vector<8x512xf32>
    %c0_3 = arith.constant 0 : index
    %c0_4 = arith.constant 0 : index
    %3 = vector.load %arg4[%c0_3, %c0_4] : memref<8x512xf32, #tpu.memory_space<vmem>>, vector<8x512xf32>
    tpu.vector_store %arg4[%c0_3, %c0_4], %2 {strides = array<i32>} : memref<8x512xf32, #tpu.memory_space<vmem>>, vector<8x512xf32>,
    return
  }
  func.func @transform_0(%arg0: i32, %arg1: i32) -> (i32, i32) {
    %c0_i32 = arith.constant 0 : i32
    return %arg0, %arg1 : i32, i32
  }
  func.func @transform_1(%arg0: i32, %arg1: i32) -> (i32, i32) {
    %c1_i32 = arith.constant 1 : i32
    %0 = arith.addi %arg1, %c1_i32 : i32
    %c0_i32 = arith.constant 0 : i32
    return %arg0, %0 : i32, i32
  }
  func.func @transform_2(%arg0: i32, %arg1: i32) -> (i32, i32) {
    %c0_i32 = arith.constant 0 : i32
    return %arg0, %arg1 : i32, i32
  }
}

module attributes {stable_mosaic.version = 11 : i64} {
  func.func @kernel(%arg0: i32, %arg1: memref<16x576xbf16, #tpu.memory_space<vmem>>, %arg2: memref<576x128xbf16, #tpu.memory_space<vmem>>, %arg3: memref<1x128xf32, #tpu.memory_space<vmem>>, %arg4: memref<1x128xf32, #tpu.memory_space<vmem>>, %arg5: memref<16x128xf32, #tpu.memory_space<vmem>>) attributes {dimension_semantics = [#tpu.dimension_semantics<parallel>], iteration_bounds = array<i64: 2>, scalar_prefetch = 0 : i64, scratch_operands = 0 : i64, tpu.core_type = #tpu.core_type<tc>, window_params = [{transform_indices = @transform_0, window_bounds = array<i64: 16, 576>}, {pipeline_mode = #tpu.pipeline_mode<synchronous>, transform_indices = @transform_1, window_bounds = array<i64: 576, 128>}, {pipeline_mode = #tpu.pipeline_mode<synchronous>, transform_indices = @transform_2, window_bounds = array<i64: 1, 128>}, {pipeline_mode = #tpu.pipeline_mode<synchronous>, transform_indices = @transform_3, window_bounds = array<i64: 1, 128>}, {transform_indices = @transform_4, window_bounds = array<i64: 16, 128>}]} {
    %c0 = arith.constant 0 : index
    %c0_0 = arith.constant 0 : index
    %0 = vector.load %arg1[%c0, %c0_0] : memref<16x576xbf16, #tpu.memory_space<vmem>>, vector<16x576xbf16>
    %c0_1 = arith.constant 0 : index
    %c0_2 = arith.constant 0 : index
    %1 = vector.load %arg2[%c0_1, %c0_2] : memref<576x128xbf16, #tpu.memory_space<vmem>>, vector<576x128xbf16>
    %cst = arith.constant dense<0.000000e+00> : vector<16x128xf32>
    %2 = tpu.matmul %0, %1, %cst {dimension_numbers = #tpu.dot_dimension_numbers<[1], [0], [0], [1], [0, 0, 1, 1], [], []>} : vector<16x576xbf16>, vector<576x128xbf16>, vector<16x128xf32> -> vector<16x128xf32>
    %c0_3 = arith.constant 0 : index
    %c0_4 = arith.constant 0 : index
    %3 = vector.load %arg3[%c0_3, %c0_4] : memref<1x128xf32, #tpu.memory_space<vmem>>, vector<1x128xf32>
    %4 = vector.broadcast %3 : vector<1x128xf32> to vector<16x128xf32>
    %5 = arith.mulf %2, %4 : vector<16x128xf32>
    %c0_5 = arith.constant 0 : index
    %c0_6 = arith.constant 0 : index
    %6 = vector.load %arg4[%c0_5, %c0_6] : memref<1x128xf32, #tpu.memory_space<vmem>>, vector<1x128xf32>
    %7 = vector.broadcast %6 : vector<1x128xf32> to vector<16x128xf32>
    %8 = arith.addf %5, %7 : vector<16x128xf32>
    %cst_7 = arith.constant 0.000000e+00 : f32
    %9 = vector.broadcast %cst_7 : f32 to vector<16x128xf32>
    %10 = arith.maximumf %8, %9 : vector<16x128xf32>
    %c0_8 = arith.constant 0 : index
    %c0_9 = arith.constant 0 : index
    %11 = vector.load %arg5[%c0_8, %c0_9] : memref<16x128xf32, #tpu.memory_space<vmem>>, vector<16x128xf32>
    tpu.vector_store %arg5[%c0_8, %c0_9], %10 {strides = array<i32>} : memref<16x128xf32, #tpu.memory_space<vmem>>, vector<16x128xf32>,
    return
  }
  func.func @transform_0(%arg0: i32) -> (i32, i32) {
    %c0_i32 = arith.constant 0 : i32
    %c0_i32_0 = arith.constant 0 : i32
    return %arg0, %c0_i32 : i32, i32
  }
  func.func @transform_1(%arg0: i32) -> (i32, i32) {
    %c0_i32 = arith.constant 0 : i32
    %c0_i32_0 = arith.constant 0 : i32
    %c0_i32_1 = arith.constant 0 : i32
    return %c0_i32, %c0_i32_0 : i32, i32
  }
  func.func @transform_2(%arg0: i32) -> (i32, i32) {
    %c0_i32 = arith.constant 0 : i32
    %c0_i32_0 = arith.constant 0 : i32
    %c0_i32_1 = arith.constant 0 : i32
    return %c0_i32, %c0_i32_0 : i32, i32
  }
  func.func @transform_3(%arg0: i32) -> (i32, i32) {
    %c0_i32 = arith.constant 0 : i32
    %c0_i32_0 = arith.constant 0 : i32
    %c0_i32_1 = arith.constant 0 : i32
    return %c0_i32, %c0_i32_0 : i32, i32
  }
  func.func @transform_4(%arg0: i32) -> (i32, i32) {
    %c0_i32 = arith.constant 0 : i32
    %c0_i32_0 = arith.constant 0 : i32
    return %arg0, %c0_i32 : i32, i32
  }
}

module attributes {stable_mosaic.version = 11 : i64} {
  func.func @kernel(%arg0: i32, %arg1: memref<16x1152xbf16, #tpu.memory_space<vmem>>, %arg2: memref<1152x128xbf16, #tpu.memory_space<vmem>>, %arg3: memref<1x128xf32, #tpu.memory_space<vmem>>, %arg4: memref<1x128xf32, #tpu.memory_space<vmem>>, %arg5: memref<16x128xf32, #tpu.memory_space<vmem>>) attributes {dimension_semantics = [#tpu.dimension_semantics<parallel>], iteration_bounds = array<i64: 2>, scalar_prefetch = 0 : i64, scratch_operands = 0 : i64, tpu.core_type = #tpu.core_type<tc>, window_params = [{transform_indices = @transform_0, window_bounds = array<i64: 16, 1152>}, {pipeline_mode = #tpu.pipeline_mode<synchronous>, transform_indices = @transform_1, window_bounds = array<i64: 1152, 128>}, {pipeline_mode = #tpu.pipeline_mode<synchronous>, transform_indices = @transform_2, window_bounds = array<i64: 1, 128>}, {pipeline_mode = #tpu.pipeline_mode<synchronous>, transform_indices = @transform_3, window_bounds = array<i64: 1, 128>}, {transform_indices = @transform_4, window_bounds = array<i64: 16, 128>}]} {
    %c0 = arith.constant 0 : index
    %c0_0 = arith.constant 0 : index
    %0 = vector.load %arg1[%c0, %c0_0] : memref<16x1152xbf16, #tpu.memory_space<vmem>>, vector<16x1152xbf16>
    %c0_1 = arith.constant 0 : index
    %c0_2 = arith.constant 0 : index
    %1 = vector.load %arg2[%c0_1, %c0_2] : memref<1152x128xbf16, #tpu.memory_space<vmem>>, vector<1152x128xbf16>
    %cst = arith.constant dense<0.000000e+00> : vector<16x128xf32>
    %2 = tpu.matmul %0, %1, %cst {dimension_numbers = #tpu.dot_dimension_numbers<[1], [0], [0], [1], [0, 0, 1, 1], [], []>} : vector<16x1152xbf16>, vector<1152x128xbf16>, vector<16x128xf32> -> vector<16x128xf32>
    %c0_3 = arith.constant 0 : index
    %c0_4 = arith.constant 0 : index
    %3 = vector.load %arg3[%c0_3, %c0_4] : memref<1x128xf32, #tpu.memory_space<vmem>>, vector<1x128xf32>
    %4 = vector.broadcast %3 : vector<1x128xf32> to vector<16x128xf32>
    %5 = arith.mulf %2, %4 : vector<16x128xf32>
    %c0_5 = arith.constant 0 : index
    %c0_6 = arith.constant 0 : index
    %6 = vector.load %arg4[%c0_5, %c0_6] : memref<1x128xf32, #tpu.memory_space<vmem>>, vector<1x128xf32>
    %7 = vector.broadcast %6 : vector<1x128xf32> to vector<16x128xf32>
    %8 = arith.addf %5, %7 : vector<16x128xf32>
    %cst_7 = arith.constant 0.000000e+00 : f32
    %9 = vector.broadcast %cst_7 : f32 to vector<16x128xf32>
    %10 = arith.maximumf %8, %9 : vector<16x128xf32>
    %c0_8 = arith.constant 0 : index
    %c0_9 = arith.constant 0 : index
    %11 = vector.load %arg5[%c0_8, %c0_9] : memref<16x128xf32, #tpu.memory_space<vmem>>, vector<16x128xf32>
    tpu.vector_store %arg5[%c0_8, %c0_9], %10 {strides = array<i32>} : memref<16x128xf32, #tpu.memory_space<vmem>>, vector<16x128xf32>,
    return
  }
  func.func @transform_0(%arg0: i32) -> (i32, i32) {
    %c0_i32 = arith.constant 0 : i32
    %c0_i32_0 = arith.constant 0 : i32
    return %arg0, %c0_i32 : i32, i32
  }
  func.func @transform_1(%arg0: i32) -> (i32, i32) {
    %c0_i32 = arith.constant 0 : i32
    %c0_i32_0 = arith.constant 0 : i32
    %c0_i32_1 = arith.constant 0 : i32
    return %c0_i32, %c0_i32_0 : i32, i32
  }
  func.func @transform_2(%arg0: i32) -> (i32, i32) {
    %c0_i32 = arith.constant 0 : i32
    %c0_i32_0 = arith.constant 0 : i32
    %c0_i32_1 = arith.constant 0 : i32
    return %c0_i32, %c0_i32_0 : i32, i32
  }
  func.func @transform_3(%arg0: i32) -> (i32, i32) {
    %c0_i32 = arith.constant 0 : i32
    %c0_i32_0 = arith.constant 0 : i32
    %c0_i32_1 = arith.constant 0 : i32
    return %c0_i32, %c0_i32_0 : i32, i32
  }
  func.func @transform_4(%arg0: i32) -> (i32, i32) {
    %c0_i32 = arith.constant 0 : i32
    %c0_i32_0 = arith.constant 0 : i32
    return %arg0, %c0_i32 : i32, i32
  }
}

module attributes {stable_mosaic.version = 11 : i64} {
  func.func @kernel(%arg0: i32, %arg1: i32, %arg2: memref<8x512xf32, #tpu.memory_space<vmem>>, %arg3: memref<8x256xf32, #tpu.memory_space<vmem>>) attributes {dimension_semantics = [#tpu.dimension_semantics<parallel>, #tpu.dimension_semantics<parallel>], iteration_bounds = array<i64: 1, 1>, scalar_prefetch = 0 : i64, scratch_operands = 0 : i64, tpu.core_type = #tpu.core_type<tc>, window_params = [{transform_indices = @transform_0, window_bounds = array<i64: 8, 512>}, {transform_indices = @transform_1, window_bounds = array<i64: 8, 256>}]} {
    %c0 = arith.constant 0 : index
    %c0_0 = arith.constant 0 : index
    %0 = vector.load %arg2[%c0, %c0_0] : memref<8x512xf32, #tpu.memory_space<vmem>>, vector<8x512xf32>
    %1 = vector.extract_strided_slice %0 {offsets = [0, 0], sizes = [8, 128], strides = [1, 1]} : vector<8x512xf32> to vector<8x128xf32>
    %2 = vector.extract_strided_slice %0 {offsets = [0, 128], sizes = [8, 128], strides = [1, 1]} : vector<8x512xf32> to vector<8x128xf32>
    %3 = arith.maximumf %1, %2 : vector<8x128xf32>
    %4 = vector.extract_strided_slice %0 {offsets = [0, 256], sizes = [8, 128], strides = [1, 1]} : vector<8x512xf32> to vector<8x128xf32>
    %5 = vector.extract_strided_slice %0 {offsets = [0, 384], sizes = [8, 128], strides = [1, 1]} : vector<8x512xf32> to vector<8x128xf32>
    %6 = arith.maximumf %4, %5 : vector<8x128xf32>
    %7 = tpu.concatenate %3, %6 in 1 : vector<8x128xf32>, vector<8x128xf32> -> vector<8x256xf32>
    %c0_1 = arith.constant 0 : index
    %c0_2 = arith.constant 0 : index
    %8 = vector.load %arg3[%c0_1, %c0_2] : memref<8x256xf32, #tpu.memory_space<vmem>>, vector<8x256xf32>
    tpu.vector_store %arg3[%c0_1, %c0_2], %7 {strides = array<i32>} : memref<8x256xf32, #tpu.memory_space<vmem>>, vector<8x256xf32>,
    return
  }
  func.func @transform_0(%arg0: i32, %arg1: i32) -> (i32, i32) {
    %c0_i32 = arith.constant 0 : i32
    return %arg0, %arg1 : i32, i32
  }
  func.func @transform_1(%arg0: i32, %arg1: i32) -> (i32, i32) {
    %c0_i32 = arith.constant 0 : i32
    return %arg0, %arg1 : i32, i32
  }
}

module attributes {stable_mosaic.version = 11 : i64} {
  func.func @kernel(%arg0: i32, %arg1: memref<8x1152xbf16, #tpu.memory_space<vmem>>, %arg2: memref<1152x128xbf16, #tpu.memory_space<vmem>>, %arg3: memref<1x128xf32, #tpu.memory_space<vmem>>, %arg4: memref<1x128xf32, #tpu.memory_space<vmem>>, %arg5: memref<8x128xf32, #tpu.memory_space<vmem>>) attributes {dimension_semantics = [#tpu.dimension_semantics<parallel>], iteration_bounds = array<i64: 1>, scalar_prefetch = 0 : i64, scratch_operands = 0 : i64, tpu.core_type = #tpu.core_type<tc>, window_params = [{transform_indices = @transform_0, window_bounds = array<i64: 8, 1152>}, {pipeline_mode = #tpu.pipeline_mode<synchronous>, transform_indices = @transform_1, window_bounds = array<i64: 1152, 128>}, {pipeline_mode = #tpu.pipeline_mode<synchronous>, transform_indices = @transform_2, window_bounds = array<i64: 1, 128>}, {pipeline_mode = #tpu.pipeline_mode<synchronous>, transform_indices = @transform_3, window_bounds = array<i64: 1, 128>}, {transform_indices = @transform_4, window_bounds = array<i64: 8, 128>}]} {
    %c0 = arith.constant 0 : index
    %c0_0 = arith.constant 0 : index
    %0 = vector.load %arg1[%c0, %c0_0] : memref<8x1152xbf16, #tpu.memory_space<vmem>>, vector<8x1152xbf16>
    %c0_1 = arith.constant 0 : index
    %c0_2 = arith.constant 0 : index
    %1 = vector.load %arg2[%c0_1, %c0_2] : memref<1152x128xbf16, #tpu.memory_space<vmem>>, vector<1152x128xbf16>
    %cst = arith.constant dense<0.000000e+00> : vector<8x128xf32>
    %2 = tpu.matmul %0, %1, %cst {dimension_numbers = #tpu.dot_dimension_numbers<[1], [0], [0], [1], [0, 0, 1, 1], [], []>} : vector<8x1152xbf16>, vector<1152x128xbf16>, vector<8x128xf32> -> vector<8x128xf32>
    %c0_3 = arith.constant 0 : index
    %c0_4 = arith.constant 0 : index
    %3 = vector.load %arg3[%c0_3, %c0_4] : memref<1x128xf32, #tpu.memory_space<vmem>>, vector<1x128xf32>
    %4 = vector.broadcast %3 : vector<1x128xf32> to vector<8x128xf32>
    %5 = arith.mulf %2, %4 : vector<8x128xf32>
    %c0_5 = arith.constant 0 : index
    %c0_6 = arith.constant 0 : index
    %6 = vector.load %arg4[%c0_5, %c0_6] : memref<1x128xf32, #tpu.memory_space<vmem>>, vector<1x128xf32>
    %7 = vector.broadcast %6 : vector<1x128xf32> to vector<8x128xf32>
    %8 = arith.addf %5, %7 : vector<8x128xf32>
    %cst_7 = arith.constant 0.000000e+00 : f32
    %9 = vector.broadcast %cst_7 : f32 to vector<8x128xf32>
    %10 = arith.maximumf %8, %9 : vector<8x128xf32>
    %c0_8 = arith.constant 0 : index
    %c0_9 = arith.constant 0 : index
    %11 = vector.load %arg5[%c0_8, %c0_9] : memref<8x128xf32, #tpu.memory_space<vmem>>, vector<8x128xf32>
    tpu.vector_store %arg5[%c0_8, %c0_9], %10 {strides = array<i32>} : memref<8x128xf32, #tpu.memory_space<vmem>>, vector<8x128xf32>,
    return
  }
  func.func @transform_0(%arg0: i32) -> (i32, i32) {
    %c0_i32 = arith.constant 0 : i32
    %c0_i32_0 = arith.constant 0 : i32
    return %arg0, %c0_i32 : i32, i32
  }
  func.func @transform_1(%arg0: i32) -> (i32, i32) {
    %c0_i32 = arith.constant 0 : i32
    %c0_i32_0 = arith.constant 0 : i32
    %c0_i32_1 = arith.constant 0 : i32
    return %c0_i32, %c0_i32_0 : i32, i32
  }
  func.func @transform_2(%arg0: i32) -> (i32, i32) {
    %c0_i32 = arith.constant 0 : i32
    %c0_i32_0 = arith.constant 0 : i32
    %c0_i32_1 = arith.constant 0 : i32
    return %c0_i32, %c0_i32_0 : i32, i32
  }
  func.func @transform_3(%arg0: i32) -> (i32, i32) {
    %c0_i32 = arith.constant 0 : i32
    %c0_i32_0 = arith.constant 0 : i32
    %c0_i32_1 = arith.constant 0 : i32
    return %c0_i32, %c0_i32_0 : i32, i32
  }
  func.func @transform_4(%arg0: i32) -> (i32, i32) {
    %c0_i32 = arith.constant 0 : i32
    %c0_i32_0 = arith.constant 0 : i32
    return %arg0, %c0_i32 : i32, i32
  }
}

module attributes {stable_mosaic.version = 11 : i64} {
  func.func @kernel(%arg0: i32, %arg1: memref<8x1152xbf16, #tpu.memory_space<vmem>>, %arg2: memref<1152x512xbf16, #tpu.memory_space<vmem>>, %arg3: memref<1x512xf32, #tpu.memory_space<vmem>>, %arg4: memref<1x512xf32, #tpu.memory_space<vmem>>, %arg5: memref<8x512xf32, #tpu.memory_space<vmem>>) attributes {dimension_semantics = [#tpu.dimension_semantics<parallel>], iteration_bounds = array<i64: 1>, scalar_prefetch = 0 : i64, scratch_operands = 0 : i64, tpu.core_type = #tpu.core_type<tc>, window_params = [{transform_indices = @transform_0, window_bounds = array<i64: 8, 1152>}, {pipeline_mode = #tpu.pipeline_mode<synchronous>, transform_indices = @transform_1, window_bounds = array<i64: 1152, 512>}, {pipeline_mode = #tpu.pipeline_mode<synchronous>, transform_indices = @transform_2, window_bounds = array<i64: 1, 512>}, {pipeline_mode = #tpu.pipeline_mode<synchronous>, transform_indices = @transform_3, window_bounds = array<i64: 1, 512>}, {transform_indices = @transform_4, window_bounds = array<i64: 8, 512>}]} {
    %c0 = arith.constant 0 : index
    %c0_0 = arith.constant 0 : index
    %0 = vector.load %arg1[%c0, %c0_0] : memref<8x1152xbf16, #tpu.memory_space<vmem>>, vector<8x1152xbf16>
    %c0_1 = arith.constant 0 : index
    %c0_2 = arith.constant 0 : index
    %1 = vector.load %arg2[%c0_1, %c0_2] : memref<1152x512xbf16, #tpu.memory_space<vmem>>, vector<1152x512xbf16>
    %cst = arith.constant dense<0.000000e+00> : vector<8x512xf32>
    %2 = tpu.matmul %0, %1, %cst {dimension_numbers = #tpu.dot_dimension_numbers<[1], [0], [0], [1], [0, 0, 1, 1], [], []>} : vector<8x1152xbf16>, vector<1152x512xbf16>, vector<8x512xf32> -> vector<8x512xf32>
    %c0_3 = arith.constant 0 : index
    %c0_4 = arith.constant 0 : index
    %3 = vector.load %arg3[%c0_3, %c0_4] : memref<1x512xf32, #tpu.memory_space<vmem>>, vector<1x512xf32>
    %4 = vector.broadcast %3 : vector<1x512xf32> to vector<8x512xf32>
    %5 = arith.mulf %2, %4 : vector<8x512xf32>
    %c0_5 = arith.constant 0 : index
    %c0_6 = arith.constant 0 : index
    %6 = vector.load %arg4[%c0_5, %c0_6] : memref<1x512xf32, #tpu.memory_space<vmem>>, vector<1x512xf32>
    %7 = vector.broadcast %6 : vector<1x512xf32> to vector<8x512xf32>
    %8 = arith.addf %5, %7 : vector<8x512xf32>
    %cst_7 = arith.constant 0.000000e+00 : f32
    %9 = vector.broadcast %cst_7 : f32 to vector<8x512xf32>
    %10 = arith.maximumf %8, %9 : vector<8x512xf32>
    %c0_8 = arith.constant 0 : index
    %c0_9 = arith.constant 0 : index
    %11 = vector.load %arg5[%c0_8, %c0_9] : memref<8x512xf32, #tpu.memory_space<vmem>>, vector<8x512xf32>
    tpu.vector_store %arg5[%c0_8, %c0_9], %10 {strides = array<i32>} : memref<8x512xf32, #tpu.memory_space<vmem>>, vector<8x512xf32>,
    return
  }
  func.func @transform_0(%arg0: i32) -> (i32, i32) {
    %c0_i32 = arith.constant 0 : i32
    %c0_i32_0 = arith.constant 0 : i32
    return %arg0, %c0_i32 : i32, i32
  }
  func.func @transform_1(%arg0: i32) -> (i32, i32) {
    %c0_i32 = arith.constant 0 : i32
    %c0_i32_0 = arith.constant 0 : i32
    %c0_i32_1 = arith.constant 0 : i32
    return %c0_i32, %c0_i32_0 : i32, i32
  }
  func.func @transform_2(%arg0: i32) -> (i32, i32) {
    %c0_i32 = arith.constant 0 : i32
    %c0_i32_0 = arith.constant 0 : i32
    %c0_i32_1 = arith.constant 0 : i32
    return %c0_i32, %c0_i32_0 : i32, i32
  }
  func.func @transform_3(%arg0: i32) -> (i32, i32) {
    %c0_i32 = arith.constant 0 : i32
    %c0_i32_0 = arith.constant 0 : i32
    %c0_i32_1 = arith.constant 0 : i32
    return %c0_i32, %c0_i32_0 : i32, i32
  }
  func.func @transform_4(%arg0: i32) -> (i32, i32) {
    %c0_i32 = arith.constant 0 : i32
    %c0_i32_0 = arith.constant 0 : i32
    return %arg0, %c0_i32 : i32, i32
  }
}

module attributes {stable_mosaic.version = 11 : i64} {
  func.func @kernel(%arg0: i32, %arg1: memref<8x256xbf16, #tpu.memory_space<vmem>>, %arg2: memref<256x256xbf16, #tpu.memory_space<vmem>>, %arg3: memref<1x256xf32, #tpu.memory_space<vmem>>, %arg4: memref<1x256xf32, #tpu.memory_space<vmem>>, %arg5: memref<8x256xf32, #tpu.memory_space<vmem>>) attributes {dimension_semantics = [#tpu.dimension_semantics<parallel>], iteration_bounds = array<i64: 1>, scalar_prefetch = 0 : i64, scratch_operands = 0 : i64, tpu.core_type = #tpu.core_type<tc>, window_params = [{transform_indices = @transform_0, window_bounds = array<i64: 8, 256>}, {pipeline_mode = #tpu.pipeline_mode<synchronous>, transform_indices = @transform_1, window_bounds = array<i64: 256, 256>}, {pipeline_mode = #tpu.pipeline_mode<synchronous>, transform_indices = @transform_2, window_bounds = array<i64: 1, 256>}, {pipeline_mode = #tpu.pipeline_mode<synchronous>, transform_indices = @transform_3, window_bounds = array<i64: 1, 256>}, {transform_indices = @transform_4, window_bounds = array<i64: 8, 256>}]} {
    %c0 = arith.constant 0 : index
    %c0_0 = arith.constant 0 : index
    %0 = vector.load %arg1[%c0, %c0_0] : memref<8x256xbf16, #tpu.memory_space<vmem>>, vector<8x256xbf16>
    %c0_1 = arith.constant 0 : index
    %c0_2 = arith.constant 0 : index
    %1 = vector.load %arg2[%c0_1, %c0_2] : memref<256x256xbf16, #tpu.memory_space<vmem>>, vector<256x256xbf16>
    %cst = arith.constant dense<0.000000e+00> : vector<8x256xf32>
    %2 = tpu.matmul %0, %1, %cst {dimension_numbers = #tpu.dot_dimension_numbers<[1], [0], [0], [1], [0, 0, 1, 1], [], []>} : vector<8x256xbf16>, vector<256x256xbf16>, vector<8x256xf32> -> vector<8x256xf32>
    %c0_3 = arith.constant 0 : index
    %c0_4 = arith.constant 0 : index
    %3 = vector.load %arg3[%c0_3, %c0_4] : memref<1x256xf32, #tpu.memory_space<vmem>>, vector<1x256xf32>
    %4 = vector.broadcast %3 : vector<1x256xf32> to vector<8x256xf32>
    %5 = arith.mulf %2, %4 : vector<8x256xf32>
    %c0_5 = arith.constant 0 : index
    %c0_6 = arith.constant 0 : index
    %6 = vector.load %arg4[%c0_5, %c0_6] : memref<1x256xf32, #tpu.memory_space<vmem>>, vector<1x256xf32>
    %7 = vector.broadcast %6 : vector<1x256xf32> to vector<8x256xf32>
    %8 = arith.addf %5, %7 : vector<8x256xf32>
    %9 = arith.mulf %8, %8 : vector<8x256xf32>
    %cst_7 = arith.constant dense<0.000000e+00> : vector<8xf32>
    %10 = vector.multi_reduction <add>, %9, %cst_7 [1] : vector<8x256xf32> to vector<8xf32>
    %11 = vector.shape_cast %10 : vector<8xf32> to vector<8x1xf32>
    %cst_8 = arith.constant 9.99999996E-13 : f32
    %12 = vector.broadcast %cst_8 : f32 to vector<8x1xf32>
    %13 = arith.addf %11, %12 : vector<8x1xf32>
    %14 = math.rsqrt %13 : vector<8x1xf32>
    %15 = vector.broadcast %14 : vector<8x1xf32> to vector<8x256xf32>
    %16 = arith.mulf %8, %15 : vector<8x256xf32>
    %c0_9 = arith.constant 0 : index
    %c0_10 = arith.constant 0 : index
    %17 = vector.load %arg5[%c0_9, %c0_10] : memref<8x256xf32, #tpu.memory_space<vmem>>, vector<8x256xf32>
    tpu.vector_store %arg5[%c0_9, %c0_10], %16 {strides = array<i32>} : memref<8x256xf32, #tpu.memory_space<vmem>>, vector<8x256xf32>,
    return
  }
  func.func @transform_0(%arg0: i32) -> (i32, i32) {
    %c0_i32 = arith.constant 0 : i32
    %c0_i32_0 = arith.constant 0 : i32
    return %arg0, %c0_i32 : i32, i32
  }
  func.func @transform_1(%arg0: i32) -> (i32, i32) {
    %c0_i32 = arith.constant 0 : i32
    %c0_i32_0 = arith.constant 0 : i32
    %c0_i32_1 = arith.constant 0 : i32
    return %c0_i32, %c0_i32_0 : i32, i32
  }
  func.func @transform_2(%arg0: i32) -> (i32, i32) {
    %c0_i32 = arith.constant 0 : i32
    %c0_i32_0 = arith.constant 0 : i32
    %c0_i32_1 = arith.constant 0 : i32
    return %c0_i32, %c0_i32_0 : i32, i32
  }
  func.func @transform_3(%arg0: i32) -> (i32, i32) {
    %c0_i32 = arith.constant 0 : i32
    %c0_i32_0 = arith.constant 0 : i32
    %c0_i32_1 = arith.constant 0 : i32
    return %c0_i32, %c0_i32_0 : i32, i32
  }
  func.func @transform_4(%arg0: i32) -> (i32, i32) {
    %c0_i32 = arith.constant 0 : i32
    %c0_i32_0 = arith.constant 0 : i32
    return %arg0, %c0_i32 : i32, i32
  }
}

module attributes {stable_mosaic.version = 11 : i64} {
  func.func @kernel(%arg0: i32, %arg1: memref<8x256xbf16, #tpu.memory_space<vmem>>, %arg2: memref<256x128xbf16, #tpu.memory_space<vmem>>, %arg3: memref<1x128xf32, #tpu.memory_space<vmem>>, %arg4: memref<1x128xf32, #tpu.memory_space<vmem>>, %arg5: memref<8x128xf32, #tpu.memory_space<vmem>>) attributes {dimension_semantics = [#tpu.dimension_semantics<parallel>], iteration_bounds = array<i64: 1>, scalar_prefetch = 0 : i64, scratch_operands = 0 : i64, tpu.core_type = #tpu.core_type<tc>, window_params = [{transform_indices = @transform_0, window_bounds = array<i64: 8, 256>}, {pipeline_mode = #tpu.pipeline_mode<synchronous>, transform_indices = @transform_1, window_bounds = array<i64: 256, 128>}, {pipeline_mode = #tpu.pipeline_mode<synchronous>, transform_indices = @transform_2, window_bounds = array<i64: 1, 128>}, {pipeline_mode = #tpu.pipeline_mode<synchronous>, transform_indices = @transform_3, window_bounds = array<i64: 1, 128>}, {transform_indices = @transform_4, window_bounds = array<i64: 8, 128>}]} {
    %c0 = arith.constant 0 : index
    %c0_0 = arith.constant 0 : index
    %0 = vector.load %arg1[%c0, %c0_0] : memref<8x256xbf16, #tpu.memory_space<vmem>>, vector<8x256xbf16>
    %c0_1 = arith.constant 0 : index
    %c0_2 = arith.constant 0 : index
    %1 = vector.load %arg2[%c0_1, %c0_2] : memref<256x128xbf16, #tpu.memory_space<vmem>>, vector<256x128xbf16>
    %cst = arith.constant dense<0.000000e+00> : vector<8x128xf32>
    %2 = tpu.matmul %0, %1, %cst {dimension_numbers = #tpu.dot_dimension_numbers<[1], [0], [0], [1], [0, 0, 1, 1], [], []>} : vector<8x256xbf16>, vector<256x128xbf16>, vector<8x128xf32> -> vector<8x128xf32>
    %c0_3 = arith.constant 0 : index
    %c0_4 = arith.constant 0 : index
    %3 = vector.load %arg3[%c0_3, %c0_4] : memref<1x128xf32, #tpu.memory_space<vmem>>, vector<1x128xf32>
    %4 = vector.broadcast %3 : vector<1x128xf32> to vector<8x128xf32>
    %5 = arith.mulf %2, %4 : vector<8x128xf32>
    %c0_5 = arith.constant 0 : index
    %c0_6 = arith.constant 0 : index
    %6 = vector.load %arg4[%c0_5, %c0_6] : memref<1x128xf32, #tpu.memory_space<vmem>>, vector<1x128xf32>
    %7 = vector.broadcast %6 : vector<1x128xf32> to vector<8x128xf32>
    %8 = arith.addf %5, %7 : vector<8x128xf32>
    %c0_7 = arith.constant 0 : index
    %c0_8 = arith.constant 0 : index
    %9 = vector.load %arg5[%c0_7, %c0_8] : memref<8x128xf32, #tpu.memory_space<vmem>>, vector<8x128xf32>
    tpu.vector_store %arg5[%c0_7, %c0_8], %8 {strides = array<i32>} : memref<8x128xf32, #tpu.memory_space<vmem>>, vector<8x128xf32>,
    return
  }
  func.func @transform_0(%arg0: i32) -> (i32, i32) {
    %c0_i32 = arith.constant 0 : i32
    %c0_i32_0 = arith.constant 0 : i32
    return %arg0, %c0_i32 : i32, i32
  }
  func.func @transform_1(%arg0: i32) -> (i32, i32) {
    %c0_i32 = arith.constant 0 : i32
    %c0_i32_0 = arith.constant 0 : i32
    %c0_i32_1 = arith.constant 0 : i32
    return %c0_i32, %c0_i32_0 : i32, i32
  }
  func.func @transform_2(%arg0: i32) -> (i32, i32) {
    %c0_i32 = arith.constant 0 : i32
    %c0_i32_0 = arith.constant 0 : i32
    %c0_i32_1 = arith.constant 0 : i32
    return %c0_i32, %c0_i32_0 : i32, i32
  }
  func.func @transform_3(%arg0: i32) -> (i32, i32) {
    %c0_i32 = arith.constant 0 : i32
    %c0_i32_0 = arith.constant 0 : i32
    %c0_i32_1 = arith.constant 0 : i32
    return %c0_i32, %c0_i32_0 : i32, i32
  }
  func.func @transform_4(%arg0: i32) -> (i32, i32) {
    %c0_i32 = arith.constant 0 : i32
    %c0_i32_0 = arith.constant 0 : i32
    return %arg0, %c0_i32 : i32, i32
  }
}

</mosaic_0001>

<llo_original>
// kernel: superpoint_forward.17
$region0: #{superpoint_forward.17}
  #allocation0 [shape = 'u32[]', space=smem, size = 0x4, offset = 0x4, fixed_abs, tag = 'smem constant byte address 0x4 - core index']
  #allocation1 [shape = 'u32[144,128]{1,0:T(1,128)}', space=vmem, size = 0x12000, scoped, tag = 'internal scratch']
  %s0 = inlined_call_operand.vmem [shape: bf16[512,9], index: 0, kind: input, shape index: {}]
  %s1 = inlined_call_operand.hbm [shape: bf16[9,64], index: 1, kind: input, shape index: {}]
  %s2 = inlined_call_operand.hbm [shape: f32[1,64], index: 2, kind: input, shape index: {}]
  %s3 = inlined_call_operand.hbm [shape: f32[1,64], index: 3, kind: input, shape index: {}]
  %s4 = inlined_call_operand.vmem [shape: f32[512,64], index: 4, kind: output, shape index: {}]
  %s5 = sld [smem:[#allocation0]]
  $region61: #{superpoint_forward.17} parent=0
    _
  %s7 = ssub.s32 1, %s5
  %s8 = scalar_select 0, %s7, %s5
  $region1: #{superpoint_forward.17} parent=0
    #allocation2 [shape = 'u8[4096]{0}', space=vmem, size = 0x1000, scoped, tag = 'input window, operand 1, single buffered']
    #allocation3 [shape = 's32[2]{0}', space=sflag, size = 0x8, scoped, tag = 'scoped memory for superpoint_forward.17']
    #allocation4 [shape = 'u8[512]{0}', space=vmem, size = 0x400, scoped, tag = 'input window, operand 2, single buffered']
    #allocation5 [shape = 's32[1]{0}', space=sflag, size = 0x4, scoped, tag = 'scoped memory for superpoint_forward.17']
    #allocation6 [shape = 'u8[512]{0}', space=vmem, size = 0x400, scoped, tag = 'input window, operand 3, single buffered']
    %9 = vsyncpa [#allocation3], 0
    %10 = vsyncpa [#allocation5], 0
    loop: start=0, step=1, limit=4
    $region2: #{superpoint_forward.17} parent=1 // loop_pre_header
      _
    $region3: #{superpoint_forward.17} parent=1 // loop_header
      %s12 = sphi 0, %s16
      %p13 = scmp.ge.s32.totalorder %s12, 4
      %s22 = sphi 0, %s24
      %s25 = sphi 0, %s22
      %s26 = sphi 0, %s25
      %s42 = sphi 0, %s26
      %s46 = sphi 0, %s46
      %s48 = sphi 0, %s46
      %s49 = sphi 0, %s48
      %s63 = sphi 0, %s49
      %s67 = sphi 0, %s67
      %s69 = sphi 0, %s67
      %s70 = sphi 0, %s69
      %s84 = sphi 0, %s70
      %s88 = sphi 0, %s88
      %s90 = sphi 0, %s88
      %s91 = sphi 0, %s90
      %s105 = sphi 0, %s91
      %s111 = sphi 0, %s113
      %s114 = sphi 0, %s111
      %s115 = sphi 0, %s114
      %s131 = sphi 0, %s115
    $region4: #{superpoint_forward.17} parent=1 // loop_header_branch
      %15 = sbr.rel (%p13) target = $region8
    $region5: #{superpoint_forward.17} parent=1 // loop_body
      %s17 = ssub.s32 %s12, 1
      %s18 = ssub.s32 %s12, 2
      %s19 = sadd.s32 %s12, 1
      %s20 = ssub.s32 %s12, %s19
      %p21 = scmp.eq.s32.totalorder %s20, 0
      %s23 = sadd.s32 %s22, 1
      %s24 = scalar_select %p21, %s22, %s23
      %p27 = pneg %p21
      %p28 = scmp.eq.s32.totalorder %s12, 1
      %p29 = por %p27, %p28
      %p30 = scmp.ne.s32.totalorder %s22, %s25
      %p31 = scmp.eq.s32.totalorder %s12, 0
      %p32 = por %p30, %p31
      %p33 = scmp.ne.s32.totalorder %s22, %s25
      %p34 = scmp.eq.s32.totalorder %s17, 1
      %p35 = por %p33, %p34
      %p36 = scmp.ne.s32.totalorder %s25, %s26
      %p37 = scmp.eq.s32.totalorder %s17, 0
      %p38 = por %p36, %p37
      %p39 = scmp.ne.s32.totalorder %s25, %s26
      %p40 = scmp.eq.s32.totalorder %s18, 1
      %p41 = por %p39, %p40
      %p43 = scmp.ne.s32.totalorder %s26, %s42
      %p44 = scmp.eq.s32.totalorder %s18, 0
      %p45 = por %p43, %p44
      %s47 = sadd.s32 %s46, 1
      %p50 = scmp.eq.s32.totalorder %s12, 1
      %p51 = scmp.ne.s32.totalorder %s46, %s48
      %p52 = scmp.eq.s32.totalorder %s12, 0
      %p53 = por %p51, %p52
      %p54 = scmp.ne.s32.totalorder %s46, %s48
      %p55 = scmp.eq.s32.totalorder %s17, 1
      %p56 = por %p54, %p55
      %p57 = scmp.ne.s32.totalorder %s48, %s49
      %p58 = scmp.eq.s32.totalorder %s17, 0
      %p59 = por %p57, %p58
      %p60 = scmp.ne.s32.totalorder %s48, %s49
      %p61 = scmp.eq.s32.totalorder %s18, 1
      %p62 = por %p60, %p61
      %p64 = scmp.ne.s32.totalorder %s49, %s63
      %p65 = scmp.eq.s32.totalorder %s18, 0
      %p66 = por %p64, %p65
      %s68 = sadd.s32 %s67, 1
      %p71 = scmp.eq.s32.totalorder %s12, 1
      %p72 = scmp.ne.s32.totalorder %s67, %s69
      %p73 = scmp.eq.s32.totalorder %s12, 0
      %p74 = por %p72, %p73
      %p75 = scmp.ne.s32.totalorder %s67, %s69
      %p76 = scmp.eq.s32.totalorder %s17, 1
      %p77 = por %p75, %p76
      %p78 = scmp.ne.s32.totalorder %s69, %s70
      %p79 = scmp.eq.s32.totalorder %s17, 0
      %p80 = por %p78, %p79
      %p81 = scmp.ne.s32.totalorder %s69, %s70
      %p82 = scmp.eq.s32.totalorder %s18, 1
      %p83 = por %p81, %p82
      %p85 = scmp.ne.s32.totalorder %s70, %s84
      %p86 = scmp.eq.s32.totalorder %s18, 0
      %p87 = por %p85, %p86
      %s89 = sadd.s32 %s88, 1
      %p92 = scmp.eq.s32.totalorder %s12, 1
      %p93 = scmp.ne.s32.totalorder %s88, %s90
      %p94 = scmp.eq.s32.totalorder %s12, 0
      %p95 = por %p93, %p94
      %p96 = scmp.ne.s32.totalorder %s88, %s90
      %p97 = scmp.eq.s32.totalorder %s17, 1
      %p98 = por %p96, %p97
      %p99 = scmp.ne.s32.totalorder %s90, %s91
      %p100 = scmp.eq.s32.totalorder %s17, 0
      %p101 = por %p99, %p100
      %p102 = scmp.ne.s32.totalorder %s90, %s91
      %p103 = scmp.eq.s32.totalorder %s18, 1
      %p104 = por %p102, %p103
      %p106 = scmp.ne.s32.totalorder %s91, %s105
      %p107 = scmp.eq.s32.totalorder %s18, 0
      %p108 = por %p106, %p107
      %s109 = ssub.s32 %s12, %s19
      %p110 = scmp.eq.s32.totalorder %s109, 0
      %s112 = sadd.s32 %s111, 1
      %s113 = scalar_select %p110, %s111, %s112
      %p116 = pneg %p110
      %p117 = scmp.eq.s32.totalorder %s12, 1
      %p118 = por %p116, %p117
      %p119 = scmp.ne.s32.totalorder %s111, %s114
      %p120 = scmp.eq.s32.totalorder %s12, 0
      %p121 = por %p119, %p120
      %p122 = scmp.ne.s32.totalorder %s111, %s114
      %p123 = scmp.eq.s32.totalorder %s17, 1
      %p124 = por %p122, %p123
      %p125 = scmp.ne.s32.totalorder %s114, %s115
      %p126 = scmp.eq.s32.totalorder %s17, 0
      %p127 = por %p125, %p126
      %p128 = scmp.ne.s32.totalorder %s114, %s115
      %p129 = scmp.eq.s32.totalorder %s18, 1
      %p130 = por %p128, %p129
      %p132 = scmp.ne.s32.totalorder %s115, %s131
      %p133 = scmp.eq.s32.totalorder %s18, 0
      %p134 = por %p132, %p133
      %p135 = scmp.le.s32.totalorder 1, %s12
      %p136 = scmp.lt.s32.totalorder %s12, 3
      %p137 = pnand %p135, %p136
      %p138 = pneg %p137
      // Predicated region
      $region9: #{superpoint_forward.17} parent=5 // pred_check
        _
      $region10: #{superpoint_forward.17} parent=5 // pred_check_branch
        %140 = sbr.rel (%p137) target = $region12
      $region11: #{superpoint_forward.17} parent=5 // pred_region
        %s141 = ssub.s32 %s12, 1
        // Predicated region
        $region13: #{superpoint_forward.17} parent=11 // pred_check
          %p142 = pneg %p59
        $region14: #{superpoint_forward.17} parent=11 // pred_check_branch
          %144 = sbr.rel (%p142) target = $region16
        $region15: #{superpoint_forward.17} parent=11 // pred_region
          %s146 = ssub.s32 128, 128
          %147 = vsyncadd [#allocation3], %s146
          %s148 = sshll.u32 [#allocation2], 4
          %s149 = int_to_ptr.vmem [resolvable:$true] %s148
          %154 = dma.hbm_to_vmem [thread:$0]  %s1, 128, %s149, [#allocation3], 64, 64, 4
        $region16: #{superpoint_forward.17} parent=11 // pred_fallthru
          _
        // Predicated region
        $region17: #{superpoint_forward.17} parent=11 // pred_check
          %p155 = pneg %p80
        $region18: #{superpoint_forward.17} parent=11 // pred_check_branch
          %157 = sbr.rel (%p155) target = $region20
        $region19: #{superpoint_forward.17} parent=11 // pred_region
          %s159 = ssub.s32 16, 16
          %160 = vsyncadd [#allocation5], %s159
          %s162 = sshll.u32 [#allocation4], 4
          %s163 = int_to_ptr.vmem [resolvable:$true] %s162
          %165 = dma.hbm_to_vmem [thread:$0]  %s2, 16, %s163, [#allocation5]
        $region20: #{superpoint_forward.17} parent=11 // pred_fallthru
          _
        // Predicated region
        $region21: #{superpoint_forward.17} parent=11 // pred_check
          %p166 = pneg %p101
        $region22: #{superpoint_forward.17} parent=11 // pred_check_branch
          %168 = sbr.rel (%p166) target = $region24
        $region23: #{superpoint_forward.17} parent=11 // pred_region
          %s170 = ssub.s32 16, 16
          %171 = vsyncadd [#allocation5], %s170
          %s173 = sshll.u32 [#allocation6], 4
          %s174 = int_to_ptr.vmem [resolvable:$true] %s173
          %176 = dma.hbm_to_vmem [thread:$0]  %s3, 16, %s174, [#allocation5]
        $region24: #{superpoint_forward.17} parent=11 // pred_fallthru
          _
      $region12: #{superpoint_forward.17} parent=5 // pred_fallthru
        _
      %p177 = scmp.lt.s32.totalorder %s12, 2
      // Predicated region
      $region25: #{superpoint_forward.17} parent=5 // pred_check
        %p178 = pneg %p177
      $region26: #{superpoint_forward.17} parent=5 // pred_check_branch
        %180 = sbr.rel (%p178) target = $region28
      $region27: #{superpoint_forward.17} parent=5 // pred_region
        // Predicated region
        $region29: #{superpoint_forward.17} parent=27 // pred_check
          %p181 = pneg %p32
        $region30: #{superpoint_forward.17} parent=27 // pred_check_branch
          %183 = sbr.rel (%p181) target = $region32
        $region31: #{superpoint_forward.17} parent=27 // pred_region
          %s184 = smul.u32 32, %s12
          %p185 = scmp.lt.s32.totalorder %s184, 63
          %s186 = scalar_select %p185, %s184, 63
          %s187 = smul.addr %s186, 4
          %s188 = scalar_lea.vmem %s0, %s187
          %s189 = smul.u32 32, %s12
        $region32: #{superpoint_forward.17} parent=27 // pred_fallthru
          _
      $region28: #{superpoint_forward.17} parent=5 // pred_fallthru
        _
      %p190 = scmp.le.s32.totalorder 1, %s12
      %p191 = scmp.lt.s32.totalorder %s12, 3
      %p192 = pnand %p190, %p191
      %p193 = pneg %p192
      // Predicated region
      $region33: #{superpoint_forward.17} parent=5 // pred_check
        _
      $region34: #{superpoint_forward.17} parent=5 // pred_check_branch
        %195 = sbr.rel (%p192) target = $region36
      $region35: #{superpoint_forward.17} parent=5 // pred_region
        %s196 = ssub.s32 %s12, 1
        // Predicated region
        $region37: #{superpoint_forward.17} parent=35 // pred_check
          %p197 = pneg %p59
        $region38: #{superpoint_forward.17} parent=35 // pred_check_branch
          %199 = sbr.rel (%p197) target = $region40
        $region39: #{superpoint_forward.17} parent=35 // pred_region
          %200 = dma.done [#allocation3], 128
        $region40: #{superpoint_forward.17} parent=35 // pred_fallthru
          _
        // Predicated region
        $region41: #{superpoint_forward.17} parent=35 // pred_check
          %p201 = pneg %p80
        $region42: #{superpoint_forward.17} parent=35 // pred_check_branch
          %203 = sbr.rel (%p201) target = $region44
        $region43: #{superpoint_forward.17} parent=35 // pred_region
          %204 = dma.done [#allocation5], 16
        $region44: #{superpoint_forward.17} parent=35 // pred_fallthru
          _
        // Predicated region
        $region45: #{superpoint_forward.17} parent=35 // pred_check
          %p205 = pneg %p101
        $region46: #{superpoint_forward.17} parent=35 // pred_check_branch
          %207 = sbr.rel (%p205) target = $region48
        $region47: #{superpoint_forward.17} parent=35 // pred_region
          %208 = dma.done [#allocation5], 16
        $region48: #{superpoint_forward.17} parent=35 // pred_fallthru
          _
        %s209 = smul.u32 32, %s17
        %p210 = scmp.lt.s32.totalorder %s209, 63
        %s211 = scalar_select %p210, %s209, 63
        %s212 = smul.addr %s211, 4
        %s213 = scalar_lea.vmem %s0, %s212
        %p214 = pneg %p38
        %p215 = pneg %p35
        %p216 = pneg %p59
        %p217 = pneg %p56
        %p218 = pneg %p80
        %p219 = pneg %p77
        %p220 = pneg %p101
        %p221 = pneg %p98
        %p222 = pneg %p127
        %p223 = pneg %p124
        %s224 = smul.u32 32, %s17
        %p225 = scmp.lt.s32.totalorder %s224, 63
        %s226 = scalar_select %p225, %s224, 63
        %s227 = smul.addr %s226, 8
        %s228 = scalar_lea.vmem %s4, %s227
        %s229 = smul.u32 32, %s17
        %p230 = scmp.lt.s32.totalorder %s229, 63
        %s231 = scalar_select %p230, %s229, 63
        %s232 = smul.addr %s231, 4
        %s233 = scalar_lea.vmem %s0, %s232
        %s234 = smul.u32 32, %s17
        %s235 = smul.u32 32, %s17
        %p236 = scmp.lt.s32.totalorder %s235, 63
        %s237 = scalar_select %p236, %s235, 63
        %s238 = smul.addr %s237, 8
        %s239 = scalar_lea.vmem %s4, %s238
        %s240 = smul.u32 32, %s17
        %v242 = vld [vmem:[%s233] sm:$0xf]
        %v243 = vld [vmem:[%s233 + $0x4] sm:$0xf]
        %v244 = vld [vmem:[%s233 + $0x8] sm:$0xf]
        %v245 = vld [vmem:[%s233 + $0xc] sm:$0xf]
        %v246 = vld [vmem:[%s233 + $0x10] sm:$0xf]
        %v247 = vld [vmem:[%s233 + $0x14] sm:$0xf]
        %v248 = vld [vmem:[%s233 + $0x18] sm:$0xf]
        %v249 = vld [vmem:[%s233 + $0x1c] sm:$0xf]
        %v250 = vld [vmem:[%s233 + $0x20] sm:$0xf]
        %v251 = vld [vmem:[%s233 + $0x24] sm:$0xf]
        %v252 = vld [vmem:[%s233 + $0x28] sm:$0xf]
        %v253 = vld [vmem:[%s233 + $0x2c] sm:$0xf]
        %v254 = vld [vmem:[%s233 + $0x30] sm:$0xf]
        %v255 = vld [vmem:[%s233 + $0x34] sm:$0xf]
        %v256 = vld [vmem:[%s233 + $0x38] sm:$0xf]
        %v257 = vld [vmem:[%s233 + $0x3c] sm:$0xf]
        %v258 = vld [vmem:[%s233 + $0x40] sm:$0xf]
        %v259 = vld [vmem:[%s233 + $0x44] sm:$0xf]
        %v260 = vld [vmem:[%s233 + $0x48] sm:$0xf]
        %v261 = vld [vmem:[%s233 + $0x4c] sm:$0xf]
        %v262 = vld [vmem:[%s233 + $0x50] sm:$0xf]
        %v263 = vld [vmem:[%s233 + $0x54] sm:$0xf]
        %v264 = vld [vmem:[%s233 + $0x58] sm:$0xf]
        %v265 = vld [vmem:[%s233 + $0x5c] sm:$0xf]
        %v266 = vld [vmem:[%s233 + $0x60] sm:$0xf]
        %v267 = vld [vmem:[%s233 + $0x64] sm:$0xf]
        %v268 = vld [vmem:[%s233 + $0x68] sm:$0xf]
        %v269 = vld [vmem:[%s233 + $0x6c] sm:$0xf]
        %v270 = vld [vmem:[%s233 + $0x70] sm:$0xf]
        %v271 = vld [vmem:[%s233 + $0x74] sm:$0xf]
        %v272 = vld [vmem:[%s233 + $0x78] sm:$0xf]
        %v273 = vld [vmem:[%s233 + $0x7c] sm:$0xf]
        %v274 = vld [vmem:[#allocation2] sm:$0xf]
        %v275 = vld [vmem:[#allocation2 + $0x4] sm:$0x1]
        %v308 = vunpack.c.l.b16 %v242
        %v309 = vunpack.c.l.b16 %v243
        %v310 = vunpack.c.l.b16 %v244
        %v311 = vunpack.c.l.b16 %v245
        %v312 = vunpack.c.l.b16 %v246
        %v313 = vunpack.c.l.b16 %v247
        %v314 = vunpack.c.l.b16 %v248
        %v315 = vunpack.c.l.b16 %v249
        %v316 = vunpack.c.l.b16 %v250
        %v317 = vunpack.c.l.b16 %v251
        %v318 = vunpack.c.l.b16 %v252
        %v319 = vunpack.c.l.b16 %v253
        %v320 = vunpack.c.l.b16 %v254
        %v321 = vunpack.c.l.b16 %v255
        %v322 = vunpack.c.l.b16 %v256
        %v323 = vunpack.c.l.b16 %v257
        %v324 = vunpack.c.l.b16 %v258
        %v325 = vunpack.c.l.b16 %v259
        %v326 = vunpack.c.l.b16 %v260
        %v327 = vunpack.c.l.b16 %v261
        %v328 = vunpack.c.l.b16 %v262
        %v329 = vunpack.c.l.b16 %v263
        %v330 = vunpack.c.l.b16 %v264
        %v331 = vunpack.c.l.b16 %v265
        %v332 = vunpack.c.l.b16 %v266
        %v333 = vunpack.c.l.b16 %v267
        %v334 = vunpack.c.l.b16 %v268
        %v335 = vunpack.c.l.b16 %v269
        %v336 = vunpack.c.l.b16 %v270
        %v337 = vunpack.c.l.b16 %v271
        %v338 = vunpack.c.l.b16 %v272
        %v339 = vunpack.c.l.b16 %v273
        %v340 = vpack.c.b16 %v309, %v308
        %v341 = vpack.c.b16 %v311, %v310
        %v342 = vpack.c.b16 %v313, %v312
        %v343 = vpack.c.b16 %v315, %v314
        %v344 = vpack.c.b16 %v317, %v316
        %v345 = vpack.c.b16 %v319, %v318
        %v346 = vpack.c.b16 %v321, %v320
        %v347 = vpack.c.b16 %v323, %v322
        %v348 = vpack.c.b16 %v325, %v324
        %v349 = vpack.c.b16 %v327, %v326
        %v350 = vpack.c.b16 %v329, %v328
        %v351 = vpack.c.b16 %v331, %v330
        %v352 = vpack.c.b16 %v333, %v332
        %v353 = vpack.c.b16 %v335, %v334
        %v354 = vpack.c.b16 %v337, %v336
        %v355 = vpack.c.b16 %v339, %v338
        %v358 = vunpack.c.l.b16 %v274
        %v359 = vunpack.c.l.b16 %v275
        %v360 = vpack.c.b16 %v359, %v358
        %vm361 = vcmask 72704
        %v363 = vsel %vm361, %v340, 0
        %v366 = vsel %vm361, %v341, 0
        %v369 = vsel %vm361, %v342, 0
        %v372 = vsel %vm361, %v343, 0
        %v375 = vsel %vm361, %v344, 0
        %v378 = vsel %vm361, %v345, 0
        %v381 = vsel %vm361, %v346, 0
        %v384 = vsel %vm361, %v347, 0
        %v387 = vsel %vm361, %v348, 0
        %v390 = vsel %vm361, %v349, 0
        %v393 = vsel %vm361, %v350, 0
        %v396 = vsel %vm361, %v351, 0
        %v399 = vsel %vm361, %v352, 0
        %v402 = vsel %vm361, %v353, 0
        %v405 = vsel %vm361, %v354, 0
        %v408 = vsel %vm361, %v355, 0
        %vm410 = vcmask 1043456
        %vm411 = vcmask 1044480
        %v412 = vsel %vm410, 4294967295, 65535
        %v413 = vsel %vm411, %v412, 0
        %v415 = vand.u32 %v360, %v413
        %417 = vmatprep.subr.bf16.mxu0 0
        %418 = vmatpush1.bf16.msra.mxu0 %v415
        %419 = vmatprep.subr.bf16.mxu0 0
        %420 = vmatpush1.bf16.msra.mxu0 0
        %421 = vmatprep.subr.bf16.mxu0 0
        %422 = vmatpush1.bf16.msra.mxu0 0
        %423 = vmatprep.subr.bf16.mxu0 0
        %424 = vmatpush1.bf16.msra.mxu0 0
        %425 = vmatprep.subr.bf16.mxu0 0
        %426 = vmatpush1.bf16.msra.mxu0 0
        %427 = vmatprep.subr.bf16.mxu0 0
        %428 = vmatpush1.bf16.msra.mxu0 0
        %429 = vmatprep.subr.bf16.mxu0 0
        %430 = vmatpush1.bf16.msra.mxu0 0
        %431 = vmatprep.subr.bf16.mxu0 0
        %432 = vmatpush1.bf16.msra.mxu0 0
        %433 = vmatprep.subr.bf16.mxu0 0
        %434 = vmatpush1.bf16.msra.mxu0 0
        %435 = vmatprep.subr.bf16.mxu0 0
        %436 = vmatpush1.bf16.msra.mxu0 0
        %437 = vmatprep.subr.bf16.mxu0 0
        %438 = vmatpush1.bf16.msra.mxu0 0
        %439 = vmatprep.subr.bf16.mxu0 0
        %440 = vmatpush1.bf16.msra.mxu0 0
        %441 = vmatprep.subr.bf16.mxu0 0
        %442 = vmatpush1.bf16.msra.mxu0 0
        %443 = vmatprep.subr.bf16.mxu0 0
        %444 = vmatpush1.bf16.msra.mxu0 0
        %445 = vmatprep.subr.bf16.mxu0 0
        %446 = vmatpush1.bf16.msra.mxu0 0
        %447 = vmatprep.subr.bf16.mxu0 0
        %448 = vmatpush1.bf16.msra.mxu0 0
        %449 = vmatprep.mubr.bf16.mxu0 0
        %450 = vmatmul.mubr.bf16.gmra.mrb[0].mxu0 %v363
        %v451 = vpop.f32.mrb[0].mxu0
        %v452 = vadd.f32 0.0, %v451
        %v453 = vpop.f32.mrb[0].mxu0
        %v454 = vpop.f32.mrb[0].mxu0
        %v455 = vadd.f32 0.0, %v454
        %v456 = vpop.f32.mrb[0].mxu0
        %457 = vmatprep.mubr.bf16.mxu0 0
        %458 = vmatmul.mubr.bf16.gmra.mrb[0].mxu0 %v366
        %v459 = vpop.f32.mrb[0].mxu0
        %v460 = vadd.f32 0.0, %v459
        %v461 = vpop.f32.mrb[0].mxu0
        %v462 = vpop.f32.mrb[0].mxu0
        %v463 = vadd.f32 0.0, %v462
        %v464 = vpop.f32.mrb[0].mxu0
        %465 = vmatprep.mubr.bf16.mxu0 0
        %466 = vmatmul.mubr.bf16.gmra.mrb[0].mxu0 %v369
        %v467 = vpop.f32.mrb[0].mxu0
        %v468 = vadd.f32 0.0, %v467
        %v469 = vpop.f32.mrb[0].mxu0
        %v470 = vpop.f32.mrb[0].mxu0
        %v471 = vadd.f32 0.0, %v470
        %v472 = vpop.f32.mrb[0].mxu0
        %473 = vmatprep.mubr.bf16.mxu0 0
        %474 = vmatmul.mubr.bf16.gmra.mrb[0].mxu0 %v372
        %v475 = vpop.f32.mrb[0].mxu0
        %v476 = vadd.f32 0.0, %v475
        %v477 = vpop.f32.mrb[0].mxu0
        %v478 = vpop.f32.mrb[0].mxu0
        %v479 = vadd.f32 0.0, %v478
        %v480 = vpop.f32.mrb[0].mxu0
        %481 = vmatprep.mubr.bf16.mxu0 0
        %482 = vmatmul.mubr.bf16.gmra.mrb[0].mxu0 %v375
        %v483 = vpop.f32.mrb[0].mxu0
        %v484 = vadd.f32 0.0, %v483
        %v485 = vpop.f32.mrb[0].mxu0
        %v486 = vpop.f32.mrb[0].mxu0
        %v487 = vadd.f32 0.0, %v486
        %v488 = vpop.f32.mrb[0].mxu0
        %489 = vmatprep.mubr.bf16.mxu0 0
        %490 = vmatmul.mubr.bf16.gmra.mrb[0].mxu0 %v378
        %v491 = vpop.f32.mrb[0].mxu0
        %v492 = vadd.f32 0.0, %v491
        %v493 = vpop.f32.mrb[0].mxu0
        %v494 = vpop.f32.mrb[0].mxu0
        %v495 = vadd.f32 0.0, %v494
        %v496 = vpop.f32.mrb[0].mxu0
        %497 = vmatprep.mubr.bf16.mxu0 0
        %498 = vmatmul.mubr.bf16.gmra.mrb[0].mxu0 %v381
        %v499 = vpop.f32.mrb[0].mxu0
        %v500 = vadd.f32 0.0, %v499
        %v501 = vpop.f32.mrb[0].mxu0
        %v502 = vpop.f32.mrb[0].mxu0
        %v503 = vadd.f32 0.0, %v502
        %v504 = vpop.f32.mrb[0].mxu0
        %505 = vmatprep.mubr.bf16.mxu0 0
        %506 = vmatmul.mubr.bf16.gmra.mrb[0].mxu0 %v384
        %v507 = vpop.f32.mrb[0].mxu0
        %v508 = vadd.f32 0.0, %v507
        %v509 = vpop.f32.mrb[0].mxu0
        %v510 = vpop.f32.mrb[0].mxu0
        %v511 = vadd.f32 0.0, %v510
        %v512 = vpop.f32.mrb[0].mxu0
        %513 = vmatprep.mubr.bf16.mxu0 0
        %514 = vmatmul.mubr.bf16.gmra.mrb[0].mxu0 %v387
        %v515 = vpop.f32.mrb[0].mxu0
        %v516 = vadd.f32 0.0, %v515
        %v517 = vpop.f32.mrb[0].mxu0
        %v518 = vpop.f32.mrb[0].mxu0
        %v519 = vadd.f32 0.0, %v518
        %v520 = vpop.f32.mrb[0].mxu0
        %521 = vmatprep.mubr.bf16.mxu0 0
        %522 = vmatmul.mubr.bf16.gmra.mrb[0].mxu0 %v390
        %v523 = vpop.f32.mrb[0].mxu0
        %v524 = vadd.f32 0.0, %v523
        %v525 = vpop.f32.mrb[0].mxu0
        %v526 = vpop.f32.mrb[0].mxu0
        %v527 = vadd.f32 0.0, %v526
        %v528 = vpop.f32.mrb[0].mxu0
        %529 = vmatprep.mubr.bf16.mxu0 0
        %530 = vmatmul.mubr.bf16.gmra.mrb[0].mxu0 %v393
        %v531 = vpop.f32.mrb[0].mxu0
        %v532 = vadd.f32 0.0, %v531
        %v533 = vpop.f32.mrb[0].mxu0
        %v534 = vpop.f32.mrb[0].mxu0
        %v535 = vadd.f32 0.0, %v534
        %v536 = vpop.f32.mrb[0].mxu0
        %537 = vmatprep.mubr.bf16.mxu0 0
        %538 = vmatmul.mubr.bf16.gmra.mrb[0].mxu0 %v396
        %v539 = vpop.f32.mrb[0].mxu0
        %v540 = vadd.f32 0.0, %v539
        %v541 = vpop.f32.mrb[0].mxu0
        %v542 = vpop.f32.mrb[0].mxu0
        %v543 = vadd.f32 0.0, %v542
        %v544 = vpop.f32.mrb[0].mxu0
        %545 = vmatprep.mubr.bf16.mxu0 0
        %546 = vmatmul.mubr.bf16.gmra.mrb[0].mxu0 %v399
        %v547 = vpop.f32.mrb[0].mxu0
        %v548 = vadd.f32 0.0, %v547
        %v549 = vpop.f32.mrb[0].mxu0
        %v550 = vpop.f32.mrb[0].mxu0
        %v551 = vadd.f32 0.0, %v550
        %v552 = vpop.f32.mrb[0].mxu0
        %553 = vmatprep.mubr.bf16.mxu0 0
        %554 = vmatmul.mubr.bf16.gmra.mrb[0].mxu0 %v402
        %v555 = vpop.f32.mrb[0].mxu0
        %v556 = vadd.f32 0.0, %v555
        %v557 = vpop.f32.mrb[0].mxu0
        %v558 = vpop.f32.mrb[0].mxu0
        %v559 = vadd.f32 0.0, %v558
        %v560 = vpop.f32.mrb[0].mxu0
        %561 = vmatprep.mubr.bf16.mxu0 0
        %562 = vmatmul.mubr.bf16.gmra.mrb[0].mxu0 %v405
        %v563 = vpop.f32.mrb[0].mxu0
        %v564 = vadd.f32 0.0, %v563
        %v565 = vpop.f32.mrb[0].mxu0
        %v566 = vpop.f32.mrb[0].mxu0
        %v567 = vadd.f32 0.0, %v566
        %v568 = vpop.f32.mrb[0].mxu0
        %569 = vmatprep.mubr.bf16.mxu0 0
        %570 = vmatmul.mubr.bf16.gmra.mrb[0].mxu0 %v408
        %v571 = vpop.f32.mrb[0].mxu0
        %v572 = vadd.f32 0.0, %v571
        %v573 = vpop.f32.mrb[0].mxu0
        %v574 = vpop.f32.mrb[0].mxu0
        %v575 = vadd.f32 0.0, %v574
        %v576 = vpop.f32.mrb[0].mxu0
        %577 = vdwg.mxu0
        %v578 = vld [vmem:[#allocation4] sm:$0x1]
        %v580 = vlaneseq
        %v581 = vshrl.u32 %v580, 7
        %v582 = vsub.s32 0, %v581
        %v583 = vrot.slane %v578, %v582
        %v585 = vmul.f32 %v452, %v583
        %v586 = vmul.f32 %v455, %v583
        %v587 = vmul.f32 %v460, %v583
        %v588 = vmul.f32 %v463, %v583
        %v589 = vmul.f32 %v468, %v583
        %v590 = vmul.f32 %v471, %v583
        %v591 = vmul.f32 %v476, %v583
        %v592 = vmul.f32 %v479, %v583
        %v593 = vmul.f32 %v484, %v583
        %v594 = vmul.f32 %v487, %v583
        %v595 = vmul.f32 %v492, %v583
        %v596 = vmul.f32 %v495, %v583
        %v597 = vmul.f32 %v500, %v583
        %v598 = vmul.f32 %v503, %v583
        %v599 = vmul.f32 %v508, %v583
        %v600 = vmul.f32 %v511, %v583
        %v601 = vmul.f32 %v516, %v583
        %v602 = vmul.f32 %v519, %v583
        %v603 = vmul.f32 %v524, %v583
        %v604 = vmul.f32 %v527, %v583
        %v605 = vmul.f32 %v532, %v583
        %v606 = vmul.f32 %v535, %v583
        %v607 = vmul.f32 %v540, %v583
        %v608 = vmul.f32 %v543, %v583
        %v609 = vmul.f32 %v548, %v583
        %v610 = vmul.f32 %v551, %v583
        %v611 = vmul.f32 %v556, %v583
        %v612 = vmul.f32 %v559, %v583
        %v613 = vmul.f32 %v564, %v583
        %v614 = vmul.f32 %v567, %v583
        %v615 = vmul.f32 %v572, %v583
        %v616 = vmul.f32 %v575, %v583
        %v617 = vld [vmem:[#allocation6] sm:$0x1]
        %v619 = vlaneseq
        %v620 = vshrl.u32 %v619, 7
        %v621 = vsub.s32 0, %v620
        %v622 = vrot.slane %v617, %v621
        %v624 = vadd.f32 %v585, %v622
        %v625 = vadd.f32 %v586, %v622
        %v626 = vadd.f32 %v587, %v622
        %v627 = vadd.f32 %v588, %v622
        %v628 = vadd.f32 %v589, %v622
        %v629 = vadd.f32 %v590, %v622
        %v630 = vadd.f32 %v591, %v622
        %v631 = vadd.f32 %v592, %v622
        %v632 = vadd.f32 %v593, %v622
        %v633 = vadd.f32 %v594, %v622
        %v634 = vadd.f32 %v595, %v622
        %v635 = vadd.f32 %v596, %v622
        %v636 = vadd.f32 %v597, %v622
        %v637 = vadd.f32 %v598, %v622
        %v638 = vadd.f32 %v599, %v622
        %v639 = vadd.f32 %v600, %v622
        %v640 = vadd.f32 %v601, %v622
        %v641 = vadd.f32 %v602, %v622
        %v642 = vadd.f32 %v603, %v622
        %v643 = vadd.f32 %v604, %v622
        %v644 = vadd.f32 %v605, %v622
        %v645 = vadd.f32 %v606, %v622
        %v646 = vadd.f32 %v607, %v622
        %v647 = vadd.f32 %v608, %v622
        %v648 = vadd.f32 %v609, %v622
        %v649 = vadd.f32 %v610, %v622
        %v650 = vadd.f32 %v611, %v622
        %v651 = vadd.f32 %v612, %v622
        %v652 = vadd.f32 %v613, %v622
        %v653 = vadd.f32 %v614, %v622
        %v654 = vadd.f32 %v615, %v622
        %v655 = vadd.f32 %v616, %v622
        %v656 = vmax.f32 %v624, 0.0
        %v657 = vmax.f32 %v625, 0.0
        %v658 = vmax.f32 %v626, 0.0
        %v659 = vmax.f32 %v627, 0.0
        %v660 = vmax.f32 %v628, 0.0
        %v661 = vmax.f32 %v629, 0.0
        %v662 = vmax.f32 %v630, 0.0
        %v663 = vmax.f32 %v631, 0.0
        %v664 = vmax.f32 %v632, 0.0
        %v665 = vmax.f32 %v633, 0.0
        %v666 = vmax.f32 %v634, 0.0
        %v667 = vmax.f32 %v635, 0.0
        %v668 = vmax.f32 %v636, 0.0
        %v669 = vmax.f32 %v637, 0.0
        %v670 = vmax.f32 %v638, 0.0
        %v671 = vmax.f32 %v639, 0.0
        %v672 = vmax.f32 %v640, 0.0
        %v673 = vmax.f32 %v641, 0.0
        %v674 = vmax.f32 %v642, 0.0
        %v675 = vmax.f32 %v643, 0.0
        %v676 = vmax.f32 %v644, 0.0
        %v677 = vmax.f32 %v645, 0.0
        %v678 = vmax.f32 %v646, 0.0
        %v679 = vmax.f32 %v647, 0.0
        %v680 = vmax.f32 %v648, 0.0
        %v681 = vmax.f32 %v649, 0.0
        %v682 = vmax.f32 %v650, 0.0
        %v683 = vmax.f32 %v651, 0.0
        %v684 = vmax.f32 %v652, 0.0
        %v685 = vmax.f32 %v653, 0.0
        %v686 = vmax.f32 %v654, 0.0
        %v687 = vmax.f32 %v655, 0.0
        %vm688 = vcmask 523264
        %689 = vst.msk [vmem:[%s239] sm:$0xff] %vm688, %v656
        %690 = vst.msk [vmem:[%s239 + $0x8] sm:$0xff] %vm688, %v657
        %691 = vst.msk [vmem:[%s239 + $0x10] sm:$0xff] %vm688, %v658
        %692 = vst.msk [vmem:[%s239 + $0x18] sm:$0xff] %vm688, %v659
        %693 = vst.msk [vmem:[%s239 + $0x20] sm:$0xff] %vm688, %v660
        %694 = vst.msk [vmem:[%s239 + $0x28] sm:$0xff] %vm688, %v661
        %695 = vst.msk [vmem:[%s239 + $0x30] sm:$0xff] %vm688, %v662
        %696 = vst.msk [vmem:[%s239 + $0x38] sm:$0xff] %vm688, %v663
        %697 = vst.msk [vmem:[%s239 + $0x40] sm:$0xff] %vm688, %v664
        %698 = vst.msk [vmem:[%s239 + $0x48] sm:$0xff] %vm688, %v665
        %699 = vst.msk [vmem:[%s239 + $0x50] sm:$0xff] %vm688, %v666
        %700 = vst.msk [vmem:[%s239 + $0x58] sm:$0xff] %vm688, %v667
        %701 = vst.msk [vmem:[%s239 + $0x60] sm:$0xff] %vm688, %v668
        %702 = vst.msk [vmem:[%s239 + $0x68] sm:$0xff] %vm688, %v669
        %703 = vst.msk [vmem:[%s239 + $0x70] sm:$0xff] %vm688, %v670
        %704 = vst.msk [vmem:[%s239 + $0x78] sm:$0xff] %vm688, %v671
        %705 = vst.msk [vmem:[%s239 + $0x80] sm:$0xff] %vm688, %v672
        %706 = vst.msk [vmem:[%s239 + $0x88] sm:$0xff] %vm688, %v673
        %707 = vst.msk [vmem:[%s239 + $0x90] sm:$0xff] %vm688, %v674
        %708 = vst.msk [vmem:[%s239 + $0x98] sm:$0xff] %vm688, %v675
        %709 = vst.msk [vmem:[%s239 + $0xa0] sm:$0xff] %vm688, %v676
        %710 = vst.msk [vmem:[%s239 + $0xa8] sm:$0xff] %vm688, %v677
        %711 = vst.msk [vmem:[%s239 + $0xb0] sm:$0xff] %vm688, %v678
        %712 = vst.msk [vmem:[%s239 + $0xb8] sm:$0xff] %vm688, %v679
        %713 = vst.msk [vmem:[%s239 + $0xc0] sm:$0xff] %vm688, %v680
        %714 = vst.msk [vmem:[%s239 + $0xc8] sm:$0xff] %vm688, %v681
        %715 = vst.msk [vmem:[%s239 + $0xd0] sm:$0xff] %vm688, %v682
        %716 = vst.msk [vmem:[%s239 + $0xd8] sm:$0xff] %vm688, %v683
        %717 = vst.msk [vmem:[%s239 + $0xe0] sm:$0xff] %vm688, %v684
        %718 = vst.msk [vmem:[%s239 + $0xe8] sm:$0xff] %vm688, %v685
        %719 = vst.msk [vmem:[%s239 + $0xf0] sm:$0xff] %vm688, %v686
        %720 = vst.msk [vmem:[%s239 + $0xf8] sm:$0xff] %vm688, %v687
        %s721 = smul.u32 32, %s17
        %p722 = scmp.lt.s32.totalorder %s721, 63
        %s723 = scalar_select %p722, %s721, 63
        %s724 = smul.addr %s723, 8
        %s725 = scalar_lea.vmem %s4, %s724
        // Predicated region
        $region49: #{superpoint_forward.17} parent=35 // pred_check
          %p726 = pneg %p124
        $region50: #{superpoint_forward.17} parent=35 // pred_check_branch
          %728 = sbr.rel (%p726) target = $region52
        $region51: #{superpoint_forward.17} parent=35 // pred_region
          %s729 = smul.u32 32, %s17
        $region52: #{superpoint_forward.17} parent=35 // pred_fallthru
          _
      $region36: #{superpoint_forward.17} parent=5 // pred_fallthru
        _
      %p730 = scmp.le.s32.totalorder 2, %s12
      // Predicated region
      $region53: #{superpoint_forward.17} parent=5 // pred_check
        %p731 = pneg %p730
      $region54: #{superpoint_forward.17} parent=5 // pred_check_branch
        %733 = sbr.rel (%p731) target = $region56
      $region55: #{superpoint_forward.17} parent=5 // pred_region
        %s734 = ssub.s32 %s12, 2
        // Predicated region
        $region57: #{superpoint_forward.17} parent=55 // pred_check
          %p735 = pneg %p130
        $region58: #{superpoint_forward.17} parent=55 // pred_check_branch
          %737 = sbr.rel (%p735) target = $region60
        $region59: #{superpoint_forward.17} parent=55 // pred_region
          %s738 = smul.u32 32, %s18
          %p739 = scmp.lt.s32.totalorder %s738, 63
          %s740 = scalar_select %p739, %s738, 63
          %s741 = smul.addr %s740, 8
          %s742 = scalar_lea.vmem %s4, %s741
        $region60: #{superpoint_forward.17} parent=55 // pred_fallthru
          _
      $region56: #{superpoint_forward.17} parent=5 // pred_fallthru
        _
    $region6: #{superpoint_forward.17} parent=1 // loop_footer
      %s16 = sadd.s32 1, %s12
    $region7: #{superpoint_forward.17} parent=1 // loop_footer_branch
      %11 = sbr.rel target = $region3
    $region8: #{superpoint_forward.17} parent=1 // loop_exit
      _
    %743 = vsyncpa [#allocation3], 1
    %s744 = scalar_lea.sflag [#allocation3], 1
    %745 = vsyncpa %s744, 1
    %746 = vsyncpa [#allocation5], 1

// kernel: superpoint_forward.18
$region0: #{superpoint_forward.18}
  #allocation0 [shape = 'u32[]', space=smem, size = 0x4, offset = 0x4, fixed_abs, tag = 'smem constant byte address 0x4 - core index']
  #allocation1 [shape = 'u32[144,128]{1,0:T(1,128)}', space=vmem, size = 0x12000, scoped, tag = 'internal scratch']
  %s0 = inlined_call_operand.vmem [shape: bf16[512,576], index: 0, kind: input, shape index: {}]
  %s1 = inlined_call_operand.vmem [shape: bf16[576,64], index: 1, kind: input, shape index: {}]
  %s2 = inlined_call_operand.vmem [shape: f32[1,64], index: 2, kind: input, shape index: {}]
  %s3 = inlined_call_operand.vmem [shape: f32[1,64], index: 3, kind: input, shape index: {}]
  %s4 = inlined_call_operand.vmem [shape: f32[512,64], index: 4, kind: output, shape index: {}]
  %s5 = sld [smem:[#allocation0]]
  $region49: #{superpoint_forward.18} parent=0
    _
  %s7 = ssub.s32 1, %s5
  %s8 = scalar_select 0, %s7, %s5
  loop: start=0, step=1, limit=4
  $region2: #{superpoint_forward.18} parent=0 // loop_pre_header
    _
  $region3: #{superpoint_forward.18} parent=0 // loop_header
    %s10 = sphi 0, %s14
    %p11 = scmp.ge.s32.totalorder %s10, 4
    %s20 = sphi 0, %s22
    %s23 = sphi 0, %s20
    %s24 = sphi 0, %s23
    %s40 = sphi 0, %s24
    %s44 = sphi 0, %s44
    %s46 = sphi 0, %s44
    %s47 = sphi 0, %s46
    %s61 = sphi 0, %s47
    %s65 = sphi 0, %s65
    %s67 = sphi 0, %s65
    %s68 = sphi 0, %s67
    %s82 = sphi 0, %s68
    %s86 = sphi 0, %s86
    %s88 = sphi 0, %s86
    %s89 = sphi 0, %s88
    %s103 = sphi 0, %s89
    %s109 = sphi 0, %s111
    %s112 = sphi 0, %s109
    %s113 = sphi 0, %s112
    %s129 = sphi 0, %s113
  $region4: #{superpoint_forward.18} parent=0 // loop_header_branch
    %13 = sbr.rel (%p11) target = $region8
  $region5: #{superpoint_forward.18} parent=0 // loop_body
    %s15 = ssub.s32 %s10, 1
    %s16 = ssub.s32 %s10, 2
    %s17 = sadd.s32 %s10, 1
    %s18 = ssub.s32 %s10, %s17
    %p19 = scmp.eq.s32.totalorder %s18, 0
    %s21 = sadd.s32 %s20, 1
    %s22 = scalar_select %p19, %s20, %s21
    %p25 = pneg %p19
    %p26 = scmp.eq.s32.totalorder %s10, 1
    %p27 = por %p25, %p26
    %p28 = scmp.ne.s32.totalorder %s20, %s23
    %p29 = scmp.eq.s32.totalorder %s10, 0
    %p30 = por %p28, %p29
    %p31 = scmp.ne.s32.totalorder %s20, %s23
    %p32 = scmp.eq.s32.totalorder %s15, 1
    %p33 = por %p31, %p32
    %p34 = scmp.ne.s32.totalorder %s23, %s24
    %p35 = scmp.eq.s32.totalorder %s15, 0
    %p36 = por %p34, %p35
    %p37 = scmp.ne.s32.totalorder %s23, %s24
    %p38 = scmp.eq.s32.totalorder %s16, 1
    %p39 = por %p37, %p38
    %p41 = scmp.ne.s32.totalorder %s24, %s40
    %p42 = scmp.eq.s32.totalorder %s16, 0
    %p43 = por %p41, %p42
    %s45 = sadd.s32 %s44, 1
    %p48 = scmp.eq.s32.totalorder %s10, 1
    %p49 = scmp.ne.s32.totalorder %s44, %s46
    %p50 = scmp.eq.s32.totalorder %s10, 0
    %p51 = por %p49, %p50
    %p52 = scmp.ne.s32.totalorder %s44, %s46
    %p53 = scmp.eq.s32.totalorder %s15, 1
    %p54 = por %p52, %p53
    %p55 = scmp.ne.s32.totalorder %s46, %s47
    %p56 = scmp.eq.s32.totalorder %s15, 0
    %p57 = por %p55, %p56
    %p58 = scmp.ne.s32.totalorder %s46, %s47
    %p59 = scmp.eq.s32.totalorder %s16, 1
    %p60 = por %p58, %p59
    %p62 = scmp.ne.s32.totalorder %s47, %s61
    %p63 = scmp.eq.s32.totalorder %s16, 0
    %p64 = por %p62, %p63
    %s66 = sadd.s32 %s65, 1
    %p69 = scmp.eq.s32.totalorder %s10, 1
    %p70 = scmp.ne.s32.totalorder %s65, %s67
    %p71 = scmp.eq.s32.totalorder %s10, 0
    %p72 = por %p70, %p71
    %p73 = scmp.ne.s32.totalorder %s65, %s67
    %p74 = scmp.eq.s32.totalorder %s15, 1
    %p75 = por %p73, %p74
    %p76 = scmp.ne.s32.totalorder %s67, %s68
    %p77 = scmp.eq.s32.totalorder %s15, 0
    %p78 = por %p76, %p77
    %p79 = scmp.ne.s32.totalorder %s67, %s68
    %p80 = scmp.eq.s32.totalorder %s16, 1
    %p81 = por %p79, %p80
    %p83 = scmp.ne.s32.totalorder %s68, %s82
    %p84 = scmp.eq.s32.totalorder %s16, 0
    %p85 = por %p83, %p84
    %s87 = sadd.s32 %s86, 1
    %p90 = scmp.eq.s32.totalorder %s10, 1
    %p91 = scmp.ne.s32.totalorder %s86, %s88
    %p92 = scmp.eq.s32.totalorder %s10, 0
    %p93 = por %p91, %p92
    %p94 = scmp.ne.s32.totalorder %s86, %s88
    %p95 = scmp.eq.s32.totalorder %s15, 1
    %p96 = por %p94, %p95
    %p97 = scmp.ne.s32.totalorder %s88, %s89
    %p98 = scmp.eq.s32.totalorder %s15, 0
    %p99 = por %p97, %p98
    %p100 = scmp.ne.s32.totalorder %s88, %s89
    %p101 = scmp.eq.s32.totalorder %s16, 1
    %p102 = por %p100, %p101
    %p104 = scmp.ne.s32.totalorder %s89, %s103
    %p105 = scmp.eq.s32.totalorder %s16, 0
    %p106 = por %p104, %p105
    %s107 = ssub.s32 %s10, %s17
    %p108 = scmp.eq.s32.totalorder %s107, 0
    %s110 = sadd.s32 %s109, 1
    %s111 = scalar_select %p108, %s109, %s110
    %p114 = pneg %p108
    %p115 = scmp.eq.s32.totalorder %s10, 1
    %p116 = por %p114, %p115
    %p117 = scmp.ne.s32.totalorder %s109, %s112
    %p118 = scmp.eq.s32.totalorder %s10, 0
    %p119 = por %p117, %p118
    %p120 = scmp.ne.s32.totalorder %s109, %s112
    %p121 = scmp.eq.s32.totalorder %s15, 1
    %p122 = por %p120, %p121
    %p123 = scmp.ne.s32.totalorder %s112, %s113
    %p124 = scmp.eq.s32.totalorder %s15, 0
    %p125 = por %p123, %p124
    %p126 = scmp.ne.s32.totalorder %s112, %s113
    %p127 = scmp.eq.s32.totalorder %s16, 1
    %p128 = por %p126, %p127
    %p130 = scmp.ne.s32.totalorder %s113, %s129
    %p131 = scmp.eq.s32.totalorder %s16, 0
    %p132 = por %p130, %p131
    %p133 = scmp.le.s32.totalorder 1, %s10
    %p134 = scmp.lt.s32.totalorder %s10, 3
    %p135 = pnand %p133, %p134
    %p136 = pneg %p135
    // Predicated region
    $region9: #{superpoint_forward.18} parent=5 // pred_check
      _
    $region10: #{superpoint_forward.18} parent=5 // pred_check_branch
      %138 = sbr.rel (%p135) target = $region12
    $region11: #{superpoint_forward.18} parent=5 // pred_region
      %s139 = ssub.s32 %s10, 1
      // Predicated region
      $region13: #{superpoint_forward.18} parent=11 // pred_check
        %p140 = pneg %p57
      $region14: #{superpoint_forward.18} parent=11 // pred_check_branch
        %142 = sbr.rel (%p140) target = $region16
      $region15: #{superpoint_forward.18} parent=11 // pred_region
        _
      $region16: #{superpoint_forward.18} parent=11 // pred_fallthru
        _
      // Predicated region
      $region17: #{superpoint_forward.18} parent=11 // pred_check
        %p143 = pneg %p78
      $region18: #{superpoint_forward.18} parent=11 // pred_check_branch
        %145 = sbr.rel (%p143) target = $region20
      $region19: #{superpoint_forward.18} parent=11 // pred_region
        _
      $region20: #{superpoint_forward.18} parent=11 // pred_fallthru
        _
      // Predicated region
      $region21: #{superpoint_forward.18} parent=11 // pred_check
        %p146 = pneg %p99
      $region22: #{superpoint_forward.18} parent=11 // pred_check_branch
        %148 = sbr.rel (%p146) target = $region24
      $region23: #{superpoint_forward.18} parent=11 // pred_region
        _
      $region24: #{superpoint_forward.18} parent=11 // pred_fallthru
        _
    $region12: #{superpoint_forward.18} parent=5 // pred_fallthru
      _
    %p149 = scmp.lt.s32.totalorder %s10, 2
    // Predicated region
    $region25: #{superpoint_forward.18} parent=5 // pred_check
      %p150 = pneg %p149
    $region26: #{superpoint_forward.18} parent=5 // pred_check_branch
      %152 = sbr.rel (%p150) target = $region28
    $region27: #{superpoint_forward.18} parent=5 // pred_region
      // Predicated region
      $region29: #{superpoint_forward.18} parent=27 // pred_check
        %p153 = pneg %p30
      $region30: #{superpoint_forward.18} parent=27 // pred_check_branch
        %155 = sbr.rel (%p153) target = $region32
      $region31: #{superpoint_forward.18} parent=27 // pred_region
        %s156 = smul.u32 32, %s10
        %p157 = scmp.lt.s32.totalorder %s156, 63
        %s158 = scalar_select %p157, %s156, 63
        %s159 = smul.addr %s158, 5
        %s160 = smul.addr %s159, 4
        %s161 = scalar_lea.vmem %s0, %s160
        %s162 = smul.u32 32, %s10
      $region32: #{superpoint_forward.18} parent=27 // pred_fallthru
        _
    $region28: #{superpoint_forward.18} parent=5 // pred_fallthru
      _
    %p163 = scmp.le.s32.totalorder 1, %s10
    %p164 = scmp.lt.s32.totalorder %s10, 3
    %p165 = pnand %p163, %p164
    %p166 = pneg %p165
    // Predicated region
    $region33: #{superpoint_forward.18} parent=5 // pred_check
      _
    $region34: #{superpoint_forward.18} parent=5 // pred_check_branch
      %168 = sbr.rel (%p165) target = $region36
    $region35: #{superpoint_forward.18} parent=5 // pred_region
      %s169 = ssub.s32 %s10, 1
      %s170 = smul.u32 32, %s15
      %p171 = scmp.lt.s32.totalorder %s170, 63
      %s172 = scalar_select %p171, %s170, 63
      %s173 = smul.addr %s172, 5
      %s174 = smul.addr %s173, 4
      %s175 = scalar_lea.vmem %s0, %s174
      %p176 = pneg %p36
      %p177 = pneg %p33
      %p178 = pneg %p57
      %p179 = pneg %p54
      %p180 = pneg %p78
      %p181 = pneg %p75
      %p182 = pneg %p99
      %p183 = pneg %p96
      %p184 = pneg %p125
      %p185 = pneg %p122
      %s186 = smul.u32 32, %s15
      %p187 = scmp.lt.s32.totalorder %s186, 63
      %s188 = scalar_select %p187, %s186, 63
      %s189 = smul.addr %s188, 8
      %s190 = scalar_lea.vmem %s4, %s189
      %s191 = smul.u32 32, %s15
      %p192 = scmp.lt.s32.totalorder %s191, 63
      %s193 = scalar_select %p192, %s191, 63
      %s194 = smul.addr %s193, 5
      %s195 = smul.addr %s194, 4
      %s196 = scalar_lea.vmem %s0, %s195
      %s197 = smul.u32 32, %s15
      %s198 = smul.u32 32, %s15
      %p199 = scmp.lt.s32.totalorder %s198, 63
      %s200 = scalar_select %p199, %s198, 63
      %s201 = smul.addr %s200, 8
      %s202 = scalar_lea.vmem %s4, %s201
      %s203 = smul.u32 32, %s15
      %v205 = vld [vmem:[%s196] sm:$0xff]
      %v206 = vld [vmem:[%s196 + $0x8] sm:$0xff]
      %v207 = vld [vmem:[%s196 + $0x10] sm:$0xf]
      %v208 = vld [vmem:[%s196 + $0x14] sm:$0xff]
      %v209 = vld [vmem:[%s196 + $0x1c] sm:$0xff]
      %v210 = vld [vmem:[%s196 + $0x24] sm:$0xf]
      %v211 = vld [vmem:[%s196 + $0x28] sm:$0xff]
      %v212 = vld [vmem:[%s196 + $0x30] sm:$0xff]
      %v213 = vld [vmem:[%s196 + $0x38] sm:$0xf]
      %v214 = vld [vmem:[%s196 + $0x3c] sm:$0xff]
      %v215 = vld [vmem:[%s196 + $0x44] sm:$0xff]
      %v216 = vld [vmem:[%s196 + $0x4c] sm:$0xf]
      %v217 = vld [vmem:[%s196 + $0x50] sm:$0xff]
      %v218 = vld [vmem:[%s196 + $0x58] sm:$0xff]
      %v219 = vld [vmem:[%s196 + $0x60] sm:$0xf]
      %v220 = vld [vmem:[%s196 + $0x64] sm:$0xff]
      %v221 = vld [vmem:[%s196 + $0x6c] sm:$0xff]
      %v222 = vld [vmem:[%s196 + $0x74] sm:$0xf]
      %v223 = vld [vmem:[%s196 + $0x78] sm:$0xff]
      %v224 = vld [vmem:[%s196 + $0x80] sm:$0xff]
      %v225 = vld [vmem:[%s196 + $0x88] sm:$0xf]
      %v226 = vld [vmem:[%s196 + $0x8c] sm:$0xff]
      %v227 = vld [vmem:[%s196 + $0x94] sm:$0xff]
      %v228 = vld [vmem:[%s196 + $0x9c] sm:$0xf]
      %v229 = vld [vmem:[%s196 + $0xa0] sm:$0xff]
      %v230 = vld [vmem:[%s196 + $0xa8] sm:$0xff]
      %v231 = vld [vmem:[%s196 + $0xb0] sm:$0xf]
      %v232 = vld [vmem:[%s196 + $0xb4] sm:$0xff]
      %v233 = vld [vmem:[%s196 + $0xbc] sm:$0xff]
      %v234 = vld [vmem:[%s196 + $0xc4] sm:$0xf]
      %v235 = vld [vmem:[%s196 + $0xc8] sm:$0xff]
      %v236 = vld [vmem:[%s196 + $0xd0] sm:$0xff]
      %v237 = vld [vmem:[%s196 + $0xd8] sm:$0xf]
      %v238 = vld [vmem:[%s196 + $0xdc] sm:$0xff]
      %v239 = vld [vmem:[%s196 + $0xe4] sm:$0xff]
      %v240 = vld [vmem:[%s196 + $0xec] sm:$0xf]
      %v241 = vld [vmem:[%s196 + $0xf0] sm:$0xff]
      %v242 = vld [vmem:[%s196 + $0xf8] sm:$0xff]
      %v243 = vld [vmem:[%s196 + $0x100] sm:$0xf]
      %v244 = vld [vmem:[%s196 + $0x104] sm:$0xff]
      %v245 = vld [vmem:[%s196 + $0x10c] sm:$0xff]
      %v246 = vld [vmem:[%s196 + $0x114] sm:$0xf]
      %v247 = vld [vmem:[%s196 + $0x118] sm:$0xff]
      %v248 = vld [vmem:[%s196 + $0x120] sm:$0xff]
      %v249 = vld [vmem:[%s196 + $0x128] sm:$0xf]
      %v250 = vld [vmem:[%s196 + $0x12c] sm:$0xff]
      %v251 = vld [vmem:[%s196 + $0x134] sm:$0xff]
      %v252 = vld [vmem:[%s196 + $0x13c] sm:$0xf]
      %v253 = vld [vmem:[%s196 + $0x140] sm:$0xff]
      %v254 = vld [vmem:[%s196 + $0x148] sm:$0xff]
      %v255 = vld [vmem:[%s196 + $0x150] sm:$0xf]
      %v256 = vld [vmem:[%s196 + $0x154] sm:$0xff]
      %v257 = vld [vmem:[%s196 + $0x15c] sm:$0xff]
      %v258 = vld [vmem:[%s196 + $0x164] sm:$0xf]
      %v259 = vld [vmem:[%s196 + $0x168] sm:$0xff]
      %v260 = vld [vmem:[%s196 + $0x170] sm:$0xff]
      %v261 = vld [vmem:[%s196 + $0x178] sm:$0xf]
      %v262 = vld [vmem:[%s196 + $0x17c] sm:$0xff]
      %v263 = vld [vmem:[%s196 + $0x184] sm:$0xff]
      %v264 = vld [vmem:[%s196 + $0x18c] sm:$0xf]
      %v265 = vld [vmem:[%s196 + $0x190] sm:$0xff]
      %v266 = vld [vmem:[%s196 + $0x198] sm:$0xff]
      %v267 = vld [vmem:[%s196 + $0x1a0] sm:$0xf]
      %v268 = vld [vmem:[%s196 + $0x1a4] sm:$0xff]
      %v269 = vld [vmem:[%s196 + $0x1ac] sm:$0xff]
      %v270 = vld [vmem:[%s196 + $0x1b4] sm:$0xf]
      %v271 = vld [vmem:[%s196 + $0x1b8] sm:$0xff]
      %v272 = vld [vmem:[%s196 + $0x1c0] sm:$0xff]
      %v273 = vld [vmem:[%s196 + $0x1c8] sm:$0xf]
      %v274 = vld [vmem:[%s196 + $0x1cc] sm:$0xff]
      %v275 = vld [vmem:[%s196 + $0x1d4] sm:$0xff]
      %v276 = vld [vmem:[%s196 + $0x1dc] sm:$0xf]
      %v277 = vld [vmem:[%s196 + $0x1e0] sm:$0xff]
      %v278 = vld [vmem:[%s196 + $0x1e8] sm:$0xff]
      %v279 = vld [vmem:[%s196 + $0x1f0] sm:$0xf]
      %v280 = vld [vmem:[%s196 + $0x1f4] sm:$0xff]
      %v281 = vld [vmem:[%s196 + $0x1fc] sm:$0xff]
      %v282 = vld [vmem:[%s196 + $0x204] sm:$0xf]
      %v283 = vld [vmem:[%s196 + $0x208] sm:$0xff]
      %v284 = vld [vmem:[%s196 + $0x210] sm:$0xff]
      %v285 = vld [vmem:[%s196 + $0x218] sm:$0xf]
      %v286 = vld [vmem:[%s196 + $0x21c] sm:$0xff]
      %v287 = vld [vmem:[%s196 + $0x224] sm:$0xff]
      %v288 = vld [vmem:[%s196 + $0x22c] sm:$0xf]
      %v289 = vld [vmem:[%s196 + $0x230] sm:$0xff]
      %v290 = vld [vmem:[%s196 + $0x238] sm:$0xff]
      %v291 = vld [vmem:[%s196 + $0x240] sm:$0xf]
      %v292 = vld [vmem:[%s196 + $0x244] sm:$0xff]
      %v293 = vld [vmem:[%s196 + $0x24c] sm:$0xff]
      %v294 = vld [vmem:[%s196 + $0x254] sm:$0xf]
      %v295 = vld [vmem:[%s196 + $0x258] sm:$0xff]
      %v296 = vld [vmem:[%s196 + $0x260] sm:$0xff]
      %v297 = vld [vmem:[%s196 + $0x268] sm:$0xf]
      %v298 = vld [vmem:[%s196 + $0x26c] sm:$0xff]
      %v299 = vld [vmem:[%s196 + $0x274] sm:$0xff]
      %v300 = vld [vmem:[%s196 + $0x27c] sm:$0xf]
      %v301 = vld [vmem:[%s1] sm:$0xf]
      %v302 = vld [vmem:[%s1 + $0x4] sm:$0xf]
      %v303 = vld [vmem:[%s1 + $0x8] sm:$0xf]
      %v304 = vld [vmem:[%s1 + $0xc] sm:$0xf]
      %v305 = vld [vmem:[%s1 + $0x10] sm:$0xf]
      %v306 = vld [vmem:[%s1 + $0x14] sm:$0xf]
      %v307 = vld [vmem:[%s1 + $0x18] sm:$0xf]
      %v308 = vld [vmem:[%s1 + $0x1c] sm:$0xf]
      %v309 = vld [vmem:[%s1 + $0x20] sm:$0xf]
      %v310 = vld [vmem:[%s1 + $0x24] sm:$0xf]
      %v311 = vld [vmem:[%s1 + $0x28] sm:$0xf]
      %v312 = vld [vmem:[%s1 + $0x2c] sm:$0xf]
      %v313 = vld [vmem:[%s1 + $0x30] sm:$0xf]
      %v314 = vld [vmem:[%s1 + $0x34] sm:$0xf]
      %v315 = vld [vmem:[%s1 + $0x38] sm:$0xf]
      %v316 = vld [vmem:[%s1 + $0x3c] sm:$0xf]
      %v317 = vld [vmem:[%s1 + $0x40] sm:$0xf]
      %v318 = vld [vmem:[%s1 + $0x44] sm:$0xf]
      %v319 = vld [vmem:[%s1 + $0x48] sm:$0xf]
      %v320 = vld [vmem:[%s1 + $0x4c] sm:$0xf]
      %v321 = vld [vmem:[%s1 + $0x50] sm:$0xf]
      %v322 = vld [vmem:[%s1 + $0x54] sm:$0xf]
      %v323 = vld [vmem:[%s1 + $0x58] sm:$0xf]
      %v324 = vld [vmem:[%s1 + $0x5c] sm:$0xf]
      %v325 = vld [vmem:[%s1 + $0x60] sm:$0xf]
      %v326 = vld [vmem:[%s1 + $0x64] sm:$0xf]
      %v327 = vld [vmem:[%s1 + $0x68] sm:$0xf]
      %v328 = vld [vmem:[%s1 + $0x6c] sm:$0xf]
      %v329 = vld [vmem:[%s1 + $0x70] sm:$0xf]
      %v330 = vld [vmem:[%s1 + $0x74] sm:$0xf]
      %v331 = vld [vmem:[%s1 + $0x78] sm:$0xf]
      %v332 = vld [vmem:[%s1 + $0x7c] sm:$0xf]
      %v333 = vld [vmem:[%s1 + $0x80] sm:$0xf]
      %v334 = vld [vmem:[%s1 + $0x84] sm:$0xf]
      %v335 = vld [vmem:[%s1 + $0x88] sm:$0xf]
      %v336 = vld [vmem:[%s1 + $0x8c] sm:$0xf]
      %v337 = vld [vmem:[%s1 + $0x90] sm:$0xf]
      %v338 = vld [vmem:[%s1 + $0x94] sm:$0xf]
      %v339 = vld [vmem:[%s1 + $0x98] sm:$0xf]
      %v340 = vld [vmem:[%s1 + $0x9c] sm:$0xf]
      %v341 = vld [vmem:[%s1 + $0xa0] sm:$0xf]
      %v342 = vld [vmem:[%s1 + $0xa4] sm:$0xf]
      %v343 = vld [vmem:[%s1 + $0xa8] sm:$0xf]
      %v344 = vld [vmem:[%s1 + $0xac] sm:$0xf]
      %v345 = vld [vmem:[%s1 + $0xb0] sm:$0xf]
      %v346 = vld [vmem:[%s1 + $0xb4] sm:$0xf]
      %v347 = vld [vmem:[%s1 + $0xb8] sm:$0xf]
      %v348 = vld [vmem:[%s1 + $0xbc] sm:$0xf]
      %v349 = vld [vmem:[%s1 + $0xc0] sm:$0xf]
      %v350 = vld [vmem:[%s1 + $0xc4] sm:$0xf]
      %v351 = vld [vmem:[%s1 + $0xc8] sm:$0xf]
      %v352 = vld [vmem:[%s1 + $0xcc] sm:$0xf]
      %v353 = vld [vmem:[%s1 + $0xd0] sm:$0xf]
      %v354 = vld [vmem:[%s1 + $0xd4] sm:$0xf]
      %v355 = vld [vmem:[%s1 + $0xd8] sm:$0xf]
      %v356 = vld [vmem:[%s1 + $0xdc] sm:$0xf]
      %v357 = vld [vmem:[%s1 + $0xe0] sm:$0xf]
      %v358 = vld [vmem:[%s1 + $0xe4] sm:$0xf]
      %v359 = vld [vmem:[%s1 + $0xe8] sm:$0xf]
      %v360 = vld [vmem:[%s1 + $0xec] sm:$0xf]
      %v361 = vld [vmem:[%s1 + $0xf0] sm:$0xf]
      %v362 = vld [vmem:[%s1 + $0xf4] sm:$0xf]
      %v363 = vld [vmem:[%s1 + $0xf8] sm:$0xf]
      %v364 = vld [vmem:[%s1 + $0xfc] sm:$0xf]
      %v365 = vld [vmem:[%s1 + $0x100] sm:$0xf]
      %v366 = vld [vmem:[%s1 + $0x104] sm:$0xf]
      %v367 = vld [vmem:[%s1 + $0x108] sm:$0xf]
      %v368 = vld [vmem:[%s1 + $0x10c] sm:$0xf]
      %v369 = vld [vmem:[%s1 + $0x110] sm:$0xf]
      %v370 = vld [vmem:[%s1 + $0x114] sm:$0xf]
      %v371 = vld [vmem:[%s1 + $0x118] sm:$0xf]
      %v372 = vld [vmem:[%s1 + $0x11c] sm:$0xf]
      %v469 = vunpack.c.l.b16 %v205
      %v470 = vunpack.c.h.b16 %v205
      %v471 = vunpack.c.l.b16 %v206
      %v472 = vunpack.c.h.b16 %v206
      %v473 = vunpack.c.l.b16 %v207
      %v474 = vunpack.c.l.b16 %v208
      %v475 = vunpack.c.h.b16 %v208
      %v476 = vunpack.c.l.b16 %v209
      %v477 = vunpack.c.h.b16 %v209
      %v478 = vunpack.c.l.b16 %v210
      %v479 = vunpack.c.l.b16 %v211
      %v480 = vunpack.c.h.b16 %v211
      %v481 = vunpack.c.l.b16 %v212
      %v482 = vunpack.c.h.b16 %v212
      %v483 = vunpack.c.l.b16 %v213
      %v484 = vunpack.c.l.b16 %v214
      %v485 = vunpack.c.h.b16 %v214
      %v486 = vunpack.c.l.b16 %v215
      %v487 = vunpack.c.h.b16 %v215
      %v488 = vunpack.c.l.b16 %v216
      %v489 = vunpack.c.l.b16 %v217
      %v490 = vunpack.c.h.b16 %v217
      %v491 = vunpack.c.l.b16 %v218
      %v492 = vunpack.c.h.b16 %v218
      %v493 = vunpack.c.l.b16 %v219
      %v494 = vunpack.c.l.b16 %v220
      %v495 = vunpack.c.h.b16 %v220
      %v496 = vunpack.c.l.b16 %v221
      %v497 = vunpack.c.h.b16 %v221
      %v498 = vunpack.c.l.b16 %v222
      %v499 = vunpack.c.l.b16 %v223
      %v500 = vunpack.c.h.b16 %v223
      %v501 = vunpack.c.l.b16 %v224
      %v502 = vunpack.c.h.b16 %v224
      %v503 = vunpack.c.l.b16 %v225
      %v504 = vunpack.c.l.b16 %v226
      %v505 = vunpack.c.h.b16 %v226
      %v506 = vunpack.c.l.b16 %v227
      %v507 = vunpack.c.h.b16 %v227
      %v508 = vunpack.c.l.b16 %v228
      %v509 = vunpack.c.l.b16 %v229
      %v510 = vunpack.c.h.b16 %v229
      %v511 = vunpack.c.l.b16 %v230
      %v512 = vunpack.c.h.b16 %v230
      %v513 = vunpack.c.l.b16 %v231
      %v514 = vunpack.c.l.b16 %v232
      %v515 = vunpack.c.h.b16 %v232
      %v516 = vunpack.c.l.b16 %v233
      %v517 = vunpack.c.h.b16 %v233
      %v518 = vunpack.c.l.b16 %v234
      %v519 = vunpack.c.l.b16 %v235
      %v520 = vunpack.c.h.b16 %v235
      %v521 = vunpack.c.l.b16 %v236
      %v522 = vunpack.c.h.b16 %v236
      %v523 = vunpack.c.l.b16 %v237
      %v524 = vunpack.c.l.b16 %v238
      %v525 = vunpack.c.h.b16 %v238
      %v526 = vunpack.c.l.b16 %v239
      %v527 = vunpack.c.h.b16 %v239
      %v528 = vunpack.c.l.b16 %v240
      %v529 = vunpack.c.l.b16 %v241
      %v530 = vunpack.c.h.b16 %v241
      %v531 = vunpack.c.l.b16 %v242
      %v532 = vunpack.c.h.b16 %v242
      %v533 = vunpack.c.l.b16 %v243
      %v534 = vunpack.c.l.b16 %v244
      %v535 = vunpack.c.h.b16 %v244
      %v536 = vunpack.c.l.b16 %v245
      %v537 = vunpack.c.h.b16 %v245
      %v538 = vunpack.c.l.b16 %v246
      %v539 = vunpack.c.l.b16 %v247
      %v540 = vunpack.c.h.b16 %v247
      %v541 = vunpack.c.l.b16 %v248
      %v542 = vunpack.c.h.b16 %v248
      %v543 = vunpack.c.l.b16 %v249
      %v544 = vunpack.c.l.b16 %v250
      %v545 = vunpack.c.h.b16 %v250
      %v546 = vunpack.c.l.b16 %v251
      %v547 = vunpack.c.h.b16 %v251
      %v548 = vunpack.c.l.b16 %v252
      %v549 = vunpack.c.l.b16 %v253
      %v550 = vunpack.c.h.b16 %v253
      %v551 = vunpack.c.l.b16 %v254
      %v552 = vunpack.c.h.b16 %v254
      %v553 = vunpack.c.l.b16 %v255
      %v554 = vunpack.c.l.b16 %v256
      %v555 = vunpack.c.h.b16 %v256
      %v556 = vunpack.c.l.b16 %v257
      %v557 = vunpack.c.h.b16 %v257
      %v558 = vunpack.c.l.b16 %v258
      %v559 = vunpack.c.l.b16 %v259
      %v560 = vunpack.c.h.b16 %v259
      %v561 = vunpack.c.l.b16 %v260
      %v562 = vunpack.c.h.b16 %v260
      %v563 = vunpack.c.l.b16 %v261
      %v564 = vunpack.c.l.b16 %v262
      %v565 = vunpack.c.h.b16 %v262
      %v566 = vunpack.c.l.b16 %v263
      %v567 = vunpack.c.h.b16 %v263
      %v568 = vunpack.c.l.b16 %v264
      %v569 = vunpack.c.l.b16 %v265
      %v570 = vunpack.c.h.b16 %v265
      %v571 = vunpack.c.l.b16 %v266
      %v572 = vunpack.c.h.b16 %v266
      %v573 = vunpack.c.l.b16 %v267
      %v574 = vunpack.c.l.b16 %v268
      %v575 = vunpack.c.h.b16 %v268
      %v576 = vunpack.c.l.b16 %v269
      %v577 = vunpack.c.h.b16 %v269
      %v578 = vunpack.c.l.b16 %v270
      %v579 = vunpack.c.l.b16 %v271
      %v580 = vunpack.c.h.b16 %v271
      %v581 = vunpack.c.l.b16 %v272
      %v582 = vunpack.c.h.b16 %v272
      %v583 = vunpack.c.l.b16 %v273
      %v584 = vunpack.c.l.b16 %v274
      %v585 = vunpack.c.h.b16 %v274
      %v586 = vunpack.c.l.b16 %v275
      %v587 = vunpack.c.h.b16 %v275
      %v588 = vunpack.c.l.b16 %v276
      %v589 = vunpack.c.l.b16 %v277
      %v590 = vunpack.c.h.b16 %v277
      %v591 = vunpack.c.l.b16 %v278
      %v592 = vunpack.c.h.b16 %v278
      %v593 = vunpack.c.l.b16 %v279
      %v594 = vunpack.c.l.b16 %v280
      %v595 = vunpack.c.h.b16 %v280
      %v596 = vunpack.c.l.b16 %v281
      %v597 = vunpack.c.h.b16 %v281
      %v598 = vunpack.c.l.b16 %v282
      %v599 = vunpack.c.l.b16 %v283
      %v600 = vunpack.c.h.b16 %v283
      %v601 = vunpack.c.l.b16 %v284
      %v602 = vunpack.c.h.b16 %v284
      %v603 = vunpack.c.l.b16 %v285
      %v604 = vunpack.c.l.b16 %v286
      %v605 = vunpack.c.h.b16 %v286
      %v606 = vunpack.c.l.b16 %v287
      %v607 = vunpack.c.h.b16 %v287
      %v608 = vunpack.c.l.b16 %v288
      %v609 = vunpack.c.l.b16 %v289
      %v610 = vunpack.c.h.b16 %v289
      %v611 = vunpack.c.l.b16 %v290
      %v612 = vunpack.c.h.b16 %v290
      %v613 = vunpack.c.l.b16 %v291
      %v614 = vunpack.c.l.b16 %v292
      %v615 = vunpack.c.h.b16 %v292
      %v616 = vunpack.c.l.b16 %v293
      %v617 = vunpack.c.h.b16 %v293
      %v618 = vunpack.c.l.b16 %v294
      %v619 = vunpack.c.l.b16 %v295
      %v620 = vunpack.c.h.b16 %v295
      %v621 = vunpack.c.l.b16 %v296
      %v622 = vunpack.c.h.b16 %v296
      %v623 = vunpack.c.l.b16 %v297
      %v624 = vunpack.c.l.b16 %v298
      %v625 = vunpack.c.h.b16 %v298
      %v626 = vunpack.c.l.b16 %v299
      %v627 = vunpack.c.h.b16 %v299
      %v628 = vunpack.c.l.b16 %v300
      %v629 = vpack.c.b16 %v474, %v469
      %v630 = vpack.c.b16 %v475, %v470
      %v631 = vpack.c.b16 %v476, %v471
      %v632 = vpack.c.b16 %v477, %v472
      %v633 = vpack.c.b16 %v478, %v473
      %v634 = vpack.c.b16 %v484, %v479
      %v635 = vpack.c.b16 %v485, %v480
      %v636 = vpack.c.b16 %v486, %v481
      %v637 = vpack.c.b16 %v487, %v482
      %v638 = vpack.c.b16 %v488, %v483
      %v639 = vpack.c.b16 %v494, %v489
      %v640 = vpack.c.b16 %v495, %v490
      %v641 = vpack.c.b16 %v496, %v491
      %v642 = vpack.c.b16 %v497, %v492
      %v643 = vpack.c.b16 %v498, %v493
      %v644 = vpack.c.b16 %v504, %v499
      %v645 = vpack.c.b16 %v505, %v500
      %v646 = vpack.c.b16 %v506, %v501
      %v647 = vpack.c.b16 %v507, %v502
      %v648 = vpack.c.b16 %v508, %v503
      %v649 = vpack.c.b16 %v514, %v509
      %v650 = vpack.c.b16 %v515, %v510
      %v651 = vpack.c.b16 %v516, %v511
      %v652 = vpack.c.b16 %v517, %v512
      %v653 = vpack.c.b16 %v518, %v513
      %v654 = vpack.c.b16 %v524, %v519
      %v655 = vpack.c.b16 %v525, %v520
      %v656 = vpack.c.b16 %v526, %v521
      %v657 = vpack.c.b16 %v527, %v522
      %v658 = vpack.c.b16 %v528, %v523
      %v659 = vpack.c.b16 %v534, %v529
      %v660 = vpack.c.b16 %v535, %v530
      %v661 = vpack.c.b16 %v536, %v531
      %v662 = vpack.c.b16 %v537, %v532
      %v663 = vpack.c.b16 %v538, %v533
      %v664 = vpack.c.b16 %v544, %v539
      %v665 = vpack.c.b16 %v545, %v540
      %v666 = vpack.c.b16 %v546, %v541
      %v667 = vpack.c.b16 %v547, %v542
      %v668 = vpack.c.b16 %v548, %v543
      %v669 = vpack.c.b16 %v554, %v549
      %v670 = vpack.c.b16 %v555, %v550
      %v671 = vpack.c.b16 %v556, %v551
      %v672 = vpack.c.b16 %v557, %v552
      %v673 = vpack.c.b16 %v558, %v553
      %v674 = vpack.c.b16 %v564, %v559
      %v675 = vpack.c.b16 %v565, %v560
      %v676 = vpack.c.b16 %v566, %v561
      %v677 = vpack.c.b16 %v567, %v562
      %v678 = vpack.c.b16 %v568, %v563
      %v679 = vpack.c.b16 %v574, %v569
      %v680 = vpack.c.b16 %v575, %v570
      %v681 = vpack.c.b16 %v576, %v571
      %v682 = vpack.c.b16 %v577, %v572
      %v683 = vpack.c.b16 %v578, %v573
      %v684 = vpack.c.b16 %v584, %v579
      %v685 = vpack.c.b16 %v585, %v580
      %v686 = vpack.c.b16 %v586, %v581
      %v687 = vpack.c.b16 %v587, %v582
      %v688 = vpack.c.b16 %v588, %v583
      %v689 = vpack.c.b16 %v594, %v589
      %v690 = vpack.c.b16 %v595, %v590
      %v691 = vpack.c.b16 %v596, %v591
      %v692 = vpack.c.b16 %v597, %v592
      %v693 = vpack.c.b16 %v598, %v593
      %v694 = vpack.c.b16 %v604, %v599
      %v695 = vpack.c.b16 %v605, %v600
      %v696 = vpack.c.b16 %v606, %v601
      %v697 = vpack.c.b16 %v607, %v602
      %v698 = vpack.c.b16 %v608, %v603
      %v699 = vpack.c.b16 %v614, %v609
      %v700 = vpack.c.b16 %v615, %v610
      %v701 = vpack.c.b16 %v616, %v611
      %v702 = vpack.c.b16 %v617, %v612
      %v703 = vpack.c.b16 %v618, %v613
      %v704 = vpack.c.b16 %v624, %v619
      %v705 = vpack.c.b16 %v625, %v620
      %v706 = vpack.c.b16 %v626, %v621
      %v707 = vpack.c.b16 %v627, %v622
      %v708 = vpack.c.b16 %v628, %v623
      %v845 = vunpack.c.l.b16 %v301
      %v846 = vunpack.c.l.b16 %v302
      %v847 = vunpack.c.l.b16 %v303
      %v848 = vunpack.c.l.b16 %v304
      %v849 = vunpack.c.l.b16 %v305
      %v850 = vunpack.c.l.b16 %v306
      %v851 = vunpack.c.l.b16 %v307
      %v852 = vunpack.c.l.b16 %v308
      %v853 = vunpack.c.l.b16 %v309
      %v854 = vunpack.c.l.b16 %v310
      %v855 = vunpack.c.l.b16 %v311
      %v856 = vunpack.c.l.b16 %v312
      %v857 = vunpack.c.l.b16 %v313
      %v858 = vunpack.c.l.b16 %v314
      %v859 = vunpack.c.l.b16 %v315
      %v860 = vunpack.c.l.b16 %v316
      %v861 = vunpack.c.l.b16 %v317
      %v862 = vunpack.c.l.b16 %v318
      %v863 = vunpack.c.l.b16 %v319
      %v864 = vunpack.c.l.b16 %v320
      %v865 = vunpack.c.l.b16 %v321
      %v866 = vunpack.c.l.b16 %v322
      %v867 = vunpack.c.l.b16 %v323
      %v868 = vunpack.c.l.b16 %v324
      %v869 = vunpack.c.l.b16 %v325
      %v870 = vunpack.c.l.b16 %v326
      %v871 = vunpack.c.l.b16 %v327
      %v872 = vunpack.c.l.b16 %v328
      %v873 = vunpack.c.l.b16 %v329
      %v874 = vunpack.c.l.b16 %v330
      %v875 = vunpack.c.l.b16 %v331
      %v876 = vunpack.c.l.b16 %v332
      %v877 = vunpack.c.l.b16 %v333
      %v878 = vunpack.c.l.b16 %v334
      %v879 = vunpack.c.l.b16 %v335
      %v880 = vunpack.c.l.b16 %v336
      %v881 = vunpack.c.l.b16 %v337
      %v882 = vunpack.c.l.b16 %v338
      %v883 = vunpack.c.l.b16 %v339
      %v884 = vunpack.c.l.b16 %v340
      %v885 = vunpack.c.l.b16 %v341
      %v886 = vunpack.c.l.b16 %v342
      %v887 = vunpack.c.l.b16 %v343
      %v888 = vunpack.c.l.b16 %v344
      %v889 = vunpack.c.l.b16 %v345
      %v890 = vunpack.c.l.b16 %v346
      %v891 = vunpack.c.l.b16 %v347
      %v892 = vunpack.c.l.b16 %v348
      %v893 = vunpack.c.l.b16 %v349
      %v894 = vunpack.c.l.b16 %v350
      %v895 = vunpack.c.l.b16 %v351
      %v896 = vunpack.c.l.b16 %v352
      %v897 = vunpack.c.l.b16 %v353
      %v898 = vunpack.c.l.b16 %v354
      %v899 = vunpack.c.l.b16 %v355
      %v900 = vunpack.c.l.b16 %v356
      %v901 = vunpack.c.l.b16 %v357
      %v902 = vunpack.c.l.b16 %v358
      %v903 = vunpack.c.l.b16 %v359
      %v904 = vunpack.c.l.b16 %v360
      %v905 = vunpack.c.l.b16 %v361
      %v906 = vunpack.c.l.b16 %v362
      %v907 = vunpack.c.l.b16 %v363
      %v908 = vunpack.c.l.b16 %v364
      %v909 = vunpack.c.l.b16 %v365
      %v910 = vunpack.c.l.b16 %v366
      %v911 = vunpack.c.l.b16 %v367
      %v912 = vunpack.c.l.b16 %v368
      %v913 = vunpack.c.l.b16 %v369
      %v914 = vunpack.c.l.b16 %v370
      %v915 = vunpack.c.l.b16 %v371
      %v916 = vunpack.c.l.b16 %v372
      %v917 = vpack.c.b16 %v846, %v845
      %v918 = vpack.c.b16 %v848, %v847
      %v919 = vpack.c.b16 %v850, %v849
      %v920 = vpack.c.b16 %v852, %v851
      %v921 = vpack.c.b16 %v854, %v853
      %v922 = vpack.c.b16 %v856, %v855
      %v923 = vpack.c.b16 %v858, %v857
      %v924 = vpack.c.b16 %v860, %v859
      %v925 = vpack.c.b16 %v862, %v861
      %v926 = vpack.c.b16 %v864, %v863
      %v927 = vpack.c.b16 %v866, %v865
      %v928 = vpack.c.b16 %v868, %v867
      %v929 = vpack.c.b16 %v870, %v869
      %v930 = vpack.c.b16 %v872, %v871
      %v931 = vpack.c.b16 %v874, %v873
      %v932 = vpack.c.b16 %v876, %v875
      %v933 = vpack.c.b16 %v878, %v877
      %v934 = vpack.c.b16 %v880, %v879
      %v935 = vpack.c.b16 %v882, %v881
      %v936 = vpack.c.b16 %v884, %v883
      %v937 = vpack.c.b16 %v886, %v885
      %v938 = vpack.c.b16 %v888, %v887
      %v939 = vpack.c.b16 %v890, %v889
      %v940 = vpack.c.b16 %v892, %v891
      %v941 = vpack.c.b16 %v894, %v893
      %v942 = vpack.c.b16 %v896, %v895
      %v943 = vpack.c.b16 %v898, %v897
      %v944 = vpack.c.b16 %v900, %v899
      %v945 = vpack.c.b16 %v902, %v901
      %v946 = vpack.c.b16 %v904, %v903
      %v947 = vpack.c.b16 %v906, %v905
      %v948 = vpack.c.b16 %v908, %v907
      %v949 = vpack.c.b16 %v910, %v909
      %v950 = vpack.c.b16 %v912, %v911
      %v951 = vpack.c.b16 %v914, %v913
      %v952 = vpack.c.b16 %v916, %v915
      %vm989 = vcmask 523264
      %v991 = vsel %vm989, %v633, 0
      %v994 = vsel %vm989, %v638, 0
      %v997 = vsel %vm989, %v643, 0
      %v1000 = vsel %vm989, %v648, 0
      %v1003 = vsel %vm989, %v653, 0
      %v1006 = vsel %vm989, %v658, 0
      %v1009 = vsel %vm989, %v663, 0
      %v1012 = vsel %vm989, %v668, 0
      %v1015 = vsel %vm989, %v673, 0
      %v1018 = vsel %vm989, %v678, 0
      %v1021 = vsel %vm989, %v683, 0
      %v1024 = vsel %vm989, %v688, 0
      %v1027 = vsel %vm989, %v693, 0
      %v1030 = vsel %vm989, %v698, 0
      %v1033 = vsel %vm989, %v703, 0
      %v1036 = vsel %vm989, %v708, 0
      %1038 = vmatprep.subr.bf16.mxu0 0
      %1039 = vmatpush1.bf16.msra.mxu0 %v917
      %1040 = vmatprep.subr.bf16.mxu0 0
      %1041 = vmatpush1.bf16.msra.mxu0 %v918
      %1042 = vmatprep.subr.bf16.mxu0 0
      %1043 = vmatpush1.bf16.msra.mxu0 %v919
      %1044 = vmatprep.subr.bf16.mxu0 0
      %1045 = vmatpush1.bf16.msra.mxu0 %v920
      %1046 = vmatprep.subr.bf16.mxu0 0
      %1047 = vmatpush1.bf16.msra.mxu0 %v921
      %1048 = vmatprep.subr.bf16.mxu0 0
      %1049 = vmatpush1.bf16.msra.mxu0 %v922
      %1050 = vmatprep.subr.bf16.mxu0 0
      %1051 = vmatpush1.bf16.msra.mxu0 %v923
      %1052 = vmatprep.subr.bf16.mxu0 0
      %1053 = vmatpush1.bf16.msra.mxu0 %v924
      %1054 = vmatprep.subr.bf16.mxu0 0
      %1055 = vmatpush1.bf16.msra.mxu0 %v925
      %1056 = vmatprep.subr.bf16.mxu0 0
      %1057 = vmatpush1.bf16.msra.mxu0 %v926
      %1058 = vmatprep.subr.bf16.mxu0 0
      %1059 = vmatpush1.bf16.msra.mxu0 %v927
      %1060 = vmatprep.subr.bf16.mxu0 0
      %1061 = vmatpush1.bf16.msra.mxu0 %v928
      %1062 = vmatprep.subr.bf16.mxu0 0
      %1063 = vmatpush1.bf16.msra.mxu0 %v929
      %1064 = vmatprep.subr.bf16.mxu0 0
      %1065 = vmatpush1.bf16.msra.mxu0 %v930
      %1066 = vmatprep.subr.bf16.mxu0 0
      %1067 = vmatpush1.bf16.msra.mxu0 %v931
      %1068 = vmatprep.subr.bf16.mxu0 0
      %1069 = vmatpush1.bf16.msra.mxu0 %v932
      %1070 = vmatprep.mubr.bf16.mxu0 %v630
      %1071 = vmatmul.mubr.bf16.gmra.mrb[0].mxu0 %v629
      %v1072 = vpop.f32.mrb[0].mxu0
      %v1073 = vadd.f32 0.0, %v1072
      %v1074 = vpop.f32.mrb[0].mxu0
      %v1075 = vpop.f32.mrb[0].mxu0
      %v1076 = vadd.f32 0.0, %v1075
      %v1077 = vpop.f32.mrb[0].mxu0
      %1078 = vmatprep.mubr.bf16.mxu0 %v635
      %1079 = vmatmul.mubr.bf16.gmra.mrb[0].mxu0 %v634
      %v1080 = vpop.f32.mrb[0].mxu0
      %v1081 = vadd.f32 0.0, %v1080
      %v1082 = vpop.f32.mrb[0].mxu0
      %v1083 = vpop.f32.mrb[0].mxu0
      %v1084 = vadd.f32 0.0, %v1083
      %v1085 = vpop.f32.mrb[0].mxu0
      %1086 = vmatprep.mubr.bf16.mxu0 %v640
      %1087 = vmatmul.mubr.bf16.gmra.mrb[0].mxu0 %v639
      %v1088 = vpop.f32.mrb[0].mxu0
      %v1089 = vadd.f32 0.0, %v1088
      %v1090 = vpop.f32.mrb[0].mxu0
      %v1091 = vpop.f32.mrb[0].mxu0
      %v1092 = vadd.f32 0.0, %v1091
      %v1093 = vpop.f32.mrb[0].mxu0
      %1094 = vmatprep.mubr.bf16.mxu0 %v645
      %1095 = vmatmul.mubr.bf16.gmra.mrb[0].mxu0 %v644
      %v1096 = vpop.f32.mrb[0].mxu0
      %v1097 = vadd.f32 0.0, %v1096
      %v1098 = vpop.f32.mrb[0].mxu0
      %v1099 = vpop.f32.mrb[0].mxu0
      %v1100 = vadd.f32 0.0, %v1099
      %v1101 = vpop.f32.mrb[0].mxu0
      %1102 = vmatprep.mubr.bf16.mxu0 %v650
      %1103 = vmatmul.mubr.bf16.gmra.mrb[0].mxu0 %v649
      %v1104 = vpop.f32.mrb[0].mxu0
      %v1105 = vadd.f32 0.0, %v1104
      %v1106 = vpop.f32.mrb[0].mxu0
      %v1107 = vpop.f32.mrb[0].mxu0
      %v1108 = vadd.f32 0.0, %v1107
      %v1109 = vpop.f32.mrb[0].mxu0
      %1110 = vmatprep.mubr.bf16.mxu0 %v655
      %1111 = vmatmul.mubr.bf16.gmra.mrb[0].mxu0 %v654
      %v1112 = vpop.f32.mrb[0].mxu0
      %v1113 = vadd.f32 0.0, %v1112
      %v1114 = vpop.f32.mrb[0].mxu0
      %v1115 = vpop.f32.mrb[0].mxu0
      %v1116 = vadd.f32 0.0, %v1115
      %v1117 = vpop.f32.mrb[0].mxu0
      %1118 = vmatprep.mubr.bf16.mxu0 %v660
      %1119 = vmatmul.mubr.bf16.gmra.mrb[0].mxu0 %v659
      %v1120 = vpop.f32.mrb[0].mxu0
      %v1121 = vadd.f32 0.0, %v1120
      %v1122 = vpop.f32.mrb[0].mxu0
      %v1123 = vpop.f32.mrb[0].mxu0
      %v1124 = vadd.f32 0.0, %v1123
      %v1125 = vpop.f32.mrb[0].mxu0
      %1126 = vmatprep.mubr.bf16.mxu0 %v665
      %1127 = vmatmul.mubr.bf16.gmra.mrb[0].mxu0 %v664
      %v1128 = vpop.f32.mrb[0].mxu0
      %v1129 = vadd.f32 0.0, %v1128
      %v1130 = vpop.f32.mrb[0].mxu0
      %v1131 = vpop.f32.mrb[0].mxu0
      %v1132 = vadd.f32 0.0, %v1131
      %v1133 = vpop.f32.mrb[0].mxu0
      %1134 = vmatprep.mubr.bf16.mxu0 %v670
      %1135 = vmatmul.mubr.bf16.gmra.mrb[0].mxu0 %v669
      %v1136 = vpop.f32.mrb[0].mxu0
      %v1137 = vadd.f32 0.0, %v1136
      %v1138 = vpop.f32.mrb[0].mxu0
      %v1139 = vpop.f32.mrb[0].mxu0
      %v1140 = vadd.f32 0.0, %v1139
      %v1141 = vpop.f32.mrb[0].mxu0
      %1142 = vmatprep.mubr.bf16.mxu0 %v675
      %1143 = vmatmul.mubr.bf16.gmra.mrb[0].mxu0 %v674
      %v1144 = vpop.f32.mrb[0].mxu0
      %v1145 = vadd.f32 0.0, %v1144
      %v1146 = vpop.f32.mrb[0].mxu0
      %v1147 = vpop.f32.mrb[0].mxu0
      %v1148 = vadd.f32 0.0, %v1147
      %v1149 = vpop.f32.mrb[0].mxu0
      %1150 = vmatprep.mubr.bf16.mxu0 %v680
      %1151 = vmatmul.mubr.bf16.gmra.mrb[0].mxu0 %v679
      %v1152 = vpop.f32.mrb[0].mxu0
      %v1153 = vadd.f32 0.0, %v1152
      %v1154 = vpop.f32.mrb[0].mxu0
      %v1155 = vpop.f32.mrb[0].mxu0
      %v1156 = vadd.f32 0.0, %v1155
      %v1157 = vpop.f32.mrb[0].mxu0
      %1158 = vmatprep.mubr.bf16.mxu0 %v685
      %1159 = vmatmul.mubr.bf16.gmra.mrb[0].mxu0 %v684
      %v1160 = vpop.f32.mrb[0].mxu0
      %v1161 = vadd.f32 0.0, %v1160
      %v1162 = vpop.f32.mrb[0].mxu0
      %v1163 = vpop.f32.mrb[0].mxu0
      %v1164 = vadd.f32 0.0, %v1163
      %v1165 = vpop.f32.mrb[0].mxu0
      %1166 = vmatprep.mubr.bf16.mxu0 %v690
      %1167 = vmatmul.mubr.bf16.gmra.mrb[0].mxu0 %v689
      %v1168 = vpop.f32.mrb[0].mxu0
      %v1169 = vadd.f32 0.0, %v1168
      %v1170 = vpop.f32.mrb[0].mxu0
      %v1171 = vpop.f32.mrb[0].mxu0
      %v1172 = vadd.f32 0.0, %v1171
      %v1173 = vpop.f32.mrb[0].mxu0
      %1174 = vmatprep.mubr.bf16.mxu0 %v695
      %1175 = vmatmul.mubr.bf16.gmra.mrb[0].mxu0 %v694
      %v1176 = vpop.f32.mrb[0].mxu0
      %v1177 = vadd.f32 0.0, %v1176
      %v1178 = vpop.f32.mrb[0].mxu0
      %v1179 = vpop.f32.mrb[0].mxu0
      %v1180 = vadd.f32 0.0, %v1179
      %v1181 = vpop.f32.mrb[0].mxu0
      %1182 = vmatprep.mubr.bf16.mxu0 %v700
      %1183 = vmatmul.mubr.bf16.gmra.mrb[0].mxu0 %v699
      %v1184 = vpop.f32.mrb[0].mxu0
      %v1185 = vadd.f32 0.0, %v1184
      %v1186 = vpop.f32.mrb[0].mxu0
      %v1187 = vpop.f32.mrb[0].mxu0
      %v1188 = vadd.f32 0.0, %v1187
      %v1189 = vpop.f32.mrb[0].mxu0
      %1190 = vmatprep.mubr.bf16.mxu0 %v705
      %1191 = vmatmul.mubr.bf16.gmra.mrb[0].mxu0 %v704
      %v1192 = vpop.f32.mrb[0].mxu0
      %v1193 = vadd.f32 0.0, %v1192
      %v1194 = vpop.f32.mrb[0].mxu0
      %v1195 = vpop.f32.mrb[0].mxu0
      %v1196 = vadd.f32 0.0, %v1195
      %v1197 = vpop.f32.mrb[0].mxu0
      %1198 = vdwg.mxu0
      %1199 = vmatprep.subr.bf16.mxu0 0
      %1200 = vmatpush1.bf16.msra.mxu0 %v933
      %1201 = vmatprep.subr.bf16.mxu0 0
      %1202 = vmatpush1.bf16.msra.mxu0 %v934
      %1203 = vmatprep.subr.bf16.mxu0 0
      %1204 = vmatpush1.bf16.msra.mxu0 %v935
      %1205 = vmatprep.subr.bf16.mxu0 0
      %1206 = vmatpush1.bf16.msra.mxu0 %v936
      %1207 = vmatprep.subr.bf16.mxu0 0
      %1208 = vmatpush1.bf16.msra.mxu0 %v937
      %1209 = vmatprep.subr.bf16.mxu0 0
      %1210 = vmatpush1.bf16.msra.mxu0 %v938
      %1211 = vmatprep.subr.bf16.mxu0 0
      %1212 = vmatpush1.bf16.msra.mxu0 %v939
      %1213 = vmatprep.subr.bf16.mxu0 0
      %1214 = vmatpush1.bf16.msra.mxu0 %v940
      %1215 = vmatprep.subr.bf16.mxu0 0
      %1216 = vmatpush1.bf16.msra.mxu0 %v941
      %1217 = vmatprep.subr.bf16.mxu0 0
      %1218 = vmatpush1.bf16.msra.mxu0 %v942
      %1219 = vmatprep.subr.bf16.mxu0 0
      %1220 = vmatpush1.bf16.msra.mxu0 %v943
      %1221 = vmatprep.subr.bf16.mxu0 0
      %1222 = vmatpush1.bf16.msra.mxu0 %v944
      %1223 = vmatprep.subr.bf16.mxu0 0
      %1224 = vmatpush1.bf16.msra.mxu0 %v945
      %1225 = vmatprep.subr.bf16.mxu0 0
      %1226 = vmatpush1.bf16.msra.mxu0 %v946
      %1227 = vmatprep.subr.bf16.mxu0 0
      %1228 = vmatpush1.bf16.msra.mxu0 %v947
      %1229 = vmatprep.subr.bf16.mxu0 0
      %1230 = vmatpush1.bf16.msra.mxu0 %v948
      %1231 = vmatprep.mubr.bf16.mxu0 %v632
      %1232 = vmatmul.mubr.bf16.gmra.mrb[0].mxu0 %v631
      %v1233 = vpop.f32.mrb[0].mxu0
      %v1234 = vadd.f32 %v1073, %v1233
      %v1235 = vpop.f32.mrb[0].mxu0
      %v1236 = vpop.f32.mrb[0].mxu0
      %v1237 = vadd.f32 %v1076, %v1236
      %v1238 = vpop.f32.mrb[0].mxu0
      %1239 = vmatprep.mubr.bf16.mxu0 %v637
      %1240 = vmatmul.mubr.bf16.gmra.mrb[0].mxu0 %v636
      %v1241 = vpop.f32.mrb[0].mxu0
      %v1242 = vadd.f32 %v1081, %v1241
      %v1243 = vpop.f32.mrb[0].mxu0
      %v1244 = vpop.f32.mrb[0].mxu0
      %v1245 = vadd.f32 %v1084, %v1244
      %v1246 = vpop.f32.mrb[0].mxu0
      %1247 = vmatprep.mubr.bf16.mxu0 %v642
      %1248 = vmatmul.mubr.bf16.gmra.mrb[0].mxu0 %v641
      %v1249 = vpop.f32.mrb[0].mxu0
      %v1250 = vadd.f32 %v1089, %v1249
      %v1251 = vpop.f32.mrb[0].mxu0
      %v1252 = vpop.f32.mrb[0].mxu0
      %v1253 = vadd.f32 %v1092, %v1252
      %v1254 = vpop.f32.mrb[0].mxu0
      %1255 = vmatprep.mubr.bf16.mxu0 %v647
      %1256 = vmatmul.mubr.bf16.gmra.mrb[0].mxu0 %v646
      %v1257 = vpop.f32.mrb[0].mxu0
      %v1258 = vadd.f32 %v1097, %v1257
      %v1259 = vpop.f32.mrb[0].mxu0
      %v1260 = vpop.f32.mrb[0].mxu0
      %v1261 = vadd.f32 %v1100, %v1260
      %v1262 = vpop.f32.mrb[0].mxu0
      %1263 = vmatprep.mubr.bf16.mxu0 %v652
      %1264 = vmatmul.mubr.bf16.gmra.mrb[0].mxu0 %v651
      %v1265 = vpop.f32.mrb[0].mxu0
      %v1266 = vadd.f32 %v1105, %v1265
      %v1267 = vpop.f32.mrb[0].mxu0
      %v1268 = vpop.f32.mrb[0].mxu0
      %v1269 = vadd.f32 %v1108, %v1268
      %v1270 = vpop.f32.mrb[0].mxu0
      %1271 = vmatprep.mubr.bf16.mxu0 %v657
      %1272 = vmatmul.mubr.bf16.gmra.mrb[0].mxu0 %v656
      %v1273 = vpop.f32.mrb[0].mxu0
      %v1274 = vadd.f32 %v1113, %v1273
      %v1275 = vpop.f32.mrb[0].mxu0
      %v1276 = vpop.f32.mrb[0].mxu0
      %v1277 = vadd.f32 %v1116, %v1276
      %v1278 = vpop.f32.mrb[0].mxu0
      %1279 = vmatprep.mubr.bf16.mxu0 %v662
      %1280 = vmatmul.mubr.bf16.gmra.mrb[0].mxu0 %v661
      %v1281 = vpop.f32.mrb[0].mxu0
      %v1282 = vadd.f32 %v1121, %v1281
      %v1283 = vpop.f32.mrb[0].mxu0
      %v1284 = vpop.f32.mrb[0].mxu0
      %v1285 = vadd.f32 %v1124, %v1284
      %v1286 = vpop.f32.mrb[0].mxu0
      %1287 = vmatprep.mubr.bf16.mxu0 %v667
      %1288 = vmatmul.mubr.bf16.gmra.mrb[0].mxu0 %v666
      %v1289 = vpop.f32.mrb[0].mxu0
      %v1290 = vadd.f32 %v1129, %v1289
      %v1291 = vpop.f32.mrb[0].mxu0
      %v1292 = vpop.f32.mrb[0].mxu0
      %v1293 = vadd.f32 %v1132, %v1292
      %v1294 = vpop.f32.mrb[0].mxu0
      %1295 = vmatprep.mubr.bf16.mxu0 %v672
      %1296 = vmatmul.mubr.bf16.gmra.mrb[0].mxu0 %v671
      %v1297 = vpop.f32.mrb[0].mxu0
      %v1298 = vadd.f32 %v1137, %v1297
      %v1299 = vpop.f32.mrb[0].mxu0
      %v1300 = vpop.f32.mrb[0].mxu0
      %v1301 = vadd.f32 %v1140, %v1300
      %v1302 = vpop.f32.mrb[0].mxu0
      %1303 = vmatprep.mubr.bf16.mxu0 %v677
      %1304 = vmatmul.mubr.bf16.gmra.mrb[0].mxu0 %v676
      %v1305 = vpop.f32.mrb[0].mxu0
      %v1306 = vadd.f32 %v1145, %v1305
      %v1307 = vpop.f32.mrb[0].mxu0
      %v1308 = vpop.f32.mrb[0].mxu0
      %v1309 = vadd.f32 %v1148, %v1308
      %v1310 = vpop.f32.mrb[0].mxu0
      %1311 = vmatprep.mubr.bf16.mxu0 %v682
      %1312 = vmatmul.mubr.bf16.gmra.mrb[0].mxu0 %v681
      %v1313 = vpop.f32.mrb[0].mxu0
      %v1314 = vadd.f32 %v1153, %v1313
      %v1315 = vpop.f32.mrb[0].mxu0
      %v1316 = vpop.f32.mrb[0].mxu0
      %v1317 = vadd.f32 %v1156, %v1316
      %v1318 = vpop.f32.mrb[0].mxu0
      %1319 = vmatprep.mubr.bf16.mxu0 %v687
      %1320 = vmatmul.mubr.bf16.gmra.mrb[0].mxu0 %v686
      %v1321 = vpop.f32.mrb[0].mxu0
      %v1322 = vadd.f32 %v1161, %v1321
      %v1323 = vpop.f32.mrb[0].mxu0
      %v1324 = vpop.f32.mrb[0].mxu0
      %v1325 = vadd.f32 %v1164, %v1324
      %v1326 = vpop.f32.mrb[0].mxu0
      %1327 = vmatprep.mubr.bf16.mxu0 %v692
      %1328 = vmatmul.mubr.bf16.gmra.mrb[0].mxu0 %v691
      %v1329 = vpop.f32.mrb[0].mxu0
      %v1330 = vadd.f32 %v1169, %v1329
      %v1331 = vpop.f32.mrb[0].mxu0
      %v1332 = vpop.f32.mrb[0].mxu0
      %v1333 = vadd.f32 %v1172, %v1332
      %v1334 = vpop.f32.mrb[0].mxu0
      %1335 = vmatprep.mubr.bf16.mxu0 %v697
      %1336 = vmatmul.mubr.bf16.gmra.mrb[0].mxu0 %v696
      %v1337 = vpop.f32.mrb[0].mxu0
      %v1338 = vadd.f32 %v1177, %v1337
      %v1339 = vpop.f32.mrb[0].mxu0
      %v1340 = vpop.f32.mrb[0].mxu0
      %v1341 = vadd.f32 %v1180, %v1340
      %v1342 = vpop.f32.mrb[0].mxu0
      %1343 = vmatprep.mubr.bf16.mxu0 %v702
      %1344 = vmatmul.mubr.bf16.gmra.mrb[0].mxu0 %v701
      %v1345 = vpop.f32.mrb[0].mxu0
      %v1346 = vadd.f32 %v1185, %v1345
      %v1347 = vpop.f32.mrb[0].mxu0
      %v1348 = vpop.f32.mrb[0].mxu0
      %v1349 = vadd.f32 %v1188, %v1348
      %v1350 = vpop.f32.mrb[0].mxu0
      %1351 = vmatprep.mubr.bf16.mxu0 %v707
      %1352 = vmatmul.mubr.bf16.gmra.mrb[0].mxu0 %v706
      %v1353 = vpop.f32.mrb[0].mxu0
      %v1354 = vadd.f32 %v1193, %v1353
      %v1355 = vpop.f32.mrb[0].mxu0
      %v1356 = vpop.f32.mrb[0].mxu0
      %v1357 = vadd.f32 %v1196, %v1356
      %v1358 = vpop.f32.mrb[0].mxu0
      %1359 = vdwg.mxu0
      %1360 = vmatprep.subr.bf16.mxu0 0
      %1361 = vmatpush1.bf16.msra.mxu0 %v949
      %1362 = vmatprep.subr.bf16.mxu0 0
      %1363 = vmatpush1.bf16.msra.mxu0 %v950
      %1364 = vmatprep.subr.bf16.mxu0 0
      %1365 = vmatpush1.bf16.msra.mxu0 %v951
      %1366 = vmatprep.subr.bf16.mxu0 0
      %1367 = vmatpush1.bf16.msra.mxu0 %v952
      %1368 = vmatprep.subr.bf16.mxu0 0
      %1369 = vmatpush1.bf16.msra.mxu0 0
      %1370 = vmatprep.subr.bf16.mxu0 0
      %1371 = vmatpush1.bf16.msra.mxu0 0
      %1372 = vmatprep.subr.bf16.mxu0 0
      %1373 = vmatpush1.bf16.msra.mxu0 0
      %1374 = vmatprep.subr.bf16.mxu0 0
      %1375 = vmatpush1.bf16.msra.mxu0 0
      %1376 = vmatprep.subr.bf16.mxu0 0
      %1377 = vmatpush1.bf16.msra.mxu0 0
      %1378 = vmatprep.subr.bf16.mxu0 0
      %1379 = vmatpush1.bf16.msra.mxu0 0
      %1380 = vmatprep.subr.bf16.mxu0 0
      %1381 = vmatpush1.bf16.msra.mxu0 0
      %1382 = vmatprep.subr.bf16.mxu0 0
      %1383 = vmatpush1.bf16.msra.mxu0 0
      %1384 = vmatprep.subr.bf16.mxu0 0
      %1385 = vmatpush1.bf16.msra.mxu0 0
      %1386 = vmatprep.subr.bf16.mxu0 0
      %1387 = vmatpush1.bf16.msra.mxu0 0
      %1388 = vmatprep.subr.bf16.mxu0 0
      %1389 = vmatpush1.bf16.msra.mxu0 0
      %1390 = vmatprep.subr.bf16.mxu0 0
      %1391 = vmatpush1.bf16.msra.mxu0 0
      %1392 = vmatprep.mubr.bf16.mxu0 0
      %1393 = vmatmul.mubr.bf16.gmra.mrb[0].mxu0 %v991
      %v1394 = vpop.f32.mrb[0].mxu0
      %v1395 = vadd.f32 %v1234, %v1394
      %v1396 = vpop.f32.mrb[0].mxu0
      %v1397 = vpop.f32.mrb[0].mxu0
      %v1398 = vadd.f32 %v1237, %v1397
      %v1399 = vpop.f32.mrb[0].mxu0
      %1400 = vmatprep.mubr.bf16.mxu0 0
      %1401 = vmatmul.mubr.bf16.gmra.mrb[0].mxu0 %v994
      %v1402 = vpop.f32.mrb[0].mxu0
      %v1403 = vadd.f32 %v1242, %v1402
      %v1404 = vpop.f32.mrb[0].mxu0
      %v1405 = vpop.f32.mrb[0].mxu0
      %v1406 = vadd.f32 %v1245, %v1405
      %v1407 = vpop.f32.mrb[0].mxu0
      %1408 = vmatprep.mubr.bf16.mxu0 0
      %1409 = vmatmul.mubr.bf16.gmra.mrb[0].mxu0 %v997
      %v1410 = vpop.f32.mrb[0].mxu0
      %v1411 = vadd.f32 %v1250, %v1410
      %v1412 = vpop.f32.mrb[0].mxu0
      %v1413 = vpop.f32.mrb[0].mxu0
      %v1414 = vadd.f32 %v1253, %v1413
      %v1415 = vpop.f32.mrb[0].mxu0
      %1416 = vmatprep.mubr.bf16.mxu0 0
      %1417 = vmatmul.mubr.bf16.gmra.mrb[0].mxu0 %v1000
      %v1418 = vpop.f32.mrb[0].mxu0
      %v1419 = vadd.f32 %v1258, %v1418
      %v1420 = vpop.f32.mrb[0].mxu0
      %v1421 = vpop.f32.mrb[0].mxu0
      %v1422 = vadd.f32 %v1261, %v1421
      %v1423 = vpop.f32.mrb[0].mxu0
      %1424 = vmatprep.mubr.bf16.mxu0 0
      %1425 = vmatmul.mubr.bf16.gmra.mrb[0].mxu0 %v1003
      %v1426 = vpop.f32.mrb[0].mxu0
      %v1427 = vadd.f32 %v1266, %v1426
      %v1428 = vpop.f32.mrb[0].mxu0
      %v1429 = vpop.f32.mrb[0].mxu0
      %v1430 = vadd.f32 %v1269, %v1429
      %v1431 = vpop.f32.mrb[0].mxu0
      %1432 = vmatprep.mubr.bf16.mxu0 0
      %1433 = vmatmul.mubr.bf16.gmra.mrb[0].mxu0 %v1006
      %v1434 = vpop.f32.mrb[0].mxu0
      %v1435 = vadd.f32 %v1274, %v1434
      %v1436 = vpop.f32.mrb[0].mxu0
      %v1437 = vpop.f32.mrb[0].mxu0
      %v1438 = vadd.f32 %v1277, %v1437
      %v1439 = vpop.f32.mrb[0].mxu0
      %1440 = vmatprep.mubr.bf16.mxu0 0
      %1441 = vmatmul.mubr.bf16.gmra.mrb[0].mxu0 %v1009
      %v1442 = vpop.f32.mrb[0].mxu0
      %v1443 = vadd.f32 %v1282, %v1442
      %v1444 = vpop.f32.mrb[0].mxu0
      %v1445 = vpop.f32.mrb[0].mxu0
      %v1446 = vadd.f32 %v1285, %v1445
      %v1447 = vpop.f32.mrb[0].mxu0
      %1448 = vmatprep.mubr.bf16.mxu0 0
      %1449 = vmatmul.mubr.bf16.gmra.mrb[0].mxu0 %v1012
      %v1450 = vpop.f32.mrb[0].mxu0
      %v1451 = vadd.f32 %v1290, %v1450
      %v1452 = vpop.f32.mrb[0].mxu0
      %v1453 = vpop.f32.mrb[0].mxu0
      %v1454 = vadd.f32 %v1293, %v1453
      %v1455 = vpop.f32.mrb[0].mxu0
      %1456 = vmatprep.mubr.bf16.mxu0 0
      %1457 = vmatmul.mubr.bf16.gmra.mrb[0].mxu0 %v1015
      %v1458 = vpop.f32.mrb[0].mxu0
      %v1459 = vadd.f32 %v1298, %v1458
      %v1460 = vpop.f32.mrb[0].mxu0
      %v1461 = vpop.f32.mrb[0].mxu0
      %v1462 = vadd.f32 %v1301, %v1461
      %v1463 = vpop.f32.mrb[0].mxu0
      %1464 = vmatprep.mubr.bf16.mxu0 0
      %1465 = vmatmul.mubr.bf16.gmra.mrb[0].mxu0 %v1018
      %v1466 = vpop.f32.mrb[0].mxu0
      %v1467 = vadd.f32 %v1306, %v1466
      %v1468 = vpop.f32.mrb[0].mxu0
      %v1469 = vpop.f32.mrb[0].mxu0
      %v1470 = vadd.f32 %v1309, %v1469
      %v1471 = vpop.f32.mrb[0].mxu0
      %1472 = vmatprep.mubr.bf16.mxu0 0
      %1473 = vmatmul.mubr.bf16.gmra.mrb[0].mxu0 %v1021
      %v1474 = vpop.f32.mrb[0].mxu0
      %v1475 = vadd.f32 %v1314, %v1474
      %v1476 = vpop.f32.mrb[0].mxu0
      %v1477 = vpop.f32.mrb[0].mxu0
      %v1478 = vadd.f32 %v1317, %v1477
      %v1479 = vpop.f32.mrb[0].mxu0
      %1480 = vmatprep.mubr.bf16.mxu0 0
      %1481 = vmatmul.mubr.bf16.gmra.mrb[0].mxu0 %v1024
      %v1482 = vpop.f32.mrb[0].mxu0
      %v1483 = vadd.f32 %v1322, %v1482
      %v1484 = vpop.f32.mrb[0].mxu0
      %v1485 = vpop.f32.mrb[0].mxu0
      %v1486 = vadd.f32 %v1325, %v1485
      %v1487 = vpop.f32.mrb[0].mxu0
      %1488 = vmatprep.mubr.bf16.mxu0 0
      %1489 = vmatmul.mubr.bf16.gmra.mrb[0].mxu0 %v1027
      %v1490 = vpop.f32.mrb[0].mxu0
      %v1491 = vadd.f32 %v1330, %v1490
      %v1492 = vpop.f32.mrb[0].mxu0
      %v1493 = vpop.f32.mrb[0].mxu0
      %v1494 = vadd.f32 %v1333, %v1493
      %v1495 = vpop.f32.mrb[0].mxu0
      %1496 = vmatprep.mubr.bf16.mxu0 0
      %1497 = vmatmul.mubr.bf16.gmra.mrb[0].mxu0 %v1030
      %v1498 = vpop.f32.mrb[0].mxu0
      %v1499 = vadd.f32 %v1338, %v1498
      %v1500 = vpop.f32.mrb[0].mxu0
      %v1501 = vpop.f32.mrb[0].mxu0
      %v1502 = vadd.f32 %v1341, %v1501
      %v1503 = vpop.f32.mrb[0].mxu0
      %1504 = vmatprep.mubr.bf16.mxu0 0
      %1505 = vmatmul.mubr.bf16.gmra.mrb[0].mxu0 %v1033
      %v1506 = vpop.f32.mrb[0].mxu0
      %v1507 = vadd.f32 %v1346, %v1506
      %v1508 = vpop.f32.mrb[0].mxu0
      %v1509 = vpop.f32.mrb[0].mxu0
      %v1510 = vadd.f32 %v1349, %v1509
      %v1511 = vpop.f32.mrb[0].mxu0
      %1512 = vmatprep.mubr.bf16.mxu0 0
      %1513 = vmatmul.mubr.bf16.gmra.mrb[0].mxu0 %v1036
      %v1514 = vpop.f32.mrb[0].mxu0
      %v1515 = vadd.f32 %v1354, %v1514
      %v1516 = vpop.f32.mrb[0].mxu0
      %v1517 = vpop.f32.mrb[0].mxu0
      %v1518 = vadd.f32 %v1357, %v1517
      %v1519 = vpop.f32.mrb[0].mxu0
      %1520 = vdwg.mxu0
      %v1521 = vld [vmem:[%s2] sm:$0x1]
      %v1523 = vlaneseq
      %v1524 = vshrl.u32 %v1523, 7
      %v1525 = vsub.s32 0, %v1524
      %v1526 = vrot.slane %v1521, %v1525
      %v1528 = vmul.f32 %v1395, %v1526
      %v1529 = vmul.f32 %v1398, %v1526
      %v1530 = vmul.f32 %v1403, %v1526
      %v1531 = vmul.f32 %v1406, %v1526
      %v1532 = vmul.f32 %v1411, %v1526
      %v1533 = vmul.f32 %v1414, %v1526
      %v1534 = vmul.f32 %v1419, %v1526
      %v1535 = vmul.f32 %v1422, %v1526
      %v1536 = vmul.f32 %v1427, %v1526
      %v1537 = vmul.f32 %v1430, %v1526
      %v1538 = vmul.f32 %v1435, %v1526
      %v1539 = vmul.f32 %v1438, %v1526
      %v1540 = vmul.f32 %v1443, %v1526
      %v1541 = vmul.f32 %v1446, %v1526
      %v1542 = vmul.f32 %v1451, %v1526
      %v1543 = vmul.f32 %v1454, %v1526
      %v1544 = vmul.f32 %v1459, %v1526
      %v1545 = vmul.f32 %v1462, %v1526
      %v1546 = vmul.f32 %v1467, %v1526
      %v1547 = vmul.f32 %v1470, %v1526
      %v1548 = vmul.f32 %v1475, %v1526
      %v1549 = vmul.f32 %v1478, %v1526
      %v1550 = vmul.f32 %v1483, %v1526
      %v1551 = vmul.f32 %v1486, %v1526
      %v1552 = vmul.f32 %v1491, %v1526
      %v1553 = vmul.f32 %v1494, %v1526
      %v1554 = vmul.f32 %v1499, %v1526
      %v1555 = vmul.f32 %v1502, %v1526
      %v1556 = vmul.f32 %v1507, %v1526
      %v1557 = vmul.f32 %v1510, %v1526
      %v1558 = vmul.f32 %v1515, %v1526
      %v1559 = vmul.f32 %v1518, %v1526
      %v1560 = vld [vmem:[%s3] sm:$0x1]
      %v1562 = vlaneseq
      %v1563 = vshrl.u32 %v1562, 7
      %v1564 = vsub.s32 0, %v1563
      %v1565 = vrot.slane %v1560, %v1564
      %v1567 = vadd.f32 %v1528, %v1565
      %v1568 = vadd.f32 %v1529, %v1565
      %v1569 = vadd.f32 %v1530, %v1565
      %v1570 = vadd.f32 %v1531, %v1565
      %v1571 = vadd.f32 %v1532, %v1565
      %v1572 = vadd.f32 %v1533, %v1565
      %v1573 = vadd.f32 %v1534, %v1565
      %v1574 = vadd.f32 %v1535, %v1565
      %v1575 = vadd.f32 %v1536, %v1565
      %v1576 = vadd.f32 %v1537, %v1565
      %v1577 = vadd.f32 %v1538, %v1565
      %v1578 = vadd.f32 %v1539, %v1565
      %v1579 = vadd.f32 %v1540, %v1565
      %v1580 = vadd.f32 %v1541, %v1565
      %v1581 = vadd.f32 %v1542, %v1565
      %v1582 = vadd.f32 %v1543, %v1565
      %v1583 = vadd.f32 %v1544, %v1565
      %v1584 = vadd.f32 %v1545, %v1565
      %v1585 = vadd.f32 %v1546, %v1565
      %v1586 = vadd.f32 %v1547, %v1565
      %v1587 = vadd.f32 %v1548, %v1565
      %v1588 = vadd.f32 %v1549, %v1565
      %v1589 = vadd.f32 %v1550, %v1565
      %v1590 = vadd.f32 %v1551, %v1565
      %v1591 = vadd.f32 %v1552, %v1565
      %v1592 = vadd.f32 %v1553, %v1565
      %v1593 = vadd.f32 %v1554, %v1565
      %v1594 = vadd.f32 %v1555, %v1565
      %v1595 = vadd.f32 %v1556, %v1565
      %v1596 = vadd.f32 %v1557, %v1565
      %v1597 = vadd.f32 %v1558, %v1565
      %v1598 = vadd.f32 %v1559, %v1565
      %v1599 = vmax.f32 %v1567, 0.0
      %v1600 = vmax.f32 %v1568, 0.0
      %v1601 = vmax.f32 %v1569, 0.0
      %v1602 = vmax.f32 %v1570, 0.0
      %v1603 = vmax.f32 %v1571, 0.0
      %v1604 = vmax.f32 %v1572, 0.0
      %v1605 = vmax.f32 %v1573, 0.0
      %v1606 = vmax.f32 %v1574, 0.0
      %v1607 = vmax.f32 %v1575, 0.0
      %v1608 = vmax.f32 %v1576, 0.0
      %v1609 = vmax.f32 %v1577, 0.0
      %v1610 = vmax.f32 %v1578, 0.0
      %v1611 = vmax.f32 %v1579, 0.0
      %v1612 = vmax.f32 %v1580, 0.0
      %v1613 = vmax.f32 %v1581, 0.0
      %v1614 = vmax.f32 %v1582, 0.0
      %v1615 = vmax.f32 %v1583, 0.0
      %v1616 = vmax.f32 %v1584, 0.0
      %v1617 = vmax.f32 %v1585, 0.0
      %v1618 = vmax.f32 %v1586, 0.0
      %v1619 = vmax.f32 %v1587, 0.0
      %v1620 = vmax.f32 %v1588, 0.0
      %v1621 = vmax.f32 %v1589, 0.0
      %v1622 = vmax.f32 %v1590, 0.0
      %v1623 = vmax.f32 %v1591, 0.0
      %v1624 = vmax.f32 %v1592, 0.0
      %v1625 = vmax.f32 %v1593, 0.0
      %v1626 = vmax.f32 %v1594, 0.0
      %v1627 = vmax.f32 %v1595, 0.0
      %v1628 = vmax.f32 %v1596, 0.0
      %v1629 = vmax.f32 %v1597, 0.0
      %v1630 = vmax.f32 %v1598, 0.0
      %1631 = vst.msk [vmem:[%s202] sm:$0xff] %vm989, %v1599
      %1632 = vst.msk [vmem:[%s202 + $0x8] sm:$0xff] %vm989, %v1600
      %1633 = vst.msk [vmem:[%s202 + $0x10] sm:$0xff] %vm989, %v1601
      %1634 = vst.msk [vmem:[%s202 + $0x18] sm:$0xff] %vm989, %v1602
      %1635 = vst.msk [vmem:[%s202 + $0x20] sm:$0xff] %vm989, %v1603
      %1636 = vst.msk [vmem:[%s202 + $0x28] sm:$0xff] %vm989, %v1604
      %1637 = vst.msk [vmem:[%s202 + $0x30] sm:$0xff] %vm989, %v1605
      %1638 = vst.msk [vmem:[%s202 + $0x38] sm:$0xff] %vm989, %v1606
      %1639 = vst.msk [vmem:[%s202 + $0x40] sm:$0xff] %vm989, %v1607
      %1640 = vst.msk [vmem:[%s202 + $0x48] sm:$0xff] %vm989, %v1608
      %1641 = vst.msk [vmem:[%s202 + $0x50] sm:$0xff] %vm989, %v1609
      %1642 = vst.msk [vmem:[%s202 + $0x58] sm:$0xff] %vm989, %v1610
      %1643 = vst.msk [vmem:[%s202 + $0x60] sm:$0xff] %vm989, %v1611
      %1644 = vst.msk [vmem:[%s202 + $0x68] sm:$0xff] %vm989, %v1612
      %1645 = vst.msk [vmem:[%s202 + $0x70] sm:$0xff] %vm989, %v1613
      %1646 = vst.msk [vmem:[%s202 + $0x78] sm:$0xff] %vm989, %v1614
      %1647 = vst.msk [vmem:[%s202 + $0x80] sm:$0xff] %vm989, %v1615
      %1648 = vst.msk [vmem:[%s202 + $0x88] sm:$0xff] %vm989, %v1616
      %1649 = vst.msk [vmem:[%s202 + $0x90] sm:$0xff] %vm989, %v1617
      %1650 = vst.msk [vmem:[%s202 + $0x98] sm:$0xff] %vm989, %v1618
      %1651 = vst.msk [vmem:[%s202 + $0xa0] sm:$0xff] %vm989, %v1619
      %1652 = vst.msk [vmem:[%s202 + $0xa8] sm:$0xff] %vm989, %v1620
      %1653 = vst.msk [vmem:[%s202 + $0xb0] sm:$0xff] %vm989, %v1621
      %1654 = vst.msk [vmem:[%s202 + $0xb8] sm:$0xff] %vm989, %v1622
      %1655 = vst.msk [vmem:[%s202 + $0xc0] sm:$0xff] %vm989, %v1623
      %1656 = vst.msk [vmem:[%s202 + $0xc8] sm:$0xff] %vm989, %v1624
      %1657 = vst.msk [vmem:[%s202 + $0xd0] sm:$0xff] %vm989, %v1625
      %1658 = vst.msk [vmem:[%s202 + $0xd8] sm:$0xff] %vm989, %v1626
      %1659 = vst.msk [vmem:[%s202 + $0xe0] sm:$0xff] %vm989, %v1627
      %1660 = vst.msk [vmem:[%s202 + $0xe8] sm:$0xff] %vm989, %v1628
      %1661 = vst.msk [vmem:[%s202 + $0xf0] sm:$0xff] %vm989, %v1629
      %1662 = vst.msk [vmem:[%s202 + $0xf8] sm:$0xff] %vm989, %v1630
      %s1663 = smul.u32 32, %s15
      %p1664 = scmp.lt.s32.totalorder %s1663, 63
      %s1665 = scalar_select %p1664, %s1663, 63
      %s1666 = smul.addr %s1665, 8
      %s1667 = scalar_lea.vmem %s4, %s1666
      // Predicated region
      $region37: #{superpoint_forward.18} parent=35 // pred_check
        %p1668 = pneg %p122
      $region38: #{superpoint_forward.18} parent=35 // pred_check_branch
        %1670 = sbr.rel (%p1668) target = $region40
      $region39: #{superpoint_forward.18} parent=35 // pred_region
        %s1671 = smul.u32 32, %s15
      $region40: #{superpoint_forward.18} parent=35 // pred_fallthru
        _
    $region36: #{superpoint_forward.18} parent=5 // pred_fallthru
      _
    %p1672 = scmp.le.s32.totalorder 2, %s10
    // Predicated region
    $region41: #{superpoint_forward.18} parent=5 // pred_check
      %p1673 = pneg %p1672
    $region42: #{superpoint_forward.18} parent=5 // pred_check_branch
      %1675 = sbr.rel (%p1673) target = $region44
    $region43: #{superpoint_forward.18} parent=5 // pred_region
      %s1676 = ssub.s32 %s10, 2
      // Predicated region
      $region45: #{superpoint_forward.18} parent=43 // pred_check
        %p1677 = pneg %p128
      $region46: #{superpoint_forward.18} parent=43 // pred_check_branch
        %1679 = sbr.rel (%p1677) target = $region48
      $region47: #{superpoint_forward.18} parent=43 // pred_region
        %s1680 = smul.u32 32, %s16
        %p1681 = scmp.lt.s32.totalorder %s1680, 63
        %s1682 = scalar_select %p1681, %s1680, 63
        %s1683 = smul.addr %s1682, 8
        %s1684 = scalar_lea.vmem %s4, %s1683
      $region48: #{superpoint_forward.18} parent=43 // pred_fallthru
        _
    $region44: #{superpoint_forward.18} parent=5 // pred_fallthru
      _
  $region6: #{superpoint_forward.18} parent=0 // loop_footer
    %s14 = sadd.s32 1, %s10
  $region7: #{superpoint_forward.18} parent=0 // loop_footer_branch
    %9 = sbr.rel target = $region3
  $region8: #{superpoint_forward.18} parent=0 // loop_exit
    _

// kernel: superpoint_forward.19
$region0: #{superpoint_forward.19}
  #allocation0 [shape = 'u32[]', space=smem, size = 0x4, offset = 0x4, fixed_abs, tag = 'smem constant byte address 0x4 - core index']
  #allocation1 [shape = 'u32[144,128]{1,0:T(1,128)}', space=vmem, size = 0x12000, scoped, tag = 'internal scratch']
  %s0 = inlined_call_operand.vmem [shape: f32[16,2048], index: 0, kind: input, shape index: {}, may-alias: {0,1}]
  %s1 = inlined_call_operand.vmem [shape: f32[16,2048], index: 1, kind: input, shape index: {}, may-alias: {0,1}]
  %s2 = inlined_call_operand.vmem [shape: f32[16,1024], index: 2, kind: output, shape index: {}]
  %s3 = sld [smem:[#allocation0]]
  $region41: #{superpoint_forward.19} parent=0
    _
  %s5 = ssub.s32 1, %s3
  %s6 = scalar_select 0, %s5, %s3
  loop: start=0, step=1, limit=4
  $region2: #{superpoint_forward.19} parent=0 // loop_pre_header
    _
  $region3: #{superpoint_forward.19} parent=0 // loop_header
    %s8 = sphi 0, %s12
    %p9 = scmp.ge.s32.totalorder %s8, 4
    %s15 = sphi 0, %s27
    %s16 = sphi 0, %s23
    %s17 = sphi 0, %s15
    %s18 = sphi 0, %s16
    %s19 = sphi 0, %s17
    %s20 = sphi 0, %s18
    %s32 = sphi 0, %s34
    %s35 = sphi 0, %s32
    %s36 = sphi 0, %s35
    %s52 = sphi 0, %s36
    %s62 = sphi 0, %s64
    %s65 = sphi 0, %s62
    %s66 = sphi 0, %s65
    %s82 = sphi 0, %s66
    %s90 = sphi 0, %s92
    %s93 = sphi 0, %s90
    %s94 = sphi 0, %s93
    %s110 = sphi 0, %s94
  $region4: #{superpoint_forward.19} parent=0 // loop_header_branch
    %11 = sbr.rel (%p9) target = $region8
  $region5: #{superpoint_forward.19} parent=0 // loop_body
    %s13 = ssub.s32 %s8, 1
    %s14 = ssub.s32 %s8, 2
    %s21 = sadd.s32 1, %s16
    %p22 = scmp.ge.s32.totalorder %s21, 1
    %s23 = scalar_select %p22, 0, %s21
    %s24 = sadd.s32 1, %s15
    %s25 = scalar_select %p22, %s24, %s15
    %p26 = scmp.ge.s32.totalorder %s25, 2
    %s27 = scalar_select %p26, 0, %s25
    %s28 = ssub.s32 %s15, %s27
    %s29 = ssub.s32 %s16, %s23
    %s30 = sor.u32 %s28, %s29
    %p31 = scmp.eq.s32.totalorder %s30, 0
    %s33 = sadd.s32 %s32, 1
    %s34 = scalar_select %p31, %s32, %s33
    %p37 = pneg %p31
    %p38 = scmp.eq.s32.totalorder %s8, 1
    %p39 = por %p37, %p38
    %p40 = scmp.ne.s32.totalorder %s32, %s35
    %p41 = scmp.eq.s32.totalorder %s8, 0
    %p42 = por %p40, %p41
    %p43 = scmp.ne.s32.totalorder %s32, %s35
    %p44 = scmp.eq.s32.totalorder %s13, 1
    %p45 = por %p43, %p44
    %p46 = scmp.ne.s32.totalorder %s35, %s36
    %p47 = scmp.eq.s32.totalorder %s13, 0
    %p48 = por %p46, %p47
    %p49 = scmp.ne.s32.totalorder %s35, %s36
    %p50 = scmp.eq.s32.totalorder %s14, 1
    %p51 = por %p49, %p50
    %p53 = scmp.ne.s32.totalorder %s36, %s52
    %p54 = scmp.eq.s32.totalorder %s14, 0
    %p55 = por %p53, %p54
    %s56 = sadd.s32 %s16, 1
    %s57 = sadd.s32 %s23, 1
    %s58 = ssub.s32 %s15, %s27
    %s59 = ssub.s32 %s56, %s57
    %s60 = sor.u32 %s58, %s59
    %p61 = scmp.eq.s32.totalorder %s60, 0
    %s63 = sadd.s32 %s62, 1
    %s64 = scalar_select %p61, %s62, %s63
    %p67 = pneg %p61
    %p68 = scmp.eq.s32.totalorder %s8, 1
    %p69 = por %p67, %p68
    %p70 = scmp.ne.s32.totalorder %s62, %s65
    %p71 = scmp.eq.s32.totalorder %s8, 0
    %p72 = por %p70, %p71
    %p73 = scmp.ne.s32.totalorder %s62, %s65
    %p74 = scmp.eq.s32.totalorder %s13, 1
    %p75 = por %p73, %p74
    %p76 = scmp.ne.s32.totalorder %s65, %s66
    %p77 = scmp.eq.s32.totalorder %s13, 0
    %p78 = por %p76, %p77
    %p79 = scmp.ne.s32.totalorder %s65, %s66
    %p80 = scmp.eq.s32.totalorder %s14, 1
    %p81 = por %p79, %p80
    %p83 = scmp.ne.s32.totalorder %s66, %s82
    %p84 = scmp.eq.s32.totalorder %s14, 0
    %p85 = por %p83, %p84
    %s86 = ssub.s32 %s15, %s27
    %s87 = ssub.s32 %s16, %s23
    %s88 = sor.u32 %s86, %s87
    %p89 = scmp.eq.s32.totalorder %s88, 0
    %s91 = sadd.s32 %s90, 1
    %s92 = scalar_select %p89, %s90, %s91
    %p95 = pneg %p89
    %p96 = scmp.eq.s32.totalorder %s8, 1
    %p97 = por %p95, %p96
    %p98 = scmp.ne.s32.totalorder %s90, %s93
    %p99 = scmp.eq.s32.totalorder %s8, 0
    %p100 = por %p98, %p99
    %p101 = scmp.ne.s32.totalorder %s90, %s93
    %p102 = scmp.eq.s32.totalorder %s13, 1
    %p103 = por %p101, %p102
    %p104 = scmp.ne.s32.totalorder %s93, %s94
    %p105 = scmp.eq.s32.totalorder %s13, 0
    %p106 = por %p104, %p105
    %p107 = scmp.ne.s32.totalorder %s93, %s94
    %p108 = scmp.eq.s32.totalorder %s14, 1
    %p109 = por %p107, %p108
    %p111 = scmp.ne.s32.totalorder %s94, %s110
    %p112 = scmp.eq.s32.totalorder %s14, 0
    %p113 = por %p111, %p112
    %p114 = scmp.le.s32.totalorder 1, %s8
    %p115 = scmp.lt.s32.totalorder %s8, 3
    %p116 = pnand %p114, %p115
    %p117 = pneg %p116
    // Predicated region
    $region9: #{superpoint_forward.19} parent=5 // pred_check
      _
    $region10: #{superpoint_forward.19} parent=5 // pred_check_branch
      %119 = sbr.rel (%p116) target = $region12
    $region11: #{superpoint_forward.19} parent=5 // pred_region
      %s120 = ssub.s32 %s8, 1
    $region12: #{superpoint_forward.19} parent=5 // pred_fallthru
      _
    %p121 = scmp.lt.s32.totalorder %s8, 2
    // Predicated region
    $region13: #{superpoint_forward.19} parent=5 // pred_check
      %p122 = pneg %p121
    $region14: #{superpoint_forward.19} parent=5 // pred_check_branch
      %124 = sbr.rel (%p122) target = $region16
    $region15: #{superpoint_forward.19} parent=5 // pred_region
      // Predicated region
      $region17: #{superpoint_forward.19} parent=15 // pred_check
        %p125 = pneg %p42
      $region18: #{superpoint_forward.19} parent=15 // pred_check_branch
        %127 = sbr.rel (%p125) target = $region20
      $region19: #{superpoint_forward.19} parent=15 // pred_region
        %s128 = smul.u32 8, %s16
        %p129 = scmp.lt.s32.totalorder %s15, 1
        %s130 = scalar_select %p129, %s15, 1
        %p131 = scmp.lt.s32.totalorder %s128, 15
        %s132 = scalar_select %p131, %s128, 15
        %s133 = smul.addr %s130, 16
        %s134 = sadd.s32 %s132, %s133
        %s135 = smul.addr %s134, 8
        %s136 = scalar_lea.vmem %s0, %s135
        %s137 = smul.u32 8, %s16
      $region20: #{superpoint_forward.19} parent=15 // pred_fallthru
        _
      // Predicated region
      $region21: #{superpoint_forward.19} parent=15 // pred_check
        %p138 = pneg %p72
      $region22: #{superpoint_forward.19} parent=15 // pred_check_branch
        %140 = sbr.rel (%p138) target = $region24
      $region23: #{superpoint_forward.19} parent=15 // pred_region
        %s141 = sadd.s32 %s16, 1
        %s142 = smul.u32 8, %s141
        %p143 = scmp.lt.s32.totalorder %s15, 1
        %s144 = scalar_select %p143, %s15, 1
        %p145 = scmp.lt.s32.totalorder %s142, 15
        %s146 = scalar_select %p145, %s142, 15
        %s147 = smul.addr %s144, 16
        %s148 = sadd.s32 %s146, %s147
        %s149 = smul.addr %s148, 8
        %s150 = scalar_lea.vmem %s1, %s149
        %s151 = sadd.s32 %s16, 1
        %s152 = smul.u32 8, %s151
      $region24: #{superpoint_forward.19} parent=15 // pred_fallthru
        _
    $region16: #{superpoint_forward.19} parent=5 // pred_fallthru
      _
    %p153 = scmp.le.s32.totalorder 1, %s8
    %p154 = scmp.lt.s32.totalorder %s8, 3
    %p155 = pnand %p153, %p154
    %p156 = pneg %p155
    // Predicated region
    $region25: #{superpoint_forward.19} parent=5 // pred_check
      _
    $region26: #{superpoint_forward.19} parent=5 // pred_check_branch
      %158 = sbr.rel (%p155) target = $region28
    $region27: #{superpoint_forward.19} parent=5 // pred_region
      %s159 = ssub.s32 %s8, 1
      %s160 = smul.u32 8, %s18
      %p161 = scmp.lt.s32.totalorder %s17, 1
      %s162 = scalar_select %p161, %s17, 1
      %p163 = scmp.lt.s32.totalorder %s160, 15
      %s164 = scalar_select %p163, %s160, 15
      %s165 = smul.addr %s162, 16
      %s166 = sadd.s32 %s164, %s165
      %s167 = smul.addr %s166, 8
      %s168 = scalar_lea.vmem %s0, %s167
      %p169 = pneg %p48
      %p170 = pneg %p45
      %s171 = sadd.s32 %s18, 1
      %s172 = smul.u32 8, %s171
      %p173 = scmp.lt.s32.totalorder %s17, 1
      %s174 = scalar_select %p173, %s17, 1
      %p175 = scmp.lt.s32.totalorder %s172, 15
      %s176 = scalar_select %p175, %s172, 15
      %s177 = smul.addr %s174, 16
      %s178 = sadd.s32 %s176, %s177
      %s179 = smul.addr %s178, 8
      %s180 = scalar_lea.vmem %s1, %s179
      %p181 = pneg %p78
      %p182 = pneg %p75
      %p183 = pneg %p106
      %p184 = pneg %p103
      %s185 = smul.u32 8, %s18
      %p186 = scmp.lt.s32.totalorder %s17, 1
      %s187 = scalar_select %p186, %s17, 1
      %p188 = scmp.lt.s32.totalorder %s185, 7
      %s189 = scalar_select %p188, %s185, 7
      %s190 = smul.addr %s187, 8
      %s191 = sadd.s32 %s189, %s190
      %s192 = smul.addr %s191, 8
      %s193 = scalar_lea.vmem %s2, %s192
      %s194 = smul.u32 8, %s18
      %p195 = scmp.lt.s32.totalorder %s17, 1
      %s196 = scalar_select %p195, %s17, 1
      %p197 = scmp.lt.s32.totalorder %s194, 15
      %s198 = scalar_select %p197, %s194, 15
      %s199 = smul.addr %s196, 16
      %s200 = sadd.s32 %s198, %s199
      %s201 = smul.addr %s200, 8
      %s202 = scalar_lea.vmem %s0, %s201
      %s203 = smul.u32 8, %s18
      %s204 = sadd.s32 %s18, 1
      %s205 = smul.u32 8, %s204
      %p206 = scmp.lt.s32.totalorder %s17, 1
      %s207 = scalar_select %p206, %s17, 1
      %p208 = scmp.lt.s32.totalorder %s205, 15
      %s209 = scalar_select %p208, %s205, 15
      %s210 = smul.addr %s207, 16
      %s211 = sadd.s32 %s209, %s210
      %s212 = smul.addr %s211, 8
      %s213 = scalar_lea.vmem %s1, %s212
      %s214 = sadd.s32 %s18, 1
      %s215 = smul.u32 8, %s214
      %s216 = smul.u32 8, %s18
      %p217 = scmp.lt.s32.totalorder %s17, 1
      %s218 = scalar_select %p217, %s17, 1
      %p219 = scmp.lt.s32.totalorder %s216, 7
      %s220 = scalar_select %p219, %s216, 7
      %s221 = smul.addr %s218, 8
      %s222 = sadd.s32 %s220, %s221
      %s223 = smul.addr %s222, 8
      %s224 = scalar_lea.vmem %s2, %s223
      %s225 = smul.u32 8, %s18
      %v226 = vld [vmem:[%s202] sm:$0xff]
      %v227 = vld [vmem:[%s202 + $0x8] sm:$0xff]
      %v228 = vld [vmem:[%s202 + $0x10] sm:$0xff]
      %v229 = vld [vmem:[%s202 + $0x18] sm:$0xff]
      %v230 = vld [vmem:[%s202 + $0x20] sm:$0xff]
      %v231 = vld [vmem:[%s202 + $0x28] sm:$0xff]
      %v232 = vld [vmem:[%s202 + $0x30] sm:$0xff]
      %v233 = vld [vmem:[%s202 + $0x38] sm:$0xff]
      %v234 = vld [vmem:[%s213] sm:$0xff]
      %v235 = vld [vmem:[%s213 + $0x8] sm:$0xff]
      %v236 = vld [vmem:[%s213 + $0x10] sm:$0xff]
      %v237 = vld [vmem:[%s213 + $0x18] sm:$0xff]
      %v238 = vld [vmem:[%s213 + $0x20] sm:$0xff]
      %v239 = vld [vmem:[%s213 + $0x28] sm:$0xff]
      %v240 = vld [vmem:[%s213 + $0x30] sm:$0xff]
      %v241 = vld [vmem:[%s213 + $0x38] sm:$0xff]
      %v242 = vmax.f32 %v226, %v234
      %v243 = vmax.f32 %v227, %v235
      %v244 = vmax.f32 %v228, %v236
      %v245 = vmax.f32 %v229, %v237
      %v246 = vmax.f32 %v230, %v238
      %v247 = vmax.f32 %v231, %v239
      %v248 = vmax.f32 %v232, %v240
      %v249 = vmax.f32 %v233, %v241
      %250 = vst [vmem:[%s224] sm:$0xff] %v242
      %251 = vst [vmem:[%s224 + $0x8] sm:$0xff] %v243
      %252 = vst [vmem:[%s224 + $0x10] sm:$0xff] %v244
      %253 = vst [vmem:[%s224 + $0x18] sm:$0xff] %v245
      %254 = vst [vmem:[%s224 + $0x20] sm:$0xff] %v246
      %255 = vst [vmem:[%s224 + $0x28] sm:$0xff] %v247
      %256 = vst [vmem:[%s224 + $0x30] sm:$0xff] %v248
      %257 = vst [vmem:[%s224 + $0x38] sm:$0xff] %v249
      %s258 = smul.u32 8, %s18
      %p259 = scmp.lt.s32.totalorder %s17, 1
      %s260 = scalar_select %p259, %s17, 1
      %p261 = scmp.lt.s32.totalorder %s258, 7
      %s262 = scalar_select %p261, %s258, 7
      %s263 = smul.addr %s260, 8
      %s264 = sadd.s32 %s262, %s263
      %s265 = smul.addr %s264, 8
      %s266 = scalar_lea.vmem %s2, %s265
      // Predicated region
      $region29: #{superpoint_forward.19} parent=27 // pred_check
        %p267 = pneg %p103
      $region30: #{superpoint_forward.19} parent=27 // pred_check_branch
        %269 = sbr.rel (%p267) target = $region32
      $region31: #{superpoint_forward.19} parent=27 // pred_region
        %s270 = smul.u32 8, %s18
      $region32: #{superpoint_forward.19} parent=27 // pred_fallthru
        _
    $region28: #{superpoint_forward.19} parent=5 // pred_fallthru
      _
    %p271 = scmp.le.s32.totalorder 2, %s8
    // Predicated region
    $region33: #{superpoint_forward.19} parent=5 // pred_check
      %p272 = pneg %p271
    $region34: #{superpoint_forward.19} parent=5 // pred_check_branch
      %274 = sbr.rel (%p272) target = $region36
    $region35: #{superpoint_forward.19} parent=5 // pred_region
      %s275 = ssub.s32 %s8, 2
      // Predicated region
      $region37: #{superpoint_forward.19} parent=35 // pred_check
        %p276 = pneg %p109
      $region38: #{superpoint_forward.19} parent=35 // pred_check_branch
        %278 = sbr.rel (%p276) target = $region40
      $region39: #{superpoint_forward.19} parent=35 // pred_region
        %s279 = smul.u32 8, %s20
        %p280 = scmp.lt.s32.totalorder %s19, 1
        %s281 = scalar_select %p280, %s19, 1
        %p282 = scmp.lt.s32.totalorder %s279, 7
        %s283 = scalar_select %p282, %s279, 7
        %s284 = smul.addr %s281, 8
        %s285 = sadd.s32 %s283, %s284
        %s286 = smul.addr %s285, 8
        %s287 = scalar_lea.vmem %s2, %s286
      $region40: #{superpoint_forward.19} parent=35 // pred_fallthru
        _
    $region36: #{superpoint_forward.19} parent=5 // pred_fallthru
      _
  $region6: #{superpoint_forward.19} parent=0 // loop_footer
    %s12 = sadd.s32 1, %s8
  $region7: #{superpoint_forward.19} parent=0 // loop_footer_branch
    %7 = sbr.rel target = $region3
  $region8: #{superpoint_forward.19} parent=0 // loop_exit
    _

// kernel: superpoint_forward.20
$region0: #{superpoint_forward.20}
  #allocation0 [shape = 'u32[]', space=smem, size = 0x4, offset = 0x4, fixed_abs, tag = 'smem constant byte address 0x4 - core index']
  #allocation1 [shape = 'u32[144,128]{1,0:T(1,128)}', space=vmem, size = 0x12000, scoped, tag = 'internal scratch']
  %s0 = inlined_call_operand.vmem [shape: f32[16,1024], index: 0, kind: input, shape index: {}]
  %s1 = inlined_call_operand.vmem [shape: f32[16,512], index: 1, kind: output, shape index: {}]
  %s2 = sld [smem:[#allocation0]]
  $region37: #{superpoint_forward.20} parent=0
    _
  %s4 = ssub.s32 1, %s2
  %s5 = scalar_select 0, %s4, %s2
  loop: start=0, step=1, limit=4
  $region2: #{superpoint_forward.20} parent=0 // loop_pre_header
    _
  $region3: #{superpoint_forward.20} parent=0 // loop_header
    %s7 = sphi 0, %s11
    %p8 = scmp.ge.s32.totalorder %s7, 4
    %s14 = sphi 0, %s26
    %s15 = sphi 0, %s22
    %s16 = sphi 0, %s14
    %s17 = sphi 0, %s15
    %s18 = sphi 0, %s16
    %s19 = sphi 0, %s17
    %s31 = sphi 0, %s33
    %s34 = sphi 0, %s31
    %s35 = sphi 0, %s34
    %s51 = sphi 0, %s35
    %s59 = sphi 0, %s61
    %s62 = sphi 0, %s59
    %s63 = sphi 0, %s62
    %s79 = sphi 0, %s63
  $region4: #{superpoint_forward.20} parent=0 // loop_header_branch
    %10 = sbr.rel (%p8) target = $region8
  $region5: #{superpoint_forward.20} parent=0 // loop_body
    %s12 = ssub.s32 %s7, 1
    %s13 = ssub.s32 %s7, 2
    %s20 = sadd.s32 1, %s15
    %p21 = scmp.ge.s32.totalorder %s20, 1
    %s22 = scalar_select %p21, 0, %s20
    %s23 = sadd.s32 1, %s14
    %s24 = scalar_select %p21, %s23, %s14
    %p25 = scmp.ge.s32.totalorder %s24, 2
    %s26 = scalar_select %p25, 0, %s24
    %s27 = ssub.s32 %s14, %s26
    %s28 = ssub.s32 %s15, %s22
    %s29 = sor.u32 %s27, %s28
    %p30 = scmp.eq.s32.totalorder %s29, 0
    %s32 = sadd.s32 %s31, 1
    %s33 = scalar_select %p30, %s31, %s32
    %p36 = pneg %p30
    %p37 = scmp.eq.s32.totalorder %s7, 1
    %p38 = por %p36, %p37
    %p39 = scmp.ne.s32.totalorder %s31, %s34
    %p40 = scmp.eq.s32.totalorder %s7, 0
    %p41 = por %p39, %p40
    %p42 = scmp.ne.s32.totalorder %s31, %s34
    %p43 = scmp.eq.s32.totalorder %s12, 1
    %p44 = por %p42, %p43
    %p45 = scmp.ne.s32.totalorder %s34, %s35
    %p46 = scmp.eq.s32.totalorder %s12, 0
    %p47 = por %p45, %p46
    %p48 = scmp.ne.s32.totalorder %s34, %s35
    %p49 = scmp.eq.s32.totalorder %s13, 1
    %p50 = por %p48, %p49
    %p52 = scmp.ne.s32.totalorder %s35, %s51
    %p53 = scmp.eq.s32.totalorder %s13, 0
    %p54 = por %p52, %p53
    %s55 = ssub.s32 %s14, %s26
    %s56 = ssub.s32 %s15, %s22
    %s57 = sor.u32 %s55, %s56
    %p58 = scmp.eq.s32.totalorder %s57, 0
    %s60 = sadd.s32 %s59, 1
    %s61 = scalar_select %p58, %s59, %s60
    %p64 = pneg %p58
    %p65 = scmp.eq.s32.totalorder %s7, 1
    %p66 = por %p64, %p65
    %p67 = scmp.ne.s32.totalorder %s59, %s62
    %p68 = scmp.eq.s32.totalorder %s7, 0
    %p69 = por %p67, %p68
    %p70 = scmp.ne.s32.totalorder %s59, %s62
    %p71 = scmp.eq.s32.totalorder %s12, 1
    %p72 = por %p70, %p71
    %p73 = scmp.ne.s32.totalorder %s62, %s63
    %p74 = scmp.eq.s32.totalorder %s12, 0
    %p75 = por %p73, %p74
    %p76 = scmp.ne.s32.totalorder %s62, %s63
    %p77 = scmp.eq.s32.totalorder %s13, 1
    %p78 = por %p76, %p77
    %p80 = scmp.ne.s32.totalorder %s63, %s79
    %p81 = scmp.eq.s32.totalorder %s13, 0
    %p82 = por %p80, %p81
    %p83 = scmp.le.s32.totalorder 1, %s7
    %p84 = scmp.lt.s32.totalorder %s7, 3
    %p85 = pnand %p83, %p84
    %p86 = pneg %p85
    // Predicated region
    $region9: #{superpoint_forward.20} parent=5 // pred_check
      _
    $region10: #{superpoint_forward.20} parent=5 // pred_check_branch
      %88 = sbr.rel (%p85) target = $region12
    $region11: #{superpoint_forward.20} parent=5 // pred_region
      %s89 = ssub.s32 %s7, 1
    $region12: #{superpoint_forward.20} parent=5 // pred_fallthru
      _
    %p90 = scmp.lt.s32.totalorder %s7, 2
    // Predicated region
    $region13: #{superpoint_forward.20} parent=5 // pred_check
      %p91 = pneg %p90
    $region14: #{superpoint_forward.20} parent=5 // pred_check_branch
      %93 = sbr.rel (%p91) target = $region16
    $region15: #{superpoint_forward.20} parent=5 // pred_region
      // Predicated region
      $region17: #{superpoint_forward.20} parent=15 // pred_check
        %p94 = pneg %p41
      $region18: #{superpoint_forward.20} parent=15 // pred_check_branch
        %96 = sbr.rel (%p94) target = $region20
      $region19: #{superpoint_forward.20} parent=15 // pred_region
        %s97 = smul.u32 8, %s15
        %p98 = scmp.lt.s32.totalorder %s14, 1
        %s99 = scalar_select %p98, %s14, 1
        %p100 = scmp.lt.s32.totalorder %s97, 7
        %s101 = scalar_select %p100, %s97, 7
        %s102 = smul.addr %s99, 8
        %s103 = sadd.s32 %s101, %s102
        %s104 = smul.addr %s103, 8
        %s105 = scalar_lea.vmem %s0, %s104
        %s106 = smul.u32 8, %s15
      $region20: #{superpoint_forward.20} parent=15 // pred_fallthru
        _
    $region16: #{superpoint_forward.20} parent=5 // pred_fallthru
      _
    %p107 = scmp.le.s32.totalorder 1, %s7
    %p108 = scmp.lt.s32.totalorder %s7, 3
    %p109 = pnand %p107, %p108
    %p110 = pneg %p109
    // Predicated region
    $region21: #{superpoint_forward.20} parent=5 // pred_check
      _
    $region22: #{superpoint_forward.20} parent=5 // pred_check_branch
      %112 = sbr.rel (%p109) target = $region24
    $region23: #{superpoint_forward.20} parent=5 // pred_region
      %s113 = ssub.s32 %s7, 1
      %s114 = smul.u32 8, %s17
      %p115 = scmp.lt.s32.totalorder %s16, 1
      %s116 = scalar_select %p115, %s16, 1
      %p117 = scmp.lt.s32.totalorder %s114, 7
      %s118 = scalar_select %p117, %s114, 7
      %s119 = smul.addr %s116, 8
      %s120 = sadd.s32 %s118, %s119
      %s121 = smul.addr %s120, 8
      %s122 = scalar_lea.vmem %s0, %s121
      %p123 = pneg %p47
      %p124 = pneg %p44
      %p125 = pneg %p75
      %p126 = pneg %p72
      %s127 = smul.u32 4, %s17
      %p128 = scmp.lt.s32.totalorder %s16, 1
      %s129 = scalar_select %p128, %s16, 1
      %p130 = scmp.lt.s32.totalorder %s127, 3
      %s131 = scalar_select %p130, %s127, 3
      %s132 = smul.addr %s129, 4
      %s133 = sadd.s32 %s131, %s132
      %s134 = smul.addr %s133, 8
      %s135 = scalar_lea.vmem %s1, %s134
      %s136 = smul.u32 8, %s17
      %p137 = scmp.lt.s32.totalorder %s16, 1
      %s138 = scalar_select %p137, %s16, 1
      %p139 = scmp.lt.s32.totalorder %s136, 7
      %s140 = scalar_select %p139, %s136, 7
      %s141 = smul.addr %s138, 8
      %s142 = sadd.s32 %s140, %s141
      %s143 = smul.addr %s142, 8
      %s144 = scalar_lea.vmem %s0, %s143
      %s145 = smul.u32 8, %s17
      %s146 = smul.u32 4, %s17
      %p147 = scmp.lt.s32.totalorder %s16, 1
      %s148 = scalar_select %p147, %s16, 1
      %p149 = scmp.lt.s32.totalorder %s146, 3
      %s150 = scalar_select %p149, %s146, 3
      %s151 = smul.addr %s148, 4
      %s152 = sadd.s32 %s150, %s151
      %s153 = smul.addr %s152, 8
      %s154 = scalar_lea.vmem %s1, %s153
      %s155 = smul.u32 4, %s17
      %v156 = vld [vmem:[%s144] sm:$0xff]
      %v157 = vld [vmem:[%s144 + $0x8] sm:$0xff]
      %v158 = vld [vmem:[%s144 + $0x10] sm:$0xff]
      %v159 = vld [vmem:[%s144 + $0x18] sm:$0xff]
      %v160 = vld [vmem:[%s144 + $0x20] sm:$0xff]
      %v161 = vld [vmem:[%s144 + $0x28] sm:$0xff]
      %v162 = vld [vmem:[%s144 + $0x30] sm:$0xff]
      %v163 = vld [vmem:[%s144 + $0x38] sm:$0xff]
      %165 = vrot.lane.b32.xlu0 %v156, 64
      %v166 = vpop.permute.xlu0 %165
      %v168 = vmax.f32 %v156, %v166
      %170 = vrot.lane.b32.xlu0 %v157, 64
      %v171 = vpop.permute.xlu0 %170
      %v173 = vmax.f32 %v157, %v171
      %175 = vrot.lane.b32.xlu0 %v158, 64
      %v176 = vpop.permute.xlu0 %175
      %v178 = vmax.f32 %v158, %v176
      %180 = vrot.lane.b32.xlu0 %v159, 64
      %v181 = vpop.permute.xlu0 %180
      %v183 = vmax.f32 %v159, %v181
      %185 = vrot.lane.b32.xlu0 %v160, 64
      %v186 = vpop.permute.xlu0 %185
      %v188 = vmax.f32 %v160, %v186
      %190 = vrot.lane.b32.xlu0 %v161, 64
      %v191 = vpop.permute.xlu0 %190
      %v193 = vmax.f32 %v161, %v191
      %195 = vrot.lane.b32.xlu0 %v162, 64
      %v196 = vpop.permute.xlu0 %195
      %v198 = vmax.f32 %v162, %v196
      %200 = vrot.lane.b32.xlu0 %v163, 64
      %v201 = vpop.permute.xlu0 %200
      %v203 = vmax.f32 %v163, %v201
      %205 = vrot.lane.b32.xlu0 %v173, 64
      %v206 = vpop.permute.xlu0 %205
      %209 = vrot.lane.b32.xlu0 %v183, 64
      %v210 = vpop.permute.xlu0 %209
      %213 = vrot.lane.b32.xlu0 %v193, 64
      %v214 = vpop.permute.xlu0 %213
      %217 = vrot.lane.b32.xlu0 %v203, 64
      %v218 = vpop.permute.xlu0 %217
      %vm220 = vcmask 523264
      %v221 = vsel %vm220, %v168, %v206
      %v222 = vsel %vm220, %v178, %v210
      %v223 = vsel %vm220, %v188, %v214
      %v224 = vsel %vm220, %v198, %v218
      %225 = vst [vmem:[%s154] sm:$0xff] %v221
      %226 = vst [vmem:[%s154 + $0x8] sm:$0xff] %v222
      %227 = vst [vmem:[%s154 + $0x10] sm:$0xff] %v223
      %228 = vst [vmem:[%s154 + $0x18] sm:$0xff] %v224
      %s229 = smul.u32 4, %s17
      %p230 = scmp.lt.s32.totalorder %s16, 1
      %s231 = scalar_select %p230, %s16, 1
      %p232 = scmp.lt.s32.totalorder %s229, 3
      %s233 = scalar_select %p232, %s229, 3
      %s234 = smul.addr %s231, 4
      %s235 = sadd.s32 %s233, %s234
      %s236 = smul.addr %s235, 8
      %s237 = scalar_lea.vmem %s1, %s236
      // Predicated region
      $region25: #{superpoint_forward.20} parent=23 // pred_check
        %p238 = pneg %p72
      $region26: #{superpoint_forward.20} parent=23 // pred_check_branch
        %240 = sbr.rel (%p238) target = $region28
      $region27: #{superpoint_forward.20} parent=23 // pred_region
        %s241 = smul.u32 4, %s17
      $region28: #{superpoint_forward.20} parent=23 // pred_fallthru
        _
    $region24: #{superpoint_forward.20} parent=5 // pred_fallthru
      _
    %p242 = scmp.le.s32.totalorder 2, %s7
    // Predicated region
    $region29: #{superpoint_forward.20} parent=5 // pred_check
      %p243 = pneg %p242
    $region30: #{superpoint_forward.20} parent=5 // pred_check_branch
      %245 = sbr.rel (%p243) target = $region32
    $region31: #{superpoint_forward.20} parent=5 // pred_region
      %s246 = ssub.s32 %s7, 2
      // Predicated region
      $region33: #{superpoint_forward.20} parent=31 // pred_check
        %p247 = pneg %p78
      $region34: #{superpoint_forward.20} parent=31 // pred_check_branch
        %249 = sbr.rel (%p247) target = $region36
      $region35: #{superpoint_forward.20} parent=31 // pred_region
        %s250 = smul.u32 4, %s19
        %p251 = scmp.lt.s32.totalorder %s18, 1
        %s252 = scalar_select %p251, %s18, 1
        %p253 = scmp.lt.s32.totalorder %s250, 3
        %s254 = scalar_select %p253, %s250, 3
        %s255 = smul.addr %s252, 4
        %s256 = sadd.s32 %s254, %s255
        %s257 = smul.addr %s256, 8
        %s258 = scalar_lea.vmem %s1, %s257
      $region36: #{superpoint_forward.20} parent=31 // pred_fallthru
        _
    $region32: #{superpoint_forward.20} parent=5 // pred_fallthru
      _
  $region6: #{superpoint_forward.20} parent=0 // loop_footer
    %s11 = sadd.s32 1, %s7
  $region7: #{superpoint_forward.20} parent=0 // loop_footer_branch
    %6 = sbr.rel target = $region3
  $region8: #{superpoint_forward.20} parent=0 // loop_exit
    _

// kernel: superpoint_forward.24
$region0: #{superpoint_forward.24}
  #allocation0 [shape = 'u32[]', space=smem, size = 0x4, offset = 0x4, fixed_abs, tag = 'smem constant byte address 0x4 - core index']
  #allocation1 [shape = 'u32[144,128]{1,0:T(1,128)}', space=vmem, size = 0x12000, scoped, tag = 'internal scratch']
  %s0 = inlined_call_operand.vmem [shape: f32[8,512], index: 0, kind: input, shape index: {}]
  %s1 = inlined_call_operand.vmem [shape: f32[8,256], index: 1, kind: output, shape index: {}]
  %s2 = sld [smem:[#allocation0]]
  $region14: #{superpoint_forward.24} parent=0
    _
  %s4 = ssub.s32 1, %s2
  %s5 = scalar_select 0, %s4, %s2
  // Predicated region
  $region2: #{superpoint_forward.24} parent=0 // pred_check
    _
  $region3: #{superpoint_forward.24} parent=0 // pred_check_branch
    %7 = sbr.rel (0) target = $region5
  $region4: #{superpoint_forward.24} parent=0 // pred_region
    _
  $region5: #{superpoint_forward.24} parent=0 // pred_fallthru
    _
  %v8 = vld [vmem:[%s0] sm:$0xff]
  %v9 = vld [vmem:[%s0 + $0x8] sm:$0xff]
  %v10 = vld [vmem:[%s0 + $0x10] sm:$0xff]
  %v11 = vld [vmem:[%s0 + $0x18] sm:$0xff]
  %13 = vrot.lane.b32.xlu0 %v8, 64
  %v14 = vpop.permute.xlu0 %13
  %v16 = vmax.f32 %v8, %v14
  %18 = vrot.lane.b32.xlu0 %v9, 64
  %v19 = vpop.permute.xlu0 %18
  %v21 = vmax.f32 %v9, %v19
  %23 = vrot.lane.b32.xlu0 %v10, 64
  %v24 = vpop.permute.xlu0 %23
  %v26 = vmax.f32 %v10, %v24
  %28 = vrot.lane.b32.xlu0 %v11, 64
  %v29 = vpop.permute.xlu0 %28
  %v31 = vmax.f32 %v11, %v29
  %33 = vrot.lane.b32.xlu0 %v21, 64
  %v34 = vpop.permute.xlu0 %33
  %37 = vrot.lane.b32.xlu0 %v31, 64
  %v38 = vpop.permute.xlu0 %37
  %vm40 = vcmask 523264
  %v41 = vsel %vm40, %v16, %v34
  %v42 = vsel %vm40, %v26, %v38
  %43 = vst [vmem:[%s1] sm:$0xff] %v41
  %44 = vst [vmem:[%s1 + $0x8] sm:$0xff] %v42
  // Predicated region
  $region6: #{superpoint_forward.24} parent=0 // pred_check
    _
  $region7: #{superpoint_forward.24} parent=0 // pred_check_branch
    %46 = sbr.rel (0) target = $region9
  $region8: #{superpoint_forward.24} parent=0 // pred_region
    _
  $region9: #{superpoint_forward.24} parent=0 // pred_fallthru
    _
  // Predicated region
  $region10: #{superpoint_forward.24} parent=0 // pred_check
    _
  $region11: #{superpoint_forward.24} parent=0 // pred_check_branch
    %48 = sbr.rel (0) target = $region13
  $region12: #{superpoint_forward.24} parent=0 // pred_region
    _
  $region13: #{superpoint_forward.24} parent=0 // pred_fallthru
    _

// kernel: superpoint_forward.21
$region0: #{superpoint_forward.21}
  #allocation0 [shape = 'u32[]', space=smem, size = 0x4, offset = 0x4, fixed_abs, tag = 'smem constant byte address 0x4 - core index']
  #allocation1 [shape = 'u32[144,128]{1,0:T(1,128)}', space=vmem, size = 0x12000, scoped, tag = 'internal scratch']
  %s0 = inlined_call_operand.vmem [shape: bf16[128,576], index: 0, kind: input, shape index: {}]
  %s1 = inlined_call_operand.vmem [shape: bf16[576,64], index: 1, kind: input, shape index: {}]
  %s2 = inlined_call_operand.vmem [shape: f32[1,64], index: 2, kind: input, shape index: {}]
  %s3 = inlined_call_operand.vmem [shape: f32[1,64], index: 3, kind: input, shape index: {}]
  %s4 = inlined_call_operand.vmem [shape: f32[128,64], index: 4, kind: output, shape index: {}]
  %s5 = sld [smem:[#allocation0]]
  $region49: #{superpoint_forward.21} parent=0
    _
  %s7 = ssub.s32 1, %s5
  %s8 = scalar_select 0, %s7, %s5
  loop: start=0, step=1, limit=4
  $region2: #{superpoint_forward.21} parent=0 // loop_pre_header
    _
  $region3: #{superpoint_forward.21} parent=0 // loop_header
    %s10 = sphi 0, %s14
    %p11 = scmp.ge.s32.totalorder %s10, 4
    %s20 = sphi 0, %s22
    %s23 = sphi 0, %s20
    %s24 = sphi 0, %s23
    %s40 = sphi 0, %s24
    %s44 = sphi 0, %s44
    %s46 = sphi 0, %s44
    %s47 = sphi 0, %s46
    %s61 = sphi 0, %s47
    %s65 = sphi 0, %s65
    %s67 = sphi 0, %s65
    %s68 = sphi 0, %s67
    %s82 = sphi 0, %s68
    %s86 = sphi 0, %s86
    %s88 = sphi 0, %s86
    %s89 = sphi 0, %s88
    %s103 = sphi 0, %s89
    %s109 = sphi 0, %s111
    %s112 = sphi 0, %s109
    %s113 = sphi 0, %s112
    %s129 = sphi 0, %s113
  $region4: #{superpoint_forward.21} parent=0 // loop_header_branch
    %13 = sbr.rel (%p11) target = $region8
  $region5: #{superpoint_forward.21} parent=0 // loop_body
    %s15 = ssub.s32 %s10, 1
    %s16 = ssub.s32 %s10, 2
    %s17 = sadd.s32 %s10, 1
    %s18 = ssub.s32 %s10, %s17
    %p19 = scmp.eq.s32.totalorder %s18, 0
    %s21 = sadd.s32 %s20, 1
    %s22 = scalar_select %p19, %s20, %s21
    %p25 = pneg %p19
    %p26 = scmp.eq.s32.totalorder %s10, 1
    %p27 = por %p25, %p26
    %p28 = scmp.ne.s32.totalorder %s20, %s23
    %p29 = scmp.eq.s32.totalorder %s10, 0
    %p30 = por %p28, %p29
    %p31 = scmp.ne.s32.totalorder %s20, %s23
    %p32 = scmp.eq.s32.totalorder %s15, 1
    %p33 = por %p31, %p32
    %p34 = scmp.ne.s32.totalorder %s23, %s24
    %p35 = scmp.eq.s32.totalorder %s15, 0
    %p36 = por %p34, %p35
    %p37 = scmp.ne.s32.totalorder %s23, %s24
    %p38 = scmp.eq.s32.totalorder %s16, 1
    %p39 = por %p37, %p38
    %p41 = scmp.ne.s32.totalorder %s24, %s40
    %p42 = scmp.eq.s32.totalorder %s16, 0
    %p43 = por %p41, %p42
    %s45 = sadd.s32 %s44, 1
    %p48 = scmp.eq.s32.totalorder %s10, 1
    %p49 = scmp.ne.s32.totalorder %s44, %s46
    %p50 = scmp.eq.s32.totalorder %s10, 0
    %p51 = por %p49, %p50
    %p52 = scmp.ne.s32.totalorder %s44, %s46
    %p53 = scmp.eq.s32.totalorder %s15, 1
    %p54 = por %p52, %p53
    %p55 = scmp.ne.s32.totalorder %s46, %s47
    %p56 = scmp.eq.s32.totalorder %s15, 0
    %p57 = por %p55, %p56
    %p58 = scmp.ne.s32.totalorder %s46, %s47
    %p59 = scmp.eq.s32.totalorder %s16, 1
    %p60 = por %p58, %p59
    %p62 = scmp.ne.s32.totalorder %s47, %s61
    %p63 = scmp.eq.s32.totalorder %s16, 0
    %p64 = por %p62, %p63
    %s66 = sadd.s32 %s65, 1
    %p69 = scmp.eq.s32.totalorder %s10, 1
    %p70 = scmp.ne.s32.totalorder %s65, %s67
    %p71 = scmp.eq.s32.totalorder %s10, 0
    %p72 = por %p70, %p71
    %p73 = scmp.ne.s32.totalorder %s65, %s67
    %p74 = scmp.eq.s32.totalorder %s15, 1
    %p75 = por %p73, %p74
    %p76 = scmp.ne.s32.totalorder %s67, %s68
    %p77 = scmp.eq.s32.totalorder %s15, 0
    %p78 = por %p76, %p77
    %p79 = scmp.ne.s32.totalorder %s67, %s68
    %p80 = scmp.eq.s32.totalorder %s16, 1
    %p81 = por %p79, %p80
    %p83 = scmp.ne.s32.totalorder %s68, %s82
    %p84 = scmp.eq.s32.totalorder %s16, 0
    %p85 = por %p83, %p84
    %s87 = sadd.s32 %s86, 1
    %p90 = scmp.eq.s32.totalorder %s10, 1
    %p91 = scmp.ne.s32.totalorder %s86, %s88
    %p92 = scmp.eq.s32.totalorder %s10, 0
    %p93 = por %p91, %p92
    %p94 = scmp.ne.s32.totalorder %s86, %s88
    %p95 = scmp.eq.s32.totalorder %s15, 1
    %p96 = por %p94, %p95
    %p97 = scmp.ne.s32.totalorder %s88, %s89
    %p98 = scmp.eq.s32.totalorder %s15, 0
    %p99 = por %p97, %p98
    %p100 = scmp.ne.s32.totalorder %s88, %s89
    %p101 = scmp.eq.s32.totalorder %s16, 1
    %p102 = por %p100, %p101
    %p104 = scmp.ne.s32.totalorder %s89, %s103
    %p105 = scmp.eq.s32.totalorder %s16, 0
    %p106 = por %p104, %p105
    %s107 = ssub.s32 %s10, %s17
    %p108 = scmp.eq.s32.totalorder %s107, 0
    %s110 = sadd.s32 %s109, 1
    %s111 = scalar_select %p108, %s109, %s110
    %p114 = pneg %p108
    %p115 = scmp.eq.s32.totalorder %s10, 1
    %p116 = por %p114, %p115
    %p117 = scmp.ne.s32.totalorder %s109, %s112
    %p118 = scmp.eq.s32.totalorder %s10, 0
    %p119 = por %p117, %p118
    %p120 = scmp.ne.s32.totalorder %s109, %s112
    %p121 = scmp.eq.s32.totalorder %s15, 1
    %p122 = por %p120, %p121
    %p123 = scmp.ne.s32.totalorder %s112, %s113
    %p124 = scmp.eq.s32.totalorder %s15, 0
    %p125 = por %p123, %p124
    %p126 = scmp.ne.s32.totalorder %s112, %s113
    %p127 = scmp.eq.s32.totalorder %s16, 1
    %p128 = por %p126, %p127
    %p130 = scmp.ne.s32.totalorder %s113, %s129
    %p131 = scmp.eq.s32.totalorder %s16, 0
    %p132 = por %p130, %p131
    %p133 = scmp.le.s32.totalorder 1, %s10
    %p134 = scmp.lt.s32.totalorder %s10, 3
    %p135 = pnand %p133, %p134
    %p136 = pneg %p135
    // Predicated region
    $region9: #{superpoint_forward.21} parent=5 // pred_check
      _
    $region10: #{superpoint_forward.21} parent=5 // pred_check_branch
      %138 = sbr.rel (%p135) target = $region12
    $region11: #{superpoint_forward.21} parent=5 // pred_region
      %s139 = ssub.s32 %s10, 1
      // Predicated region
      $region13: #{superpoint_forward.21} parent=11 // pred_check
        %p140 = pneg %p57
      $region14: #{superpoint_forward.21} parent=11 // pred_check_branch
        %142 = sbr.rel (%p140) target = $region16
      $region15: #{superpoint_forward.21} parent=11 // pred_region
        _
      $region16: #{superpoint_forward.21} parent=11 // pred_fallthru
        _
      // Predicated region
      $region17: #{superpoint_forward.21} parent=11 // pred_check
        %p143 = pneg %p78
      $region18: #{superpoint_forward.21} parent=11 // pred_check_branch
        %145 = sbr.rel (%p143) target = $region20
      $region19: #{superpoint_forward.21} parent=11 // pred_region
        _
      $region20: #{superpoint_forward.21} parent=11 // pred_fallthru
        _
      // Predicated region
      $region21: #{superpoint_forward.21} parent=11 // pred_check
        %p146 = pneg %p99
      $region22: #{superpoint_forward.21} parent=11 // pred_check_branch
        %148 = sbr.rel (%p146) target = $region24
      $region23: #{superpoint_forward.21} parent=11 // pred_region
        _
      $region24: #{superpoint_forward.21} parent=11 // pred_fallthru
        _
    $region12: #{superpoint_forward.21} parent=5 // pred_fallthru
      _
    %p149 = scmp.lt.s32.totalorder %s10, 2
    // Predicated region
    $region25: #{superpoint_forward.21} parent=5 // pred_check
      %p150 = pneg %p149
    $region26: #{superpoint_forward.21} parent=5 // pred_check_branch
      %152 = sbr.rel (%p150) target = $region28
    $region27: #{superpoint_forward.21} parent=5 // pred_region
      // Predicated region
      $region29: #{superpoint_forward.21} parent=27 // pred_check
        %p153 = pneg %p30
      $region30: #{superpoint_forward.21} parent=27 // pred_check_branch
        %155 = sbr.rel (%p153) target = $region32
      $region31: #{superpoint_forward.21} parent=27 // pred_region
        %s156 = smul.u32 8, %s10
        %p157 = scmp.lt.s32.totalorder %s156, 15
        %s158 = scalar_select %p157, %s156, 15
        %s159 = smul.addr %s158, 5
        %s160 = smul.addr %s159, 4
        %s161 = scalar_lea.vmem %s0, %s160
        %s162 = smul.u32 8, %s10
      $region32: #{superpoint_forward.21} parent=27 // pred_fallthru
        _
    $region28: #{superpoint_forward.21} parent=5 // pred_fallthru
      _
    %p163 = scmp.le.s32.totalorder 1, %s10
    %p164 = scmp.lt.s32.totalorder %s10, 3
    %p165 = pnand %p163, %p164
    %p166 = pneg %p165
    // Predicated region
    $region33: #{superpoint_forward.21} parent=5 // pred_check
      _
    $region34: #{superpoint_forward.21} parent=5 // pred_check_branch
      %168 = sbr.rel (%p165) target = $region36
    $region35: #{superpoint_forward.21} parent=5 // pred_region
      %s169 = ssub.s32 %s10, 1
      %s170 = smul.u32 8, %s15
      %p171 = scmp.lt.s32.totalorder %s170, 15
      %s172 = scalar_select %p171, %s170, 15
      %s173 = smul.addr %s172, 5
      %s174 = smul.addr %s173, 4
      %s175 = scalar_lea.vmem %s0, %s174
      %p176 = pneg %p36
      %p177 = pneg %p33
      %p178 = pneg %p57
      %p179 = pneg %p54
      %p180 = pneg %p78
      %p181 = pneg %p75
      %p182 = pneg %p99
      %p183 = pneg %p96
      %p184 = pneg %p125
      %p185 = pneg %p122
      %s186 = smul.u32 8, %s15
      %p187 = scmp.lt.s32.totalorder %s186, 15
      %s188 = scalar_select %p187, %s186, 15
      %s189 = smul.addr %s188, 8
      %s190 = scalar_lea.vmem %s4, %s189
      %s191 = smul.u32 8, %s15
      %p192 = scmp.lt.s32.totalorder %s191, 15
      %s193 = scalar_select %p192, %s191, 15
      %s194 = smul.addr %s193, 5
      %s195 = smul.addr %s194, 4
      %s196 = scalar_lea.vmem %s0, %s195
      %s197 = smul.u32 8, %s15
      %s198 = smul.u32 8, %s15
      %p199 = scmp.lt.s32.totalorder %s198, 15
      %s200 = scalar_select %p199, %s198, 15
      %s201 = smul.addr %s200, 8
      %s202 = scalar_lea.vmem %s4, %s201
      %s203 = smul.u32 8, %s15
      %v205 = vld [vmem:[%s196] sm:$0xff]
      %v206 = vld [vmem:[%s196 + $0x8] sm:$0xff]
      %v207 = vld [vmem:[%s196 + $0x10] sm:$0xf]
      %v208 = vld [vmem:[%s196 + $0x14] sm:$0xff]
      %v209 = vld [vmem:[%s196 + $0x1c] sm:$0xff]
      %v210 = vld [vmem:[%s196 + $0x24] sm:$0xf]
      %v211 = vld [vmem:[%s196 + $0x28] sm:$0xff]
      %v212 = vld [vmem:[%s196 + $0x30] sm:$0xff]
      %v213 = vld [vmem:[%s196 + $0x38] sm:$0xf]
      %v214 = vld [vmem:[%s196 + $0x3c] sm:$0xff]
      %v215 = vld [vmem:[%s196 + $0x44] sm:$0xff]
      %v216 = vld [vmem:[%s196 + $0x4c] sm:$0xf]
      %v217 = vld [vmem:[%s196 + $0x50] sm:$0xff]
      %v218 = vld [vmem:[%s196 + $0x58] sm:$0xff]
      %v219 = vld [vmem:[%s196 + $0x60] sm:$0xf]
      %v220 = vld [vmem:[%s196 + $0x64] sm:$0xff]
      %v221 = vld [vmem:[%s196 + $0x6c] sm:$0xff]
      %v222 = vld [vmem:[%s196 + $0x74] sm:$0xf]
      %v223 = vld [vmem:[%s196 + $0x78] sm:$0xff]
      %v224 = vld [vmem:[%s196 + $0x80] sm:$0xff]
      %v225 = vld [vmem:[%s196 + $0x88] sm:$0xf]
      %v226 = vld [vmem:[%s196 + $0x8c] sm:$0xff]
      %v227 = vld [vmem:[%s196 + $0x94] sm:$0xff]
      %v228 = vld [vmem:[%s196 + $0x9c] sm:$0xf]
      %v229 = vld [vmem:[%s1] sm:$0xf]
      %v230 = vld [vmem:[%s1 + $0x4] sm:$0xf]
      %v231 = vld [vmem:[%s1 + $0x8] sm:$0xf]
      %v232 = vld [vmem:[%s1 + $0xc] sm:$0xf]
      %v233 = vld [vmem:[%s1 + $0x10] sm:$0xf]
      %v234 = vld [vmem:[%s1 + $0x14] sm:$0xf]
      %v235 = vld [vmem:[%s1 + $0x18] sm:$0xf]
      %v236 = vld [vmem:[%s1 + $0x1c] sm:$0xf]
      %v237 = vld [vmem:[%s1 + $0x20] sm:$0xf]
      %v238 = vld [vmem:[%s1 + $0x24] sm:$0xf]
      %v239 = vld [vmem:[%s1 + $0x28] sm:$0xf]
      %v240 = vld [vmem:[%s1 + $0x2c] sm:$0xf]
      %v241 = vld [vmem:[%s1 + $0x30] sm:$0xf]
      %v242 = vld [vmem:[%s1 + $0x34] sm:$0xf]
      %v243 = vld [vmem:[%s1 + $0x38] sm:$0xf]
      %v244 = vld [vmem:[%s1 + $0x3c] sm:$0xf]
      %v245 = vld [vmem:[%s1 + $0x40] sm:$0xf]
      %v246 = vld [vmem:[%s1 + $0x44] sm:$0xf]
      %v247 = vld [vmem:[%s1 + $0x48] sm:$0xf]
      %v248 = vld [vmem:[%s1 + $0x4c] sm:$0xf]
      %v249 = vld [vmem:[%s1 + $0x50] sm:$0xf]
      %v250 = vld [vmem:[%s1 + $0x54] sm:$0xf]
      %v251 = vld [vmem:[%s1 + $0x58] sm:$0xf]
      %v252 = vld [vmem:[%s1 + $0x5c] sm:$0xf]
      %v253 = vld [vmem:[%s1 + $0x60] sm:$0xf]
      %v254 = vld [vmem:[%s1 + $0x64] sm:$0xf]
      %v255 = vld [vmem:[%s1 + $0x68] sm:$0xf]
      %v256 = vld [vmem:[%s1 + $0x6c] sm:$0xf]
      %v257 = vld [vmem:[%s1 + $0x70] sm:$0xf]
      %v258 = vld [vmem:[%s1 + $0x74] sm:$0xf]
      %v259 = vld [vmem:[%s1 + $0x78] sm:$0xf]
      %v260 = vld [vmem:[%s1 + $0x7c] sm:$0xf]
      %v261 = vld [vmem:[%s1 + $0x80] sm:$0xf]
      %v262 = vld [vmem:[%s1 + $0x84] sm:$0xf]
      %v263 = vld [vmem:[%s1 + $0x88] sm:$0xf]
      %v264 = vld [vmem:[%s1 + $0x8c] sm:$0xf]
      %v265 = vld [vmem:[%s1 + $0x90] sm:$0xf]
      %v266 = vld [vmem:[%s1 + $0x94] sm:$0xf]
      %v267 = vld [vmem:[%s1 + $0x98] sm:$0xf]
      %v268 = vld [vmem:[%s1 + $0x9c] sm:$0xf]
      %v269 = vld [vmem:[%s1 + $0xa0] sm:$0xf]
      %v270 = vld [vmem:[%s1 + $0xa4] sm:$0xf]
      %v271 = vld [vmem:[%s1 + $0xa8] sm:$0xf]
      %v272 = vld [vmem:[%s1 + $0xac] sm:$0xf]
      %v273 = vld [vmem:[%s1 + $0xb0] sm:$0xf]
      %v274 = vld [vmem:[%s1 + $0xb4] sm:$0xf]
      %v275 = vld [vmem:[%s1 + $0xb8] sm:$0xf]
      %v276 = vld [vmem:[%s1 + $0xbc] sm:$0xf]
      %v277 = vld [vmem:[%s1 + $0xc0] sm:$0xf]
      %v278 = vld [vmem:[%s1 + $0xc4] sm:$0xf]
      %v279 = vld [vmem:[%s1 + $0xc8] sm:$0xf]
      %v280 = vld [vmem:[%s1 + $0xcc] sm:$0xf]
      %v281 = vld [vmem:[%s1 + $0xd0] sm:$0xf]
      %v282 = vld [vmem:[%s1 + $0xd4] sm:$0xf]
      %v283 = vld [vmem:[%s1 + $0xd8] sm:$0xf]
      %v284 = vld [vmem:[%s1 + $0xdc] sm:$0xf]
      %v285 = vld [vmem:[%s1 + $0xe0] sm:$0xf]
      %v286 = vld [vmem:[%s1 + $0xe4] sm:$0xf]
      %v287 = vld [vmem:[%s1 + $0xe8] sm:$0xf]
      %v288 = vld [vmem:[%s1 + $0xec] sm:$0xf]
      %v289 = vld [vmem:[%s1 + $0xf0] sm:$0xf]
      %v290 = vld [vmem:[%s1 + $0xf4] sm:$0xf]
      %v291 = vld [vmem:[%s1 + $0xf8] sm:$0xf]
      %v292 = vld [vmem:[%s1 + $0xfc] sm:$0xf]
      %v293 = vld [vmem:[%s1 + $0x100] sm:$0xf]
      %v294 = vld [vmem:[%s1 + $0x104] sm:$0xf]
      %v295 = vld [vmem:[%s1 + $0x108] sm:$0xf]
      %v296 = vld [vmem:[%s1 + $0x10c] sm:$0xf]
      %v297 = vld [vmem:[%s1 + $0x110] sm:$0xf]
      %v298 = vld [vmem:[%s1 + $0x114] sm:$0xf]
      %v299 = vld [vmem:[%s1 + $0x118] sm:$0xf]
      %v300 = vld [vmem:[%s1 + $0x11c] sm:$0xf]
      %v325 = vunpack.c.l.b16 %v205
      %v326 = vunpack.c.h.b16 %v205
      %v327 = vunpack.c.l.b16 %v206
      %v328 = vunpack.c.h.b16 %v206
      %v329 = vunpack.c.l.b16 %v207
      %v330 = vunpack.c.l.b16 %v208
      %v331 = vunpack.c.h.b16 %v208
      %v332 = vunpack.c.l.b16 %v209
      %v333 = vunpack.c.h.b16 %v209
      %v334 = vunpack.c.l.b16 %v210
      %v335 = vunpack.c.l.b16 %v211
      %v336 = vunpack.c.h.b16 %v211
      %v337 = vunpack.c.l.b16 %v212
      %v338 = vunpack.c.h.b16 %v212
      %v339 = vunpack.c.l.b16 %v213
      %v340 = vunpack.c.l.b16 %v214
      %v341 = vunpack.c.h.b16 %v214
      %v342 = vunpack.c.l.b16 %v215
      %v343 = vunpack.c.h.b16 %v215
      %v344 = vunpack.c.l.b16 %v216
      %v345 = vunpack.c.l.b16 %v217
      %v346 = vunpack.c.h.b16 %v217
      %v347 = vunpack.c.l.b16 %v218
      %v348 = vunpack.c.h.b16 %v218
      %v349 = vunpack.c.l.b16 %v219
      %v350 = vunpack.c.l.b16 %v220
      %v351 = vunpack.c.h.b16 %v220
      %v352 = vunpack.c.l.b16 %v221
      %v353 = vunpack.c.h.b16 %v221
      %v354 = vunpack.c.l.b16 %v222
      %v355 = vunpack.c.l.b16 %v223
      %v356 = vunpack.c.h.b16 %v223
      %v357 = vunpack.c.l.b16 %v224
      %v358 = vunpack.c.h.b16 %v224
      %v359 = vunpack.c.l.b16 %v225
      %v360 = vunpack.c.l.b16 %v226
      %v361 = vunpack.c.h.b16 %v226
      %v362 = vunpack.c.l.b16 %v227
      %v363 = vunpack.c.h.b16 %v227
      %v364 = vunpack.c.l.b16 %v228
      %v365 = vpack.c.b16 %v330, %v325
      %v366 = vpack.c.b16 %v331, %v326
      %v367 = vpack.c.b16 %v332, %v327
      %v368 = vpack.c.b16 %v333, %v328
      %v369 = vpack.c.b16 %v334, %v329
      %v370 = vpack.c.b16 %v340, %v335
      %v371 = vpack.c.b16 %v341, %v336
      %v372 = vpack.c.b16 %v342, %v337
      %v373 = vpack.c.b16 %v343, %v338
      %v374 = vpack.c.b16 %v344, %v339
      %v375 = vpack.c.b16 %v350, %v345
      %v376 = vpack.c.b16 %v351, %v346
      %v377 = vpack.c.b16 %v352, %v347
      %v378 = vpack.c.b16 %v353, %v348
      %v379 = vpack.c.b16 %v354, %v349
      %v380 = vpack.c.b16 %v360, %v355
      %v381 = vpack.c.b16 %v361, %v356
      %v382 = vpack.c.b16 %v362, %v357
      %v383 = vpack.c.b16 %v363, %v358
      %v384 = vpack.c.b16 %v364, %v359
      %v473 = vunpack.c.l.b16 %v229
      %v474 = vunpack.c.l.b16 %v230
      %v475 = vunpack.c.l.b16 %v231
      %v476 = vunpack.c.l.b16 %v232
      %v477 = vunpack.c.l.b16 %v233
      %v478 = vunpack.c.l.b16 %v234
      %v479 = vunpack.c.l.b16 %v235
      %v480 = vunpack.c.l.b16 %v236
      %v481 = vunpack.c.l.b16 %v237
      %v482 = vunpack.c.l.b16 %v238
      %v483 = vunpack.c.l.b16 %v239
      %v484 = vunpack.c.l.b16 %v240
      %v485 = vunpack.c.l.b16 %v241
      %v486 = vunpack.c.l.b16 %v242
      %v487 = vunpack.c.l.b16 %v243
      %v488 = vunpack.c.l.b16 %v244
      %v489 = vunpack.c.l.b16 %v245
      %v490 = vunpack.c.l.b16 %v246
      %v491 = vunpack.c.l.b16 %v247
      %v492 = vunpack.c.l.b16 %v248
      %v493 = vunpack.c.l.b16 %v249
      %v494 = vunpack.c.l.b16 %v250
      %v495 = vunpack.c.l.b16 %v251
      %v496 = vunpack.c.l.b16 %v252
      %v497 = vunpack.c.l.b16 %v253
      %v498 = vunpack.c.l.b16 %v254
      %v499 = vunpack.c.l.b16 %v255
      %v500 = vunpack.c.l.b16 %v256
      %v501 = vunpack.c.l.b16 %v257
      %v502 = vunpack.c.l.b16 %v258
      %v503 = vunpack.c.l.b16 %v259
      %v504 = vunpack.c.l.b16 %v260
      %v505 = vunpack.c.l.b16 %v261
      %v506 = vunpack.c.l.b16 %v262
      %v507 = vunpack.c.l.b16 %v263
      %v508 = vunpack.c.l.b16 %v264
      %v509 = vunpack.c.l.b16 %v265
      %v510 = vunpack.c.l.b16 %v266
      %v511 = vunpack.c.l.b16 %v267
      %v512 = vunpack.c.l.b16 %v268
      %v513 = vunpack.c.l.b16 %v269
      %v514 = vunpack.c.l.b16 %v270
      %v515 = vunpack.c.l.b16 %v271
      %v516 = vunpack.c.l.b16 %v272
      %v517 = vunpack.c.l.b16 %v273
      %v518 = vunpack.c.l.b16 %v274
      %v519 = vunpack.c.l.b16 %v275
      %v520 = vunpack.c.l.b16 %v276
      %v521 = vunpack.c.l.b16 %v277
      %v522 = vunpack.c.l.b16 %v278
      %v523 = vunpack.c.l.b16 %v279
      %v524 = vunpack.c.l.b16 %v280
      %v525 = vunpack.c.l.b16 %v281
      %v526 = vunpack.c.l.b16 %v282
      %v527 = vunpack.c.l.b16 %v283
      %v528 = vunpack.c.l.b16 %v284
      %v529 = vunpack.c.l.b16 %v285
      %v530 = vunpack.c.l.b16 %v286
      %v531 = vunpack.c.l.b16 %v287
      %v532 = vunpack.c.l.b16 %v288
      %v533 = vunpack.c.l.b16 %v289
      %v534 = vunpack.c.l.b16 %v290
      %v535 = vunpack.c.l.b16 %v291
      %v536 = vunpack.c.l.b16 %v292
      %v537 = vunpack.c.l.b16 %v293
      %v538 = vunpack.c.l.b16 %v294
      %v539 = vunpack.c.l.b16 %v295
      %v540 = vunpack.c.l.b16 %v296
      %v541 = vunpack.c.l.b16 %v297
      %v542 = vunpack.c.l.b16 %v298
      %v543 = vunpack.c.l.b16 %v299
      %v544 = vunpack.c.l.b16 %v300
      %v545 = vpack.c.b16 %v474, %v473
      %v546 = vpack.c.b16 %v476, %v475
      %v547 = vpack.c.b16 %v478, %v477
      %v548 = vpack.c.b16 %v480, %v479
      %v549 = vpack.c.b16 %v482, %v481
      %v550 = vpack.c.b16 %v484, %v483
      %v551 = vpack.c.b16 %v486, %v485
      %v552 = vpack.c.b16 %v488, %v487
      %v553 = vpack.c.b16 %v490, %v489
      %v554 = vpack.c.b16 %v492, %v491
      %v555 = vpack.c.b16 %v494, %v493
      %v556 = vpack.c.b16 %v496, %v495
      %v557 = vpack.c.b16 %v498, %v497
      %v558 = vpack.c.b16 %v500, %v499
      %v559 = vpack.c.b16 %v502, %v501
      %v560 = vpack.c.b16 %v504, %v503
      %v561 = vpack.c.b16 %v506, %v505
      %v562 = vpack.c.b16 %v508, %v507
      %v563 = vpack.c.b16 %v510, %v509
      %v564 = vpack.c.b16 %v512, %v511
      %v565 = vpack.c.b16 %v514, %v513
      %v566 = vpack.c.b16 %v516, %v515
      %v567 = vpack.c.b16 %v518, %v517
      %v568 = vpack.c.b16 %v520, %v519
      %v569 = vpack.c.b16 %v522, %v521
      %v570 = vpack.c.b16 %v524, %v523
      %v571 = vpack.c.b16 %v526, %v525
      %v572 = vpack.c.b16 %v528, %v527
      %v573 = vpack.c.b16 %v530, %v529
      %v574 = vpack.c.b16 %v532, %v531
      %v575 = vpack.c.b16 %v534, %v533
      %v576 = vpack.c.b16 %v536, %v535
      %v577 = vpack.c.b16 %v538, %v537
      %v578 = vpack.c.b16 %v540, %v539
      %v579 = vpack.c.b16 %v542, %v541
      %v580 = vpack.c.b16 %v544, %v543
      %vm617 = vcmask 523264
      %v619 = vsel %vm617, %v369, 0
      %v622 = vsel %vm617, %v374, 0
      %v625 = vsel %vm617, %v379, 0
      %v628 = vsel %vm617, %v384, 0
      %630 = vmatprep.subr.bf16.mxu0 0
      %631 = vmatpush1.bf16.msra.mxu0 %v545
      %632 = vmatprep.subr.bf16.mxu0 0
      %633 = vmatpush1.bf16.msra.mxu0 %v546
      %634 = vmatprep.subr.bf16.mxu0 0
      %635 = vmatpush1.bf16.msra.mxu0 %v547
      %636 = vmatprep.subr.bf16.mxu0 0
      %637 = vmatpush1.bf16.msra.mxu0 %v548
      %638 = vmatprep.subr.bf16.mxu0 0
      %639 = vmatpush1.bf16.msra.mxu0 %v549
      %640 = vmatprep.subr.bf16.mxu0 0
      %641 = vmatpush1.bf16.msra.mxu0 %v550
      %642 = vmatprep.subr.bf16.mxu0 0
      %643 = vmatpush1.bf16.msra.mxu0 %v551
      %644 = vmatprep.subr.bf16.mxu0 0
      %645 = vmatpush1.bf16.msra.mxu0 %v552
      %646 = vmatprep.subr.bf16.mxu0 0
      %647 = vmatpush1.bf16.msra.mxu0 %v553
      %648 = vmatprep.subr.bf16.mxu0 0
      %649 = vmatpush1.bf16.msra.mxu0 %v554
      %650 = vmatprep.subr.bf16.mxu0 0
      %651 = vmatpush1.bf16.msra.mxu0 %v555
      %652 = vmatprep.subr.bf16.mxu0 0
      %653 = vmatpush1.bf16.msra.mxu0 %v556
      %654 = vmatprep.subr.bf16.mxu0 0
      %655 = vmatpush1.bf16.msra.mxu0 %v557
      %656 = vmatprep.subr.bf16.mxu0 0
      %657 = vmatpush1.bf16.msra.mxu0 %v558
      %658 = vmatprep.subr.bf16.mxu0 0
      %659 = vmatpush1.bf16.msra.mxu0 %v559
      %660 = vmatprep.subr.bf16.mxu0 0
      %661 = vmatpush1.bf16.msra.mxu0 %v560
      %662 = vmatprep.mubr.bf16.mxu0 %v366
      %663 = vmatmul.mubr.bf16.gmra.mrb[0].mxu0 %v365
      %v664 = vpop.f32.mrb[0].mxu0
      %v665 = vadd.f32 0.0, %v664
      %v666 = vpop.f32.mrb[0].mxu0
      %v667 = vpop.f32.mrb[0].mxu0
      %v668 = vadd.f32 0.0, %v667
      %v669 = vpop.f32.mrb[0].mxu0
      %670 = vmatprep.mubr.bf16.mxu0 %v371
      %671 = vmatmul.mubr.bf16.gmra.mrb[0].mxu0 %v370
      %v672 = vpop.f32.mrb[0].mxu0
      %v673 = vadd.f32 0.0, %v672
      %v674 = vpop.f32.mrb[0].mxu0
      %v675 = vpop.f32.mrb[0].mxu0
      %v676 = vadd.f32 0.0, %v675
      %v677 = vpop.f32.mrb[0].mxu0
      %678 = vmatprep.mubr.bf16.mxu0 %v376
      %679 = vmatmul.mubr.bf16.gmra.mrb[0].mxu0 %v375
      %v680 = vpop.f32.mrb[0].mxu0
      %v681 = vadd.f32 0.0, %v680
      %v682 = vpop.f32.mrb[0].mxu0
      %v683 = vpop.f32.mrb[0].mxu0
      %v684 = vadd.f32 0.0, %v683
      %v685 = vpop.f32.mrb[0].mxu0
      %686 = vmatprep.mubr.bf16.mxu0 %v381
      %687 = vmatmul.mubr.bf16.gmra.mrb[0].mxu0 %v380
      %v688 = vpop.f32.mrb[0].mxu0
      %v689 = vadd.f32 0.0, %v688
      %v690 = vpop.f32.mrb[0].mxu0
      %v691 = vpop.f32.mrb[0].mxu0
      %v692 = vadd.f32 0.0, %v691
      %v693 = vpop.f32.mrb[0].mxu0
      %694 = vdwg.mxu0
      %695 = vmatprep.subr.bf16.mxu0 0
      %696 = vmatpush1.bf16.msra.mxu0 %v561
      %697 = vmatprep.subr.bf16.mxu0 0
      %698 = vmatpush1.bf16.msra.mxu0 %v562
      %699 = vmatprep.subr.bf16.mxu0 0
      %700 = vmatpush1.bf16.msra.mxu0 %v563
      %701 = vmatprep.subr.bf16.mxu0 0
      %702 = vmatpush1.bf16.msra.mxu0 %v564
      %703 = vmatprep.subr.bf16.mxu0 0
      %704 = vmatpush1.bf16.msra.mxu0 %v565
      %705 = vmatprep.subr.bf16.mxu0 0
      %706 = vmatpush1.bf16.msra.mxu0 %v566
      %707 = vmatprep.subr.bf16.mxu0 0
      %708 = vmatpush1.bf16.msra.mxu0 %v567
      %709 = vmatprep.subr.bf16.mxu0 0
      %710 = vmatpush1.bf16.msra.mxu0 %v568
      %711 = vmatprep.subr.bf16.mxu0 0
      %712 = vmatpush1.bf16.msra.mxu0 %v569
      %713 = vmatprep.subr.bf16.mxu0 0
      %714 = vmatpush1.bf16.msra.mxu0 %v570
      %715 = vmatprep.subr.bf16.mxu0 0
      %716 = vmatpush1.bf16.msra.mxu0 %v571
      %717 = vmatprep.subr.bf16.mxu0 0
      %718 = vmatpush1.bf16.msra.mxu0 %v572
      %719 = vmatprep.subr.bf16.mxu0 0
      %720 = vmatpush1.bf16.msra.mxu0 %v573
      %721 = vmatprep.subr.bf16.mxu0 0
      %722 = vmatpush1.bf16.msra.mxu0 %v574
      %723 = vmatprep.subr.bf16.mxu0 0
      %724 = vmatpush1.bf16.msra.mxu0 %v575
      %725 = vmatprep.subr.bf16.mxu0 0
      %726 = vmatpush1.bf16.msra.mxu0 %v576
      %727 = vmatprep.mubr.bf16.mxu0 %v368
      %728 = vmatmul.mubr.bf16.gmra.mrb[0].mxu0 %v367
      %v729 = vpop.f32.mrb[0].mxu0
      %v730 = vadd.f32 %v665, %v729
      %v731 = vpop.f32.mrb[0].mxu0
      %v732 = vpop.f32.mrb[0].mxu0
      %v733 = vadd.f32 %v668, %v732
      %v734 = vpop.f32.mrb[0].mxu0
      %735 = vmatprep.mubr.bf16.mxu0 %v373
      %736 = vmatmul.mubr.bf16.gmra.mrb[0].mxu0 %v372
      %v737 = vpop.f32.mrb[0].mxu0
      %v738 = vadd.f32 %v673, %v737
      %v739 = vpop.f32.mrb[0].mxu0
      %v740 = vpop.f32.mrb[0].mxu0
      %v741 = vadd.f32 %v676, %v740
      %v742 = vpop.f32.mrb[0].mxu0
      %743 = vmatprep.mubr.bf16.mxu0 %v378
      %744 = vmatmul.mubr.bf16.gmra.mrb[0].mxu0 %v377
      %v745 = vpop.f32.mrb[0].mxu0
      %v746 = vadd.f32 %v681, %v745
      %v747 = vpop.f32.mrb[0].mxu0
      %v748 = vpop.f32.mrb[0].mxu0
      %v749 = vadd.f32 %v684, %v748
      %v750 = vpop.f32.mrb[0].mxu0
      %751 = vmatprep.mubr.bf16.mxu0 %v383
      %752 = vmatmul.mubr.bf16.gmra.mrb[0].mxu0 %v382
      %v753 = vpop.f32.mrb[0].mxu0
      %v754 = vadd.f32 %v689, %v753
      %v755 = vpop.f32.mrb[0].mxu0
      %v756 = vpop.f32.mrb[0].mxu0
      %v757 = vadd.f32 %v692, %v756
      %v758 = vpop.f32.mrb[0].mxu0
      %759 = vdwg.mxu0
      %760 = vmatprep.subr.bf16.mxu0 0
      %761 = vmatpush1.bf16.msra.mxu0 %v577
      %762 = vmatprep.subr.bf16.mxu0 0
      %763 = vmatpush1.bf16.msra.mxu0 %v578
      %764 = vmatprep.subr.bf16.mxu0 0
      %765 = vmatpush1.bf16.msra.mxu0 %v579
      %766 = vmatprep.subr.bf16.mxu0 0
      %767 = vmatpush1.bf16.msra.mxu0 %v580
      %768 = vmatprep.subr.bf16.mxu0 0
      %769 = vmatpush1.bf16.msra.mxu0 0
      %770 = vmatprep.subr.bf16.mxu0 0
      %771 = vmatpush1.bf16.msra.mxu0 0
      %772 = vmatprep.subr.bf16.mxu0 0
      %773 = vmatpush1.bf16.msra.mxu0 0
      %774 = vmatprep.subr.bf16.mxu0 0
      %775 = vmatpush1.bf16.msra.mxu0 0
      %776 = vmatprep.subr.bf16.mxu0 0
      %777 = vmatpush1.bf16.msra.mxu0 0
      %778 = vmatprep.subr.bf16.mxu0 0
      %779 = vmatpush1.bf16.msra.mxu0 0
      %780 = vmatprep.subr.bf16.mxu0 0
      %781 = vmatpush1.bf16.msra.mxu0 0
      %782 = vmatprep.subr.bf16.mxu0 0
      %783 = vmatpush1.bf16.msra.mxu0 0
      %784 = vmatprep.subr.bf16.mxu0 0
      %785 = vmatpush1.bf16.msra.mxu0 0
      %786 = vmatprep.subr.bf16.mxu0 0
      %787 = vmatpush1.bf16.msra.mxu0 0
      %788 = vmatprep.subr.bf16.mxu0 0
      %789 = vmatpush1.bf16.msra.mxu0 0
      %790 = vmatprep.subr.bf16.mxu0 0
      %791 = vmatpush1.bf16.msra.mxu0 0
      %792 = vmatprep.mubr.bf16.mxu0 0
      %793 = vmatmul.mubr.bf16.gmra.mrb[0].mxu0 %v619
      %v794 = vpop.f32.mrb[0].mxu0
      %v795 = vadd.f32 %v730, %v794
      %v796 = vpop.f32.mrb[0].mxu0
      %v797 = vpop.f32.mrb[0].mxu0
      %v798 = vadd.f32 %v733, %v797
      %v799 = vpop.f32.mrb[0].mxu0
      %800 = vmatprep.mubr.bf16.mxu0 0
      %801 = vmatmul.mubr.bf16.gmra.mrb[0].mxu0 %v622
      %v802 = vpop.f32.mrb[0].mxu0
      %v803 = vadd.f32 %v738, %v802
      %v804 = vpop.f32.mrb[0].mxu0
      %v805 = vpop.f32.mrb[0].mxu0
      %v806 = vadd.f32 %v741, %v805
      %v807 = vpop.f32.mrb[0].mxu0
      %808 = vmatprep.mubr.bf16.mxu0 0
      %809 = vmatmul.mubr.bf16.gmra.mrb[0].mxu0 %v625
      %v810 = vpop.f32.mrb[0].mxu0
      %v811 = vadd.f32 %v746, %v810
      %v812 = vpop.f32.mrb[0].mxu0
      %v813 = vpop.f32.mrb[0].mxu0
      %v814 = vadd.f32 %v749, %v813
      %v815 = vpop.f32.mrb[0].mxu0
      %816 = vmatprep.mubr.bf16.mxu0 0
      %817 = vmatmul.mubr.bf16.gmra.mrb[0].mxu0 %v628
      %v818 = vpop.f32.mrb[0].mxu0
      %v819 = vadd.f32 %v754, %v818
      %v820 = vpop.f32.mrb[0].mxu0
      %v821 = vpop.f32.mrb[0].mxu0
      %v822 = vadd.f32 %v757, %v821
      %v823 = vpop.f32.mrb[0].mxu0
      %824 = vdwg.mxu0
      %v825 = vld [vmem:[%s2] sm:$0x1]
      %v827 = vlaneseq
      %v828 = vshrl.u32 %v827, 7
      %v829 = vsub.s32 0, %v828
      %v830 = vrot.slane %v825, %v829
      %v832 = vmul.f32 %v795, %v830
      %v833 = vmul.f32 %v798, %v830
      %v834 = vmul.f32 %v803, %v830
      %v835 = vmul.f32 %v806, %v830
      %v836 = vmul.f32 %v811, %v830
      %v837 = vmul.f32 %v814, %v830
      %v838 = vmul.f32 %v819, %v830
      %v839 = vmul.f32 %v822, %v830
      %v840 = vld [vmem:[%s3] sm:$0x1]
      %v842 = vlaneseq
      %v843 = vshrl.u32 %v842, 7
      %v844 = vsub.s32 0, %v843
      %v845 = vrot.slane %v840, %v844
      %v847 = vadd.f32 %v832, %v845
      %v848 = vadd.f32 %v833, %v845
      %v849 = vadd.f32 %v834, %v845
      %v850 = vadd.f32 %v835, %v845
      %v851 = vadd.f32 %v836, %v845
      %v852 = vadd.f32 %v837, %v845
      %v853 = vadd.f32 %v838, %v845
      %v854 = vadd.f32 %v839, %v845
      %v855 = vmax.f32 %v847, 0.0
      %v856 = vmax.f32 %v848, 0.0
      %v857 = vmax.f32 %v849, 0.0
      %v858 = vmax.f32 %v850, 0.0
      %v859 = vmax.f32 %v851, 0.0
      %v860 = vmax.f32 %v852, 0.0
      %v861 = vmax.f32 %v853, 0.0
      %v862 = vmax.f32 %v854, 0.0
      %863 = vst.msk [vmem:[%s202] sm:$0xff] %vm617, %v855
      %864 = vst.msk [vmem:[%s202 + $0x8] sm:$0xff] %vm617, %v856
      %865 = vst.msk [vmem:[%s202 + $0x10] sm:$0xff] %vm617, %v857
      %866 = vst.msk [vmem:[%s202 + $0x18] sm:$0xff] %vm617, %v858
      %867 = vst.msk [vmem:[%s202 + $0x20] sm:$0xff] %vm617, %v859
      %868 = vst.msk [vmem:[%s202 + $0x28] sm:$0xff] %vm617, %v860
      %869 = vst.msk [vmem:[%s202 + $0x30] sm:$0xff] %vm617, %v861
      %870 = vst.msk [vmem:[%s202 + $0x38] sm:$0xff] %vm617, %v862
      %s871 = smul.u32 8, %s15
      %p872 = scmp.lt.s32.totalorder %s871, 15
      %s873 = scalar_select %p872, %s871, 15
      %s874 = smul.addr %s873, 8
      %s875 = scalar_lea.vmem %s4, %s874
      // Predicated region
      $region37: #{superpoint_forward.21} parent=35 // pred_check
        %p876 = pneg %p122
      $region38: #{superpoint_forward.21} parent=35 // pred_check_branch
        %878 = sbr.rel (%p876) target = $region40
      $region39: #{superpoint_forward.21} parent=35 // pred_region
        %s879 = smul.u32 8, %s15
      $region40: #{superpoint_forward.21} parent=35 // pred_fallthru
        _
    $region36: #{superpoint_forward.21} parent=5 // pred_fallthru
      _
    %p880 = scmp.le.s32.totalorder 2, %s10
    // Predicated region
    $region41: #{superpoint_forward.21} parent=5 // pred_check
      %p881 = pneg %p880
    $region42: #{superpoint_forward.21} parent=5 // pred_check_branch
      %883 = sbr.rel (%p881) target = $region44
    $region43: #{superpoint_forward.21} parent=5 // pred_region
      %s884 = ssub.s32 %s10, 2
      // Predicated region
      $region45: #{superpoint_forward.21} parent=43 // pred_check
        %p885 = pneg %p128
      $region46: #{superpoint_forward.21} parent=43 // pred_check_branch
        %887 = sbr.rel (%p885) target = $region48
      $region47: #{superpoint_forward.21} parent=43 // pred_region
        %s888 = smul.u32 8, %s16
        %p889 = scmp.lt.s32.totalorder %s888, 15
        %s890 = scalar_select %p889, %s888, 15
        %s891 = smul.addr %s890, 8
        %s892 = scalar_lea.vmem %s4, %s891
      $region48: #{superpoint_forward.21} parent=43 // pred_fallthru
        _
    $region44: #{superpoint_forward.21} parent=5 // pred_fallthru
      _
  $region6: #{superpoint_forward.21} parent=0 // loop_footer
    %s14 = sadd.s32 1, %s10
  $region7: #{superpoint_forward.21} parent=0 // loop_footer_branch
    %9 = sbr.rel target = $region3
  $region8: #{superpoint_forward.21} parent=0 // loop_exit
    _

// kernel: superpoint_forward.23
$region0: #{superpoint_forward.23}
  #allocation0 [shape = 'u32[]', space=smem, size = 0x4, offset = 0x4, fixed_abs, tag = 'smem constant byte address 0x4 - core index']
  #allocation1 [shape = 'u32[144,128]{1,0:T(1,128)}', space=vmem, size = 0x12000, scoped, tag = 'internal scratch']
  %s0 = inlined_call_operand.vmem [shape: f32[8,1024], index: 0, kind: input, shape index: {}, may-alias: {0,1}]
  %s1 = inlined_call_operand.vmem [shape: f32[8,1024], index: 1, kind: input, shape index: {}, may-alias: {0,1}]
  %s2 = inlined_call_operand.vmem [shape: f32[8,512], index: 2, kind: output, shape index: {}]
  %s3 = sld [smem:[#allocation0]]
  $region18: #{superpoint_forward.23} parent=0
    _
  %s5 = ssub.s32 1, %s3
  %s6 = scalar_select 0, %s5, %s3
  // Predicated region
  $region2: #{superpoint_forward.23} parent=0 // pred_check
    _
  $region3: #{superpoint_forward.23} parent=0 // pred_check_branch
    %8 = sbr.rel (0) target = $region5
  $region4: #{superpoint_forward.23} parent=0 // pred_region
    _
  $region5: #{superpoint_forward.23} parent=0 // pred_fallthru
    _
  // Predicated region
  $region6: #{superpoint_forward.23} parent=0 // pred_check
    _
  $region7: #{superpoint_forward.23} parent=0 // pred_check_branch
    %10 = sbr.rel (0) target = $region9
  $region8: #{superpoint_forward.23} parent=0 // pred_region
    %s11 = sadd.s32 0, 1
    %s12 = smul.u32 4, %s11
    %p13 = scmp.lt.s32.totalorder %s12, 7
    %s14 = scalar_select %p13, %s12, 7
    %s15 = smul.addr %s14, 8
    %s16 = scalar_lea.vmem %s1, %s15
    %s17 = sadd.s32 0, 1
    %s18 = smul.u32 4, %s17
  $region9: #{superpoint_forward.23} parent=0 // pred_fallthru
    _
  %s19 = sadd.s32 0, 1
  %s20 = smul.u32 4, %s19
  %p21 = scmp.lt.s32.totalorder %s20, 7
  %s22 = scalar_select %p21, %s20, 7
  %s23 = smul.addr %s22, 8
  %s24 = scalar_lea.vmem %s1, %s23
  %s25 = sadd.s32 0, 1
  %s26 = smul.u32 4, %s25
  %p27 = scmp.lt.s32.totalorder %s26, 7
  %s28 = scalar_select %p27, %s26, 7
  %s29 = smul.addr %s28, 8
  %s30 = scalar_lea.vmem %s1, %s29
  %s31 = sadd.s32 0, 1
  %s32 = smul.u32 4, %s31
  %v33 = vld [vmem:[%s0] sm:$0xff]
  %v34 = vld [vmem:[%s0 + $0x8] sm:$0xff]
  %v35 = vld [vmem:[%s0 + $0x10] sm:$0xff]
  %v36 = vld [vmem:[%s0 + $0x18] sm:$0xff]
  %v37 = vld [vmem:[%s30] sm:$0xff]
  %v38 = vld [vmem:[%s30 + $0x8] sm:$0xff]
  %v39 = vld [vmem:[%s30 + $0x10] sm:$0xff]
  %v40 = vld [vmem:[%s30 + $0x18] sm:$0xff]
  %v41 = vmax.f32 %v33, %v37
  %v42 = vmax.f32 %v34, %v38
  %v43 = vmax.f32 %v35, %v39
  %v44 = vmax.f32 %v36, %v40
  %45 = vst [vmem:[%s2] sm:$0xff] %v41
  %46 = vst [vmem:[%s2 + $0x8] sm:$0xff] %v42
  %47 = vst [vmem:[%s2 + $0x10] sm:$0xff] %v43
  %48 = vst [vmem:[%s2 + $0x18] sm:$0xff] %v44
  // Predicated region
  $region10: #{superpoint_forward.23} parent=0 // pred_check
    _
  $region11: #{superpoint_forward.23} parent=0 // pred_check_branch
    %50 = sbr.rel (0) target = $region13
  $region12: #{superpoint_forward.23} parent=0 // pred_region
    _
  $region13: #{superpoint_forward.23} parent=0 // pred_fallthru
    _
  // Predicated region
  $region14: #{superpoint_forward.23} parent=0 // pred_check
    _
  $region15: #{superpoint_forward.23} parent=0 // pred_check_branch
    %52 = sbr.rel (0) target = $region17
  $region16: #{superpoint_forward.23} parent=0 // pred_region
    _
  $region17: #{superpoint_forward.23} parent=0 // pred_fallthru
    _

// kernel: superpoint_forward.25
$region0: #{superpoint_forward.25}
  #allocation0 [shape = 'u32[]', space=smem, size = 0x4, offset = 0x4, fixed_abs, tag = 'smem constant byte address 0x4 - core index']
  #allocation1 [shape = 'u32[144,128]{1,0:T(1,128)}', space=vmem, size = 0x12000, scoped, tag = 'internal scratch']
  %s0 = inlined_call_operand.vmem [shape: bf16[32,576], index: 0, kind: input, shape index: {}]
  %s1 = inlined_call_operand.vmem [shape: bf16[576,128], index: 1, kind: input, shape index: {}]
  %s2 = inlined_call_operand.vmem [shape: f32[1,128], index: 2, kind: input, shape index: {}]
  %s3 = inlined_call_operand.vmem [shape: f32[1,128], index: 3, kind: input, shape index: {}]
  %s4 = inlined_call_operand.vmem [shape: f32[32,128], index: 4, kind: output, shape index: {}]
  %s5 = sld [smem:[#allocation0]]
  $region49: #{superpoint_forward.25} parent=0
    _
  %s7 = ssub.s32 1, %s5
  %s8 = scalar_select 0, %s7, %s5
  loop: start=0, step=1, limit=4
  $region2: #{superpoint_forward.25} parent=0 // loop_pre_header
    _
  $region3: #{superpoint_forward.25} parent=0 // loop_header
    %s10 = sphi 0, %s14
    %p11 = scmp.ge.s32.totalorder %s10, 4
    %s20 = sphi 0, %s22
    %s23 = sphi 0, %s20
    %s24 = sphi 0, %s23
    %s40 = sphi 0, %s24
    %s44 = sphi 0, %s44
    %s46 = sphi 0, %s44
    %s47 = sphi 0, %s46
    %s61 = sphi 0, %s47
    %s65 = sphi 0, %s65
    %s67 = sphi 0, %s65
    %s68 = sphi 0, %s67
    %s82 = sphi 0, %s68
    %s86 = sphi 0, %s86
    %s88 = sphi 0, %s86
    %s89 = sphi 0, %s88
    %s103 = sphi 0, %s89
    %s109 = sphi 0, %s111
    %s112 = sphi 0, %s109
    %s113 = sphi 0, %s112
    %s129 = sphi 0, %s113
  $region4: #{superpoint_forward.25} parent=0 // loop_header_branch
    %13 = sbr.rel (%p11) target = $region8
  $region5: #{superpoint_forward.25} parent=0 // loop_body
    %s15 = ssub.s32 %s10, 1
    %s16 = ssub.s32 %s10, 2
    %s17 = sadd.s32 %s10, 1
    %s18 = ssub.s32 %s10, %s17
    %p19 = scmp.eq.s32.totalorder %s18, 0
    %s21 = sadd.s32 %s20, 1
    %s22 = scalar_select %p19, %s20, %s21
    %p25 = pneg %p19
    %p26 = scmp.eq.s32.totalorder %s10, 1
    %p27 = por %p25, %p26
    %p28 = scmp.ne.s32.totalorder %s20, %s23
    %p29 = scmp.eq.s32.totalorder %s10, 0
    %p30 = por %p28, %p29
    %p31 = scmp.ne.s32.totalorder %s20, %s23
    %p32 = scmp.eq.s32.totalorder %s15, 1
    %p33 = por %p31, %p32
    %p34 = scmp.ne.s32.totalorder %s23, %s24
    %p35 = scmp.eq.s32.totalorder %s15, 0
    %p36 = por %p34, %p35
    %p37 = scmp.ne.s32.totalorder %s23, %s24
    %p38 = scmp.eq.s32.totalorder %s16, 1
    %p39 = por %p37, %p38
    %p41 = scmp.ne.s32.totalorder %s24, %s40
    %p42 = scmp.eq.s32.totalorder %s16, 0
    %p43 = por %p41, %p42
    %s45 = sadd.s32 %s44, 1
    %p48 = scmp.eq.s32.totalorder %s10, 1
    %p49 = scmp.ne.s32.totalorder %s44, %s46
    %p50 = scmp.eq.s32.totalorder %s10, 0
    %p51 = por %p49, %p50
    %p52 = scmp.ne.s32.totalorder %s44, %s46
    %p53 = scmp.eq.s32.totalorder %s15, 1
    %p54 = por %p52, %p53
    %p55 = scmp.ne.s32.totalorder %s46, %s47
    %p56 = scmp.eq.s32.totalorder %s15, 0
    %p57 = por %p55, %p56
    %p58 = scmp.ne.s32.totalorder %s46, %s47
    %p59 = scmp.eq.s32.totalorder %s16, 1
    %p60 = por %p58, %p59
    %p62 = scmp.ne.s32.totalorder %s47, %s61
    %p63 = scmp.eq.s32.totalorder %s16, 0
    %p64 = por %p62, %p63
    %s66 = sadd.s32 %s65, 1
    %p69 = scmp.eq.s32.totalorder %s10, 1
    %p70 = scmp.ne.s32.totalorder %s65, %s67
    %p71 = scmp.eq.s32.totalorder %s10, 0
    %p72 = por %p70, %p71
    %p73 = scmp.ne.s32.totalorder %s65, %s67
    %p74 = scmp.eq.s32.totalorder %s15, 1
    %p75 = por %p73, %p74
    %p76 = scmp.ne.s32.totalorder %s67, %s68
    %p77 = scmp.eq.s32.totalorder %s15, 0
    %p78 = por %p76, %p77
    %p79 = scmp.ne.s32.totalorder %s67, %s68
    %p80 = scmp.eq.s32.totalorder %s16, 1
    %p81 = por %p79, %p80
    %p83 = scmp.ne.s32.totalorder %s68, %s82
    %p84 = scmp.eq.s32.totalorder %s16, 0
    %p85 = por %p83, %p84
    %s87 = sadd.s32 %s86, 1
    %p90 = scmp.eq.s32.totalorder %s10, 1
    %p91 = scmp.ne.s32.totalorder %s86, %s88
    %p92 = scmp.eq.s32.totalorder %s10, 0
    %p93 = por %p91, %p92
    %p94 = scmp.ne.s32.totalorder %s86, %s88
    %p95 = scmp.eq.s32.totalorder %s15, 1
    %p96 = por %p94, %p95
    %p97 = scmp.ne.s32.totalorder %s88, %s89
    %p98 = scmp.eq.s32.totalorder %s15, 0
    %p99 = por %p97, %p98
    %p100 = scmp.ne.s32.totalorder %s88, %s89
    %p101 = scmp.eq.s32.totalorder %s16, 1
    %p102 = por %p100, %p101
    %p104 = scmp.ne.s32.totalorder %s89, %s103
    %p105 = scmp.eq.s32.totalorder %s16, 0
    %p106 = por %p104, %p105
    %s107 = ssub.s32 %s10, %s17
    %p108 = scmp.eq.s32.totalorder %s107, 0
    %s110 = sadd.s32 %s109, 1
    %s111 = scalar_select %p108, %s109, %s110
    %p114 = pneg %p108
    %p115 = scmp.eq.s32.totalorder %s10, 1
    %p116 = por %p114, %p115
    %p117 = scmp.ne.s32.totalorder %s109, %s112
    %p118 = scmp.eq.s32.totalorder %s10, 0
    %p119 = por %p117, %p118
    %p120 = scmp.ne.s32.totalorder %s109, %s112
    %p121 = scmp.eq.s32.totalorder %s15, 1
    %p122 = por %p120, %p121
    %p123 = scmp.ne.s32.totalorder %s112, %s113
    %p124 = scmp.eq.s32.totalorder %s15, 0
    %p125 = por %p123, %p124
    %p126 = scmp.ne.s32.totalorder %s112, %s113
    %p127 = scmp.eq.s32.totalorder %s16, 1
    %p128 = por %p126, %p127
    %p130 = scmp.ne.s32.totalorder %s113, %s129
    %p131 = scmp.eq.s32.totalorder %s16, 0
    %p132 = por %p130, %p131
    %p133 = scmp.le.s32.totalorder 1, %s10
    %p134 = scmp.lt.s32.totalorder %s10, 3
    %p135 = pnand %p133, %p134
    %p136 = pneg %p135
    // Predicated region
    $region9: #{superpoint_forward.25} parent=5 // pred_check
      _
    $region10: #{superpoint_forward.25} parent=5 // pred_check_branch
      %138 = sbr.rel (%p135) target = $region12
    $region11: #{superpoint_forward.25} parent=5 // pred_region
      %s139 = ssub.s32 %s10, 1
      // Predicated region
      $region13: #{superpoint_forward.25} parent=11 // pred_check
        %p140 = pneg %p57
      $region14: #{superpoint_forward.25} parent=11 // pred_check_branch
        %142 = sbr.rel (%p140) target = $region16
      $region15: #{superpoint_forward.25} parent=11 // pred_region
        _
      $region16: #{superpoint_forward.25} parent=11 // pred_fallthru
        _
      // Predicated region
      $region17: #{superpoint_forward.25} parent=11 // pred_check
        %p143 = pneg %p78
      $region18: #{superpoint_forward.25} parent=11 // pred_check_branch
        %145 = sbr.rel (%p143) target = $region20
      $region19: #{superpoint_forward.25} parent=11 // pred_region
        _
      $region20: #{superpoint_forward.25} parent=11 // pred_fallthru
        _
      // Predicated region
      $region21: #{superpoint_forward.25} parent=11 // pred_check
        %p146 = pneg %p99
      $region22: #{superpoint_forward.25} parent=11 // pred_check_branch
        %148 = sbr.rel (%p146) target = $region24
      $region23: #{superpoint_forward.25} parent=11 // pred_region
        _
      $region24: #{superpoint_forward.25} parent=11 // pred_fallthru
        _
    $region12: #{superpoint_forward.25} parent=5 // pred_fallthru
      _
    %p149 = scmp.lt.s32.totalorder %s10, 2
    // Predicated region
    $region25: #{superpoint_forward.25} parent=5 // pred_check
      %p150 = pneg %p149
    $region26: #{superpoint_forward.25} parent=5 // pred_check_branch
      %152 = sbr.rel (%p150) target = $region28
    $region27: #{superpoint_forward.25} parent=5 // pred_region
      // Predicated region
      $region29: #{superpoint_forward.25} parent=27 // pred_check
        %p153 = pneg %p30
      $region30: #{superpoint_forward.25} parent=27 // pred_check_branch
        %155 = sbr.rel (%p153) target = $region32
      $region31: #{superpoint_forward.25} parent=27 // pred_region
        %s156 = smul.u32 2, %s10
        %p157 = scmp.lt.s32.totalorder %s156, 3
        %s158 = scalar_select %p157, %s156, 3
        %s159 = smul.addr %s158, 5
        %s160 = smul.addr %s159, 4
        %s161 = scalar_lea.vmem %s0, %s160
        %s162 = smul.u32 2, %s10
      $region32: #{superpoint_forward.25} parent=27 // pred_fallthru
        _
    $region28: #{superpoint_forward.25} parent=5 // pred_fallthru
      _
    %p163 = scmp.le.s32.totalorder 1, %s10
    %p164 = scmp.lt.s32.totalorder %s10, 3
    %p165 = pnand %p163, %p164
    %p166 = pneg %p165
    // Predicated region
    $region33: #{superpoint_forward.25} parent=5 // pred_check
      _
    $region34: #{superpoint_forward.25} parent=5 // pred_check_branch
      %168 = sbr.rel (%p165) target = $region36
    $region35: #{superpoint_forward.25} parent=5 // pred_region
      %s169 = ssub.s32 %s10, 1
      %s170 = smul.u32 2, %s15
      %p171 = scmp.lt.s32.totalorder %s170, 3
      %s172 = scalar_select %p171, %s170, 3
      %s173 = smul.addr %s172, 5
      %s174 = smul.addr %s173, 4
      %s175 = scalar_lea.vmem %s0, %s174
      %p176 = pneg %p36
      %p177 = pneg %p33
      %p178 = pneg %p57
      %p179 = pneg %p54
      %p180 = pneg %p78
      %p181 = pneg %p75
      %p182 = pneg %p99
      %p183 = pneg %p96
      %p184 = pneg %p125
      %p185 = pneg %p122
      %s186 = smul.u32 2, %s15
      %p187 = scmp.lt.s32.totalorder %s186, 3
      %s188 = scalar_select %p187, %s186, 3
      %s189 = smul.addr %s188, 8
      %s190 = scalar_lea.vmem %s4, %s189
      %s191 = smul.u32 2, %s15
      %p192 = scmp.lt.s32.totalorder %s191, 3
      %s193 = scalar_select %p192, %s191, 3
      %s194 = smul.addr %s193, 5
      %s195 = smul.addr %s194, 4
      %s196 = scalar_lea.vmem %s0, %s195
      %s197 = smul.u32 2, %s15
      %s198 = smul.u32 2, %s15
      %p199 = scmp.lt.s32.totalorder %s198, 3
      %s200 = scalar_select %p199, %s198, 3
      %s201 = smul.addr %s200, 8
      %s202 = scalar_lea.vmem %s4, %s201
      %s203 = smul.u32 2, %s15
      %v205 = vld [vmem:[%s196] sm:$0xff]
      %v206 = vld [vmem:[%s196 + $0x8] sm:$0xff]
      %v207 = vld [vmem:[%s196 + $0x10] sm:$0xf]
      %v208 = vld [vmem:[%s196 + $0x14] sm:$0xff]
      %v209 = vld [vmem:[%s196 + $0x1c] sm:$0xff]
      %v210 = vld [vmem:[%s196 + $0x24] sm:$0xf]
      %v211 = vld [vmem:[%s1] sm:$0xf]
      %v212 = vld [vmem:[%s1 + $0x4] sm:$0xf]
      %v213 = vld [vmem:[%s1 + $0x8] sm:$0xf]
      %v214 = vld [vmem:[%s1 + $0xc] sm:$0xf]
      %v215 = vld [vmem:[%s1 + $0x10] sm:$0xf]
      %v216 = vld [vmem:[%s1 + $0x14] sm:$0xf]
      %v217 = vld [vmem:[%s1 + $0x18] sm:$0xf]
      %v218 = vld [vmem:[%s1 + $0x1c] sm:$0xf]
      %v219 = vld [vmem:[%s1 + $0x20] sm:$0xf]
      %v220 = vld [vmem:[%s1 + $0x24] sm:$0xf]
      %v221 = vld [vmem:[%s1 + $0x28] sm:$0xf]
      %v222 = vld [vmem:[%s1 + $0x2c] sm:$0xf]
      %v223 = vld [vmem:[%s1 + $0x30] sm:$0xf]
      %v224 = vld [vmem:[%s1 + $0x34] sm:$0xf]
      %v225 = vld [vmem:[%s1 + $0x38] sm:$0xf]
      %v226 = vld [vmem:[%s1 + $0x3c] sm:$0xf]
      %v227 = vld [vmem:[%s1 + $0x40] sm:$0xf]
      %v228 = vld [vmem:[%s1 + $0x44] sm:$0xf]
      %v229 = vld [vmem:[%s1 + $0x48] sm:$0xf]
      %v230 = vld [vmem:[%s1 + $0x4c] sm:$0xf]
      %v231 = vld [vmem:[%s1 + $0x50] sm:$0xf]
      %v232 = vld [vmem:[%s1 + $0x54] sm:$0xf]
      %v233 = vld [vmem:[%s1 + $0x58] sm:$0xf]
      %v234 = vld [vmem:[%s1 + $0x5c] sm:$0xf]
      %v235 = vld [vmem:[%s1 + $0x60] sm:$0xf]
      %v236 = vld [vmem:[%s1 + $0x64] sm:$0xf]
      %v237 = vld [vmem:[%s1 + $0x68] sm:$0xf]
      %v238 = vld [vmem:[%s1 + $0x6c] sm:$0xf]
      %v239 = vld [vmem:[%s1 + $0x70] sm:$0xf]
      %v240 = vld [vmem:[%s1 + $0x74] sm:$0xf]
      %v241 = vld [vmem:[%s1 + $0x78] sm:$0xf]
      %v242 = vld [vmem:[%s1 + $0x7c] sm:$0xf]
      %v243 = vld [vmem:[%s1 + $0x80] sm:$0xf]
      %v244 = vld [vmem:[%s1 + $0x84] sm:$0xf]
      %v245 = vld [vmem:[%s1 + $0x88] sm:$0xf]
      %v246 = vld [vmem:[%s1 + $0x8c] sm:$0xf]
      %v247 = vld [vmem:[%s1 + $0x90] sm:$0xf]
      %v248 = vld [vmem:[%s1 + $0x94] sm:$0xf]
      %v249 = vld [vmem:[%s1 + $0x98] sm:$0xf]
      %v250 = vld [vmem:[%s1 + $0x9c] sm:$0xf]
      %v251 = vld [vmem:[%s1 + $0xa0] sm:$0xf]
      %v252 = vld [vmem:[%s1 + $0xa4] sm:$0xf]
      %v253 = vld [vmem:[%s1 + $0xa8] sm:$0xf]
      %v254 = vld [vmem:[%s1 + $0xac] sm:$0xf]
      %v255 = vld [vmem:[%s1 + $0xb0] sm:$0xf]
      %v256 = vld [vmem:[%s1 + $0xb4] sm:$0xf]
      %v257 = vld [vmem:[%s1 + $0xb8] sm:$0xf]
      %v258 = vld [vmem:[%s1 + $0xbc] sm:$0xf]
      %v259 = vld [vmem:[%s1 + $0xc0] sm:$0xf]
      %v260 = vld [vmem:[%s1 + $0xc4] sm:$0xf]
      %v261 = vld [vmem:[%s1 + $0xc8] sm:$0xf]
      %v262 = vld [vmem:[%s1 + $0xcc] sm:$0xf]
      %v263 = vld [vmem:[%s1 + $0xd0] sm:$0xf]
      %v264 = vld [vmem:[%s1 + $0xd4] sm:$0xf]
      %v265 = vld [vmem:[%s1 + $0xd8] sm:$0xf]
      %v266 = vld [vmem:[%s1 + $0xdc] sm:$0xf]
      %v267 = vld [vmem:[%s1 + $0xe0] sm:$0xf]
      %v268 = vld [vmem:[%s1 + $0xe4] sm:$0xf]
      %v269 = vld [vmem:[%s1 + $0xe8] sm:$0xf]
      %v270 = vld [vmem:[%s1 + $0xec] sm:$0xf]
      %v271 = vld [vmem:[%s1 + $0xf0] sm:$0xf]
      %v272 = vld [vmem:[%s1 + $0xf4] sm:$0xf]
      %v273 = vld [vmem:[%s1 + $0xf8] sm:$0xf]
      %v274 = vld [vmem:[%s1 + $0xfc] sm:$0xf]
      %v275 = vld [vmem:[%s1 + $0x100] sm:$0xf]
      %v276 = vld [vmem:[%s1 + $0x104] sm:$0xf]
      %v277 = vld [vmem:[%s1 + $0x108] sm:$0xf]
      %v278 = vld [vmem:[%s1 + $0x10c] sm:$0xf]
      %v279 = vld [vmem:[%s1 + $0x110] sm:$0xf]
      %v280 = vld [vmem:[%s1 + $0x114] sm:$0xf]
      %v281 = vld [vmem:[%s1 + $0x118] sm:$0xf]
      %v282 = vld [vmem:[%s1 + $0x11c] sm:$0xf]
      %v289 = vunpack.c.l.b16 %v205
      %v290 = vunpack.c.h.b16 %v205
      %v291 = vunpack.c.l.b16 %v206
      %v292 = vunpack.c.h.b16 %v206
      %v293 = vunpack.c.l.b16 %v207
      %v294 = vunpack.c.l.b16 %v208
      %v295 = vunpack.c.h.b16 %v208
      %v296 = vunpack.c.l.b16 %v209
      %v297 = vunpack.c.h.b16 %v209
      %v298 = vunpack.c.l.b16 %v210
      %v299 = vpack.c.b16 %v294, %v289
      %v300 = vpack.c.b16 %v295, %v290
      %v301 = vpack.c.b16 %v296, %v291
      %v302 = vpack.c.b16 %v297, %v292
      %v303 = vpack.c.b16 %v298, %v293
      %v380 = vunpack.c.l.b16 %v211
      %v381 = vunpack.c.l.b16 %v212
      %v382 = vunpack.c.l.b16 %v213
      %v383 = vunpack.c.l.b16 %v214
      %v384 = vunpack.c.l.b16 %v215
      %v385 = vunpack.c.l.b16 %v216
      %v386 = vunpack.c.l.b16 %v217
      %v387 = vunpack.c.l.b16 %v218
      %v388 = vunpack.c.l.b16 %v219
      %v389 = vunpack.c.l.b16 %v220
      %v390 = vunpack.c.l.b16 %v221
      %v391 = vunpack.c.l.b16 %v222
      %v392 = vunpack.c.l.b16 %v223
      %v393 = vunpack.c.l.b16 %v224
      %v394 = vunpack.c.l.b16 %v225
      %v395 = vunpack.c.l.b16 %v226
      %v396 = vunpack.c.l.b16 %v227
      %v397 = vunpack.c.l.b16 %v228
      %v398 = vunpack.c.l.b16 %v229
      %v399 = vunpack.c.l.b16 %v230
      %v400 = vunpack.c.l.b16 %v231
      %v401 = vunpack.c.l.b16 %v232
      %v402 = vunpack.c.l.b16 %v233
      %v403 = vunpack.c.l.b16 %v234
      %v404 = vunpack.c.l.b16 %v235
      %v405 = vunpack.c.l.b16 %v236
      %v406 = vunpack.c.l.b16 %v237
      %v407 = vunpack.c.l.b16 %v238
      %v408 = vunpack.c.l.b16 %v239
      %v409 = vunpack.c.l.b16 %v240
      %v410 = vunpack.c.l.b16 %v241
      %v411 = vunpack.c.l.b16 %v242
      %v412 = vunpack.c.l.b16 %v243
      %v413 = vunpack.c.l.b16 %v244
      %v414 = vunpack.c.l.b16 %v245
      %v415 = vunpack.c.l.b16 %v246
      %v416 = vunpack.c.l.b16 %v247
      %v417 = vunpack.c.l.b16 %v248
      %v418 = vunpack.c.l.b16 %v249
      %v419 = vunpack.c.l.b16 %v250
      %v420 = vunpack.c.l.b16 %v251
      %v421 = vunpack.c.l.b16 %v252
      %v422 = vunpack.c.l.b16 %v253
      %v423 = vunpack.c.l.b16 %v254
      %v424 = vunpack.c.l.b16 %v255
      %v425 = vunpack.c.l.b16 %v256
      %v426 = vunpack.c.l.b16 %v257
      %v427 = vunpack.c.l.b16 %v258
      %v428 = vunpack.c.l.b16 %v259
      %v429 = vunpack.c.l.b16 %v260
      %v430 = vunpack.c.l.b16 %v261
      %v431 = vunpack.c.l.b16 %v262
      %v432 = vunpack.c.l.b16 %v263
      %v433 = vunpack.c.l.b16 %v264
      %v434 = vunpack.c.l.b16 %v265
      %v435 = vunpack.c.l.b16 %v266
      %v436 = vunpack.c.l.b16 %v267
      %v437 = vunpack.c.l.b16 %v268
      %v438 = vunpack.c.l.b16 %v269
      %v439 = vunpack.c.l.b16 %v270
      %v440 = vunpack.c.l.b16 %v271
      %v441 = vunpack.c.l.b16 %v272
      %v442 = vunpack.c.l.b16 %v273
      %v443 = vunpack.c.l.b16 %v274
      %v444 = vunpack.c.l.b16 %v275
      %v445 = vunpack.c.l.b16 %v276
      %v446 = vunpack.c.l.b16 %v277
      %v447 = vunpack.c.l.b16 %v278
      %v448 = vunpack.c.l.b16 %v279
      %v449 = vunpack.c.l.b16 %v280
      %v450 = vunpack.c.l.b16 %v281
      %v451 = vunpack.c.l.b16 %v282
      %v452 = vpack.c.b16 %v381, %v380
      %v453 = vpack.c.b16 %v383, %v382
      %v454 = vpack.c.b16 %v385, %v384
      %v455 = vpack.c.b16 %v387, %v386
      %v456 = vpack.c.b16 %v389, %v388
      %v457 = vpack.c.b16 %v391, %v390
      %v458 = vpack.c.b16 %v393, %v392
      %v459 = vpack.c.b16 %v395, %v394
      %v460 = vpack.c.b16 %v397, %v396
      %v461 = vpack.c.b16 %v399, %v398
      %v462 = vpack.c.b16 %v401, %v400
      %v463 = vpack.c.b16 %v403, %v402
      %v464 = vpack.c.b16 %v405, %v404
      %v465 = vpack.c.b16 %v407, %v406
      %v466 = vpack.c.b16 %v409, %v408
      %v467 = vpack.c.b16 %v411, %v410
      %v468 = vpack.c.b16 %v413, %v412
      %v469 = vpack.c.b16 %v415, %v414
      %v470 = vpack.c.b16 %v417, %v416
      %v471 = vpack.c.b16 %v419, %v418
      %v472 = vpack.c.b16 %v421, %v420
      %v473 = vpack.c.b16 %v423, %v422
      %v474 = vpack.c.b16 %v425, %v424
      %v475 = vpack.c.b16 %v427, %v426
      %v476 = vpack.c.b16 %v429, %v428
      %v477 = vpack.c.b16 %v431, %v430
      %v478 = vpack.c.b16 %v433, %v432
      %v479 = vpack.c.b16 %v435, %v434
      %v480 = vpack.c.b16 %v437, %v436
      %v481 = vpack.c.b16 %v439, %v438
      %v482 = vpack.c.b16 %v441, %v440
      %v483 = vpack.c.b16 %v443, %v442
      %v484 = vpack.c.b16 %v445, %v444
      %v485 = vpack.c.b16 %v447, %v446
      %v486 = vpack.c.b16 %v449, %v448
      %v487 = vpack.c.b16 %v451, %v450
      %vm524 = vcmask 523264
      %v526 = vsel %vm524, %v303, 0
      %528 = vmatprep.subr.bf16.mxu0 0
      %529 = vmatpush1.bf16.msra.mxu0 %v452
      %530 = vmatprep.subr.bf16.mxu0 0
      %531 = vmatpush1.bf16.msra.mxu0 %v453
      %532 = vmatprep.subr.bf16.mxu0 0
      %533 = vmatpush1.bf16.msra.mxu0 %v454
      %534 = vmatprep.subr.bf16.mxu0 0
      %535 = vmatpush1.bf16.msra.mxu0 %v455
      %536 = vmatprep.subr.bf16.mxu0 0
      %537 = vmatpush1.bf16.msra.mxu0 %v456
      %538 = vmatprep.subr.bf16.mxu0 0
      %539 = vmatpush1.bf16.msra.mxu0 %v457
      %540 = vmatprep.subr.bf16.mxu0 0
      %541 = vmatpush1.bf16.msra.mxu0 %v458
      %542 = vmatprep.subr.bf16.mxu0 0
      %543 = vmatpush1.bf16.msra.mxu0 %v459
      %544 = vmatprep.subr.bf16.mxu0 0
      %545 = vmatpush1.bf16.msra.mxu0 %v460
      %546 = vmatprep.subr.bf16.mxu0 0
      %547 = vmatpush1.bf16.msra.mxu0 %v461
      %548 = vmatprep.subr.bf16.mxu0 0
      %549 = vmatpush1.bf16.msra.mxu0 %v462
      %550 = vmatprep.subr.bf16.mxu0 0
      %551 = vmatpush1.bf16.msra.mxu0 %v463
      %552 = vmatprep.subr.bf16.mxu0 0
      %553 = vmatpush1.bf16.msra.mxu0 %v464
      %554 = vmatprep.subr.bf16.mxu0 0
      %555 = vmatpush1.bf16.msra.mxu0 %v465
      %556 = vmatprep.subr.bf16.mxu0 0
      %557 = vmatpush1.bf16.msra.mxu0 %v466
      %558 = vmatprep.subr.bf16.mxu0 0
      %559 = vmatpush1.bf16.msra.mxu0 %v467
      %560 = vmatprep.mubr.bf16.mxu0 %v300
      %561 = vmatmul.mubr.bf16.gmra.mrb[0].mxu0 %v299
      %v562 = vpop.f32.mrb[0].mxu0
      %v563 = vadd.f32 0.0, %v562
      %v564 = vpop.f32.mrb[0].mxu0
      %v565 = vpop.f32.mrb[0].mxu0
      %v566 = vadd.f32 0.0, %v565
      %v567 = vpop.f32.mrb[0].mxu0
      %568 = vdwg.mxu0
      %569 = vmatprep.subr.bf16.mxu0 0
      %570 = vmatpush1.bf16.msra.mxu0 %v468
      %571 = vmatprep.subr.bf16.mxu0 0
      %572 = vmatpush1.bf16.msra.mxu0 %v469
      %573 = vmatprep.subr.bf16.mxu0 0
      %574 = vmatpush1.bf16.msra.mxu0 %v470
      %575 = vmatprep.subr.bf16.mxu0 0
      %576 = vmatpush1.bf16.msra.mxu0 %v471
      %577 = vmatprep.subr.bf16.mxu0 0
      %578 = vmatpush1.bf16.msra.mxu0 %v472
      %579 = vmatprep.subr.bf16.mxu0 0
      %580 = vmatpush1.bf16.msra.mxu0 %v473
      %581 = vmatprep.subr.bf16.mxu0 0
      %582 = vmatpush1.bf16.msra.mxu0 %v474
      %583 = vmatprep.subr.bf16.mxu0 0
      %584 = vmatpush1.bf16.msra.mxu0 %v475
      %585 = vmatprep.subr.bf16.mxu0 0
      %586 = vmatpush1.bf16.msra.mxu0 %v476
      %587 = vmatprep.subr.bf16.mxu0 0
      %588 = vmatpush1.bf16.msra.mxu0 %v477
      %589 = vmatprep.subr.bf16.mxu0 0
      %590 = vmatpush1.bf16.msra.mxu0 %v478
      %591 = vmatprep.subr.bf16.mxu0 0
      %592 = vmatpush1.bf16.msra.mxu0 %v479
      %593 = vmatprep.subr.bf16.mxu0 0
      %594 = vmatpush1.bf16.msra.mxu0 %v480
      %595 = vmatprep.subr.bf16.mxu0 0
      %596 = vmatpush1.bf16.msra.mxu0 %v481
      %597 = vmatprep.subr.bf16.mxu0 0
      %598 = vmatpush1.bf16.msra.mxu0 %v482
      %599 = vmatprep.subr.bf16.mxu0 0
      %600 = vmatpush1.bf16.msra.mxu0 %v483
      %601 = vmatprep.mubr.bf16.mxu0 %v302
      %602 = vmatmul.mubr.bf16.gmra.mrb[0].mxu0 %v301
      %v603 = vpop.f32.mrb[0].mxu0
      %v604 = vadd.f32 %v563, %v603
      %v605 = vpop.f32.mrb[0].mxu0
      %v606 = vpop.f32.mrb[0].mxu0
      %v607 = vadd.f32 %v566, %v606
      %v608 = vpop.f32.mrb[0].mxu0
      %609 = vdwg.mxu0
      %610 = vmatprep.subr.bf16.mxu0 0
      %611 = vmatpush1.bf16.msra.mxu0 %v484
      %612 = vmatprep.subr.bf16.mxu0 0
      %613 = vmatpush1.bf16.msra.mxu0 %v485
      %614 = vmatprep.subr.bf16.mxu0 0
      %615 = vmatpush1.bf16.msra.mxu0 %v486
      %616 = vmatprep.subr.bf16.mxu0 0
      %617 = vmatpush1.bf16.msra.mxu0 %v487
      %618 = vmatprep.subr.bf16.mxu0 0
      %619 = vmatpush1.bf16.msra.mxu0 0
      %620 = vmatprep.subr.bf16.mxu0 0
      %621 = vmatpush1.bf16.msra.mxu0 0
      %622 = vmatprep.subr.bf16.mxu0 0
      %623 = vmatpush1.bf16.msra.mxu0 0
      %624 = vmatprep.subr.bf16.mxu0 0
      %625 = vmatpush1.bf16.msra.mxu0 0
      %626 = vmatprep.subr.bf16.mxu0 0
      %627 = vmatpush1.bf16.msra.mxu0 0
      %628 = vmatprep.subr.bf16.mxu0 0
      %629 = vmatpush1.bf16.msra.mxu0 0
      %630 = vmatprep.subr.bf16.mxu0 0
      %631 = vmatpush1.bf16.msra.mxu0 0
      %632 = vmatprep.subr.bf16.mxu0 0
      %633 = vmatpush1.bf16.msra.mxu0 0
      %634 = vmatprep.subr.bf16.mxu0 0
      %635 = vmatpush1.bf16.msra.mxu0 0
      %636 = vmatprep.subr.bf16.mxu0 0
      %637 = vmatpush1.bf16.msra.mxu0 0
      %638 = vmatprep.subr.bf16.mxu0 0
      %639 = vmatpush1.bf16.msra.mxu0 0
      %640 = vmatprep.subr.bf16.mxu0 0
      %641 = vmatpush1.bf16.msra.mxu0 0
      %642 = vmatprep.mubr.bf16.mxu0 0
      %643 = vmatmul.mubr.bf16.gmra.mrb[0].mxu0 %v526
      %v644 = vpop.f32.mrb[0].mxu0
      %v645 = vadd.f32 %v604, %v644
      %v646 = vpop.f32.mrb[0].mxu0
      %v647 = vpop.f32.mrb[0].mxu0
      %v648 = vadd.f32 %v607, %v647
      %v649 = vpop.f32.mrb[0].mxu0
      %650 = vdwg.mxu0
      %v651 = vld [vmem:[%s2] sm:$0x1]
      %v653 = vlaneseq
      %v654 = vshrl.u32 %v653, 7
      %v655 = vsub.s32 0, %v654
      %v656 = vrot.slane %v651, %v655
      %v658 = vmul.f32 %v645, %v656
      %v659 = vmul.f32 %v648, %v656
      %v660 = vld [vmem:[%s3] sm:$0x1]
      %v662 = vlaneseq
      %v663 = vshrl.u32 %v662, 7
      %v664 = vsub.s32 0, %v663
      %v665 = vrot.slane %v660, %v664
      %v667 = vadd.f32 %v658, %v665
      %v668 = vadd.f32 %v659, %v665
      %v669 = vmax.f32 %v667, 0.0
      %v670 = vmax.f32 %v668, 0.0
      %671 = vst [vmem:[%s202] sm:$0xff] %v669
      %672 = vst [vmem:[%s202 + $0x8] sm:$0xff] %v670
      %s673 = smul.u32 2, %s15
      %p674 = scmp.lt.s32.totalorder %s673, 3
      %s675 = scalar_select %p674, %s673, 3
      %s676 = smul.addr %s675, 8
      %s677 = scalar_lea.vmem %s4, %s676
      // Predicated region
      $region37: #{superpoint_forward.25} parent=35 // pred_check
        %p678 = pneg %p122
      $region38: #{superpoint_forward.25} parent=35 // pred_check_branch
        %680 = sbr.rel (%p678) target = $region40
      $region39: #{superpoint_forward.25} parent=35 // pred_region
        %s681 = smul.u32 2, %s15
      $region40: #{superpoint_forward.25} parent=35 // pred_fallthru
        _
    $region36: #{superpoint_forward.25} parent=5 // pred_fallthru
      _
    %p682 = scmp.le.s32.totalorder 2, %s10
    // Predicated region
    $region41: #{superpoint_forward.25} parent=5 // pred_check
      %p683 = pneg %p682
    $region42: #{superpoint_forward.25} parent=5 // pred_check_branch
      %685 = sbr.rel (%p683) target = $region44
    $region43: #{superpoint_forward.25} parent=5 // pred_region
      %s686 = ssub.s32 %s10, 2
      // Predicated region
      $region45: #{superpoint_forward.25} parent=43 // pred_check
        %p687 = pneg %p128
      $region46: #{superpoint_forward.25} parent=43 // pred_check_branch
        %689 = sbr.rel (%p687) target = $region48
      $region47: #{superpoint_forward.25} parent=43 // pred_region
        %s690 = smul.u32 2, %s16
        %p691 = scmp.lt.s32.totalorder %s690, 3
        %s692 = scalar_select %p691, %s690, 3
        %s693 = smul.addr %s692, 8
        %s694 = scalar_lea.vmem %s4, %s693
      $region48: #{superpoint_forward.25} parent=43 // pred_fallthru
        _
    $region44: #{superpoint_forward.25} parent=5 // pred_fallthru
      _
  $region6: #{superpoint_forward.25} parent=0 // loop_footer
    %s14 = sadd.s32 1, %s10
  $region7: #{superpoint_forward.25} parent=0 // loop_footer_branch
    %9 = sbr.rel target = $region3
  $region8: #{superpoint_forward.25} parent=0 // loop_exit
    _

// kernel: superpoint_forward.28
$region0: #{superpoint_forward.28}
  #allocation0 [shape = 'u32[]', space=smem, size = 0x4, offset = 0x4, fixed_abs, tag = 'smem constant byte address 0x4 - core index']
  #allocation1 [shape = 'u32[144,128]{1,0:T(1,128)}', space=vmem, size = 0x12000, scoped, tag = 'internal scratch']
  %s0 = inlined_call_operand.vmem [shape: f32[8,512], index: 0, kind: input, shape index: {}]
  %s1 = inlined_call_operand.vmem [shape: f32[8,256], index: 1, kind: output, shape index: {}]
  %s2 = sld [smem:[#allocation0]]
  $region14: #{superpoint_forward.28} parent=0
    _
  %s4 = ssub.s32 1, %s2
  %s5 = scalar_select 0, %s4, %s2
  // Predicated region
  $region2: #{superpoint_forward.28} parent=0 // pred_check
    _
  $region3: #{superpoint_forward.28} parent=0 // pred_check_branch
    %7 = sbr.rel (0) target = $region5
  $region4: #{superpoint_forward.28} parent=0 // pred_region
    _
  $region5: #{superpoint_forward.28} parent=0 // pred_fallthru
    _
  %v8 = vld [vmem:[%s0] sm:$0xff]
  %v9 = vld [vmem:[%s0 + $0x8] sm:$0xff]
  %v10 = vld [vmem:[%s0 + $0x10] sm:$0xff]
  %v11 = vld [vmem:[%s0 + $0x18] sm:$0xff]
  %v12 = vmax.f32 %v8, %v9
  %v13 = vmax.f32 %v10, %v11
  %14 = vst [vmem:[%s1] sm:$0xff] %v12
  %15 = vst [vmem:[%s1 + $0x8] sm:$0xff] %v13
  // Predicated region
  $region6: #{superpoint_forward.28} parent=0 // pred_check
    _
  $region7: #{superpoint_forward.28} parent=0 // pred_check_branch
    %17 = sbr.rel (0) target = $region9
  $region8: #{superpoint_forward.28} parent=0 // pred_region
    _
  $region9: #{superpoint_forward.28} parent=0 // pred_fallthru
    _
  // Predicated region
  $region10: #{superpoint_forward.28} parent=0 // pred_check
    _
  $region11: #{superpoint_forward.28} parent=0 // pred_check_branch
    %19 = sbr.rel (0) target = $region13
  $region12: #{superpoint_forward.28} parent=0 // pred_region
    _
  $region13: #{superpoint_forward.28} parent=0 // pred_fallthru
    _

// kernel: superpoint_forward.26
$region0: #{superpoint_forward.26}
  #allocation0 [shape = 'u32[]', space=smem, size = 0x4, offset = 0x4, fixed_abs, tag = 'smem constant byte address 0x4 - core index']
  #allocation1 [shape = 'u32[144,128]{1,0:T(1,128)}', space=vmem, size = 0x12000, scoped, tag = 'internal scratch']
  %s0 = inlined_call_operand.vmem [shape: bf16[32,1152], index: 0, kind: input, shape index: {}]
  %s1 = inlined_call_operand.vmem [shape: bf16[1152,128], index: 1, kind: input, shape index: {}]
  %s2 = inlined_call_operand.vmem [shape: f32[1,128], index: 2, kind: input, shape index: {}]
  %s3 = inlined_call_operand.vmem [shape: f32[1,128], index: 3, kind: input, shape index: {}]
  %s4 = inlined_call_operand.vmem [shape: f32[32,128], index: 4, kind: output, shape index: {}]
  %s5 = sld [smem:[#allocation0]]
  $region49: #{superpoint_forward.26} parent=0
    _
  %s7 = ssub.s32 1, %s5
  %s8 = scalar_select 0, %s7, %s5
  loop: start=0, step=1, limit=4
  $region2: #{superpoint_forward.26} parent=0 // loop_pre_header
    _
  $region3: #{superpoint_forward.26} parent=0 // loop_header
    %s10 = sphi 0, %s14
    %p11 = scmp.ge.s32.totalorder %s10, 4
    %s20 = sphi 0, %s22
    %s23 = sphi 0, %s20
    %s24 = sphi 0, %s23
    %s40 = sphi 0, %s24
    %s44 = sphi 0, %s44
    %s46 = sphi 0, %s44
    %s47 = sphi 0, %s46
    %s61 = sphi 0, %s47
    %s65 = sphi 0, %s65
    %s67 = sphi 0, %s65
    %s68 = sphi 0, %s67
    %s82 = sphi 0, %s68
    %s86 = sphi 0, %s86
    %s88 = sphi 0, %s86
    %s89 = sphi 0, %s88
    %s103 = sphi 0, %s89
    %s109 = sphi 0, %s111
    %s112 = sphi 0, %s109
    %s113 = sphi 0, %s112
    %s129 = sphi 0, %s113
  $region4: #{superpoint_forward.26} parent=0 // loop_header_branch
    %13 = sbr.rel (%p11) target = $region8
  $region5: #{superpoint_forward.26} parent=0 // loop_body
    %s15 = ssub.s32 %s10, 1
    %s16 = ssub.s32 %s10, 2
    %s17 = sadd.s32 %s10, 1
    %s18 = ssub.s32 %s10, %s17
    %p19 = scmp.eq.s32.totalorder %s18, 0
    %s21 = sadd.s32 %s20, 1
    %s22 = scalar_select %p19, %s20, %s21
    %p25 = pneg %p19
    %p26 = scmp.eq.s32.totalorder %s10, 1
    %p27 = por %p25, %p26
    %p28 = scmp.ne.s32.totalorder %s20, %s23
    %p29 = scmp.eq.s32.totalorder %s10, 0
    %p30 = por %p28, %p29
    %p31 = scmp.ne.s32.totalorder %s20, %s23
    %p32 = scmp.eq.s32.totalorder %s15, 1
    %p33 = por %p31, %p32
    %p34 = scmp.ne.s32.totalorder %s23, %s24
    %p35 = scmp.eq.s32.totalorder %s15, 0
    %p36 = por %p34, %p35
    %p37 = scmp.ne.s32.totalorder %s23, %s24
    %p38 = scmp.eq.s32.totalorder %s16, 1
    %p39 = por %p37, %p38
    %p41 = scmp.ne.s32.totalorder %s24, %s40
    %p42 = scmp.eq.s32.totalorder %s16, 0
    %p43 = por %p41, %p42
    %s45 = sadd.s32 %s44, 1
    %p48 = scmp.eq.s32.totalorder %s10, 1
    %p49 = scmp.ne.s32.totalorder %s44, %s46
    %p50 = scmp.eq.s32.totalorder %s10, 0
    %p51 = por %p49, %p50
    %p52 = scmp.ne.s32.totalorder %s44, %s46
    %p53 = scmp.eq.s32.totalorder %s15, 1
    %p54 = por %p52, %p53
    %p55 = scmp.ne.s32.totalorder %s46, %s47
    %p56 = scmp.eq.s32.totalorder %s15, 0
    %p57 = por %p55, %p56
    %p58 = scmp.ne.s32.totalorder %s46, %s47
    %p59 = scmp.eq.s32.totalorder %s16, 1
    %p60 = por %p58, %p59
    %p62 = scmp.ne.s32.totalorder %s47, %s61
    %p63 = scmp.eq.s32.totalorder %s16, 0
    %p64 = por %p62, %p63
    %s66 = sadd.s32 %s65, 1
    %p69 = scmp.eq.s32.totalorder %s10, 1
    %p70 = scmp.ne.s32.totalorder %s65, %s67
    %p71 = scmp.eq.s32.totalorder %s10, 0
    %p72 = por %p70, %p71
    %p73 = scmp.ne.s32.totalorder %s65, %s67
    %p74 = scmp.eq.s32.totalorder %s15, 1
    %p75 = por %p73, %p74
    %p76 = scmp.ne.s32.totalorder %s67, %s68
    %p77 = scmp.eq.s32.totalorder %s15, 0
    %p78 = por %p76, %p77
    %p79 = scmp.ne.s32.totalorder %s67, %s68
    %p80 = scmp.eq.s32.totalorder %s16, 1
    %p81 = por %p79, %p80
    %p83 = scmp.ne.s32.totalorder %s68, %s82
    %p84 = scmp.eq.s32.totalorder %s16, 0
    %p85 = por %p83, %p84
    %s87 = sadd.s32 %s86, 1
    %p90 = scmp.eq.s32.totalorder %s10, 1
    %p91 = scmp.ne.s32.totalorder %s86, %s88
    %p92 = scmp.eq.s32.totalorder %s10, 0
    %p93 = por %p91, %p92
    %p94 = scmp.ne.s32.totalorder %s86, %s88
    %p95 = scmp.eq.s32.totalorder %s15, 1
    %p96 = por %p94, %p95
    %p97 = scmp.ne.s32.totalorder %s88, %s89
    %p98 = scmp.eq.s32.totalorder %s15, 0
    %p99 = por %p97, %p98
    %p100 = scmp.ne.s32.totalorder %s88, %s89
    %p101 = scmp.eq.s32.totalorder %s16, 1
    %p102 = por %p100, %p101
    %p104 = scmp.ne.s32.totalorder %s89, %s103
    %p105 = scmp.eq.s32.totalorder %s16, 0
    %p106 = por %p104, %p105
    %s107 = ssub.s32 %s10, %s17
    %p108 = scmp.eq.s32.totalorder %s107, 0
    %s110 = sadd.s32 %s109, 1
    %s111 = scalar_select %p108, %s109, %s110
    %p114 = pneg %p108
    %p115 = scmp.eq.s32.totalorder %s10, 1
    %p116 = por %p114, %p115
    %p117 = scmp.ne.s32.totalorder %s109, %s112
    %p118 = scmp.eq.s32.totalorder %s10, 0
    %p119 = por %p117, %p118
    %p120 = scmp.ne.s32.totalorder %s109, %s112
    %p121 = scmp.eq.s32.totalorder %s15, 1
    %p122 = por %p120, %p121
    %p123 = scmp.ne.s32.totalorder %s112, %s113
    %p124 = scmp.eq.s32.totalorder %s15, 0
    %p125 = por %p123, %p124
    %p126 = scmp.ne.s32.totalorder %s112, %s113
    %p127 = scmp.eq.s32.totalorder %s16, 1
    %p128 = por %p126, %p127
    %p130 = scmp.ne.s32.totalorder %s113, %s129
    %p131 = scmp.eq.s32.totalorder %s16, 0
    %p132 = por %p130, %p131
    %p133 = scmp.le.s32.totalorder 1, %s10
    %p134 = scmp.lt.s32.totalorder %s10, 3
    %p135 = pnand %p133, %p134
    %p136 = pneg %p135
    // Predicated region
    $region9: #{superpoint_forward.26} parent=5 // pred_check
      _
    $region10: #{superpoint_forward.26} parent=5 // pred_check_branch
      %138 = sbr.rel (%p135) target = $region12
    $region11: #{superpoint_forward.26} parent=5 // pred_region
      %s139 = ssub.s32 %s10, 1
      // Predicated region
      $region13: #{superpoint_forward.26} parent=11 // pred_check
        %p140 = pneg %p57
      $region14: #{superpoint_forward.26} parent=11 // pred_check_branch
        %142 = sbr.rel (%p140) target = $region16
      $region15: #{superpoint_forward.26} parent=11 // pred_region
        _
      $region16: #{superpoint_forward.26} parent=11 // pred_fallthru
        _
      // Predicated region
      $region17: #{superpoint_forward.26} parent=11 // pred_check
        %p143 = pneg %p78
      $region18: #{superpoint_forward.26} parent=11 // pred_check_branch
        %145 = sbr.rel (%p143) target = $region20
      $region19: #{superpoint_forward.26} parent=11 // pred_region
        _
      $region20: #{superpoint_forward.26} parent=11 // pred_fallthru
        _
      // Predicated region
      $region21: #{superpoint_forward.26} parent=11 // pred_check
        %p146 = pneg %p99
      $region22: #{superpoint_forward.26} parent=11 // pred_check_branch
        %148 = sbr.rel (%p146) target = $region24
      $region23: #{superpoint_forward.26} parent=11 // pred_region
        _
      $region24: #{superpoint_forward.26} parent=11 // pred_fallthru
        _
    $region12: #{superpoint_forward.26} parent=5 // pred_fallthru
      _
    %p149 = scmp.lt.s32.totalorder %s10, 2
    // Predicated region
    $region25: #{superpoint_forward.26} parent=5 // pred_check
      %p150 = pneg %p149
    $region26: #{superpoint_forward.26} parent=5 // pred_check_branch
      %152 = sbr.rel (%p150) target = $region28
    $region27: #{superpoint_forward.26} parent=5 // pred_region
      // Predicated region
      $region29: #{superpoint_forward.26} parent=27 // pred_check
        %p153 = pneg %p30
      $region30: #{superpoint_forward.26} parent=27 // pred_check_branch
        %155 = sbr.rel (%p153) target = $region32
      $region31: #{superpoint_forward.26} parent=27 // pred_region
        %s156 = smul.u32 2, %s10
        %p157 = scmp.lt.s32.totalorder %s156, 3
        %s158 = scalar_select %p157, %s156, 3
        %s159 = smul.addr %s158, 9
        %s160 = smul.addr %s159, 4
        %s161 = scalar_lea.vmem %s0, %s160
        %s162 = smul.u32 2, %s10
      $region32: #{superpoint_forward.26} parent=27 // pred_fallthru
        _
    $region28: #{superpoint_forward.26} parent=5 // pred_fallthru
      _
    %p163 = scmp.le.s32.totalorder 1, %s10
    %p164 = scmp.lt.s32.totalorder %s10, 3
    %p165 = pnand %p163, %p164
    %p166 = pneg %p165
    // Predicated region
    $region33: #{superpoint_forward.26} parent=5 // pred_check
      _
    $region34: #{superpoint_forward.26} parent=5 // pred_check_branch
      %168 = sbr.rel (%p165) target = $region36
    $region35: #{superpoint_forward.26} parent=5 // pred_region
      %s169 = ssub.s32 %s10, 1
      %s170 = smul.u32 2, %s15
      %p171 = scmp.lt.s32.totalorder %s170, 3
      %s172 = scalar_select %p171, %s170, 3
      %s173 = smul.addr %s172, 9
      %s174 = smul.addr %s173, 4
      %s175 = scalar_lea.vmem %s0, %s174
      %p176 = pneg %p36
      %p177 = pneg %p33
      %p178 = pneg %p57
      %p179 = pneg %p54
      %p180 = pneg %p78
      %p181 = pneg %p75
      %p182 = pneg %p99
      %p183 = pneg %p96
      %p184 = pneg %p125
      %p185 = pneg %p122
      %s186 = smul.u32 2, %s15
      %p187 = scmp.lt.s32.totalorder %s186, 3
      %s188 = scalar_select %p187, %s186, 3
      %s189 = smul.addr %s188, 8
      %s190 = scalar_lea.vmem %s4, %s189
      %s191 = smul.u32 2, %s15
      %p192 = scmp.lt.s32.totalorder %s191, 3
      %s193 = scalar_select %p192, %s191, 3
      %s194 = smul.addr %s193, 9
      %s195 = smul.addr %s194, 4
      %s196 = scalar_lea.vmem %s0, %s195
      %s197 = smul.u32 2, %s15
      %s198 = smul.u32 2, %s15
      %p199 = scmp.lt.s32.totalorder %s198, 3
      %s200 = scalar_select %p199, %s198, 3
      %s201 = smul.addr %s200, 8
      %s202 = scalar_lea.vmem %s4, %s201
      %s203 = smul.u32 2, %s15
      %v205 = vld [vmem:[%s196] sm:$0xff]
      %v206 = vld [vmem:[%s196 + $0x8] sm:$0xff]
      %v207 = vld [vmem:[%s196 + $0x10] sm:$0xff]
      %v208 = vld [vmem:[%s196 + $0x18] sm:$0xff]
      %v209 = vld [vmem:[%s196 + $0x20] sm:$0xf]
      %v210 = vld [vmem:[%s196 + $0x24] sm:$0xff]
      %v211 = vld [vmem:[%s196 + $0x2c] sm:$0xff]
      %v212 = vld [vmem:[%s196 + $0x34] sm:$0xff]
      %v213 = vld [vmem:[%s196 + $0x3c] sm:$0xff]
      %v214 = vld [vmem:[%s196 + $0x44] sm:$0xf]
      %v215 = vld [vmem:[%s1] sm:$0xf]
      %v216 = vld [vmem:[%s1 + $0x4] sm:$0xf]
      %v217 = vld [vmem:[%s1 + $0x8] sm:$0xf]
      %v218 = vld [vmem:[%s1 + $0xc] sm:$0xf]
      %v219 = vld [vmem:[%s1 + $0x10] sm:$0xf]
      %v220 = vld [vmem:[%s1 + $0x14] sm:$0xf]
      %v221 = vld [vmem:[%s1 + $0x18] sm:$0xf]
      %v222 = vld [vmem:[%s1 + $0x1c] sm:$0xf]
      %v223 = vld [vmem:[%s1 + $0x20] sm:$0xf]
      %v224 = vld [vmem:[%s1 + $0x24] sm:$0xf]
      %v225 = vld [vmem:[%s1 + $0x28] sm:$0xf]
      %v226 = vld [vmem:[%s1 + $0x2c] sm:$0xf]
      %v227 = vld [vmem:[%s1 + $0x30] sm:$0xf]
      %v228 = vld [vmem:[%s1 + $0x34] sm:$0xf]
      %v229 = vld [vmem:[%s1 + $0x38] sm:$0xf]
      %v230 = vld [vmem:[%s1 + $0x3c] sm:$0xf]
      %v231 = vld [vmem:[%s1 + $0x40] sm:$0xf]
      %v232 = vld [vmem:[%s1 + $0x44] sm:$0xf]
      %v233 = vld [vmem:[%s1 + $0x48] sm:$0xf]
      %v234 = vld [vmem:[%s1 + $0x4c] sm:$0xf]
      %v235 = vld [vmem:[%s1 + $0x50] sm:$0xf]
      %v236 = vld [vmem:[%s1 + $0x54] sm:$0xf]
      %v237 = vld [vmem:[%s1 + $0x58] sm:$0xf]
      %v238 = vld [vmem:[%s1 + $0x5c] sm:$0xf]
      %v239 = vld [vmem:[%s1 + $0x60] sm:$0xf]
      %v240 = vld [vmem:[%s1 + $0x64] sm:$0xf]
      %v241 = vld [vmem:[%s1 + $0x68] sm:$0xf]
      %v242 = vld [vmem:[%s1 + $0x6c] sm:$0xf]
      %v243 = vld [vmem:[%s1 + $0x70] sm:$0xf]
      %v244 = vld [vmem:[%s1 + $0x74] sm:$0xf]
      %v245 = vld [vmem:[%s1 + $0x78] sm:$0xf]
      %v246 = vld [vmem:[%s1 + $0x7c] sm:$0xf]
      %v247 = vld [vmem:[%s1 + $0x80] sm:$0xf]
      %v248 = vld [vmem:[%s1 + $0x84] sm:$0xf]
      %v249 = vld [vmem:[%s1 + $0x88] sm:$0xf]
      %v250 = vld [vmem:[%s1 + $0x8c] sm:$0xf]
      %v251 = vld [vmem:[%s1 + $0x90] sm:$0xf]
      %v252 = vld [vmem:[%s1 + $0x94] sm:$0xf]
      %v253 = vld [vmem:[%s1 + $0x98] sm:$0xf]
      %v254 = vld [vmem:[%s1 + $0x9c] sm:$0xf]
      %v255 = vld [vmem:[%s1 + $0xa0] sm:$0xf]
      %v256 = vld [vmem:[%s1 + $0xa4] sm:$0xf]
      %v257 = vld [vmem:[%s1 + $0xa8] sm:$0xf]
      %v258 = vld [vmem:[%s1 + $0xac] sm:$0xf]
      %v259 = vld [vmem:[%s1 + $0xb0] sm:$0xf]
      %v260 = vld [vmem:[%s1 + $0xb4] sm:$0xf]
      %v261 = vld [vmem:[%s1 + $0xb8] sm:$0xf]
      %v262 = vld [vmem:[%s1 + $0xbc] sm:$0xf]
      %v263 = vld [vmem:[%s1 + $0xc0] sm:$0xf]
      %v264 = vld [vmem:[%s1 + $0xc4] sm:$0xf]
      %v265 = vld [vmem:[%s1 + $0xc8] sm:$0xf]
      %v266 = vld [vmem:[%s1 + $0xcc] sm:$0xf]
      %v267 = vld [vmem:[%s1 + $0xd0] sm:$0xf]
      %v268 = vld [vmem:[%s1 + $0xd4] sm:$0xf]
      %v269 = vld [vmem:[%s1 + $0xd8] sm:$0xf]
      %v270 = vld [vmem:[%s1 + $0xdc] sm:$0xf]
      %v271 = vld [vmem:[%s1 + $0xe0] sm:$0xf]
      %v272 = vld [vmem:[%s1 + $0xe4] sm:$0xf]
      %v273 = vld [vmem:[%s1 + $0xe8] sm:$0xf]
      %v274 = vld [vmem:[%s1 + $0xec] sm:$0xf]
      %v275 = vld [vmem:[%s1 + $0xf0] sm:$0xf]
      %v276 = vld [vmem:[%s1 + $0xf4] sm:$0xf]
      %v277 = vld [vmem:[%s1 + $0xf8] sm:$0xf]
      %v278 = vld [vmem:[%s1 + $0xfc] sm:$0xf]
      %v279 = vld [vmem:[%s1 + $0x100] sm:$0xf]
      %v280 = vld [vmem:[%s1 + $0x104] sm:$0xf]
      %v281 = vld [vmem:[%s1 + $0x108] sm:$0xf]
      %v282 = vld [vmem:[%s1 + $0x10c] sm:$0xf]
      %v283 = vld [vmem:[%s1 + $0x110] sm:$0xf]
      %v284 = vld [vmem:[%s1 + $0x114] sm:$0xf]
      %v285 = vld [vmem:[%s1 + $0x118] sm:$0xf]
      %v286 = vld [vmem:[%s1 + $0x11c] sm:$0xf]
      %v287 = vld [vmem:[%s1 + $0x120] sm:$0xf]
      %v288 = vld [vmem:[%s1 + $0x124] sm:$0xf]
      %v289 = vld [vmem:[%s1 + $0x128] sm:$0xf]
      %v290 = vld [vmem:[%s1 + $0x12c] sm:$0xf]
      %v291 = vld [vmem:[%s1 + $0x130] sm:$0xf]
      %v292 = vld [vmem:[%s1 + $0x134] sm:$0xf]
      %v293 = vld [vmem:[%s1 + $0x138] sm:$0xf]
      %v294 = vld [vmem:[%s1 + $0x13c] sm:$0xf]
      %v295 = vld [vmem:[%s1 + $0x140] sm:$0xf]
      %v296 = vld [vmem:[%s1 + $0x144] sm:$0xf]
      %v297 = vld [vmem:[%s1 + $0x148] sm:$0xf]
      %v298 = vld [vmem:[%s1 + $0x14c] sm:$0xf]
      %v299 = vld [vmem:[%s1 + $0x150] sm:$0xf]
      %v300 = vld [vmem:[%s1 + $0x154] sm:$0xf]
      %v301 = vld [vmem:[%s1 + $0x158] sm:$0xf]
      %v302 = vld [vmem:[%s1 + $0x15c] sm:$0xf]
      %v303 = vld [vmem:[%s1 + $0x160] sm:$0xf]
      %v304 = vld [vmem:[%s1 + $0x164] sm:$0xf]
      %v305 = vld [vmem:[%s1 + $0x168] sm:$0xf]
      %v306 = vld [vmem:[%s1 + $0x16c] sm:$0xf]
      %v307 = vld [vmem:[%s1 + $0x170] sm:$0xf]
      %v308 = vld [vmem:[%s1 + $0x174] sm:$0xf]
      %v309 = vld [vmem:[%s1 + $0x178] sm:$0xf]
      %v310 = vld [vmem:[%s1 + $0x17c] sm:$0xf]
      %v311 = vld [vmem:[%s1 + $0x180] sm:$0xf]
      %v312 = vld [vmem:[%s1 + $0x184] sm:$0xf]
      %v313 = vld [vmem:[%s1 + $0x188] sm:$0xf]
      %v314 = vld [vmem:[%s1 + $0x18c] sm:$0xf]
      %v315 = vld [vmem:[%s1 + $0x190] sm:$0xf]
      %v316 = vld [vmem:[%s1 + $0x194] sm:$0xf]
      %v317 = vld [vmem:[%s1 + $0x198] sm:$0xf]
      %v318 = vld [vmem:[%s1 + $0x19c] sm:$0xf]
      %v319 = vld [vmem:[%s1 + $0x1a0] sm:$0xf]
      %v320 = vld [vmem:[%s1 + $0x1a4] sm:$0xf]
      %v321 = vld [vmem:[%s1 + $0x1a8] sm:$0xf]
      %v322 = vld [vmem:[%s1 + $0x1ac] sm:$0xf]
      %v323 = vld [vmem:[%s1 + $0x1b0] sm:$0xf]
      %v324 = vld [vmem:[%s1 + $0x1b4] sm:$0xf]
      %v325 = vld [vmem:[%s1 + $0x1b8] sm:$0xf]
      %v326 = vld [vmem:[%s1 + $0x1bc] sm:$0xf]
      %v327 = vld [vmem:[%s1 + $0x1c0] sm:$0xf]
      %v328 = vld [vmem:[%s1 + $0x1c4] sm:$0xf]
      %v329 = vld [vmem:[%s1 + $0x1c8] sm:$0xf]
      %v330 = vld [vmem:[%s1 + $0x1cc] sm:$0xf]
      %v331 = vld [vmem:[%s1 + $0x1d0] sm:$0xf]
      %v332 = vld [vmem:[%s1 + $0x1d4] sm:$0xf]
      %v333 = vld [vmem:[%s1 + $0x1d8] sm:$0xf]
      %v334 = vld [vmem:[%s1 + $0x1dc] sm:$0xf]
      %v335 = vld [vmem:[%s1 + $0x1e0] sm:$0xf]
      %v336 = vld [vmem:[%s1 + $0x1e4] sm:$0xf]
      %v337 = vld [vmem:[%s1 + $0x1e8] sm:$0xf]
      %v338 = vld [vmem:[%s1 + $0x1ec] sm:$0xf]
      %v339 = vld [vmem:[%s1 + $0x1f0] sm:$0xf]
      %v340 = vld [vmem:[%s1 + $0x1f4] sm:$0xf]
      %v341 = vld [vmem:[%s1 + $0x1f8] sm:$0xf]
      %v342 = vld [vmem:[%s1 + $0x1fc] sm:$0xf]
      %v343 = vld [vmem:[%s1 + $0x200] sm:$0xf]
      %v344 = vld [vmem:[%s1 + $0x204] sm:$0xf]
      %v345 = vld [vmem:[%s1 + $0x208] sm:$0xf]
      %v346 = vld [vmem:[%s1 + $0x20c] sm:$0xf]
      %v347 = vld [vmem:[%s1 + $0x210] sm:$0xf]
      %v348 = vld [vmem:[%s1 + $0x214] sm:$0xf]
      %v349 = vld [vmem:[%s1 + $0x218] sm:$0xf]
      %v350 = vld [vmem:[%s1 + $0x21c] sm:$0xf]
      %v351 = vld [vmem:[%s1 + $0x220] sm:$0xf]
      %v352 = vld [vmem:[%s1 + $0x224] sm:$0xf]
      %v353 = vld [vmem:[%s1 + $0x228] sm:$0xf]
      %v354 = vld [vmem:[%s1 + $0x22c] sm:$0xf]
      %v355 = vld [vmem:[%s1 + $0x230] sm:$0xf]
      %v356 = vld [vmem:[%s1 + $0x234] sm:$0xf]
      %v357 = vld [vmem:[%s1 + $0x238] sm:$0xf]
      %v358 = vld [vmem:[%s1 + $0x23c] sm:$0xf]
      %v369 = vunpack.c.l.b16 %v205
      %v370 = vunpack.c.h.b16 %v205
      %v371 = vunpack.c.l.b16 %v206
      %v372 = vunpack.c.h.b16 %v206
      %v373 = vunpack.c.l.b16 %v207
      %v374 = vunpack.c.h.b16 %v207
      %v375 = vunpack.c.l.b16 %v208
      %v376 = vunpack.c.h.b16 %v208
      %v377 = vunpack.c.l.b16 %v209
      %v378 = vunpack.c.l.b16 %v210
      %v379 = vunpack.c.h.b16 %v210
      %v380 = vunpack.c.l.b16 %v211
      %v381 = vunpack.c.h.b16 %v211
      %v382 = vunpack.c.l.b16 %v212
      %v383 = vunpack.c.h.b16 %v212
      %v384 = vunpack.c.l.b16 %v213
      %v385 = vunpack.c.h.b16 %v213
      %v386 = vunpack.c.l.b16 %v214
      %v387 = vpack.c.b16 %v378, %v369
      %v388 = vpack.c.b16 %v379, %v370
      %v389 = vpack.c.b16 %v380, %v371
      %v390 = vpack.c.b16 %v381, %v372
      %v391 = vpack.c.b16 %v382, %v373
      %v392 = vpack.c.b16 %v383, %v374
      %v393 = vpack.c.b16 %v384, %v375
      %v394 = vpack.c.b16 %v385, %v376
      %v395 = vpack.c.b16 %v386, %v377
      %v549 = vunpack.c.l.b16 %v215
      %v550 = vunpack.c.l.b16 %v216
      %v551 = vunpack.c.l.b16 %v217
      %v552 = vunpack.c.l.b16 %v218
      %v553 = vunpack.c.l.b16 %v219
      %v554 = vunpack.c.l.b16 %v220
      %v555 = vunpack.c.l.b16 %v221
      %v556 = vunpack.c.l.b16 %v222
      %v557 = vunpack.c.l.b16 %v223
      %v558 = vunpack.c.l.b16 %v224
      %v559 = vunpack.c.l.b16 %v225
      %v560 = vunpack.c.l.b16 %v226
      %v561 = vunpack.c.l.b16 %v227
      %v562 = vunpack.c.l.b16 %v228
      %v563 = vunpack.c.l.b16 %v229
      %v564 = vunpack.c.l.b16 %v230
      %v565 = vunpack.c.l.b16 %v231
      %v566 = vunpack.c.l.b16 %v232
      %v567 = vunpack.c.l.b16 %v233
      %v568 = vunpack.c.l.b16 %v234
      %v569 = vunpack.c.l.b16 %v235
      %v570 = vunpack.c.l.b16 %v236
      %v571 = vunpack.c.l.b16 %v237
      %v572 = vunpack.c.l.b16 %v238
      %v573 = vunpack.c.l.b16 %v239
      %v574 = vunpack.c.l.b16 %v240
      %v575 = vunpack.c.l.b16 %v241
      %v576 = vunpack.c.l.b16 %v242
      %v577 = vunpack.c.l.b16 %v243
      %v578 = vunpack.c.l.b16 %v244
      %v579 = vunpack.c.l.b16 %v245
      %v580 = vunpack.c.l.b16 %v246
      %v581 = vunpack.c.l.b16 %v247
      %v582 = vunpack.c.l.b16 %v248
      %v583 = vunpack.c.l.b16 %v249
      %v584 = vunpack.c.l.b16 %v250
      %v585 = vunpack.c.l.b16 %v251
      %v586 = vunpack.c.l.b16 %v252
      %v587 = vunpack.c.l.b16 %v253
      %v588 = vunpack.c.l.b16 %v254
      %v589 = vunpack.c.l.b16 %v255
      %v590 = vunpack.c.l.b16 %v256
      %v591 = vunpack.c.l.b16 %v257
      %v592 = vunpack.c.l.b16 %v258
      %v593 = vunpack.c.l.b16 %v259
      %v594 = vunpack.c.l.b16 %v260
      %v595 = vunpack.c.l.b16 %v261
      %v596 = vunpack.c.l.b16 %v262
      %v597 = vunpack.c.l.b16 %v263
      %v598 = vunpack.c.l.b16 %v264
      %v599 = vunpack.c.l.b16 %v265
      %v600 = vunpack.c.l.b16 %v266
      %v601 = vunpack.c.l.b16 %v267
      %v602 = vunpack.c.l.b16 %v268
      %v603 = vunpack.c.l.b16 %v269
      %v604 = vunpack.c.l.b16 %v270
      %v605 = vunpack.c.l.b16 %v271
      %v606 = vunpack.c.l.b16 %v272
      %v607 = vunpack.c.l.b16 %v273
      %v608 = vunpack.c.l.b16 %v274
      %v609 = vunpack.c.l.b16 %v275
      %v610 = vunpack.c.l.b16 %v276
      %v611 = vunpack.c.l.b16 %v277
      %v612 = vunpack.c.l.b16 %v278
      %v613 = vunpack.c.l.b16 %v279
      %v614 = vunpack.c.l.b16 %v280
      %v615 = vunpack.c.l.b16 %v281
      %v616 = vunpack.c.l.b16 %v282
      %v617 = vunpack.c.l.b16 %v283
      %v618 = vunpack.c.l.b16 %v284
      %v619 = vunpack.c.l.b16 %v285
      %v620 = vunpack.c.l.b16 %v286
      %v621 = vunpack.c.l.b16 %v287
      %v622 = vunpack.c.l.b16 %v288
      %v623 = vunpack.c.l.b16 %v289
      %v624 = vunpack.c.l.b16 %v290
      %v625 = vunpack.c.l.b16 %v291
      %v626 = vunpack.c.l.b16 %v292
      %v627 = vunpack.c.l.b16 %v293
      %v628 = vunpack.c.l.b16 %v294
      %v629 = vunpack.c.l.b16 %v295
      %v630 = vunpack.c.l.b16 %v296
      %v631 = vunpack.c.l.b16 %v297
      %v632 = vunpack.c.l.b16 %v298
      %v633 = vunpack.c.l.b16 %v299
      %v634 = vunpack.c.l.b16 %v300
      %v635 = vunpack.c.l.b16 %v301
      %v636 = vunpack.c.l.b16 %v302
      %v637 = vunpack.c.l.b16 %v303
      %v638 = vunpack.c.l.b16 %v304
      %v639 = vunpack.c.l.b16 %v305
      %v640 = vunpack.c.l.b16 %v306
      %v641 = vunpack.c.l.b16 %v307
      %v642 = vunpack.c.l.b16 %v308
      %v643 = vunpack.c.l.b16 %v309
      %v644 = vunpack.c.l.b16 %v310
      %v645 = vunpack.c.l.b16 %v311
      %v646 = vunpack.c.l.b16 %v312
      %v647 = vunpack.c.l.b16 %v313
      %v648 = vunpack.c.l.b16 %v314
      %v649 = vunpack.c.l.b16 %v315
      %v650 = vunpack.c.l.b16 %v316
      %v651 = vunpack.c.l.b16 %v317
      %v652 = vunpack.c.l.b16 %v318
      %v653 = vunpack.c.l.b16 %v319
      %v654 = vunpack.c.l.b16 %v320
      %v655 = vunpack.c.l.b16 %v321
      %v656 = vunpack.c.l.b16 %v322
      %v657 = vunpack.c.l.b16 %v323
      %v658 = vunpack.c.l.b16 %v324
      %v659 = vunpack.c.l.b16 %v325
      %v660 = vunpack.c.l.b16 %v326
      %v661 = vunpack.c.l.b16 %v327
      %v662 = vunpack.c.l.b16 %v328
      %v663 = vunpack.c.l.b16 %v329
      %v664 = vunpack.c.l.b16 %v330
      %v665 = vunpack.c.l.b16 %v331
      %v666 = vunpack.c.l.b16 %v332
      %v667 = vunpack.c.l.b16 %v333
      %v668 = vunpack.c.l.b16 %v334
      %v669 = vunpack.c.l.b16 %v335
      %v670 = vunpack.c.l.b16 %v336
      %v671 = vunpack.c.l.b16 %v337
      %v672 = vunpack.c.l.b16 %v338
      %v673 = vunpack.c.l.b16 %v339
      %v674 = vunpack.c.l.b16 %v340
      %v675 = vunpack.c.l.b16 %v341
      %v676 = vunpack.c.l.b16 %v342
      %v677 = vunpack.c.l.b16 %v343
      %v678 = vunpack.c.l.b16 %v344
      %v679 = vunpack.c.l.b16 %v345
      %v680 = vunpack.c.l.b16 %v346
      %v681 = vunpack.c.l.b16 %v347
      %v682 = vunpack.c.l.b16 %v348
      %v683 = vunpack.c.l.b16 %v349
      %v684 = vunpack.c.l.b16 %v350
      %v685 = vunpack.c.l.b16 %v351
      %v686 = vunpack.c.l.b16 %v352
      %v687 = vunpack.c.l.b16 %v353
      %v688 = vunpack.c.l.b16 %v354
      %v689 = vunpack.c.l.b16 %v355
      %v690 = vunpack.c.l.b16 %v356
      %v691 = vunpack.c.l.b16 %v357
      %v692 = vunpack.c.l.b16 %v358
      %v693 = vpack.c.b16 %v550, %v549
      %v694 = vpack.c.b16 %v552, %v551
      %v695 = vpack.c.b16 %v554, %v553
      %v696 = vpack.c.b16 %v556, %v555
      %v697 = vpack.c.b16 %v558, %v557
      %v698 = vpack.c.b16 %v560, %v559
      %v699 = vpack.c.b16 %v562, %v561
      %v700 = vpack.c.b16 %v564, %v563
      %v701 = vpack.c.b16 %v566, %v565
      %v702 = vpack.c.b16 %v568, %v567
      %v703 = vpack.c.b16 %v570, %v569
      %v704 = vpack.c.b16 %v572, %v571
      %v705 = vpack.c.b16 %v574, %v573
      %v706 = vpack.c.b16 %v576, %v575
      %v707 = vpack.c.b16 %v578, %v577
      %v708 = vpack.c.b16 %v580, %v579
      %v709 = vpack.c.b16 %v582, %v581
      %v710 = vpack.c.b16 %v584, %v583
      %v711 = vpack.c.b16 %v586, %v585
      %v712 = vpack.c.b16 %v588, %v587
      %v713 = vpack.c.b16 %v590, %v589
      %v714 = vpack.c.b16 %v592, %v591
      %v715 = vpack.c.b16 %v594, %v593
      %v716 = vpack.c.b16 %v596, %v595
      %v717 = vpack.c.b16 %v598, %v597
      %v718 = vpack.c.b16 %v600, %v599
      %v719 = vpack.c.b16 %v602, %v601
      %v720 = vpack.c.b16 %v604, %v603
      %v721 = vpack.c.b16 %v606, %v605
      %v722 = vpack.c.b16 %v608, %v607
      %v723 = vpack.c.b16 %v610, %v609
      %v724 = vpack.c.b16 %v612, %v611
      %v725 = vpack.c.b16 %v614, %v613
      %v726 = vpack.c.b16 %v616, %v615
      %v727 = vpack.c.b16 %v618, %v617
      %v728 = vpack.c.b16 %v620, %v619
      %v729 = vpack.c.b16 %v622, %v621
      %v730 = vpack.c.b16 %v624, %v623
      %v731 = vpack.c.b16 %v626, %v625
      %v732 = vpack.c.b16 %v628, %v627
      %v733 = vpack.c.b16 %v630, %v629
      %v734 = vpack.c.b16 %v632, %v631
      %v735 = vpack.c.b16 %v634, %v633
      %v736 = vpack.c.b16 %v636, %v635
      %v737 = vpack.c.b16 %v638, %v637
      %v738 = vpack.c.b16 %v640, %v639
      %v739 = vpack.c.b16 %v642, %v641
      %v740 = vpack.c.b16 %v644, %v643
      %v741 = vpack.c.b16 %v646, %v645
      %v742 = vpack.c.b16 %v648, %v647
      %v743 = vpack.c.b16 %v650, %v649
      %v744 = vpack.c.b16 %v652, %v651
      %v745 = vpack.c.b16 %v654, %v653
      %v746 = vpack.c.b16 %v656, %v655
      %v747 = vpack.c.b16 %v658, %v657
      %v748 = vpack.c.b16 %v660, %v659
      %v749 = vpack.c.b16 %v662, %v661
      %v750 = vpack.c.b16 %v664, %v663
      %v751 = vpack.c.b16 %v666, %v665
      %v752 = vpack.c.b16 %v668, %v667
      %v753 = vpack.c.b16 %v670, %v669
      %v754 = vpack.c.b16 %v672, %v671
      %v755 = vpack.c.b16 %v674, %v673
      %v756 = vpack.c.b16 %v676, %v675
      %v757 = vpack.c.b16 %v678, %v677
      %v758 = vpack.c.b16 %v680, %v679
      %v759 = vpack.c.b16 %v682, %v681
      %v760 = vpack.c.b16 %v684, %v683
      %v761 = vpack.c.b16 %v686, %v685
      %v762 = vpack.c.b16 %v688, %v687
      %v763 = vpack.c.b16 %v690, %v689
      %v764 = vpack.c.b16 %v692, %v691
      %837 = vmatprep.subr.bf16.mxu0 0
      %838 = vmatpush1.bf16.msra.mxu0 %v693
      %839 = vmatprep.subr.bf16.mxu0 0
      %840 = vmatpush1.bf16.msra.mxu0 %v694
      %841 = vmatprep.subr.bf16.mxu0 0
      %842 = vmatpush1.bf16.msra.mxu0 %v695
      %843 = vmatprep.subr.bf16.mxu0 0
      %844 = vmatpush1.bf16.msra.mxu0 %v696
      %845 = vmatprep.subr.bf16.mxu0 0
      %846 = vmatpush1.bf16.msra.mxu0 %v697
      %847 = vmatprep.subr.bf16.mxu0 0
      %848 = vmatpush1.bf16.msra.mxu0 %v698
      %849 = vmatprep.subr.bf16.mxu0 0
      %850 = vmatpush1.bf16.msra.mxu0 %v699
      %851 = vmatprep.subr.bf16.mxu0 0
      %852 = vmatpush1.bf16.msra.mxu0 %v700
      %853 = vmatprep.subr.bf16.mxu0 0
      %854 = vmatpush1.bf16.msra.mxu0 %v701
      %855 = vmatprep.subr.bf16.mxu0 0
      %856 = vmatpush1.bf16.msra.mxu0 %v702
      %857 = vmatprep.subr.bf16.mxu0 0
      %858 = vmatpush1.bf16.msra.mxu0 %v703
      %859 = vmatprep.subr.bf16.mxu0 0
      %860 = vmatpush1.bf16.msra.mxu0 %v704
      %861 = vmatprep.subr.bf16.mxu0 0
      %862 = vmatpush1.bf16.msra.mxu0 %v705
      %863 = vmatprep.subr.bf16.mxu0 0
      %864 = vmatpush1.bf16.msra.mxu0 %v706
      %865 = vmatprep.subr.bf16.mxu0 0
      %866 = vmatpush1.bf16.msra.mxu0 %v707
      %867 = vmatprep.subr.bf16.mxu0 0
      %868 = vmatpush1.bf16.msra.mxu0 %v708
      %869 = vmatprep.mubr.bf16.mxu0 %v388
      %870 = vmatmul.mubr.bf16.gmra.mrb[0].mxu0 %v387
      %v871 = vpop.f32.mrb[0].mxu0
      %v872 = vadd.f32 0.0, %v871
      %v873 = vpop.f32.mrb[0].mxu0
      %v874 = vpop.f32.mrb[0].mxu0
      %v875 = vadd.f32 0.0, %v874
      %v876 = vpop.f32.mrb[0].mxu0
      %877 = vdwg.mxu0
      %878 = vmatprep.subr.bf16.mxu0 0
      %879 = vmatpush1.bf16.msra.mxu0 %v709
      %880 = vmatprep.subr.bf16.mxu0 0
      %881 = vmatpush1.bf16.msra.mxu0 %v710
      %882 = vmatprep.subr.bf16.mxu0 0
      %883 = vmatpush1.bf16.msra.mxu0 %v711
      %884 = vmatprep.subr.bf16.mxu0 0
      %885 = vmatpush1.bf16.msra.mxu0 %v712
      %886 = vmatprep.subr.bf16.mxu0 0
      %887 = vmatpush1.bf16.msra.mxu0 %v713
      %888 = vmatprep.subr.bf16.mxu0 0
      %889 = vmatpush1.bf16.msra.mxu0 %v714
      %890 = vmatprep.subr.bf16.mxu0 0
      %891 = vmatpush1.bf16.msra.mxu0 %v715
      %892 = vmatprep.subr.bf16.mxu0 0
      %893 = vmatpush1.bf16.msra.mxu0 %v716
      %894 = vmatprep.subr.bf16.mxu0 0
      %895 = vmatpush1.bf16.msra.mxu0 %v717
      %896 = vmatprep.subr.bf16.mxu0 0
      %897 = vmatpush1.bf16.msra.mxu0 %v718
      %898 = vmatprep.subr.bf16.mxu0 0
      %899 = vmatpush1.bf16.msra.mxu0 %v719
      %900 = vmatprep.subr.bf16.mxu0 0
      %901 = vmatpush1.bf16.msra.mxu0 %v720
      %902 = vmatprep.subr.bf16.mxu0 0
      %903 = vmatpush1.bf16.msra.mxu0 %v721
      %904 = vmatprep.subr.bf16.mxu0 0
      %905 = vmatpush1.bf16.msra.mxu0 %v722
      %906 = vmatprep.subr.bf16.mxu0 0
      %907 = vmatpush1.bf16.msra.mxu0 %v723
      %908 = vmatprep.subr.bf16.mxu0 0
      %909 = vmatpush1.bf16.msra.mxu0 %v724
      %910 = vmatprep.mubr.bf16.mxu0 %v390
      %911 = vmatmul.mubr.bf16.gmra.mrb[0].mxu0 %v389
      %v912 = vpop.f32.mrb[0].mxu0
      %v913 = vadd.f32 %v872, %v912
      %v914 = vpop.f32.mrb[0].mxu0
      %v915 = vpop.f32.mrb[0].mxu0
      %v916 = vadd.f32 %v875, %v915
      %v917 = vpop.f32.mrb[0].mxu0
      %918 = vdwg.mxu0
      %919 = vmatprep.subr.bf16.mxu0 0
      %920 = vmatpush1.bf16.msra.mxu0 %v725
      %921 = vmatprep.subr.bf16.mxu0 0
      %922 = vmatpush1.bf16.msra.mxu0 %v726
      %923 = vmatprep.subr.bf16.mxu0 0
      %924 = vmatpush1.bf16.msra.mxu0 %v727
      %925 = vmatprep.subr.bf16.mxu0 0
      %926 = vmatpush1.bf16.msra.mxu0 %v728
      %927 = vmatprep.subr.bf16.mxu0 0
      %928 = vmatpush1.bf16.msra.mxu0 %v729
      %929 = vmatprep.subr.bf16.mxu0 0
      %930 = vmatpush1.bf16.msra.mxu0 %v730
      %931 = vmatprep.subr.bf16.mxu0 0
      %932 = vmatpush1.bf16.msra.mxu0 %v731
      %933 = vmatprep.subr.bf16.mxu0 0
      %934 = vmatpush1.bf16.msra.mxu0 %v732
      %935 = vmatprep.subr.bf16.mxu0 0
      %936 = vmatpush1.bf16.msra.mxu0 %v733
      %937 = vmatprep.subr.bf16.mxu0 0
      %938 = vmatpush1.bf16.msra.mxu0 %v734
      %939 = vmatprep.subr.bf16.mxu0 0
      %940 = vmatpush1.bf16.msra.mxu0 %v735
      %941 = vmatprep.subr.bf16.mxu0 0
      %942 = vmatpush1.bf16.msra.mxu0 %v736
      %943 = vmatprep.subr.bf16.mxu0 0
      %944 = vmatpush1.bf16.msra.mxu0 %v737
      %945 = vmatprep.subr.bf16.mxu0 0
      %946 = vmatpush1.bf16.msra.mxu0 %v738
      %947 = vmatprep.subr.bf16.mxu0 0
      %948 = vmatpush1.bf16.msra.mxu0 %v739
      %949 = vmatprep.subr.bf16.mxu0 0
      %950 = vmatpush1.bf16.msra.mxu0 %v740
      %951 = vmatprep.mubr.bf16.mxu0 %v392
      %952 = vmatmul.mubr.bf16.gmra.mrb[0].mxu0 %v391
      %v953 = vpop.f32.mrb[0].mxu0
      %v954 = vadd.f32 %v913, %v953
      %v955 = vpop.f32.mrb[0].mxu0
      %v956 = vpop.f32.mrb[0].mxu0
      %v957 = vadd.f32 %v916, %v956
      %v958 = vpop.f32.mrb[0].mxu0
      %959 = vdwg.mxu0
      %960 = vmatprep.subr.bf16.mxu0 0
      %961 = vmatpush1.bf16.msra.mxu0 %v741
      %962 = vmatprep.subr.bf16.mxu0 0
      %963 = vmatpush1.bf16.msra.mxu0 %v742
      %964 = vmatprep.subr.bf16.mxu0 0
      %965 = vmatpush1.bf16.msra.mxu0 %v743
      %966 = vmatprep.subr.bf16.mxu0 0
      %967 = vmatpush1.bf16.msra.mxu0 %v744
      %968 = vmatprep.subr.bf16.mxu0 0
      %969 = vmatpush1.bf16.msra.mxu0 %v745
      %970 = vmatprep.subr.bf16.mxu0 0
      %971 = vmatpush1.bf16.msra.mxu0 %v746
      %972 = vmatprep.subr.bf16.mxu0 0
      %973 = vmatpush1.bf16.msra.mxu0 %v747
      %974 = vmatprep.subr.bf16.mxu0 0
      %975 = vmatpush1.bf16.msra.mxu0 %v748
      %976 = vmatprep.subr.bf16.mxu0 0
      %977 = vmatpush1.bf16.msra.mxu0 %v749
      %978 = vmatprep.subr.bf16.mxu0 0
      %979 = vmatpush1.bf16.msra.mxu0 %v750
      %980 = vmatprep.subr.bf16.mxu0 0
      %981 = vmatpush1.bf16.msra.mxu0 %v751
      %982 = vmatprep.subr.bf16.mxu0 0
      %983 = vmatpush1.bf16.msra.mxu0 %v752
      %984 = vmatprep.subr.bf16.mxu0 0
      %985 = vmatpush1.bf16.msra.mxu0 %v753
      %986 = vmatprep.subr.bf16.mxu0 0
      %987 = vmatpush1.bf16.msra.mxu0 %v754
      %988 = vmatprep.subr.bf16.mxu0 0
      %989 = vmatpush1.bf16.msra.mxu0 %v755
      %990 = vmatprep.subr.bf16.mxu0 0
      %991 = vmatpush1.bf16.msra.mxu0 %v756
      %992 = vmatprep.mubr.bf16.mxu0 %v394
      %993 = vmatmul.mubr.bf16.gmra.mrb[0].mxu0 %v393
      %v994 = vpop.f32.mrb[0].mxu0
      %v995 = vadd.f32 %v954, %v994
      %v996 = vpop.f32.mrb[0].mxu0
      %v997 = vpop.f32.mrb[0].mxu0
      %v998 = vadd.f32 %v957, %v997
      %v999 = vpop.f32.mrb[0].mxu0
      %1000 = vdwg.mxu0
      %1001 = vmatprep.subr.bf16.mxu0 0
      %1002 = vmatpush1.bf16.msra.mxu0 %v757
      %1003 = vmatprep.subr.bf16.mxu0 0
      %1004 = vmatpush1.bf16.msra.mxu0 %v758
      %1005 = vmatprep.subr.bf16.mxu0 0
      %1006 = vmatpush1.bf16.msra.mxu0 %v759
      %1007 = vmatprep.subr.bf16.mxu0 0
      %1008 = vmatpush1.bf16.msra.mxu0 %v760
      %1009 = vmatprep.subr.bf16.mxu0 0
      %1010 = vmatpush1.bf16.msra.mxu0 %v761
      %1011 = vmatprep.subr.bf16.mxu0 0
      %1012 = vmatpush1.bf16.msra.mxu0 %v762
      %1013 = vmatprep.subr.bf16.mxu0 0
      %1014 = vmatpush1.bf16.msra.mxu0 %v763
      %1015 = vmatprep.subr.bf16.mxu0 0
      %1016 = vmatpush1.bf16.msra.mxu0 %v764
      %1017 = vmatprep.subr.bf16.mxu0 0
      %1018 = vmatpush1.bf16.msra.mxu0 0
      %1019 = vmatprep.subr.bf16.mxu0 0
      %1020 = vmatpush1.bf16.msra.mxu0 0
      %1021 = vmatprep.subr.bf16.mxu0 0
      %1022 = vmatpush1.bf16.msra.mxu0 0
      %1023 = vmatprep.subr.bf16.mxu0 0
      %1024 = vmatpush1.bf16.msra.mxu0 0
      %1025 = vmatprep.subr.bf16.mxu0 0
      %1026 = vmatpush1.bf16.msra.mxu0 0
      %1027 = vmatprep.subr.bf16.mxu0 0
      %1028 = vmatpush1.bf16.msra.mxu0 0
      %1029 = vmatprep.subr.bf16.mxu0 0
      %1030 = vmatpush1.bf16.msra.mxu0 0
      %1031 = vmatprep.subr.bf16.mxu0 0
      %1032 = vmatpush1.bf16.msra.mxu0 0
      %1033 = vmatprep.mubr.bf16.mxu0 0
      %1034 = vmatmul.mubr.bf16.gmra.mrb[0].mxu0 %v395
      %v1035 = vpop.f32.mrb[0].mxu0
      %v1036 = vadd.f32 %v995, %v1035
      %v1037 = vpop.f32.mrb[0].mxu0
      %v1038 = vpop.f32.mrb[0].mxu0
      %v1039 = vadd.f32 %v998, %v1038
      %v1040 = vpop.f32.mrb[0].mxu0
      %1041 = vdwg.mxu0
      %v1042 = vld [vmem:[%s2] sm:$0x1]
      %v1044 = vlaneseq
      %v1045 = vshrl.u32 %v1044, 7
      %v1046 = vsub.s32 0, %v1045
      %v1047 = vrot.slane %v1042, %v1046
      %v1049 = vmul.f32 %v1036, %v1047
      %v1050 = vmul.f32 %v1039, %v1047
      %v1051 = vld [vmem:[%s3] sm:$0x1]
      %v1053 = vlaneseq
      %v1054 = vshrl.u32 %v1053, 7
      %v1055 = vsub.s32 0, %v1054
      %v1056 = vrot.slane %v1051, %v1055
      %v1058 = vadd.f32 %v1049, %v1056
      %v1059 = vadd.f32 %v1050, %v1056
      %v1060 = vmax.f32 %v1058, 0.0
      %v1061 = vmax.f32 %v1059, 0.0
      %1062 = vst [vmem:[%s202] sm:$0xff] %v1060
      %1063 = vst [vmem:[%s202 + $0x8] sm:$0xff] %v1061
      %s1064 = smul.u32 2, %s15
      %p1065 = scmp.lt.s32.totalorder %s1064, 3
      %s1066 = scalar_select %p1065, %s1064, 3
      %s1067 = smul.addr %s1066, 8
      %s1068 = scalar_lea.vmem %s4, %s1067
      // Predicated region
      $region37: #{superpoint_forward.26} parent=35 // pred_check
        %p1069 = pneg %p122
      $region38: #{superpoint_forward.26} parent=35 // pred_check_branch
        %1071 = sbr.rel (%p1069) target = $region40
      $region39: #{superpoint_forward.26} parent=35 // pred_region
        %s1072 = smul.u32 2, %s15
      $region40: #{superpoint_forward.26} parent=35 // pred_fallthru
        _
    $region36: #{superpoint_forward.26} parent=5 // pred_fallthru
      _
    %p1073 = scmp.le.s32.totalorder 2, %s10
    // Predicated region
    $region41: #{superpoint_forward.26} parent=5 // pred_check
      %p1074 = pneg %p1073
    $region42: #{superpoint_forward.26} parent=5 // pred_check_branch
      %1076 = sbr.rel (%p1074) target = $region44
    $region43: #{superpoint_forward.26} parent=5 // pred_region
      %s1077 = ssub.s32 %s10, 2
      // Predicated region
      $region45: #{superpoint_forward.26} parent=43 // pred_check
        %p1078 = pneg %p128
      $region46: #{superpoint_forward.26} parent=43 // pred_check_branch
        %1080 = sbr.rel (%p1078) target = $region48
      $region47: #{superpoint_forward.26} parent=43 // pred_region
        %s1081 = smul.u32 2, %s16
        %p1082 = scmp.lt.s32.totalorder %s1081, 3
        %s1083 = scalar_select %p1082, %s1081, 3
        %s1084 = smul.addr %s1083, 8
        %s1085 = scalar_lea.vmem %s4, %s1084
      $region48: #{superpoint_forward.26} parent=43 // pred_fallthru
        _
    $region44: #{superpoint_forward.26} parent=5 // pred_fallthru
      _
  $region6: #{superpoint_forward.26} parent=0 // loop_footer
    %s14 = sadd.s32 1, %s10
  $region7: #{superpoint_forward.26} parent=0 // loop_footer_branch
    %9 = sbr.rel target = $region3
  $region8: #{superpoint_forward.26} parent=0 // loop_exit
    _

// kernel: superpoint_forward.29
$region0: #{superpoint_forward.29}
  #allocation0 [shape = 'u32[]', space=smem, size = 0x4, offset = 0x4, fixed_abs, tag = 'smem constant byte address 0x4 - core index']
  #allocation1 [shape = 'u32[144,128]{1,0:T(1,128)}', space=vmem, size = 0x12000, scoped, tag = 'internal scratch']
  %s0 = inlined_call_operand.vmem [shape: bf16[8,1152], index: 0, kind: input, shape index: {}]
  %s1 = inlined_call_operand.vmem [shape: bf16[1152,128], index: 1, kind: input, shape index: {}]
  %s2 = inlined_call_operand.vmem [shape: f32[1,128], index: 2, kind: input, shape index: {}]
  %s3 = inlined_call_operand.vmem [shape: f32[1,128], index: 3, kind: input, shape index: {}]
  %s4 = inlined_call_operand.vmem [shape: f32[8,128], index: 4, kind: output, shape index: {}]
  %s5 = sld [smem:[#allocation0]]
  $region26: #{superpoint_forward.29} parent=0
    _
  %s7 = ssub.s32 1, %s5
  %s8 = scalar_select 0, %s7, %s5
  // Predicated region
  $region2: #{superpoint_forward.29} parent=0 // pred_check
    _
  $region3: #{superpoint_forward.29} parent=0 // pred_check_branch
    %10 = sbr.rel (0) target = $region5
  $region4: #{superpoint_forward.29} parent=0 // pred_region
    _
  $region5: #{superpoint_forward.29} parent=0 // pred_fallthru
    _
  // Predicated region
  $region6: #{superpoint_forward.29} parent=0 // pred_check
    _
  $region7: #{superpoint_forward.29} parent=0 // pred_check_branch
    %12 = sbr.rel (0) target = $region9
  $region8: #{superpoint_forward.29} parent=0 // pred_region
    _
  $region9: #{superpoint_forward.29} parent=0 // pred_fallthru
    _
  // Predicated region
  $region10: #{superpoint_forward.29} parent=0 // pred_check
    _
  $region11: #{superpoint_forward.29} parent=0 // pred_check_branch
    %14 = sbr.rel (0) target = $region13
  $region12: #{superpoint_forward.29} parent=0 // pred_region
    _
  $region13: #{superpoint_forward.29} parent=0 // pred_fallthru
    _
  // Predicated region
  $region14: #{superpoint_forward.29} parent=0 // pred_check
    _
  $region15: #{superpoint_forward.29} parent=0 // pred_check_branch
    %16 = sbr.rel (0) target = $region17
  $region16: #{superpoint_forward.29} parent=0 // pred_region
    _
  $region17: #{superpoint_forward.29} parent=0 // pred_fallthru
    _
  %v18 = vld [vmem:[%s0] sm:$0xff]
  %v19 = vld [vmem:[%s0 + $0x8] sm:$0xff]
  %v20 = vld [vmem:[%s0 + $0x10] sm:$0xff]
  %v21 = vld [vmem:[%s0 + $0x18] sm:$0xff]
  %v22 = vld [vmem:[%s0 + $0x20] sm:$0xf]
  %v23 = vld [vmem:[%s1] sm:$0xf]
  %v24 = vld [vmem:[%s1 + $0x4] sm:$0xf]
  %v25 = vld [vmem:[%s1 + $0x8] sm:$0xf]
  %v26 = vld [vmem:[%s1 + $0xc] sm:$0xf]
  %v27 = vld [vmem:[%s1 + $0x10] sm:$0xf]
  %v28 = vld [vmem:[%s1 + $0x14] sm:$0xf]
  %v29 = vld [vmem:[%s1 + $0x18] sm:$0xf]
  %v30 = vld [vmem:[%s1 + $0x1c] sm:$0xf]
  %v31 = vld [vmem:[%s1 + $0x20] sm:$0xf]
  %v32 = vld [vmem:[%s1 + $0x24] sm:$0xf]
  %v33 = vld [vmem:[%s1 + $0x28] sm:$0xf]
  %v34 = vld [vmem:[%s1 + $0x2c] sm:$0xf]
  %v35 = vld [vmem:[%s1 + $0x30] sm:$0xf]
  %v36 = vld [vmem:[%s1 + $0x34] sm:$0xf]
  %v37 = vld [vmem:[%s1 + $0x38] sm:$0xf]
  %v38 = vld [vmem:[%s1 + $0x3c] sm:$0xf]
  %v39 = vld [vmem:[%s1 + $0x40] sm:$0xf]
  %v40 = vld [vmem:[%s1 + $0x44] sm:$0xf]
  %v41 = vld [vmem:[%s1 + $0x48] sm:$0xf]
  %v42 = vld [vmem:[%s1 + $0x4c] sm:$0xf]
  %v43 = vld [vmem:[%s1 + $0x50] sm:$0xf]
  %v44 = vld [vmem:[%s1 + $0x54] sm:$0xf]
  %v45 = vld [vmem:[%s1 + $0x58] sm:$0xf]
  %v46 = vld [vmem:[%s1 + $0x5c] sm:$0xf]
  %v47 = vld [vmem:[%s1 + $0x60] sm:$0xf]
  %v48 = vld [vmem:[%s1 + $0x64] sm:$0xf]
  %v49 = vld [vmem:[%s1 + $0x68] sm:$0xf]
  %v50 = vld [vmem:[%s1 + $0x6c] sm:$0xf]
  %v51 = vld [vmem:[%s1 + $0x70] sm:$0xf]
  %v52 = vld [vmem:[%s1 + $0x74] sm:$0xf]
  %v53 = vld [vmem:[%s1 + $0x78] sm:$0xf]
  %v54 = vld [vmem:[%s1 + $0x7c] sm:$0xf]
  %v55 = vld [vmem:[%s1 + $0x80] sm:$0xf]
  %v56 = vld [vmem:[%s1 + $0x84] sm:$0xf]
  %v57 = vld [vmem:[%s1 + $0x88] sm:$0xf]
  %v58 = vld [vmem:[%s1 + $0x8c] sm:$0xf]
  %v59 = vld [vmem:[%s1 + $0x90] sm:$0xf]
  %v60 = vld [vmem:[%s1 + $0x94] sm:$0xf]
  %v61 = vld [vmem:[%s1 + $0x98] sm:$0xf]
  %v62 = vld [vmem:[%s1 + $0x9c] sm:$0xf]
  %v63 = vld [vmem:[%s1 + $0xa0] sm:$0xf]
  %v64 = vld [vmem:[%s1 + $0xa4] sm:$0xf]
  %v65 = vld [vmem:[%s1 + $0xa8] sm:$0xf]
  %v66 = vld [vmem:[%s1 + $0xac] sm:$0xf]
  %v67 = vld [vmem:[%s1 + $0xb0] sm:$0xf]
  %v68 = vld [vmem:[%s1 + $0xb4] sm:$0xf]
  %v69 = vld [vmem:[%s1 + $0xb8] sm:$0xf]
  %v70 = vld [vmem:[%s1 + $0xbc] sm:$0xf]
  %v71 = vld [vmem:[%s1 + $0xc0] sm:$0xf]
  %v72 = vld [vmem:[%s1 + $0xc4] sm:$0xf]
  %v73 = vld [vmem:[%s1 + $0xc8] sm:$0xf]
  %v74 = vld [vmem:[%s1 + $0xcc] sm:$0xf]
  %v75 = vld [vmem:[%s1 + $0xd0] sm:$0xf]
  %v76 = vld [vmem:[%s1 + $0xd4] sm:$0xf]
  %v77 = vld [vmem:[%s1 + $0xd8] sm:$0xf]
  %v78 = vld [vmem:[%s1 + $0xdc] sm:$0xf]
  %v79 = vld [vmem:[%s1 + $0xe0] sm:$0xf]
  %v80 = vld [vmem:[%s1 + $0xe4] sm:$0xf]
  %v81 = vld [vmem:[%s1 + $0xe8] sm:$0xf]
  %v82 = vld [vmem:[%s1 + $0xec] sm:$0xf]
  %v83 = vld [vmem:[%s1 + $0xf0] sm:$0xf]
  %v84 = vld [vmem:[%s1 + $0xf4] sm:$0xf]
  %v85 = vld [vmem:[%s1 + $0xf8] sm:$0xf]
  %v86 = vld [vmem:[%s1 + $0xfc] sm:$0xf]
  %v87 = vld [vmem:[%s1 + $0x100] sm:$0xf]
  %v88 = vld [vmem:[%s1 + $0x104] sm:$0xf]
  %v89 = vld [vmem:[%s1 + $0x108] sm:$0xf]
  %v90 = vld [vmem:[%s1 + $0x10c] sm:$0xf]
  %v91 = vld [vmem:[%s1 + $0x110] sm:$0xf]
  %v92 = vld [vmem:[%s1 + $0x114] sm:$0xf]
  %v93 = vld [vmem:[%s1 + $0x118] sm:$0xf]
  %v94 = vld [vmem:[%s1 + $0x11c] sm:$0xf]
  %v95 = vld [vmem:[%s1 + $0x120] sm:$0xf]
  %v96 = vld [vmem:[%s1 + $0x124] sm:$0xf]
  %v97 = vld [vmem:[%s1 + $0x128] sm:$0xf]
  %v98 = vld [vmem:[%s1 + $0x12c] sm:$0xf]
  %v99 = vld [vmem:[%s1 + $0x130] sm:$0xf]
  %v100 = vld [vmem:[%s1 + $0x134] sm:$0xf]
  %v101 = vld [vmem:[%s1 + $0x138] sm:$0xf]
  %v102 = vld [vmem:[%s1 + $0x13c] sm:$0xf]
  %v103 = vld [vmem:[%s1 + $0x140] sm:$0xf]
  %v104 = vld [vmem:[%s1 + $0x144] sm:$0xf]
  %v105 = vld [vmem:[%s1 + $0x148] sm:$0xf]
  %v106 = vld [vmem:[%s1 + $0x14c] sm:$0xf]
  %v107 = vld [vmem:[%s1 + $0x150] sm:$0xf]
  %v108 = vld [vmem:[%s1 + $0x154] sm:$0xf]
  %v109 = vld [vmem:[%s1 + $0x158] sm:$0xf]
  %v110 = vld [vmem:[%s1 + $0x15c] sm:$0xf]
  %v111 = vld [vmem:[%s1 + $0x160] sm:$0xf]
  %v112 = vld [vmem:[%s1 + $0x164] sm:$0xf]
  %v113 = vld [vmem:[%s1 + $0x168] sm:$0xf]
  %v114 = vld [vmem:[%s1 + $0x16c] sm:$0xf]
  %v115 = vld [vmem:[%s1 + $0x170] sm:$0xf]
  %v116 = vld [vmem:[%s1 + $0x174] sm:$0xf]
  %v117 = vld [vmem:[%s1 + $0x178] sm:$0xf]
  %v118 = vld [vmem:[%s1 + $0x17c] sm:$0xf]
  %v119 = vld [vmem:[%s1 + $0x180] sm:$0xf]
  %v120 = vld [vmem:[%s1 + $0x184] sm:$0xf]
  %v121 = vld [vmem:[%s1 + $0x188] sm:$0xf]
  %v122 = vld [vmem:[%s1 + $0x18c] sm:$0xf]
  %v123 = vld [vmem:[%s1 + $0x190] sm:$0xf]
  %v124 = vld [vmem:[%s1 + $0x194] sm:$0xf]
  %v125 = vld [vmem:[%s1 + $0x198] sm:$0xf]
  %v126 = vld [vmem:[%s1 + $0x19c] sm:$0xf]
  %v127 = vld [vmem:[%s1 + $0x1a0] sm:$0xf]
  %v128 = vld [vmem:[%s1 + $0x1a4] sm:$0xf]
  %v129 = vld [vmem:[%s1 + $0x1a8] sm:$0xf]
  %v130 = vld [vmem:[%s1 + $0x1ac] sm:$0xf]
  %v131 = vld [vmem:[%s1 + $0x1b0] sm:$0xf]
  %v132 = vld [vmem:[%s1 + $0x1b4] sm:$0xf]
  %v133 = vld [vmem:[%s1 + $0x1b8] sm:$0xf]
  %v134 = vld [vmem:[%s1 + $0x1bc] sm:$0xf]
  %v135 = vld [vmem:[%s1 + $0x1c0] sm:$0xf]
  %v136 = vld [vmem:[%s1 + $0x1c4] sm:$0xf]
  %v137 = vld [vmem:[%s1 + $0x1c8] sm:$0xf]
  %v138 = vld [vmem:[%s1 + $0x1cc] sm:$0xf]
  %v139 = vld [vmem:[%s1 + $0x1d0] sm:$0xf]
  %v140 = vld [vmem:[%s1 + $0x1d4] sm:$0xf]
  %v141 = vld [vmem:[%s1 + $0x1d8] sm:$0xf]
  %v142 = vld [vmem:[%s1 + $0x1dc] sm:$0xf]
  %v143 = vld [vmem:[%s1 + $0x1e0] sm:$0xf]
  %v144 = vld [vmem:[%s1 + $0x1e4] sm:$0xf]
  %v145 = vld [vmem:[%s1 + $0x1e8] sm:$0xf]
  %v146 = vld [vmem:[%s1 + $0x1ec] sm:$0xf]
  %v147 = vld [vmem:[%s1 + $0x1f0] sm:$0xf]
  %v148 = vld [vmem:[%s1 + $0x1f4] sm:$0xf]
  %v149 = vld [vmem:[%s1 + $0x1f8] sm:$0xf]
  %v150 = vld [vmem:[%s1 + $0x1fc] sm:$0xf]
  %v151 = vld [vmem:[%s1 + $0x200] sm:$0xf]
  %v152 = vld [vmem:[%s1 + $0x204] sm:$0xf]
  %v153 = vld [vmem:[%s1 + $0x208] sm:$0xf]
  %v154 = vld [vmem:[%s1 + $0x20c] sm:$0xf]
  %v155 = vld [vmem:[%s1 + $0x210] sm:$0xf]
  %v156 = vld [vmem:[%s1 + $0x214] sm:$0xf]
  %v157 = vld [vmem:[%s1 + $0x218] sm:$0xf]
  %v158 = vld [vmem:[%s1 + $0x21c] sm:$0xf]
  %v159 = vld [vmem:[%s1 + $0x220] sm:$0xf]
  %v160 = vld [vmem:[%s1 + $0x224] sm:$0xf]
  %v161 = vld [vmem:[%s1 + $0x228] sm:$0xf]
  %v162 = vld [vmem:[%s1 + $0x22c] sm:$0xf]
  %v163 = vld [vmem:[%s1 + $0x230] sm:$0xf]
  %v164 = vld [vmem:[%s1 + $0x234] sm:$0xf]
  %v165 = vld [vmem:[%s1 + $0x238] sm:$0xf]
  %v166 = vld [vmem:[%s1 + $0x23c] sm:$0xf]
  %v172 = vunpack.c.l.b16 %v18
  %v173 = vunpack.c.h.b16 %v18
  %v174 = vunpack.c.l.b16 %v19
  %v175 = vunpack.c.h.b16 %v19
  %v176 = vunpack.c.l.b16 %v20
  %v177 = vunpack.c.h.b16 %v20
  %v178 = vunpack.c.l.b16 %v21
  %v179 = vunpack.c.h.b16 %v21
  %v180 = vunpack.c.l.b16 %v22
  %v181 = vpack.c.b16 %v172, %v172
  %v182 = vpack.c.b16 %v173, %v173
  %v183 = vpack.c.b16 %v174, %v174
  %v184 = vpack.c.b16 %v175, %v175
  %v185 = vpack.c.b16 %v176, %v176
  %v186 = vpack.c.b16 %v177, %v177
  %v187 = vpack.c.b16 %v178, %v178
  %v188 = vpack.c.b16 %v179, %v179
  %v189 = vpack.c.b16 %v180, %v180
  %v343 = vunpack.c.l.b16 %v23
  %v344 = vunpack.c.l.b16 %v24
  %v345 = vunpack.c.l.b16 %v25
  %v346 = vunpack.c.l.b16 %v26
  %v347 = vunpack.c.l.b16 %v27
  %v348 = vunpack.c.l.b16 %v28
  %v349 = vunpack.c.l.b16 %v29
  %v350 = vunpack.c.l.b16 %v30
  %v351 = vunpack.c.l.b16 %v31
  %v352 = vunpack.c.l.b16 %v32
  %v353 = vunpack.c.l.b16 %v33
  %v354 = vunpack.c.l.b16 %v34
  %v355 = vunpack.c.l.b16 %v35
  %v356 = vunpack.c.l.b16 %v36
  %v357 = vunpack.c.l.b16 %v37
  %v358 = vunpack.c.l.b16 %v38
  %v359 = vunpack.c.l.b16 %v39
  %v360 = vunpack.c.l.b16 %v40
  %v361 = vunpack.c.l.b16 %v41
  %v362 = vunpack.c.l.b16 %v42
  %v363 = vunpack.c.l.b16 %v43
  %v364 = vunpack.c.l.b16 %v44
  %v365 = vunpack.c.l.b16 %v45
  %v366 = vunpack.c.l.b16 %v46
  %v367 = vunpack.c.l.b16 %v47
  %v368 = vunpack.c.l.b16 %v48
  %v369 = vunpack.c.l.b16 %v49
  %v370 = vunpack.c.l.b16 %v50
  %v371 = vunpack.c.l.b16 %v51
  %v372 = vunpack.c.l.b16 %v52
  %v373 = vunpack.c.l.b16 %v53
  %v374 = vunpack.c.l.b16 %v54
  %v375 = vunpack.c.l.b16 %v55
  %v376 = vunpack.c.l.b16 %v56
  %v377 = vunpack.c.l.b16 %v57
  %v378 = vunpack.c.l.b16 %v58
  %v379 = vunpack.c.l.b16 %v59
  %v380 = vunpack.c.l.b16 %v60
  %v381 = vunpack.c.l.b16 %v61
  %v382 = vunpack.c.l.b16 %v62
  %v383 = vunpack.c.l.b16 %v63
  %v384 = vunpack.c.l.b16 %v64
  %v385 = vunpack.c.l.b16 %v65
  %v386 = vunpack.c.l.b16 %v66
  %v387 = vunpack.c.l.b16 %v67
  %v388 = vunpack.c.l.b16 %v68
  %v389 = vunpack.c.l.b16 %v69
  %v390 = vunpack.c.l.b16 %v70
  %v391 = vunpack.c.l.b16 %v71
  %v392 = vunpack.c.l.b16 %v72
  %v393 = vunpack.c.l.b16 %v73
  %v394 = vunpack.c.l.b16 %v74
  %v395 = vunpack.c.l.b16 %v75
  %v396 = vunpack.c.l.b16 %v76
  %v397 = vunpack.c.l.b16 %v77
  %v398 = vunpack.c.l.b16 %v78
  %v399 = vunpack.c.l.b16 %v79
  %v400 = vunpack.c.l.b16 %v80
  %v401 = vunpack.c.l.b16 %v81
  %v402 = vunpack.c.l.b16 %v82
  %v403 = vunpack.c.l.b16 %v83
  %v404 = vunpack.c.l.b16 %v84
  %v405 = vunpack.c.l.b16 %v85
  %v406 = vunpack.c.l.b16 %v86
  %v407 = vunpack.c.l.b16 %v87
  %v408 = vunpack.c.l.b16 %v88
  %v409 = vunpack.c.l.b16 %v89
  %v410 = vunpack.c.l.b16 %v90
  %v411 = vunpack.c.l.b16 %v91
  %v412 = vunpack.c.l.b16 %v92
  %v413 = vunpack.c.l.b16 %v93
  %v414 = vunpack.c.l.b16 %v94
  %v415 = vunpack.c.l.b16 %v95
  %v416 = vunpack.c.l.b16 %v96
  %v417 = vunpack.c.l.b16 %v97
  %v418 = vunpack.c.l.b16 %v98
  %v419 = vunpack.c.l.b16 %v99
  %v420 = vunpack.c.l.b16 %v100
  %v421 = vunpack.c.l.b16 %v101
  %v422 = vunpack.c.l.b16 %v102
  %v423 = vunpack.c.l.b16 %v103
  %v424 = vunpack.c.l.b16 %v104
  %v425 = vunpack.c.l.b16 %v105
  %v426 = vunpack.c.l.b16 %v106
  %v427 = vunpack.c.l.b16 %v107
  %v428 = vunpack.c.l.b16 %v108
  %v429 = vunpack.c.l.b16 %v109
  %v430 = vunpack.c.l.b16 %v110
  %v431 = vunpack.c.l.b16 %v111
  %v432 = vunpack.c.l.b16 %v112
  %v433 = vunpack.c.l.b16 %v113
  %v434 = vunpack.c.l.b16 %v114
  %v435 = vunpack.c.l.b16 %v115
  %v436 = vunpack.c.l.b16 %v116
  %v437 = vunpack.c.l.b16 %v117
  %v438 = vunpack.c.l.b16 %v118
  %v439 = vunpack.c.l.b16 %v119
  %v440 = vunpack.c.l.b16 %v120
  %v441 = vunpack.c.l.b16 %v121
  %v442 = vunpack.c.l.b16 %v122
  %v443 = vunpack.c.l.b16 %v123
  %v444 = vunpack.c.l.b16 %v124
  %v445 = vunpack.c.l.b16 %v125
  %v446 = vunpack.c.l.b16 %v126
  %v447 = vunpack.c.l.b16 %v127
  %v448 = vunpack.c.l.b16 %v128
  %v449 = vunpack.c.l.b16 %v129
  %v450 = vunpack.c.l.b16 %v130
  %v451 = vunpack.c.l.b16 %v131
  %v452 = vunpack.c.l.b16 %v132
  %v453 = vunpack.c.l.b16 %v133
  %v454 = vunpack.c.l.b16 %v134
  %v455 = vunpack.c.l.b16 %v135
  %v456 = vunpack.c.l.b16 %v136
  %v457 = vunpack.c.l.b16 %v137
  %v458 = vunpack.c.l.b16 %v138
  %v459 = vunpack.c.l.b16 %v139
  %v460 = vunpack.c.l.b16 %v140
  %v461 = vunpack.c.l.b16 %v141
  %v462 = vunpack.c.l.b16 %v142
  %v463 = vunpack.c.l.b16 %v143
  %v464 = vunpack.c.l.b16 %v144
  %v465 = vunpack.c.l.b16 %v145
  %v466 = vunpack.c.l.b16 %v146
  %v467 = vunpack.c.l.b16 %v147
  %v468 = vunpack.c.l.b16 %v148
  %v469 = vunpack.c.l.b16 %v149
  %v470 = vunpack.c.l.b16 %v150
  %v471 = vunpack.c.l.b16 %v151
  %v472 = vunpack.c.l.b16 %v152
  %v473 = vunpack.c.l.b16 %v153
  %v474 = vunpack.c.l.b16 %v154
  %v475 = vunpack.c.l.b16 %v155
  %v476 = vunpack.c.l.b16 %v156
  %v477 = vunpack.c.l.b16 %v157
  %v478 = vunpack.c.l.b16 %v158
  %v479 = vunpack.c.l.b16 %v159
  %v480 = vunpack.c.l.b16 %v160
  %v481 = vunpack.c.l.b16 %v161
  %v482 = vunpack.c.l.b16 %v162
  %v483 = vunpack.c.l.b16 %v163
  %v484 = vunpack.c.l.b16 %v164
  %v485 = vunpack.c.l.b16 %v165
  %v486 = vunpack.c.l.b16 %v166
  %v487 = vpack.c.b16 %v344, %v343
  %v488 = vpack.c.b16 %v346, %v345
  %v489 = vpack.c.b16 %v348, %v347
  %v490 = vpack.c.b16 %v350, %v349
  %v491 = vpack.c.b16 %v352, %v351
  %v492 = vpack.c.b16 %v354, %v353
  %v493 = vpack.c.b16 %v356, %v355
  %v494 = vpack.c.b16 %v358, %v357
  %v495 = vpack.c.b16 %v360, %v359
  %v496 = vpack.c.b16 %v362, %v361
  %v497 = vpack.c.b16 %v364, %v363
  %v498 = vpack.c.b16 %v366, %v365
  %v499 = vpack.c.b16 %v368, %v367
  %v500 = vpack.c.b16 %v370, %v369
  %v501 = vpack.c.b16 %v372, %v371
  %v502 = vpack.c.b16 %v374, %v373
  %v503 = vpack.c.b16 %v376, %v375
  %v504 = vpack.c.b16 %v378, %v377
  %v505 = vpack.c.b16 %v380, %v379
  %v506 = vpack.c.b16 %v382, %v381
  %v507 = vpack.c.b16 %v384, %v383
  %v508 = vpack.c.b16 %v386, %v385
  %v509 = vpack.c.b16 %v388, %v387
  %v510 = vpack.c.b16 %v390, %v389
  %v511 = vpack.c.b16 %v392, %v391
  %v512 = vpack.c.b16 %v394, %v393
  %v513 = vpack.c.b16 %v396, %v395
  %v514 = vpack.c.b16 %v398, %v397
  %v515 = vpack.c.b16 %v400, %v399
  %v516 = vpack.c.b16 %v402, %v401
  %v517 = vpack.c.b16 %v404, %v403
  %v518 = vpack.c.b16 %v406, %v405
  %v519 = vpack.c.b16 %v408, %v407
  %v520 = vpack.c.b16 %v410, %v409
  %v521 = vpack.c.b16 %v412, %v411
  %v522 = vpack.c.b16 %v414, %v413
  %v523 = vpack.c.b16 %v416, %v415
  %v524 = vpack.c.b16 %v418, %v417
  %v525 = vpack.c.b16 %v420, %v419
  %v526 = vpack.c.b16 %v422, %v421
  %v527 = vpack.c.b16 %v424, %v423
  %v528 = vpack.c.b16 %v426, %v425
  %v529 = vpack.c.b16 %v428, %v427
  %v530 = vpack.c.b16 %v430, %v429
  %v531 = vpack.c.b16 %v432, %v431
  %v532 = vpack.c.b16 %v434, %v433
  %v533 = vpack.c.b16 %v436, %v435
  %v534 = vpack.c.b16 %v438, %v437
  %v535 = vpack.c.b16 %v440, %v439
  %v536 = vpack.c.b16 %v442, %v441
  %v537 = vpack.c.b16 %v444, %v443
  %v538 = vpack.c.b16 %v446, %v445
  %v539 = vpack.c.b16 %v448, %v447
  %v540 = vpack.c.b16 %v450, %v449
  %v541 = vpack.c.b16 %v452, %v451
  %v542 = vpack.c.b16 %v454, %v453
  %v543 = vpack.c.b16 %v456, %v455
  %v544 = vpack.c.b16 %v458, %v457
  %v545 = vpack.c.b16 %v460, %v459
  %v546 = vpack.c.b16 %v462, %v461
  %v547 = vpack.c.b16 %v464, %v463
  %v548 = vpack.c.b16 %v466, %v465
  %v549 = vpack.c.b16 %v468, %v467
  %v550 = vpack.c.b16 %v470, %v469
  %v551 = vpack.c.b16 %v472, %v471
  %v552 = vpack.c.b16 %v474, %v473
  %v553 = vpack.c.b16 %v476, %v475
  %v554 = vpack.c.b16 %v478, %v477
  %v555 = vpack.c.b16 %v480, %v479
  %v556 = vpack.c.b16 %v482, %v481
  %v557 = vpack.c.b16 %v484, %v483
  %v558 = vpack.c.b16 %v486, %v485
  %631 = vmatprep.subr.bf16.mxu0 0
  %632 = vmatpush1.bf16.msra.mxu0 %v487
  %633 = vmatprep.subr.bf16.mxu0 0
  %634 = vmatpush1.bf16.msra.mxu0 %v488
  %635 = vmatprep.subr.bf16.mxu0 0
  %636 = vmatpush1.bf16.msra.mxu0 %v489
  %637 = vmatprep.subr.bf16.mxu0 0
  %638 = vmatpush1.bf16.msra.mxu0 %v490
  %639 = vmatprep.subr.bf16.mxu0 0
  %640 = vmatpush1.bf16.msra.mxu0 %v491
  %641 = vmatprep.subr.bf16.mxu0 0
  %642 = vmatpush1.bf16.msra.mxu0 %v492
  %643 = vmatprep.subr.bf16.mxu0 0
  %644 = vmatpush1.bf16.msra.mxu0 %v493
  %645 = vmatprep.subr.bf16.mxu0 0
  %646 = vmatpush1.bf16.msra.mxu0 %v494
  %647 = vmatprep.subr.bf16.mxu0 0
  %648 = vmatpush1.bf16.msra.mxu0 %v495
  %649 = vmatprep.subr.bf16.mxu0 0
  %650 = vmatpush1.bf16.msra.mxu0 %v496
  %651 = vmatprep.subr.bf16.mxu0 0
  %652 = vmatpush1.bf16.msra.mxu0 %v497
  %653 = vmatprep.subr.bf16.mxu0 0
  %654 = vmatpush1.bf16.msra.mxu0 %v498
  %655 = vmatprep.subr.bf16.mxu0 0
  %656 = vmatpush1.bf16.msra.mxu0 %v499
  %657 = vmatprep.subr.bf16.mxu0 0
  %658 = vmatpush1.bf16.msra.mxu0 %v500
  %659 = vmatprep.subr.bf16.mxu0 0
  %660 = vmatpush1.bf16.msra.mxu0 %v501
  %661 = vmatprep.subr.bf16.mxu0 0
  %662 = vmatpush1.bf16.msra.mxu0 %v502
  %663 = vmatprep.mubr.bf16.mxu0 %v182
  %664 = vmatmul.mubr.bf16.gmra.mrb[0].mxu0 %v181
  %v665 = vpop.f32.mrb[0].mxu0
  %v666 = vadd.f32 0.0, %v665
  %v667 = vpop.f32.mrb[0].mxu0
  %v668 = vpop.f32.mrb[0].mxu0
  %v669 = vpop.f32.mrb[0].mxu0
  %670 = vdwg.mxu0
  %671 = vmatprep.subr.bf16.mxu0 0
  %672 = vmatpush1.bf16.msra.mxu0 %v503
  %673 = vmatprep.subr.bf16.mxu0 0
  %674 = vmatpush1.bf16.msra.mxu0 %v504
  %675 = vmatprep.subr.bf16.mxu0 0
  %676 = vmatpush1.bf16.msra.mxu0 %v505
  %677 = vmatprep.subr.bf16.mxu0 0
  %678 = vmatpush1.bf16.msra.mxu0 %v506
  %679 = vmatprep.subr.bf16.mxu0 0
  %680 = vmatpush1.bf16.msra.mxu0 %v507
  %681 = vmatprep.subr.bf16.mxu0 0
  %682 = vmatpush1.bf16.msra.mxu0 %v508
  %683 = vmatprep.subr.bf16.mxu0 0
  %684 = vmatpush1.bf16.msra.mxu0 %v509
  %685 = vmatprep.subr.bf16.mxu0 0
  %686 = vmatpush1.bf16.msra.mxu0 %v510
  %687 = vmatprep.subr.bf16.mxu0 0
  %688 = vmatpush1.bf16.msra.mxu0 %v511
  %689 = vmatprep.subr.bf16.mxu0 0
  %690 = vmatpush1.bf16.msra.mxu0 %v512
  %691 = vmatprep.subr.bf16.mxu0 0
  %692 = vmatpush1.bf16.msra.mxu0 %v513
  %693 = vmatprep.subr.bf16.mxu0 0
  %694 = vmatpush1.bf16.msra.mxu0 %v514
  %695 = vmatprep.subr.bf16.mxu0 0
  %696 = vmatpush1.bf16.msra.mxu0 %v515
  %697 = vmatprep.subr.bf16.mxu0 0
  %698 = vmatpush1.bf16.msra.mxu0 %v516
  %699 = vmatprep.subr.bf16.mxu0 0
  %700 = vmatpush1.bf16.msra.mxu0 %v517
  %701 = vmatprep.subr.bf16.mxu0 0
  %702 = vmatpush1.bf16.msra.mxu0 %v518
  %703 = vmatprep.mubr.bf16.mxu0 %v184
  %704 = vmatmul.mubr.bf16.gmra.mrb[0].mxu0 %v183
  %v705 = vpop.f32.mrb[0].mxu0
  %v706 = vadd.f32 %v666, %v705
  %v707 = vpop.f32.mrb[0].mxu0
  %v708 = vpop.f32.mrb[0].mxu0
  %v709 = vpop.f32.mrb[0].mxu0
  %710 = vdwg.mxu0
  %711 = vmatprep.subr.bf16.mxu0 0
  %712 = vmatpush1.bf16.msra.mxu0 %v519
  %713 = vmatprep.subr.bf16.mxu0 0
  %714 = vmatpush1.bf16.msra.mxu0 %v520
  %715 = vmatprep.subr.bf16.mxu0 0
  %716 = vmatpush1.bf16.msra.mxu0 %v521
  %717 = vmatprep.subr.bf16.mxu0 0
  %718 = vmatpush1.bf16.msra.mxu0 %v522
  %719 = vmatprep.subr.bf16.mxu0 0
  %720 = vmatpush1.bf16.msra.mxu0 %v523
  %721 = vmatprep.subr.bf16.mxu0 0
  %722 = vmatpush1.bf16.msra.mxu0 %v524
  %723 = vmatprep.subr.bf16.mxu0 0
  %724 = vmatpush1.bf16.msra.mxu0 %v525
  %725 = vmatprep.subr.bf16.mxu0 0
  %726 = vmatpush1.bf16.msra.mxu0 %v526
  %727 = vmatprep.subr.bf16.mxu0 0
  %728 = vmatpush1.bf16.msra.mxu0 %v527
  %729 = vmatprep.subr.bf16.mxu0 0
  %730 = vmatpush1.bf16.msra.mxu0 %v528
  %731 = vmatprep.subr.bf16.mxu0 0
  %732 = vmatpush1.bf16.msra.mxu0 %v529
  %733 = vmatprep.subr.bf16.mxu0 0
  %734 = vmatpush1.bf16.msra.mxu0 %v530
  %735 = vmatprep.subr.bf16.mxu0 0
  %736 = vmatpush1.bf16.msra.mxu0 %v531
  %737 = vmatprep.subr.bf16.mxu0 0
  %738 = vmatpush1.bf16.msra.mxu0 %v532
  %739 = vmatprep.subr.bf16.mxu0 0
  %740 = vmatpush1.bf16.msra.mxu0 %v533
  %741 = vmatprep.subr.bf16.mxu0 0
  %742 = vmatpush1.bf16.msra.mxu0 %v534
  %743 = vmatprep.mubr.bf16.mxu0 %v186
  %744 = vmatmul.mubr.bf16.gmra.mrb[0].mxu0 %v185
  %v745 = vpop.f32.mrb[0].mxu0
  %v746 = vadd.f32 %v706, %v745
  %v747 = vpop.f32.mrb[0].mxu0
  %v748 = vpop.f32.mrb[0].mxu0
  %v749 = vpop.f32.mrb[0].mxu0
  %750 = vdwg.mxu0
  %751 = vmatprep.subr.bf16.mxu0 0
  %752 = vmatpush1.bf16.msra.mxu0 %v535
  %753 = vmatprep.subr.bf16.mxu0 0
  %754 = vmatpush1.bf16.msra.mxu0 %v536
  %755 = vmatprep.subr.bf16.mxu0 0
  %756 = vmatpush1.bf16.msra.mxu0 %v537
  %757 = vmatprep.subr.bf16.mxu0 0
  %758 = vmatpush1.bf16.msra.mxu0 %v538
  %759 = vmatprep.subr.bf16.mxu0 0
  %760 = vmatpush1.bf16.msra.mxu0 %v539
  %761 = vmatprep.subr.bf16.mxu0 0
  %762 = vmatpush1.bf16.msra.mxu0 %v540
  %763 = vmatprep.subr.bf16.mxu0 0
  %764 = vmatpush1.bf16.msra.mxu0 %v541
  %765 = vmatprep.subr.bf16.mxu0 0
  %766 = vmatpush1.bf16.msra.mxu0 %v542
  %767 = vmatprep.subr.bf16.mxu0 0
  %768 = vmatpush1.bf16.msra.mxu0 %v543
  %769 = vmatprep.subr.bf16.mxu0 0
  %770 = vmatpush1.bf16.msra.mxu0 %v544
  %771 = vmatprep.subr.bf16.mxu0 0
  %772 = vmatpush1.bf16.msra.mxu0 %v545
  %773 = vmatprep.subr.bf16.mxu0 0
  %774 = vmatpush1.bf16.msra.mxu0 %v546
  %775 = vmatprep.subr.bf16.mxu0 0
  %776 = vmatpush1.bf16.msra.mxu0 %v547
  %777 = vmatprep.subr.bf16.mxu0 0
  %778 = vmatpush1.bf16.msra.mxu0 %v548
  %779 = vmatprep.subr.bf16.mxu0 0
  %780 = vmatpush1.bf16.msra.mxu0 %v549
  %781 = vmatprep.subr.bf16.mxu0 0
  %782 = vmatpush1.bf16.msra.mxu0 %v550
  %783 = vmatprep.mubr.bf16.mxu0 %v188
  %784 = vmatmul.mubr.bf16.gmra.mrb[0].mxu0 %v187
  %v785 = vpop.f32.mrb[0].mxu0
  %v786 = vadd.f32 %v746, %v785
  %v787 = vpop.f32.mrb[0].mxu0
  %v788 = vpop.f32.mrb[0].mxu0
  %v789 = vpop.f32.mrb[0].mxu0
  %790 = vdwg.mxu0
  %791 = vmatprep.subr.bf16.mxu0 0
  %792 = vmatpush1.bf16.msra.mxu0 %v551
  %793 = vmatprep.subr.bf16.mxu0 0
  %794 = vmatpush1.bf16.msra.mxu0 %v552
  %795 = vmatprep.subr.bf16.mxu0 0
  %796 = vmatpush1.bf16.msra.mxu0 %v553
  %797 = vmatprep.subr.bf16.mxu0 0
  %798 = vmatpush1.bf16.msra.mxu0 %v554
  %799 = vmatprep.subr.bf16.mxu0 0
  %800 = vmatpush1.bf16.msra.mxu0 %v555
  %801 = vmatprep.subr.bf16.mxu0 0
  %802 = vmatpush1.bf16.msra.mxu0 %v556
  %803 = vmatprep.subr.bf16.mxu0 0
  %804 = vmatpush1.bf16.msra.mxu0 %v557
  %805 = vmatprep.subr.bf16.mxu0 0
  %806 = vmatpush1.bf16.msra.mxu0 %v558
  %807 = vmatprep.subr.bf16.mxu0 0
  %808 = vmatpush1.bf16.msra.mxu0 0
  %809 = vmatprep.subr.bf16.mxu0 0
  %810 = vmatpush1.bf16.msra.mxu0 0
  %811 = vmatprep.subr.bf16.mxu0 0
  %812 = vmatpush1.bf16.msra.mxu0 0
  %813 = vmatprep.subr.bf16.mxu0 0
  %814 = vmatpush1.bf16.msra.mxu0 0
  %815 = vmatprep.subr.bf16.mxu0 0
  %816 = vmatpush1.bf16.msra.mxu0 0
  %817 = vmatprep.subr.bf16.mxu0 0
  %818 = vmatpush1.bf16.msra.mxu0 0
  %819 = vmatprep.subr.bf16.mxu0 0
  %820 = vmatpush1.bf16.msra.mxu0 0
  %821 = vmatprep.subr.bf16.mxu0 0
  %822 = vmatpush1.bf16.msra.mxu0 0
  %823 = vmatprep.mubr.bf16.mxu0 0
  %824 = vmatmul.mubr.bf16.gmra.mrb[0].mxu0 %v189
  %v825 = vpop.f32.mrb[0].mxu0
  %v826 = vadd.f32 %v786, %v825
  %v827 = vpop.f32.mrb[0].mxu0
  %v828 = vpop.f32.mrb[0].mxu0
  %v829 = vpop.f32.mrb[0].mxu0
  %830 = vdwg.mxu0
  %v831 = vld [vmem:[%s2] sm:$0x1]
  %v833 = vlaneseq
  %v834 = vshrl.u32 %v833, 7
  %v835 = vsub.s32 0, %v834
  %v836 = vrot.slane %v831, %v835
  %v838 = vmul.f32 %v826, %v836
  %v839 = vld [vmem:[%s3] sm:$0x1]
  %v841 = vlaneseq
  %v842 = vshrl.u32 %v841, 7
  %v843 = vsub.s32 0, %v842
  %v844 = vrot.slane %v839, %v843
  %v846 = vadd.f32 %v838, %v844
  %v847 = vmax.f32 %v846, 0.0
  %848 = vst [vmem:[%s4] sm:$0xff] %v847
  // Predicated region
  $region18: #{superpoint_forward.29} parent=0 // pred_check
    _
  $region19: #{superpoint_forward.29} parent=0 // pred_check_branch
    %850 = sbr.rel (0) target = $region21
  $region20: #{superpoint_forward.29} parent=0 // pred_region
    _
  $region21: #{superpoint_forward.29} parent=0 // pred_fallthru
    _
  // Predicated region
  $region22: #{superpoint_forward.29} parent=0 // pred_check
    _
  $region23: #{superpoint_forward.29} parent=0 // pred_check_branch
    %852 = sbr.rel (0) target = $region25
  $region24: #{superpoint_forward.29} parent=0 // pred_region
    _
  $region25: #{superpoint_forward.29} parent=0 // pred_fallthru
    _

// kernel: superpoint_forward.33
$region0: #{superpoint_forward.33}
  #allocation0 [shape = 'u32[]', space=smem, size = 0x4, offset = 0x4, fixed_abs, tag = 'smem constant byte address 0x4 - core index']
  #allocation1 [shape = 'u32[144,128]{1,0:T(1,128)}', space=vmem, size = 0x12000, scoped, tag = 'internal scratch']
  %s0 = inlined_call_operand.vmem [shape: bf16[8,256], index: 0, kind: input, shape index: {}]
  %s1 = inlined_call_operand.vmem [shape: bf16[256,256], index: 1, kind: input, shape index: {}]
  %s2 = inlined_call_operand.vmem [shape: f32[1,256], index: 2, kind: input, shape index: {}]
  %s3 = inlined_call_operand.vmem [shape: f32[1,256], index: 3, kind: input, shape index: {}]
  %s4 = inlined_call_operand.vmem [shape: f32[8,256], index: 4, kind: output, shape index: {}]
  %s5 = sld [smem:[#allocation0]]
  $region26: #{superpoint_forward.33} parent=0
    _
  %s7 = ssub.s32 1, %s5
  %s8 = scalar_select 0, %s7, %s5
  // Predicated region
  $region2: #{superpoint_forward.33} parent=0 // pred_check
    _
  $region3: #{superpoint_forward.33} parent=0 // pred_check_branch
    %10 = sbr.rel (0) target = $region5
  $region4: #{superpoint_forward.33} parent=0 // pred_region
    _
  $region5: #{superpoint_forward.33} parent=0 // pred_fallthru
    _
  // Predicated region
  $region6: #{superpoint_forward.33} parent=0 // pred_check
    _
  $region7: #{superpoint_forward.33} parent=0 // pred_check_branch
    %12 = sbr.rel (0) target = $region9
  $region8: #{superpoint_forward.33} parent=0 // pred_region
    _
  $region9: #{superpoint_forward.33} parent=0 // pred_fallthru
    _
  // Predicated region
  $region10: #{superpoint_forward.33} parent=0 // pred_check
    _
  $region11: #{superpoint_forward.33} parent=0 // pred_check_branch
    %14 = sbr.rel (0) target = $region13
  $region12: #{superpoint_forward.33} parent=0 // pred_region
    _
  $region13: #{superpoint_forward.33} parent=0 // pred_fallthru
    _
  // Predicated region
  $region14: #{superpoint_forward.33} parent=0 // pred_check
    _
  $region15: #{superpoint_forward.33} parent=0 // pred_check_branch
    %16 = sbr.rel (0) target = $region17
  $region16: #{superpoint_forward.33} parent=0 // pred_region
    _
  $region17: #{superpoint_forward.33} parent=0 // pred_fallthru
    _
  %v17 = vld [vmem:[%s0] sm:$0xff]
  %v18 = vld [vmem:[%s1] sm:$0xff]
  %v19 = vld [vmem:[%s1 + $0x8] sm:$0xff]
  %v20 = vld [vmem:[%s1 + $0x10] sm:$0xff]
  %v21 = vld [vmem:[%s1 + $0x18] sm:$0xff]
  %v22 = vld [vmem:[%s1 + $0x20] sm:$0xff]
  %v23 = vld [vmem:[%s1 + $0x28] sm:$0xff]
  %v24 = vld [vmem:[%s1 + $0x30] sm:$0xff]
  %v25 = vld [vmem:[%s1 + $0x38] sm:$0xff]
  %v26 = vld [vmem:[%s1 + $0x40] sm:$0xff]
  %v27 = vld [vmem:[%s1 + $0x48] sm:$0xff]
  %v28 = vld [vmem:[%s1 + $0x50] sm:$0xff]
  %v29 = vld [vmem:[%s1 + $0x58] sm:$0xff]
  %v30 = vld [vmem:[%s1 + $0x60] sm:$0xff]
  %v31 = vld [vmem:[%s1 + $0x68] sm:$0xff]
  %v32 = vld [vmem:[%s1 + $0x70] sm:$0xff]
  %v33 = vld [vmem:[%s1 + $0x78] sm:$0xff]
  %v34 = vld [vmem:[%s1 + $0x80] sm:$0xff]
  %v35 = vld [vmem:[%s1 + $0x88] sm:$0xff]
  %v36 = vld [vmem:[%s1 + $0x90] sm:$0xff]
  %v37 = vld [vmem:[%s1 + $0x98] sm:$0xff]
  %v38 = vld [vmem:[%s1 + $0xa0] sm:$0xff]
  %v39 = vld [vmem:[%s1 + $0xa8] sm:$0xff]
  %v40 = vld [vmem:[%s1 + $0xb0] sm:$0xff]
  %v41 = vld [vmem:[%s1 + $0xb8] sm:$0xff]
  %v42 = vld [vmem:[%s1 + $0xc0] sm:$0xff]
  %v43 = vld [vmem:[%s1 + $0xc8] sm:$0xff]
  %v44 = vld [vmem:[%s1 + $0xd0] sm:$0xff]
  %v45 = vld [vmem:[%s1 + $0xd8] sm:$0xff]
  %v46 = vld [vmem:[%s1 + $0xe0] sm:$0xff]
  %v47 = vld [vmem:[%s1 + $0xe8] sm:$0xff]
  %v48 = vld [vmem:[%s1 + $0xf0] sm:$0xff]
  %v49 = vld [vmem:[%s1 + $0xf8] sm:$0xff]
  %v51 = vunpack.c.l.b16 %v17
  %v52 = vunpack.c.h.b16 %v17
  %v53 = vpack.c.b16 %v51, %v51
  %v54 = vpack.c.b16 %v52, %v52
  %v89 = vunpack.c.l.b16 %v18
  %v90 = vunpack.c.h.b16 %v18
  %v91 = vunpack.c.l.b16 %v19
  %v92 = vunpack.c.h.b16 %v19
  %v93 = vunpack.c.l.b16 %v20
  %v94 = vunpack.c.h.b16 %v20
  %v95 = vunpack.c.l.b16 %v21
  %v96 = vunpack.c.h.b16 %v21
  %v97 = vunpack.c.l.b16 %v22
  %v98 = vunpack.c.h.b16 %v22
  %v99 = vunpack.c.l.b16 %v23
  %v100 = vunpack.c.h.b16 %v23
  %v101 = vunpack.c.l.b16 %v24
  %v102 = vunpack.c.h.b16 %v24
  %v103 = vunpack.c.l.b16 %v25
  %v104 = vunpack.c.h.b16 %v25
  %v105 = vunpack.c.l.b16 %v26
  %v106 = vunpack.c.h.b16 %v26
  %v107 = vunpack.c.l.b16 %v27
  %v108 = vunpack.c.h.b16 %v27
  %v109 = vunpack.c.l.b16 %v28
  %v110 = vunpack.c.h.b16 %v28
  %v111 = vunpack.c.l.b16 %v29
  %v112 = vunpack.c.h.b16 %v29
  %v113 = vunpack.c.l.b16 %v30
  %v114 = vunpack.c.h.b16 %v30
  %v115 = vunpack.c.l.b16 %v31
  %v116 = vunpack.c.h.b16 %v31
  %v117 = vunpack.c.l.b16 %v32
  %v118 = vunpack.c.h.b16 %v32
  %v119 = vunpack.c.l.b16 %v33
  %v120 = vunpack.c.h.b16 %v33
  %v121 = vunpack.c.l.b16 %v34
  %v122 = vunpack.c.h.b16 %v34
  %v123 = vunpack.c.l.b16 %v35
  %v124 = vunpack.c.h.b16 %v35
  %v125 = vunpack.c.l.b16 %v36
  %v126 = vunpack.c.h.b16 %v36
  %v127 = vunpack.c.l.b16 %v37
  %v128 = vunpack.c.h.b16 %v37
  %v129 = vunpack.c.l.b16 %v38
  %v130 = vunpack.c.h.b16 %v38
  %v131 = vunpack.c.l.b16 %v39
  %v132 = vunpack.c.h.b16 %v39
  %v133 = vunpack.c.l.b16 %v40
  %v134 = vunpack.c.h.b16 %v40
  %v135 = vunpack.c.l.b16 %v41
  %v136 = vunpack.c.h.b16 %v41
  %v137 = vunpack.c.l.b16 %v42
  %v138 = vunpack.c.h.b16 %v42
  %v139 = vunpack.c.l.b16 %v43
  %v140 = vunpack.c.h.b16 %v43
  %v141 = vunpack.c.l.b16 %v44
  %v142 = vunpack.c.h.b16 %v44
  %v143 = vunpack.c.l.b16 %v45
  %v144 = vunpack.c.h.b16 %v45
  %v145 = vunpack.c.l.b16 %v46
  %v146 = vunpack.c.h.b16 %v46
  %v147 = vunpack.c.l.b16 %v47
  %v148 = vunpack.c.h.b16 %v47
  %v149 = vunpack.c.l.b16 %v48
  %v150 = vunpack.c.h.b16 %v48
  %v151 = vunpack.c.l.b16 %v49
  %v152 = vunpack.c.h.b16 %v49
  %v153 = vpack.c.b16 %v91, %v89
  %v154 = vpack.c.b16 %v92, %v90
  %v155 = vpack.c.b16 %v95, %v93
  %v156 = vpack.c.b16 %v96, %v94
  %v157 = vpack.c.b16 %v99, %v97
  %v158 = vpack.c.b16 %v100, %v98
  %v159 = vpack.c.b16 %v103, %v101
  %v160 = vpack.c.b16 %v104, %v102
  %v161 = vpack.c.b16 %v107, %v105
  %v162 = vpack.c.b16 %v108, %v106
  %v163 = vpack.c.b16 %v111, %v109
  %v164 = vpack.c.b16 %v112, %v110
  %v165 = vpack.c.b16 %v115, %v113
  %v166 = vpack.c.b16 %v116, %v114
  %v167 = vpack.c.b16 %v119, %v117
  %v168 = vpack.c.b16 %v120, %v118
  %v169 = vpack.c.b16 %v123, %v121
  %v170 = vpack.c.b16 %v124, %v122
  %v171 = vpack.c.b16 %v127, %v125
  %v172 = vpack.c.b16 %v128, %v126
  %v173 = vpack.c.b16 %v131, %v129
  %v174 = vpack.c.b16 %v132, %v130
  %v175 = vpack.c.b16 %v135, %v133
  %v176 = vpack.c.b16 %v136, %v134
  %v177 = vpack.c.b16 %v139, %v137
  %v178 = vpack.c.b16 %v140, %v138
  %v179 = vpack.c.b16 %v143, %v141
  %v180 = vpack.c.b16 %v144, %v142
  %v181 = vpack.c.b16 %v147, %v145
  %v182 = vpack.c.b16 %v148, %v146
  %v183 = vpack.c.b16 %v151, %v149
  %v184 = vpack.c.b16 %v152, %v150
  %217 = vmatprep.subr.bf16.mxu0 %v154
  %218 = vmatpush1.bf16.msra.mxu0 %v153
  %219 = vmatprep.subr.bf16.mxu0 %v156
  %220 = vmatpush1.bf16.msra.mxu0 %v155
  %221 = vmatprep.subr.bf16.mxu0 %v158
  %222 = vmatpush1.bf16.msra.mxu0 %v157
  %223 = vmatprep.subr.bf16.mxu0 %v160
  %224 = vmatpush1.bf16.msra.mxu0 %v159
  %225 = vmatprep.subr.bf16.mxu0 %v162
  %226 = vmatpush1.bf16.msra.mxu0 %v161
  %227 = vmatprep.subr.bf16.mxu0 %v164
  %228 = vmatpush1.bf16.msra.mxu0 %v163
  %229 = vmatprep.subr.bf16.mxu0 %v166
  %230 = vmatpush1.bf16.msra.mxu0 %v165
  %231 = vmatprep.subr.bf16.mxu0 %v168
  %232 = vmatpush1.bf16.msra.mxu0 %v167
  %233 = vmatprep.subr.bf16.mxu0 %v170
  %234 = vmatpush1.bf16.msra.mxu0 %v169
  %235 = vmatprep.subr.bf16.mxu0 %v172
  %236 = vmatpush1.bf16.msra.mxu0 %v171
  %237 = vmatprep.subr.bf16.mxu0 %v174
  %238 = vmatpush1.bf16.msra.mxu0 %v173
  %239 = vmatprep.subr.bf16.mxu0 %v176
  %240 = vmatpush1.bf16.msra.mxu0 %v175
  %241 = vmatprep.subr.bf16.mxu0 %v178
  %242 = vmatpush1.bf16.msra.mxu0 %v177
  %243 = vmatprep.subr.bf16.mxu0 %v180
  %244 = vmatpush1.bf16.msra.mxu0 %v179
  %245 = vmatprep.subr.bf16.mxu0 %v182
  %246 = vmatpush1.bf16.msra.mxu0 %v181
  %247 = vmatprep.subr.bf16.mxu0 %v184
  %248 = vmatpush1.bf16.msra.mxu0 %v183
  %249 = vmatprep.mubr.bf16.mxu0 %v54
  %250 = vmatmul.mubr.bf16.gmra.mrb[0].mxu0 %v53
  %v251 = vpop.f32.mrb[0].mxu0
  %v252 = vadd.f32 0.0, %v251
  %v253 = vpop.f32.mrb[0].mxu0
  %v254 = vadd.f32 0.0, %v253
  %v255 = vpop.f32.mrb[0].mxu0
  %v256 = vpop.f32.mrb[0].mxu0
  %257 = vdwg.mxu0
  %v258 = vld [vmem:[%s2] sm:$0x3]
  %v260 = vlaneseq
  %v261 = vshrl.u32 %v260, 7
  %v262 = vsub.s32 0, %v261
  %v263 = vrot.slane %v258, %v262
  %v264 = vlaneseq
  %v265 = vshrl.u32 %v264, 7
  %v266 = vsub.s32 1, %v265
  %v267 = vrot.slane %v258, %v266
  %v270 = vmul.f32 %v252, %v263
  %v271 = vmul.f32 %v254, %v267
  %v272 = vld [vmem:[%s3] sm:$0x3]
  %v274 = vlaneseq
  %v275 = vshrl.u32 %v274, 7
  %v276 = vsub.s32 0, %v275
  %v277 = vrot.slane %v272, %v276
  %v278 = vlaneseq
  %v279 = vshrl.u32 %v278, 7
  %v280 = vsub.s32 1, %v279
  %v281 = vrot.slane %v272, %v280
  %v284 = vadd.f32 %v270, %v277
  %v285 = vadd.f32 %v271, %v281
  %v286 = vmul.f32 %v284, %v284
  %v287 = vmul.f32 %v285, %v285
  %v288 = vadd.f32 %v286, %v287
  %289 = vadd.xlane.f32.xlu0 %v288
  %v290 = vpop.xlane.xlu0 %289
  %v291 = vadd.f32 %v290, 1e-12
  %v292 = vrsqrt.pop %v291
  %v293 = vmul.f32 %v284, %v292
  %v294 = vmul.f32 %v285, %v292
  %295 = vst [vmem:[%s4] sm:$0xff] %v293
  %296 = vst [vmem:[%s4 + $0x8] sm:$0xff] %v294
  // Predicated region
  $region18: #{superpoint_forward.33} parent=0 // pred_check
    _
  $region19: #{superpoint_forward.33} parent=0 // pred_check_branch
    %298 = sbr.rel (0) target = $region21
  $region20: #{superpoint_forward.33} parent=0 // pred_region
    _
  $region21: #{superpoint_forward.33} parent=0 // pred_fallthru
    _
  // Predicated region
  $region22: #{superpoint_forward.33} parent=0 // pred_check
    _
  $region23: #{superpoint_forward.33} parent=0 // pred_check_branch
    %300 = sbr.rel (0) target = $region25
  $region24: #{superpoint_forward.33} parent=0 // pred_region
    _
  $region25: #{superpoint_forward.33} parent=0 // pred_fallthru
    _

// kernel: superpoint_forward.32
$region0: #{superpoint_forward.32}
  #allocation0 [shape = 'u32[]', space=smem, size = 0x4, offset = 0x4, fixed_abs, tag = 'smem constant byte address 0x4 - core index']
  #allocation1 [shape = 'u32[144,128]{1,0:T(1,128)}', space=vmem, size = 0x12000, scoped, tag = 'internal scratch']
  %s0 = inlined_call_operand.vmem [shape: bf16[8,256], index: 0, kind: input, shape index: {}]
  %s1 = inlined_call_operand.vmem [shape: bf16[256,128], index: 1, kind: input, shape index: {}]
  %s2 = inlined_call_operand.vmem [shape: f32[1,128], index: 2, kind: input, shape index: {}]
  %s3 = inlined_call_operand.vmem [shape: f32[1,128], index: 3, kind: input, shape index: {}]
  %s4 = inlined_call_operand.vmem [shape: f32[8,128], index: 4, kind: output, shape index: {}]
  %s5 = sld [smem:[#allocation0]]
  $region26: #{superpoint_forward.32} parent=0
    _
  %s7 = ssub.s32 1, %s5
  %s8 = scalar_select 0, %s7, %s5
  // Predicated region
  $region2: #{superpoint_forward.32} parent=0 // pred_check
    _
  $region3: #{superpoint_forward.32} parent=0 // pred_check_branch
    %10 = sbr.rel (0) target = $region5
  $region4: #{superpoint_forward.32} parent=0 // pred_region
    _
  $region5: #{superpoint_forward.32} parent=0 // pred_fallthru
    _
  // Predicated region
  $region6: #{superpoint_forward.32} parent=0 // pred_check
    _
  $region7: #{superpoint_forward.32} parent=0 // pred_check_branch
    %12 = sbr.rel (0) target = $region9
  $region8: #{superpoint_forward.32} parent=0 // pred_region
    _
  $region9: #{superpoint_forward.32} parent=0 // pred_fallthru
    _
  // Predicated region
  $region10: #{superpoint_forward.32} parent=0 // pred_check
    _
  $region11: #{superpoint_forward.32} parent=0 // pred_check_branch
    %14 = sbr.rel (0) target = $region13
  $region12: #{superpoint_forward.32} parent=0 // pred_region
    _
  $region13: #{superpoint_forward.32} parent=0 // pred_fallthru
    _
  // Predicated region
  $region14: #{superpoint_forward.32} parent=0 // pred_check
    _
  $region15: #{superpoint_forward.32} parent=0 // pred_check_branch
    %16 = sbr.rel (0) target = $region17
  $region16: #{superpoint_forward.32} parent=0 // pred_region
    _
  $region17: #{superpoint_forward.32} parent=0 // pred_fallthru
    _
  %v18 = vld [vmem:[%s0] sm:$0xff]
  %v19 = vld [vmem:[%s1] sm:$0xf]
  %v20 = vld [vmem:[%s1 + $0x4] sm:$0xf]
  %v21 = vld [vmem:[%s1 + $0x8] sm:$0xf]
  %v22 = vld [vmem:[%s1 + $0xc] sm:$0xf]
  %v23 = vld [vmem:[%s1 + $0x10] sm:$0xf]
  %v24 = vld [vmem:[%s1 + $0x14] sm:$0xf]
  %v25 = vld [vmem:[%s1 + $0x18] sm:$0xf]
  %v26 = vld [vmem:[%s1 + $0x1c] sm:$0xf]
  %v27 = vld [vmem:[%s1 + $0x20] sm:$0xf]
  %v28 = vld [vmem:[%s1 + $0x24] sm:$0xf]
  %v29 = vld [vmem:[%s1 + $0x28] sm:$0xf]
  %v30 = vld [vmem:[%s1 + $0x2c] sm:$0xf]
  %v31 = vld [vmem:[%s1 + $0x30] sm:$0xf]
  %v32 = vld [vmem:[%s1 + $0x34] sm:$0xf]
  %v33 = vld [vmem:[%s1 + $0x38] sm:$0xf]
  %v34 = vld [vmem:[%s1 + $0x3c] sm:$0xf]
  %v35 = vld [vmem:[%s1 + $0x40] sm:$0xf]
  %v36 = vld [vmem:[%s1 + $0x44] sm:$0xf]
  %v37 = vld [vmem:[%s1 + $0x48] sm:$0xf]
  %v38 = vld [vmem:[%s1 + $0x4c] sm:$0xf]
  %v39 = vld [vmem:[%s1 + $0x50] sm:$0xf]
  %v40 = vld [vmem:[%s1 + $0x54] sm:$0xf]
  %v41 = vld [vmem:[%s1 + $0x58] sm:$0xf]
  %v42 = vld [vmem:[%s1 + $0x5c] sm:$0xf]
  %v43 = vld [vmem:[%s1 + $0x60] sm:$0xf]
  %v44 = vld [vmem:[%s1 + $0x64] sm:$0xf]
  %v45 = vld [vmem:[%s1 + $0x68] sm:$0xf]
  %v46 = vld [vmem:[%s1 + $0x6c] sm:$0xf]
  %v47 = vld [vmem:[%s1 + $0x70] sm:$0xf]
  %v48 = vld [vmem:[%s1 + $0x74] sm:$0xf]
  %v49 = vld [vmem:[%s1 + $0x78] sm:$0xf]
  %v50 = vld [vmem:[%s1 + $0x7c] sm:$0xf]
  %v52 = vunpack.c.l.b16 %v18
  %v53 = vunpack.c.h.b16 %v18
  %v54 = vpack.c.b16 %v52, %v52
  %v55 = vpack.c.b16 %v53, %v53
  %v90 = vunpack.c.l.b16 %v19
  %v91 = vunpack.c.l.b16 %v20
  %v92 = vunpack.c.l.b16 %v21
  %v93 = vunpack.c.l.b16 %v22
  %v94 = vunpack.c.l.b16 %v23
  %v95 = vunpack.c.l.b16 %v24
  %v96 = vunpack.c.l.b16 %v25
  %v97 = vunpack.c.l.b16 %v26
  %v98 = vunpack.c.l.b16 %v27
  %v99 = vunpack.c.l.b16 %v28
  %v100 = vunpack.c.l.b16 %v29
  %v101 = vunpack.c.l.b16 %v30
  %v102 = vunpack.c.l.b16 %v31
  %v103 = vunpack.c.l.b16 %v32
  %v104 = vunpack.c.l.b16 %v33
  %v105 = vunpack.c.l.b16 %v34
  %v106 = vunpack.c.l.b16 %v35
  %v107 = vunpack.c.l.b16 %v36
  %v108 = vunpack.c.l.b16 %v37
  %v109 = vunpack.c.l.b16 %v38
  %v110 = vunpack.c.l.b16 %v39
  %v111 = vunpack.c.l.b16 %v40
  %v112 = vunpack.c.l.b16 %v41
  %v113 = vunpack.c.l.b16 %v42
  %v114 = vunpack.c.l.b16 %v43
  %v115 = vunpack.c.l.b16 %v44
  %v116 = vunpack.c.l.b16 %v45
  %v117 = vunpack.c.l.b16 %v46
  %v118 = vunpack.c.l.b16 %v47
  %v119 = vunpack.c.l.b16 %v48
  %v120 = vunpack.c.l.b16 %v49
  %v121 = vunpack.c.l.b16 %v50
  %v122 = vpack.c.b16 %v91, %v90
  %v123 = vpack.c.b16 %v93, %v92
  %v124 = vpack.c.b16 %v95, %v94
  %v125 = vpack.c.b16 %v97, %v96
  %v126 = vpack.c.b16 %v99, %v98
  %v127 = vpack.c.b16 %v101, %v100
  %v128 = vpack.c.b16 %v103, %v102
  %v129 = vpack.c.b16 %v105, %v104
  %v130 = vpack.c.b16 %v107, %v106
  %v131 = vpack.c.b16 %v109, %v108
  %v132 = vpack.c.b16 %v111, %v110
  %v133 = vpack.c.b16 %v113, %v112
  %v134 = vpack.c.b16 %v115, %v114
  %v135 = vpack.c.b16 %v117, %v116
  %v136 = vpack.c.b16 %v119, %v118
  %v137 = vpack.c.b16 %v121, %v120
  %154 = vmatprep.subr.bf16.mxu0 0
  %155 = vmatpush1.bf16.msra.mxu0 %v122
  %156 = vmatprep.subr.bf16.mxu0 0
  %157 = vmatpush1.bf16.msra.mxu0 %v123
  %158 = vmatprep.subr.bf16.mxu0 0
  %159 = vmatpush1.bf16.msra.mxu0 %v124
  %160 = vmatprep.subr.bf16.mxu0 0
  %161 = vmatpush1.bf16.msra.mxu0 %v125
  %162 = vmatprep.subr.bf16.mxu0 0
  %163 = vmatpush1.bf16.msra.mxu0 %v126
  %164 = vmatprep.subr.bf16.mxu0 0
  %165 = vmatpush1.bf16.msra.mxu0 %v127
  %166 = vmatprep.subr.bf16.mxu0 0
  %167 = vmatpush1.bf16.msra.mxu0 %v128
  %168 = vmatprep.subr.bf16.mxu0 0
  %169 = vmatpush1.bf16.msra.mxu0 %v129
  %170 = vmatprep.subr.bf16.mxu0 0
  %171 = vmatpush1.bf16.msra.mxu0 %v130
  %172 = vmatprep.subr.bf16.mxu0 0
  %173 = vmatpush1.bf16.msra.mxu0 %v131
  %174 = vmatprep.subr.bf16.mxu0 0
  %175 = vmatpush1.bf16.msra.mxu0 %v132
  %176 = vmatprep.subr.bf16.mxu0 0
  %177 = vmatpush1.bf16.msra.mxu0 %v133
  %178 = vmatprep.subr.bf16.mxu0 0
  %179 = vmatpush1.bf16.msra.mxu0 %v134
  %180 = vmatprep.subr.bf16.mxu0 0
  %181 = vmatpush1.bf16.msra.mxu0 %v135
  %182 = vmatprep.subr.bf16.mxu0 0
  %183 = vmatpush1.bf16.msra.mxu0 %v136
  %184 = vmatprep.subr.bf16.mxu0 0
  %185 = vmatpush1.bf16.msra.mxu0 %v137
  %186 = vmatprep.mubr.bf16.mxu0 %v55
  %187 = vmatmul.mubr.bf16.gmra.mrb[0].mxu0 %v54
  %v188 = vpop.f32.mrb[0].mxu0
  %v189 = vadd.f32 0.0, %v188
  %v190 = vpop.f32.mrb[0].mxu0
  %v191 = vpop.f32.mrb[0].mxu0
  %v192 = vpop.f32.mrb[0].mxu0
  %193 = vdwg.mxu0
  %v194 = vld [vmem:[%s2] sm:$0x1]
  %v196 = vlaneseq
  %v197 = vshrl.u32 %v196, 7
  %v198 = vsub.s32 0, %v197
  %v199 = vrot.slane %v194, %v198
  %v201 = vmul.f32 %v189, %v199
  %v202 = vld [vmem:[%s3] sm:$0x1]
  %v204 = vlaneseq
  %v205 = vshrl.u32 %v204, 7
  %v206 = vsub.s32 0, %v205
  %v207 = vrot.slane %v202, %v206
  %v209 = vadd.f32 %v201, %v207
  %210 = vst [vmem:[%s4] sm:$0xff] %v209
  // Predicated region
  $region18: #{superpoint_forward.32} parent=0 // pred_check
    _
  $region19: #{superpoint_forward.32} parent=0 // pred_check_branch
    %212 = sbr.rel (0) target = $region21
  $region20: #{superpoint_forward.32} parent=0 // pred_region
    _
  $region21: #{superpoint_forward.32} parent=0 // pred_fallthru
    _
  // Predicated region
  $region22: #{superpoint_forward.32} parent=0 // pred_check
    _
  $region23: #{superpoint_forward.32} parent=0 // pred_check_branch
    %214 = sbr.rel (0) target = $region25
  $region24: #{superpoint_forward.32} parent=0 // pred_region
    _
  $region25: #{superpoint_forward.32} parent=0 // pred_fallthru
    _

// kernel: superpoint_forward.31
$region0: #{superpoint_forward.31}
  #allocation0 [shape = 'u32[]', space=smem, size = 0x4, offset = 0x4, fixed_abs, tag = 'smem constant byte address 0x4 - core index']
  #allocation1 [shape = 'u32[144,128]{1,0:T(1,128)}', space=vmem, size = 0x12000, scoped, tag = 'internal scratch']
  %s0 = inlined_call_operand.vmem [shape: bf16[8,1152], index: 0, kind: input, shape index: {}]
  %s1 = inlined_call_operand.vmem [shape: bf16[1152,512], index: 1, kind: input, shape index: {}]
  %s2 = inlined_call_operand.vmem [shape: f32[1,512], index: 2, kind: input, shape index: {}]
  %s3 = inlined_call_operand.vmem [shape: f32[1,512], index: 3, kind: input, shape index: {}]
  %s4 = inlined_call_operand.vmem [shape: f32[8,512], index: 4, kind: output, shape index: {}]
  %s5 = sld [smem:[#allocation0]]
  $region26: #{superpoint_forward.31} parent=0
    _
  %s7 = ssub.s32 1, %s5
  %s8 = scalar_select 0, %s7, %s5
  // Predicated region
  $region2: #{superpoint_forward.31} parent=0 // pred_check
    _
  $region3: #{superpoint_forward.31} parent=0 // pred_check_branch
    %10 = sbr.rel (0) target = $region5
  $region4: #{superpoint_forward.31} parent=0 // pred_region
    _
  $region5: #{superpoint_forward.31} parent=0 // pred_fallthru
    _
  // Predicated region
  $region6: #{superpoint_forward.31} parent=0 // pred_check
    _
  $region7: #{superpoint_forward.31} parent=0 // pred_check_branch
    %12 = sbr.rel (0) target = $region9
  $region8: #{superpoint_forward.31} parent=0 // pred_region
    _
  $region9: #{superpoint_forward.31} parent=0 // pred_fallthru
    _
  // Predicated region
  $region10: #{superpoint_forward.31} parent=0 // pred_check
    _
  $region11: #{superpoint_forward.31} parent=0 // pred_check_branch
    %14 = sbr.rel (0) target = $region13
  $region12: #{superpoint_forward.31} parent=0 // pred_region
    _
  $region13: #{superpoint_forward.31} parent=0 // pred_fallthru
    _
  // Predicated region
  $region14: #{superpoint_forward.31} parent=0 // pred_check
    _
  $region15: #{superpoint_forward.31} parent=0 // pred_check_branch
    %16 = sbr.rel (0) target = $region17
  $region16: #{superpoint_forward.31} parent=0 // pred_region
    _
  $region17: #{superpoint_forward.31} parent=0 // pred_fallthru
    _
  %v18 = vld [vmem:[%s0] sm:$0xff]
  %v19 = vld [vmem:[%s0 + $0x8] sm:$0xff]
  %v20 = vld [vmem:[%s0 + $0x10] sm:$0xff]
  %v21 = vld [vmem:[%s0 + $0x18] sm:$0xff]
  %v22 = vld [vmem:[%s0 + $0x20] sm:$0xf]
  %v23 = vld [vmem:[%s1] sm:$0xff]
  %v24 = vld [vmem:[%s1 + $0x8] sm:$0xff]
  %v25 = vld [vmem:[%s1 + $0x10] sm:$0xff]
  %v26 = vld [vmem:[%s1 + $0x18] sm:$0xff]
  %v27 = vld [vmem:[%s1 + $0x20] sm:$0xff]
  %v28 = vld [vmem:[%s1 + $0x28] sm:$0xff]
  %v29 = vld [vmem:[%s1 + $0x30] sm:$0xff]
  %v30 = vld [vmem:[%s1 + $0x38] sm:$0xff]
  %v31 = vld [vmem:[%s1 + $0x40] sm:$0xff]
  %v32 = vld [vmem:[%s1 + $0x48] sm:$0xff]
  %v33 = vld [vmem:[%s1 + $0x50] sm:$0xff]
  %v34 = vld [vmem:[%s1 + $0x58] sm:$0xff]
  %v35 = vld [vmem:[%s1 + $0x60] sm:$0xff]
  %v36 = vld [vmem:[%s1 + $0x68] sm:$0xff]
  %v37 = vld [vmem:[%s1 + $0x70] sm:$0xff]
  %v38 = vld [vmem:[%s1 + $0x78] sm:$0xff]
  %v39 = vld [vmem:[%s1 + $0x80] sm:$0xff]
  %v40 = vld [vmem:[%s1 + $0x88] sm:$0xff]
  %v41 = vld [vmem:[%s1 + $0x90] sm:$0xff]
  %v42 = vld [vmem:[%s1 + $0x98] sm:$0xff]
  %v43 = vld [vmem:[%s1 + $0xa0] sm:$0xff]
  %v44 = vld [vmem:[%s1 + $0xa8] sm:$0xff]
  %v45 = vld [vmem:[%s1 + $0xb0] sm:$0xff]
  %v46 = vld [vmem:[%s1 + $0xb8] sm:$0xff]
  %v47 = vld [vmem:[%s1 + $0xc0] sm:$0xff]
  %v48 = vld [vmem:[%s1 + $0xc8] sm:$0xff]
  %v49 = vld [vmem:[%s1 + $0xd0] sm:$0xff]
  %v50 = vld [vmem:[%s1 + $0xd8] sm:$0xff]
  %v51 = vld [vmem:[%s1 + $0xe0] sm:$0xff]
  %v52 = vld [vmem:[%s1 + $0xe8] sm:$0xff]
  %v53 = vld [vmem:[%s1 + $0xf0] sm:$0xff]
  %v54 = vld [vmem:[%s1 + $0xf8] sm:$0xff]
  %v55 = vld [vmem:[%s1 + $0x100] sm:$0xff]
  %v56 = vld [vmem:[%s1 + $0x108] sm:$0xff]
  %v57 = vld [vmem:[%s1 + $0x110] sm:$0xff]
  %v58 = vld [vmem:[%s1 + $0x118] sm:$0xff]
  %v59 = vld [vmem:[%s1 + $0x120] sm:$0xff]
  %v60 = vld [vmem:[%s1 + $0x128] sm:$0xff]
  %v61 = vld [vmem:[%s1 + $0x130] sm:$0xff]
  %v62 = vld [vmem:[%s1 + $0x138] sm:$0xff]
  %v63 = vld [vmem:[%s1 + $0x140] sm:$0xff]
  %v64 = vld [vmem:[%s1 + $0x148] sm:$0xff]
  %v65 = vld [vmem:[%s1 + $0x150] sm:$0xff]
  %v66 = vld [vmem:[%s1 + $0x158] sm:$0xff]
  %v67 = vld [vmem:[%s1 + $0x160] sm:$0xff]
  %v68 = vld [vmem:[%s1 + $0x168] sm:$0xff]
  %v69 = vld [vmem:[%s1 + $0x170] sm:$0xff]
  %v70 = vld [vmem:[%s1 + $0x178] sm:$0xff]
  %v71 = vld [vmem:[%s1 + $0x180] sm:$0xff]
  %v72 = vld [vmem:[%s1 + $0x188] sm:$0xff]
  %v73 = vld [vmem:[%s1 + $0x190] sm:$0xff]
  %v74 = vld [vmem:[%s1 + $0x198] sm:$0xff]
  %v75 = vld [vmem:[%s1 + $0x1a0] sm:$0xff]
  %v76 = vld [vmem:[%s1 + $0x1a8] sm:$0xff]
  %v77 = vld [vmem:[%s1 + $0x1b0] sm:$0xff]
  %v78 = vld [vmem:[%s1 + $0x1b8] sm:$0xff]
  %v79 = vld [vmem:[%s1 + $0x1c0] sm:$0xff]
  %v80 = vld [vmem:[%s1 + $0x1c8] sm:$0xff]
  %v81 = vld [vmem:[%s1 + $0x1d0] sm:$0xff]
  %v82 = vld [vmem:[%s1 + $0x1d8] sm:$0xff]
  %v83 = vld [vmem:[%s1 + $0x1e0] sm:$0xff]
  %v84 = vld [vmem:[%s1 + $0x1e8] sm:$0xff]
  %v85 = vld [vmem:[%s1 + $0x1f0] sm:$0xff]
  %v86 = vld [vmem:[%s1 + $0x1f8] sm:$0xff]
  %v87 = vld [vmem:[%s1 + $0x200] sm:$0xff]
  %v88 = vld [vmem:[%s1 + $0x208] sm:$0xff]
  %v89 = vld [vmem:[%s1 + $0x210] sm:$0xff]
  %v90 = vld [vmem:[%s1 + $0x218] sm:$0xff]
  %v91 = vld [vmem:[%s1 + $0x220] sm:$0xff]
  %v92 = vld [vmem:[%s1 + $0x228] sm:$0xff]
  %v93 = vld [vmem:[%s1 + $0x230] sm:$0xff]
  %v94 = vld [vmem:[%s1 + $0x238] sm:$0xff]
  %v95 = vld [vmem:[%s1 + $0x240] sm:$0xff]
  %v96 = vld [vmem:[%s1 + $0x248] sm:$0xff]
  %v97 = vld [vmem:[%s1 + $0x250] sm:$0xff]
  %v98 = vld [vmem:[%s1 + $0x258] sm:$0xff]
  %v99 = vld [vmem:[%s1 + $0x260] sm:$0xff]
  %v100 = vld [vmem:[%s1 + $0x268] sm:$0xff]
  %v101 = vld [vmem:[%s1 + $0x270] sm:$0xff]
  %v102 = vld [vmem:[%s1 + $0x278] sm:$0xff]
  %v103 = vld [vmem:[%s1 + $0x280] sm:$0xff]
  %v104 = vld [vmem:[%s1 + $0x288] sm:$0xff]
  %v105 = vld [vmem:[%s1 + $0x290] sm:$0xff]
  %v106 = vld [vmem:[%s1 + $0x298] sm:$0xff]
  %v107 = vld [vmem:[%s1 + $0x2a0] sm:$0xff]
  %v108 = vld [vmem:[%s1 + $0x2a8] sm:$0xff]
  %v109 = vld [vmem:[%s1 + $0x2b0] sm:$0xff]
  %v110 = vld [vmem:[%s1 + $0x2b8] sm:$0xff]
  %v111 = vld [vmem:[%s1 + $0x2c0] sm:$0xff]
  %v112 = vld [vmem:[%s1 + $0x2c8] sm:$0xff]
  %v113 = vld [vmem:[%s1 + $0x2d0] sm:$0xff]
  %v114 = vld [vmem:[%s1 + $0x2d8] sm:$0xff]
  %v115 = vld [vmem:[%s1 + $0x2e0] sm:$0xff]
  %v116 = vld [vmem:[%s1 + $0x2e8] sm:$0xff]
  %v117 = vld [vmem:[%s1 + $0x2f0] sm:$0xff]
  %v118 = vld [vmem:[%s1 + $0x2f8] sm:$0xff]
  %v119 = vld [vmem:[%s1 + $0x300] sm:$0xff]
  %v120 = vld [vmem:[%s1 + $0x308] sm:$0xff]
  %v121 = vld [vmem:[%s1 + $0x310] sm:$0xff]
  %v122 = vld [vmem:[%s1 + $0x318] sm:$0xff]
  %v123 = vld [vmem:[%s1 + $0x320] sm:$0xff]
  %v124 = vld [vmem:[%s1 + $0x328] sm:$0xff]
  %v125 = vld [vmem:[%s1 + $0x330] sm:$0xff]
  %v126 = vld [vmem:[%s1 + $0x338] sm:$0xff]
  %v127 = vld [vmem:[%s1 + $0x340] sm:$0xff]
  %v128 = vld [vmem:[%s1 + $0x348] sm:$0xff]
  %v129 = vld [vmem:[%s1 + $0x350] sm:$0xff]
  %v130 = vld [vmem:[%s1 + $0x358] sm:$0xff]
  %v131 = vld [vmem:[%s1 + $0x360] sm:$0xff]
  %v132 = vld [vmem:[%s1 + $0x368] sm:$0xff]
  %v133 = vld [vmem:[%s1 + $0x370] sm:$0xff]
  %v134 = vld [vmem:[%s1 + $0x378] sm:$0xff]
  %v135 = vld [vmem:[%s1 + $0x380] sm:$0xff]
  %v136 = vld [vmem:[%s1 + $0x388] sm:$0xff]
  %v137 = vld [vmem:[%s1 + $0x390] sm:$0xff]
  %v138 = vld [vmem:[%s1 + $0x398] sm:$0xff]
  %v139 = vld [vmem:[%s1 + $0x3a0] sm:$0xff]
  %v140 = vld [vmem:[%s1 + $0x3a8] sm:$0xff]
  %v141 = vld [vmem:[%s1 + $0x3b0] sm:$0xff]
  %v142 = vld [vmem:[%s1 + $0x3b8] sm:$0xff]
  %v143 = vld [vmem:[%s1 + $0x3c0] sm:$0xff]
  %v144 = vld [vmem:[%s1 + $0x3c8] sm:$0xff]
  %v145 = vld [vmem:[%s1 + $0x3d0] sm:$0xff]
  %v146 = vld [vmem:[%s1 + $0x3d8] sm:$0xff]
  %v147 = vld [vmem:[%s1 + $0x3e0] sm:$0xff]
  %v148 = vld [vmem:[%s1 + $0x3e8] sm:$0xff]
  %v149 = vld [vmem:[%s1 + $0x3f0] sm:$0xff]
  %v150 = vld [vmem:[%s1 + $0x3f8] sm:$0xff]
  %v151 = vld [vmem:[%s1 + $0x400] sm:$0xff]
  %v152 = vld [vmem:[%s1 + $0x408] sm:$0xff]
  %v153 = vld [vmem:[%s1 + $0x410] sm:$0xff]
  %v154 = vld [vmem:[%s1 + $0x418] sm:$0xff]
  %v155 = vld [vmem:[%s1 + $0x420] sm:$0xff]
  %v156 = vld [vmem:[%s1 + $0x428] sm:$0xff]
  %v157 = vld [vmem:[%s1 + $0x430] sm:$0xff]
  %v158 = vld [vmem:[%s1 + $0x438] sm:$0xff]
  %v159 = vld [vmem:[%s1 + $0x440] sm:$0xff]
  %v160 = vld [vmem:[%s1 + $0x448] sm:$0xff]
  %v161 = vld [vmem:[%s1 + $0x450] sm:$0xff]
  %v162 = vld [vmem:[%s1 + $0x458] sm:$0xff]
  %v163 = vld [vmem:[%s1 + $0x460] sm:$0xff]
  %v164 = vld [vmem:[%s1 + $0x468] sm:$0xff]
  %v165 = vld [vmem:[%s1 + $0x470] sm:$0xff]
  %v166 = vld [vmem:[%s1 + $0x478] sm:$0xff]
  %v167 = vld [vmem:[%s1 + $0x480] sm:$0xff]
  %v168 = vld [vmem:[%s1 + $0x488] sm:$0xff]
  %v169 = vld [vmem:[%s1 + $0x490] sm:$0xff]
  %v170 = vld [vmem:[%s1 + $0x498] sm:$0xff]
  %v171 = vld [vmem:[%s1 + $0x4a0] sm:$0xff]
  %v172 = vld [vmem:[%s1 + $0x4a8] sm:$0xff]
  %v173 = vld [vmem:[%s1 + $0x4b0] sm:$0xff]
  %v174 = vld [vmem:[%s1 + $0x4b8] sm:$0xff]
  %v175 = vld [vmem:[%s1 + $0x4c0] sm:$0xff]
  %v176 = vld [vmem:[%s1 + $0x4c8] sm:$0xff]
  %v177 = vld [vmem:[%s1 + $0x4d0] sm:$0xff]
  %v178 = vld [vmem:[%s1 + $0x4d8] sm:$0xff]
  %v179 = vld [vmem:[%s1 + $0x4e0] sm:$0xff]
  %v180 = vld [vmem:[%s1 + $0x4e8] sm:$0xff]
  %v181 = vld [vmem:[%s1 + $0x4f0] sm:$0xff]
  %v182 = vld [vmem:[%s1 + $0x4f8] sm:$0xff]
  %v183 = vld [vmem:[%s1 + $0x500] sm:$0xff]
  %v184 = vld [vmem:[%s1 + $0x508] sm:$0xff]
  %v185 = vld [vmem:[%s1 + $0x510] sm:$0xff]
  %v186 = vld [vmem:[%s1 + $0x518] sm:$0xff]
  %v187 = vld [vmem:[%s1 + $0x520] sm:$0xff]
  %v188 = vld [vmem:[%s1 + $0x528] sm:$0xff]
  %v189 = vld [vmem:[%s1 + $0x530] sm:$0xff]
  %v190 = vld [vmem:[%s1 + $0x538] sm:$0xff]
  %v191 = vld [vmem:[%s1 + $0x540] sm:$0xff]
  %v192 = vld [vmem:[%s1 + $0x548] sm:$0xff]
  %v193 = vld [vmem:[%s1 + $0x550] sm:$0xff]
  %v194 = vld [vmem:[%s1 + $0x558] sm:$0xff]
  %v195 = vld [vmem:[%s1 + $0x560] sm:$0xff]
  %v196 = vld [vmem:[%s1 + $0x568] sm:$0xff]
  %v197 = vld [vmem:[%s1 + $0x570] sm:$0xff]
  %v198 = vld [vmem:[%s1 + $0x578] sm:$0xff]
  %v199 = vld [vmem:[%s1 + $0x580] sm:$0xff]
  %v200 = vld [vmem:[%s1 + $0x588] sm:$0xff]
  %v201 = vld [vmem:[%s1 + $0x590] sm:$0xff]
  %v202 = vld [vmem:[%s1 + $0x598] sm:$0xff]
  %v203 = vld [vmem:[%s1 + $0x5a0] sm:$0xff]
  %v204 = vld [vmem:[%s1 + $0x5a8] sm:$0xff]
  %v205 = vld [vmem:[%s1 + $0x5b0] sm:$0xff]
  %v206 = vld [vmem:[%s1 + $0x5b8] sm:$0xff]
  %v207 = vld [vmem:[%s1 + $0x5c0] sm:$0xff]
  %v208 = vld [vmem:[%s1 + $0x5c8] sm:$0xff]
  %v209 = vld [vmem:[%s1 + $0x5d0] sm:$0xff]
  %v210 = vld [vmem:[%s1 + $0x5d8] sm:$0xff]
  %v211 = vld [vmem:[%s1 + $0x5e0] sm:$0xff]
  %v212 = vld [vmem:[%s1 + $0x5e8] sm:$0xff]
  %v213 = vld [vmem:[%s1 + $0x5f0] sm:$0xff]
  %v214 = vld [vmem:[%s1 + $0x5f8] sm:$0xff]
  %v215 = vld [vmem:[%s1 + $0x600] sm:$0xff]
  %v216 = vld [vmem:[%s1 + $0x608] sm:$0xff]
  %v217 = vld [vmem:[%s1 + $0x610] sm:$0xff]
  %v218 = vld [vmem:[%s1 + $0x618] sm:$0xff]
  %v219 = vld [vmem:[%s1 + $0x620] sm:$0xff]
  %v220 = vld [vmem:[%s1 + $0x628] sm:$0xff]
  %v221 = vld [vmem:[%s1 + $0x630] sm:$0xff]
  %v222 = vld [vmem:[%s1 + $0x638] sm:$0xff]
  %v223 = vld [vmem:[%s1 + $0x640] sm:$0xff]
  %v224 = vld [vmem:[%s1 + $0x648] sm:$0xff]
  %v225 = vld [vmem:[%s1 + $0x650] sm:$0xff]
  %v226 = vld [vmem:[%s1 + $0x658] sm:$0xff]
  %v227 = vld [vmem:[%s1 + $0x660] sm:$0xff]
  %v228 = vld [vmem:[%s1 + $0x668] sm:$0xff]
  %v229 = vld [vmem:[%s1 + $0x670] sm:$0xff]
  %v230 = vld [vmem:[%s1 + $0x678] sm:$0xff]
  %v231 = vld [vmem:[%s1 + $0x680] sm:$0xff]
  %v232 = vld [vmem:[%s1 + $0x688] sm:$0xff]
  %v233 = vld [vmem:[%s1 + $0x690] sm:$0xff]
  %v234 = vld [vmem:[%s1 + $0x698] sm:$0xff]
  %v235 = vld [vmem:[%s1 + $0x6a0] sm:$0xff]
  %v236 = vld [vmem:[%s1 + $0x6a8] sm:$0xff]
  %v237 = vld [vmem:[%s1 + $0x6b0] sm:$0xff]
  %v238 = vld [vmem:[%s1 + $0x6b8] sm:$0xff]
  %v239 = vld [vmem:[%s1 + $0x6c0] sm:$0xff]
  %v240 = vld [vmem:[%s1 + $0x6c8] sm:$0xff]
  %v241 = vld [vmem:[%s1 + $0x6d0] sm:$0xff]
  %v242 = vld [vmem:[%s1 + $0x6d8] sm:$0xff]
  %v243 = vld [vmem:[%s1 + $0x6e0] sm:$0xff]
  %v244 = vld [vmem:[%s1 + $0x6e8] sm:$0xff]
  %v245 = vld [vmem:[%s1 + $0x6f0] sm:$0xff]
  %v246 = vld [vmem:[%s1 + $0x6f8] sm:$0xff]
  %v247 = vld [vmem:[%s1 + $0x700] sm:$0xff]
  %v248 = vld [vmem:[%s1 + $0x708] sm:$0xff]
  %v249 = vld [vmem:[%s1 + $0x710] sm:$0xff]
  %v250 = vld [vmem:[%s1 + $0x718] sm:$0xff]
  %v251 = vld [vmem:[%s1 + $0x720] sm:$0xff]
  %v252 = vld [vmem:[%s1 + $0x728] sm:$0xff]
  %v253 = vld [vmem:[%s1 + $0x730] sm:$0xff]
  %v254 = vld [vmem:[%s1 + $0x738] sm:$0xff]
  %v255 = vld [vmem:[%s1 + $0x740] sm:$0xff]
  %v256 = vld [vmem:[%s1 + $0x748] sm:$0xff]
  %v257 = vld [vmem:[%s1 + $0x750] sm:$0xff]
  %v258 = vld [vmem:[%s1 + $0x758] sm:$0xff]
  %v259 = vld [vmem:[%s1 + $0x760] sm:$0xff]
  %v260 = vld [vmem:[%s1 + $0x768] sm:$0xff]
  %v261 = vld [vmem:[%s1 + $0x770] sm:$0xff]
  %v262 = vld [vmem:[%s1 + $0x778] sm:$0xff]
  %v263 = vld [vmem:[%s1 + $0x780] sm:$0xff]
  %v264 = vld [vmem:[%s1 + $0x788] sm:$0xff]
  %v265 = vld [vmem:[%s1 + $0x790] sm:$0xff]
  %v266 = vld [vmem:[%s1 + $0x798] sm:$0xff]
  %v267 = vld [vmem:[%s1 + $0x7a0] sm:$0xff]
  %v268 = vld [vmem:[%s1 + $0x7a8] sm:$0xff]
  %v269 = vld [vmem:[%s1 + $0x7b0] sm:$0xff]
  %v270 = vld [vmem:[%s1 + $0x7b8] sm:$0xff]
  %v271 = vld [vmem:[%s1 + $0x7c0] sm:$0xff]
  %v272 = vld [vmem:[%s1 + $0x7c8] sm:$0xff]
  %v273 = vld [vmem:[%s1 + $0x7d0] sm:$0xff]
  %v274 = vld [vmem:[%s1 + $0x7d8] sm:$0xff]
  %v275 = vld [vmem:[%s1 + $0x7e0] sm:$0xff]
  %v276 = vld [vmem:[%s1 + $0x7e8] sm:$0xff]
  %v277 = vld [vmem:[%s1 + $0x7f0] sm:$0xff]
  %v278 = vld [vmem:[%s1 + $0x7f8] sm:$0xff]
  %v279 = vld [vmem:[%s1 + $0x800] sm:$0xff]
  %v280 = vld [vmem:[%s1 + $0x808] sm:$0xff]
  %v281 = vld [vmem:[%s1 + $0x810] sm:$0xff]
  %v282 = vld [vmem:[%s1 + $0x818] sm:$0xff]
  %v283 = vld [vmem:[%s1 + $0x820] sm:$0xff]
  %v284 = vld [vmem:[%s1 + $0x828] sm:$0xff]
  %v285 = vld [vmem:[%s1 + $0x830] sm:$0xff]
  %v286 = vld [vmem:[%s1 + $0x838] sm:$0xff]
  %v287 = vld [vmem:[%s1 + $0x840] sm:$0xff]
  %v288 = vld [vmem:[%s1 + $0x848] sm:$0xff]
  %v289 = vld [vmem:[%s1 + $0x850] sm:$0xff]
  %v290 = vld [vmem:[%s1 + $0x858] sm:$0xff]
  %v291 = vld [vmem:[%s1 + $0x860] sm:$0xff]
  %v292 = vld [vmem:[%s1 + $0x868] sm:$0xff]
  %v293 = vld [vmem:[%s1 + $0x870] sm:$0xff]
  %v294 = vld [vmem:[%s1 + $0x878] sm:$0xff]
  %v295 = vld [vmem:[%s1 + $0x880] sm:$0xff]
  %v296 = vld [vmem:[%s1 + $0x888] sm:$0xff]
  %v297 = vld [vmem:[%s1 + $0x890] sm:$0xff]
  %v298 = vld [vmem:[%s1 + $0x898] sm:$0xff]
  %v299 = vld [vmem:[%s1 + $0x8a0] sm:$0xff]
  %v300 = vld [vmem:[%s1 + $0x8a8] sm:$0xff]
  %v301 = vld [vmem:[%s1 + $0x8b0] sm:$0xff]
  %v302 = vld [vmem:[%s1 + $0x8b8] sm:$0xff]
  %v303 = vld [vmem:[%s1 + $0x8c0] sm:$0xff]
  %v304 = vld [vmem:[%s1 + $0x8c8] sm:$0xff]
  %v305 = vld [vmem:[%s1 + $0x8d0] sm:$0xff]
  %v306 = vld [vmem:[%s1 + $0x8d8] sm:$0xff]
  %v307 = vld [vmem:[%s1 + $0x8e0] sm:$0xff]
  %v308 = vld [vmem:[%s1 + $0x8e8] sm:$0xff]
  %v309 = vld [vmem:[%s1 + $0x8f0] sm:$0xff]
  %v310 = vld [vmem:[%s1 + $0x8f8] sm:$0xff]
  %v316 = vunpack.c.l.b16 %v18
  %v317 = vunpack.c.h.b16 %v18
  %v318 = vunpack.c.l.b16 %v19
  %v319 = vunpack.c.h.b16 %v19
  %v320 = vunpack.c.l.b16 %v20
  %v321 = vunpack.c.h.b16 %v20
  %v322 = vunpack.c.l.b16 %v21
  %v323 = vunpack.c.h.b16 %v21
  %v324 = vunpack.c.l.b16 %v22
  %v325 = vpack.c.b16 %v316, %v316
  %v326 = vpack.c.b16 %v317, %v317
  %v327 = vpack.c.b16 %v318, %v318
  %v328 = vpack.c.b16 %v319, %v319
  %v329 = vpack.c.b16 %v320, %v320
  %v330 = vpack.c.b16 %v321, %v321
  %v331 = vpack.c.b16 %v322, %v322
  %v332 = vpack.c.b16 %v323, %v323
  %v333 = vpack.c.b16 %v324, %v324
  %v631 = vunpack.c.l.b16 %v23
  %v632 = vunpack.c.h.b16 %v23
  %v633 = vunpack.c.l.b16 %v24
  %v634 = vunpack.c.h.b16 %v24
  %v635 = vunpack.c.l.b16 %v25
  %v636 = vunpack.c.h.b16 %v25
  %v637 = vunpack.c.l.b16 %v26
  %v638 = vunpack.c.h.b16 %v26
  %v639 = vunpack.c.l.b16 %v27
  %v640 = vunpack.c.h.b16 %v27
  %v641 = vunpack.c.l.b16 %v28
  %v642 = vunpack.c.h.b16 %v28
  %v643 = vunpack.c.l.b16 %v29
  %v644 = vunpack.c.h.b16 %v29
  %v645 = vunpack.c.l.b16 %v30
  %v646 = vunpack.c.h.b16 %v30
  %v647 = vunpack.c.l.b16 %v31
  %v648 = vunpack.c.h.b16 %v31
  %v649 = vunpack.c.l.b16 %v32
  %v650 = vunpack.c.h.b16 %v32
  %v651 = vunpack.c.l.b16 %v33
  %v652 = vunpack.c.h.b16 %v33
  %v653 = vunpack.c.l.b16 %v34
  %v654 = vunpack.c.h.b16 %v34
  %v655 = vunpack.c.l.b16 %v35
  %v656 = vunpack.c.h.b16 %v35
  %v657 = vunpack.c.l.b16 %v36
  %v658 = vunpack.c.h.b16 %v36
  %v659 = vunpack.c.l.b16 %v37
  %v660 = vunpack.c.h.b16 %v37
  %v661 = vunpack.c.l.b16 %v38
  %v662 = vunpack.c.h.b16 %v38
  %v663 = vunpack.c.l.b16 %v39
  %v664 = vunpack.c.h.b16 %v39
  %v665 = vunpack.c.l.b16 %v40
  %v666 = vunpack.c.h.b16 %v40
  %v667 = vunpack.c.l.b16 %v41
  %v668 = vunpack.c.h.b16 %v41
  %v669 = vunpack.c.l.b16 %v42
  %v670 = vunpack.c.h.b16 %v42
  %v671 = vunpack.c.l.b16 %v43
  %v672 = vunpack.c.h.b16 %v43
  %v673 = vunpack.c.l.b16 %v44
  %v674 = vunpack.c.h.b16 %v44
  %v675 = vunpack.c.l.b16 %v45
  %v676 = vunpack.c.h.b16 %v45
  %v677 = vunpack.c.l.b16 %v46
  %v678 = vunpack.c.h.b16 %v46
  %v679 = vunpack.c.l.b16 %v47
  %v680 = vunpack.c.h.b16 %v47
  %v681 = vunpack.c.l.b16 %v48
  %v682 = vunpack.c.h.b16 %v48
  %v683 = vunpack.c.l.b16 %v49
  %v684 = vunpack.c.h.b16 %v49
  %v685 = vunpack.c.l.b16 %v50
  %v686 = vunpack.c.h.b16 %v50
  %v687 = vunpack.c.l.b16 %v51
  %v688 = vunpack.c.h.b16 %v51
  %v689 = vunpack.c.l.b16 %v52
  %v690 = vunpack.c.h.b16 %v52
  %v691 = vunpack.c.l.b16 %v53
  %v692 = vunpack.c.h.b16 %v53
  %v693 = vunpack.c.l.b16 %v54
  %v694 = vunpack.c.h.b16 %v54
  %v695 = vunpack.c.l.b16 %v55
  %v696 = vunpack.c.h.b16 %v55
  %v697 = vunpack.c.l.b16 %v56
  %v698 = vunpack.c.h.b16 %v56
  %v699 = vunpack.c.l.b16 %v57
  %v700 = vunpack.c.h.b16 %v57
  %v701 = vunpack.c.l.b16 %v58
  %v702 = vunpack.c.h.b16 %v58
  %v703 = vunpack.c.l.b16 %v59
  %v704 = vunpack.c.h.b16 %v59
  %v705 = vunpack.c.l.b16 %v60
  %v706 = vunpack.c.h.b16 %v60
  %v707 = vunpack.c.l.b16 %v61
  %v708 = vunpack.c.h.b16 %v61
  %v709 = vunpack.c.l.b16 %v62
  %v710 = vunpack.c.h.b16 %v62
  %v711 = vunpack.c.l.b16 %v63
  %v712 = vunpack.c.h.b16 %v63
  %v713 = vunpack.c.l.b16 %v64
  %v714 = vunpack.c.h.b16 %v64
  %v715 = vunpack.c.l.b16 %v65
  %v716 = vunpack.c.h.b16 %v65
  %v717 = vunpack.c.l.b16 %v66
  %v718 = vunpack.c.h.b16 %v66
  %v719 = vunpack.c.l.b16 %v67
  %v720 = vunpack.c.h.b16 %v67
  %v721 = vunpack.c.l.b16 %v68
  %v722 = vunpack.c.h.b16 %v68
  %v723 = vunpack.c.l.b16 %v69
  %v724 = vunpack.c.h.b16 %v69
  %v725 = vunpack.c.l.b16 %v70
  %v726 = vunpack.c.h.b16 %v70
  %v727 = vunpack.c.l.b16 %v71
  %v728 = vunpack.c.h.b16 %v71
  %v729 = vunpack.c.l.b16 %v72
  %v730 = vunpack.c.h.b16 %v72
  %v731 = vunpack.c.l.b16 %v73
  %v732 = vunpack.c.h.b16 %v73
  %v733 = vunpack.c.l.b16 %v74
  %v734 = vunpack.c.h.b16 %v74
  %v735 = vunpack.c.l.b16 %v75
  %v736 = vunpack.c.h.b16 %v75
  %v737 = vunpack.c.l.b16 %v76
  %v738 = vunpack.c.h.b16 %v76
  %v739 = vunpack.c.l.b16 %v77
  %v740 = vunpack.c.h.b16 %v77
  %v741 = vunpack.c.l.b16 %v78
  %v742 = vunpack.c.h.b16 %v78
  %v743 = vunpack.c.l.b16 %v79
  %v744 = vunpack.c.h.b16 %v79
  %v745 = vunpack.c.l.b16 %v80
  %v746 = vunpack.c.h.b16 %v80
  %v747 = vunpack.c.l.b16 %v81
  %v748 = vunpack.c.h.b16 %v81
  %v749 = vunpack.c.l.b16 %v82
  %v750 = vunpack.c.h.b16 %v82
  %v751 = vunpack.c.l.b16 %v83
  %v752 = vunpack.c.h.b16 %v83
  %v753 = vunpack.c.l.b16 %v84
  %v754 = vunpack.c.h.b16 %v84
  %v755 = vunpack.c.l.b16 %v85
  %v756 = vunpack.c.h.b16 %v85
  %v757 = vunpack.c.l.b16 %v86
  %v758 = vunpack.c.h.b16 %v86
  %v759 = vunpack.c.l.b16 %v87
  %v760 = vunpack.c.h.b16 %v87
  %v761 = vunpack.c.l.b16 %v88
  %v762 = vunpack.c.h.b16 %v88
  %v763 = vunpack.c.l.b16 %v89
  %v764 = vunpack.c.h.b16 %v89
  %v765 = vunpack.c.l.b16 %v90
  %v766 = vunpack.c.h.b16 %v90
  %v767 = vunpack.c.l.b16 %v91
  %v768 = vunpack.c.h.b16 %v91
  %v769 = vunpack.c.l.b16 %v92
  %v770 = vunpack.c.h.b16 %v92
  %v771 = vunpack.c.l.b16 %v93
  %v772 = vunpack.c.h.b16 %v93
  %v773 = vunpack.c.l.b16 %v94
  %v774 = vunpack.c.h.b16 %v94
  %v775 = vunpack.c.l.b16 %v95
  %v776 = vunpack.c.h.b16 %v95
  %v777 = vunpack.c.l.b16 %v96
  %v778 = vunpack.c.h.b16 %v96
  %v779 = vunpack.c.l.b16 %v97
  %v780 = vunpack.c.h.b16 %v97
  %v781 = vunpack.c.l.b16 %v98
  %v782 = vunpack.c.h.b16 %v98
  %v783 = vunpack.c.l.b16 %v99
  %v784 = vunpack.c.h.b16 %v99
  %v785 = vunpack.c.l.b16 %v100
  %v786 = vunpack.c.h.b16 %v100
  %v787 = vunpack.c.l.b16 %v101
  %v788 = vunpack.c.h.b16 %v101
  %v789 = vunpack.c.l.b16 %v102
  %v790 = vunpack.c.h.b16 %v102
  %v791 = vunpack.c.l.b16 %v103
  %v792 = vunpack.c.h.b16 %v103
  %v793 = vunpack.c.l.b16 %v104
  %v794 = vunpack.c.h.b16 %v104
  %v795 = vunpack.c.l.b16 %v105
  %v796 = vunpack.c.h.b16 %v105
  %v797 = vunpack.c.l.b16 %v106
  %v798 = vunpack.c.h.b16 %v106
  %v799 = vunpack.c.l.b16 %v107
  %v800 = vunpack.c.h.b16 %v107
  %v801 = vunpack.c.l.b16 %v108
  %v802 = vunpack.c.h.b16 %v108
  %v803 = vunpack.c.l.b16 %v109
  %v804 = vunpack.c.h.b16 %v109
  %v805 = vunpack.c.l.b16 %v110
  %v806 = vunpack.c.h.b16 %v110
  %v807 = vunpack.c.l.b16 %v111
  %v808 = vunpack.c.h.b16 %v111
  %v809 = vunpack.c.l.b16 %v112
  %v810 = vunpack.c.h.b16 %v112
  %v811 = vunpack.c.l.b16 %v113
  %v812 = vunpack.c.h.b16 %v113
  %v813 = vunpack.c.l.b16 %v114
  %v814 = vunpack.c.h.b16 %v114
  %v815 = vunpack.c.l.b16 %v115
  %v816 = vunpack.c.h.b16 %v115
  %v817 = vunpack.c.l.b16 %v116
  %v818 = vunpack.c.h.b16 %v116
  %v819 = vunpack.c.l.b16 %v117
  %v820 = vunpack.c.h.b16 %v117
  %v821 = vunpack.c.l.b16 %v118
  %v822 = vunpack.c.h.b16 %v118
  %v823 = vunpack.c.l.b16 %v119
  %v824 = vunpack.c.h.b16 %v119
  %v825 = vunpack.c.l.b16 %v120
  %v826 = vunpack.c.h.b16 %v120
  %v827 = vunpack.c.l.b16 %v121
  %v828 = vunpack.c.h.b16 %v121
  %v829 = vunpack.c.l.b16 %v122
  %v830 = vunpack.c.h.b16 %v122
  %v831 = vunpack.c.l.b16 %v123
  %v832 = vunpack.c.h.b16 %v123
  %v833 = vunpack.c.l.b16 %v124
  %v834 = vunpack.c.h.b16 %v124
  %v835 = vunpack.c.l.b16 %v125
  %v836 = vunpack.c.h.b16 %v125
  %v837 = vunpack.c.l.b16 %v126
  %v838 = vunpack.c.h.b16 %v126
  %v839 = vunpack.c.l.b16 %v127
  %v840 = vunpack.c.h.b16 %v127
  %v841 = vunpack.c.l.b16 %v128
  %v842 = vunpack.c.h.b16 %v128
  %v843 = vunpack.c.l.b16 %v129
  %v844 = vunpack.c.h.b16 %v129
  %v845 = vunpack.c.l.b16 %v130
  %v846 = vunpack.c.h.b16 %v130
  %v847 = vunpack.c.l.b16 %v131
  %v848 = vunpack.c.h.b16 %v131
  %v849 = vunpack.c.l.b16 %v132
  %v850 = vunpack.c.h.b16 %v132
  %v851 = vunpack.c.l.b16 %v133
  %v852 = vunpack.c.h.b16 %v133
  %v853 = vunpack.c.l.b16 %v134
  %v854 = vunpack.c.h.b16 %v134
  %v855 = vunpack.c.l.b16 %v135
  %v856 = vunpack.c.h.b16 %v135
  %v857 = vunpack.c.l.b16 %v136
  %v858 = vunpack.c.h.b16 %v136
  %v859 = vunpack.c.l.b16 %v137
  %v860 = vunpack.c.h.b16 %v137
  %v861 = vunpack.c.l.b16 %v138
  %v862 = vunpack.c.h.b16 %v138
  %v863 = vunpack.c.l.b16 %v139
  %v864 = vunpack.c.h.b16 %v139
  %v865 = vunpack.c.l.b16 %v140
  %v866 = vunpack.c.h.b16 %v140
  %v867 = vunpack.c.l.b16 %v141
  %v868 = vunpack.c.h.b16 %v141
  %v869 = vunpack.c.l.b16 %v142
  %v870 = vunpack.c.h.b16 %v142
  %v871 = vunpack.c.l.b16 %v143
  %v872 = vunpack.c.h.b16 %v143
  %v873 = vunpack.c.l.b16 %v144
  %v874 = vunpack.c.h.b16 %v144
  %v875 = vunpack.c.l.b16 %v145
  %v876 = vunpack.c.h.b16 %v145
  %v877 = vunpack.c.l.b16 %v146
  %v878 = vunpack.c.h.b16 %v146
  %v879 = vunpack.c.l.b16 %v147
  %v880 = vunpack.c.h.b16 %v147
  %v881 = vunpack.c.l.b16 %v148
  %v882 = vunpack.c.h.b16 %v148
  %v883 = vunpack.c.l.b16 %v149
  %v884 = vunpack.c.h.b16 %v149
  %v885 = vunpack.c.l.b16 %v150
  %v886 = vunpack.c.h.b16 %v150
  %v887 = vunpack.c.l.b16 %v151
  %v888 = vunpack.c.h.b16 %v151
  %v889 = vunpack.c.l.b16 %v152
  %v890 = vunpack.c.h.b16 %v152
  %v891 = vunpack.c.l.b16 %v153
  %v892 = vunpack.c.h.b16 %v153
  %v893 = vunpack.c.l.b16 %v154
  %v894 = vunpack.c.h.b16 %v154
  %v895 = vunpack.c.l.b16 %v155
  %v896 = vunpack.c.h.b16 %v155
  %v897 = vunpack.c.l.b16 %v156
  %v898 = vunpack.c.h.b16 %v156
  %v899 = vunpack.c.l.b16 %v157
  %v900 = vunpack.c.h.b16 %v157
  %v901 = vunpack.c.l.b16 %v158
  %v902 = vunpack.c.h.b16 %v158
  %v903 = vunpack.c.l.b16 %v159
  %v904 = vunpack.c.h.b16 %v159
  %v905 = vunpack.c.l.b16 %v160
  %v906 = vunpack.c.h.b16 %v160
  %v907 = vunpack.c.l.b16 %v161
  %v908 = vunpack.c.h.b16 %v161
  %v909 = vunpack.c.l.b16 %v162
  %v910 = vunpack.c.h.b16 %v162
  %v911 = vunpack.c.l.b16 %v163
  %v912 = vunpack.c.h.b16 %v163
  %v913 = vunpack.c.l.b16 %v164
  %v914 = vunpack.c.h.b16 %v164
  %v915 = vunpack.c.l.b16 %v165
  %v916 = vunpack.c.h.b16 %v165
  %v917 = vunpack.c.l.b16 %v166
  %v918 = vunpack.c.h.b16 %v166
  %v919 = vunpack.c.l.b16 %v167
  %v920 = vunpack.c.h.b16 %v167
  %v921 = vunpack.c.l.b16 %v168
  %v922 = vunpack.c.h.b16 %v168
  %v923 = vunpack.c.l.b16 %v169
  %v924 = vunpack.c.h.b16 %v169
  %v925 = vunpack.c.l.b16 %v170
  %v926 = vunpack.c.h.b16 %v170
  %v927 = vunpack.c.l.b16 %v171
  %v928 = vunpack.c.h.b16 %v171
  %v929 = vunpack.c.l.b16 %v172
  %v930 = vunpack.c.h.b16 %v172
  %v931 = vunpack.c.l.b16 %v173
  %v932 = vunpack.c.h.b16 %v173
  %v933 = vunpack.c.l.b16 %v174
  %v934 = vunpack.c.h.b16 %v174
  %v935 = vunpack.c.l.b16 %v175
  %v936 = vunpack.c.h.b16 %v175
  %v937 = vunpack.c.l.b16 %v176
  %v938 = vunpack.c.h.b16 %v176
  %v939 = vunpack.c.l.b16 %v177
  %v940 = vunpack.c.h.b16 %v177
  %v941 = vunpack.c.l.b16 %v178
  %v942 = vunpack.c.h.b16 %v178
  %v943 = vunpack.c.l.b16 %v179
  %v944 = vunpack.c.h.b16 %v179
  %v945 = vunpack.c.l.b16 %v180
  %v946 = vunpack.c.h.b16 %v180
  %v947 = vunpack.c.l.b16 %v181
  %v948 = vunpack.c.h.b16 %v181
  %v949 = vunpack.c.l.b16 %v182
  %v950 = vunpack.c.h.b16 %v182
  %v951 = vunpack.c.l.b16 %v183
  %v952 = vunpack.c.h.b16 %v183
  %v953 = vunpack.c.l.b16 %v184
  %v954 = vunpack.c.h.b16 %v184
  %v955 = vunpack.c.l.b16 %v185
  %v956 = vunpack.c.h.b16 %v185
  %v957 = vunpack.c.l.b16 %v186
  %v958 = vunpack.c.h.b16 %v186
  %v959 = vunpack.c.l.b16 %v187
  %v960 = vunpack.c.h.b16 %v187
  %v961 = vunpack.c.l.b16 %v188
  %v962 = vunpack.c.h.b16 %v188
  %v963 = vunpack.c.l.b16 %v189
  %v964 = vunpack.c.h.b16 %v189
  %v965 = vunpack.c.l.b16 %v190
  %v966 = vunpack.c.h.b16 %v190
  %v967 = vunpack.c.l.b16 %v191
  %v968 = vunpack.c.h.b16 %v191
  %v969 = vunpack.c.l.b16 %v192
  %v970 = vunpack.c.h.b16 %v192
  %v971 = vunpack.c.l.b16 %v193
  %v972 = vunpack.c.h.b16 %v193
  %v973 = vunpack.c.l.b16 %v194
  %v974 = vunpack.c.h.b16 %v194
  %v975 = vunpack.c.l.b16 %v195
  %v976 = vunpack.c.h.b16 %v195
  %v977 = vunpack.c.l.b16 %v196
  %v978 = vunpack.c.h.b16 %v196
  %v979 = vunpack.c.l.b16 %v197
  %v980 = vunpack.c.h.b16 %v197
  %v981 = vunpack.c.l.b16 %v198
  %v982 = vunpack.c.h.b16 %v198
  %v983 = vunpack.c.l.b16 %v199
  %v984 = vunpack.c.h.b16 %v199
  %v985 = vunpack.c.l.b16 %v200
  %v986 = vunpack.c.h.b16 %v200
  %v987 = vunpack.c.l.b16 %v201
  %v988 = vunpack.c.h.b16 %v201
  %v989 = vunpack.c.l.b16 %v202
  %v990 = vunpack.c.h.b16 %v202
  %v991 = vunpack.c.l.b16 %v203
  %v992 = vunpack.c.h.b16 %v203
  %v993 = vunpack.c.l.b16 %v204
  %v994 = vunpack.c.h.b16 %v204
  %v995 = vunpack.c.l.b16 %v205
  %v996 = vunpack.c.h.b16 %v205
  %v997 = vunpack.c.l.b16 %v206
  %v998 = vunpack.c.h.b16 %v206
  %v999 = vunpack.c.l.b16 %v207
  %v1000 = vunpack.c.h.b16 %v207
  %v1001 = vunpack.c.l.b16 %v208
  %v1002 = vunpack.c.h.b16 %v208
  %v1003 = vunpack.c.l.b16 %v209
  %v1004 = vunpack.c.h.b16 %v209
  %v1005 = vunpack.c.l.b16 %v210
  %v1006 = vunpack.c.h.b16 %v210
  %v1007 = vunpack.c.l.b16 %v211
  %v1008 = vunpack.c.h.b16 %v211
  %v1009 = vunpack.c.l.b16 %v212
  %v1010 = vunpack.c.h.b16 %v212
  %v1011 = vunpack.c.l.b16 %v213
  %v1012 = vunpack.c.h.b16 %v213
  %v1013 = vunpack.c.l.b16 %v214
  %v1014 = vunpack.c.h.b16 %v214
  %v1015 = vunpack.c.l.b16 %v215
  %v1016 = vunpack.c.h.b16 %v215
  %v1017 = vunpack.c.l.b16 %v216
  %v1018 = vunpack.c.h.b16 %v216
  %v1019 = vunpack.c.l.b16 %v217
  %v1020 = vunpack.c.h.b16 %v217
  %v1021 = vunpack.c.l.b16 %v218
  %v1022 = vunpack.c.h.b16 %v218
  %v1023 = vunpack.c.l.b16 %v219
  %v1024 = vunpack.c.h.b16 %v219
  %v1025 = vunpack.c.l.b16 %v220
  %v1026 = vunpack.c.h.b16 %v220
  %v1027 = vunpack.c.l.b16 %v221
  %v1028 = vunpack.c.h.b16 %v221
  %v1029 = vunpack.c.l.b16 %v222
  %v1030 = vunpack.c.h.b16 %v222
  %v1031 = vunpack.c.l.b16 %v223
  %v1032 = vunpack.c.h.b16 %v223
  %v1033 = vunpack.c.l.b16 %v224
  %v1034 = vunpack.c.h.b16 %v224
  %v1035 = vunpack.c.l.b16 %v225
  %v1036 = vunpack.c.h.b16 %v225
  %v1037 = vunpack.c.l.b16 %v226
  %v1038 = vunpack.c.h.b16 %v226
  %v1039 = vunpack.c.l.b16 %v227
  %v1040 = vunpack.c.h.b16 %v227
  %v1041 = vunpack.c.l.b16 %v228
  %v1042 = vunpack.c.h.b16 %v228
  %v1043 = vunpack.c.l.b16 %v229
  %v1044 = vunpack.c.h.b16 %v229
  %v1045 = vunpack.c.l.b16 %v230
  %v1046 = vunpack.c.h.b16 %v230
  %v1047 = vunpack.c.l.b16 %v231
  %v1048 = vunpack.c.h.b16 %v231
  %v1049 = vunpack.c.l.b16 %v232
  %v1050 = vunpack.c.h.b16 %v232
  %v1051 = vunpack.c.l.b16 %v233
  %v1052 = vunpack.c.h.b16 %v233
  %v1053 = vunpack.c.l.b16 %v234
  %v1054 = vunpack.c.h.b16 %v234
  %v1055 = vunpack.c.l.b16 %v235
  %v1056 = vunpack.c.h.b16 %v235
  %v1057 = vunpack.c.l.b16 %v236
  %v1058 = vunpack.c.h.b16 %v236
  %v1059 = vunpack.c.l.b16 %v237
  %v1060 = vunpack.c.h.b16 %v237
  %v1061 = vunpack.c.l.b16 %v238
  %v1062 = vunpack.c.h.b16 %v238
  %v1063 = vunpack.c.l.b16 %v239
  %v1064 = vunpack.c.h.b16 %v239
  %v1065 = vunpack.c.l.b16 %v240
  %v1066 = vunpack.c.h.b16 %v240
  %v1067 = vunpack.c.l.b16 %v241
  %v1068 = vunpack.c.h.b16 %v241
  %v1069 = vunpack.c.l.b16 %v242
  %v1070 = vunpack.c.h.b16 %v242
  %v1071 = vunpack.c.l.b16 %v243
  %v1072 = vunpack.c.h.b16 %v243
  %v1073 = vunpack.c.l.b16 %v244
  %v1074 = vunpack.c.h.b16 %v244
  %v1075 = vunpack.c.l.b16 %v245
  %v1076 = vunpack.c.h.b16 %v245
  %v1077 = vunpack.c.l.b16 %v246
  %v1078 = vunpack.c.h.b16 %v246
  %v1079 = vunpack.c.l.b16 %v247
  %v1080 = vunpack.c.h.b16 %v247
  %v1081 = vunpack.c.l.b16 %v248
  %v1082 = vunpack.c.h.b16 %v248
  %v1083 = vunpack.c.l.b16 %v249
  %v1084 = vunpack.c.h.b16 %v249
  %v1085 = vunpack.c.l.b16 %v250
  %v1086 = vunpack.c.h.b16 %v250
  %v1087 = vunpack.c.l.b16 %v251
  %v1088 = vunpack.c.h.b16 %v251
  %v1089 = vunpack.c.l.b16 %v252
  %v1090 = vunpack.c.h.b16 %v252
  %v1091 = vunpack.c.l.b16 %v253
  %v1092 = vunpack.c.h.b16 %v253
  %v1093 = vunpack.c.l.b16 %v254
  %v1094 = vunpack.c.h.b16 %v254
  %v1095 = vunpack.c.l.b16 %v255
  %v1096 = vunpack.c.h.b16 %v255
  %v1097 = vunpack.c.l.b16 %v256
  %v1098 = vunpack.c.h.b16 %v256
  %v1099 = vunpack.c.l.b16 %v257
  %v1100 = vunpack.c.h.b16 %v257
  %v1101 = vunpack.c.l.b16 %v258
  %v1102 = vunpack.c.h.b16 %v258
  %v1103 = vunpack.c.l.b16 %v259
  %v1104 = vunpack.c.h.b16 %v259
  %v1105 = vunpack.c.l.b16 %v260
  %v1106 = vunpack.c.h.b16 %v260
  %v1107 = vunpack.c.l.b16 %v261
  %v1108 = vunpack.c.h.b16 %v261
  %v1109 = vunpack.c.l.b16 %v262
  %v1110 = vunpack.c.h.b16 %v262
  %v1111 = vunpack.c.l.b16 %v263
  %v1112 = vunpack.c.h.b16 %v263
  %v1113 = vunpack.c.l.b16 %v264
  %v1114 = vunpack.c.h.b16 %v264
  %v1115 = vunpack.c.l.b16 %v265
  %v1116 = vunpack.c.h.b16 %v265
  %v1117 = vunpack.c.l.b16 %v266
  %v1118 = vunpack.c.h.b16 %v266
  %v1119 = vunpack.c.l.b16 %v267
  %v1120 = vunpack.c.h.b16 %v267
  %v1121 = vunpack.c.l.b16 %v268
  %v1122 = vunpack.c.h.b16 %v268
  %v1123 = vunpack.c.l.b16 %v269
  %v1124 = vunpack.c.h.b16 %v269
  %v1125 = vunpack.c.l.b16 %v270
  %v1126 = vunpack.c.h.b16 %v270
  %v1127 = vunpack.c.l.b16 %v271
  %v1128 = vunpack.c.h.b16 %v271
  %v1129 = vunpack.c.l.b16 %v272
  %v1130 = vunpack.c.h.b16 %v272
  %v1131 = vunpack.c.l.b16 %v273
  %v1132 = vunpack.c.h.b16 %v273
  %v1133 = vunpack.c.l.b16 %v274
  %v1134 = vunpack.c.h.b16 %v274
  %v1135 = vunpack.c.l.b16 %v275
  %v1136 = vunpack.c.h.b16 %v275
  %v1137 = vunpack.c.l.b16 %v276
  %v1138 = vunpack.c.h.b16 %v276
  %v1139 = vunpack.c.l.b16 %v277
  %v1140 = vunpack.c.h.b16 %v277
  %v1141 = vunpack.c.l.b16 %v278
  %v1142 = vunpack.c.h.b16 %v278
  %v1143 = vunpack.c.l.b16 %v279
  %v1144 = vunpack.c.h.b16 %v279
  %v1145 = vunpack.c.l.b16 %v280
  %v1146 = vunpack.c.h.b16 %v280
  %v1147 = vunpack.c.l.b16 %v281
  %v1148 = vunpack.c.h.b16 %v281
  %v1149 = vunpack.c.l.b16 %v282
  %v1150 = vunpack.c.h.b16 %v282
  %v1151 = vunpack.c.l.b16 %v283
  %v1152 = vunpack.c.h.b16 %v283
  %v1153 = vunpack.c.l.b16 %v284
  %v1154 = vunpack.c.h.b16 %v284
  %v1155 = vunpack.c.l.b16 %v285
  %v1156 = vunpack.c.h.b16 %v285
  %v1157 = vunpack.c.l.b16 %v286
  %v1158 = vunpack.c.h.b16 %v286
  %v1159 = vunpack.c.l.b16 %v287
  %v1160 = vunpack.c.h.b16 %v287
  %v1161 = vunpack.c.l.b16 %v288
  %v1162 = vunpack.c.h.b16 %v288
  %v1163 = vunpack.c.l.b16 %v289
  %v1164 = vunpack.c.h.b16 %v289
  %v1165 = vunpack.c.l.b16 %v290
  %v1166 = vunpack.c.h.b16 %v290
  %v1167 = vunpack.c.l.b16 %v291
  %v1168 = vunpack.c.h.b16 %v291
  %v1169 = vunpack.c.l.b16 %v292
  %v1170 = vunpack.c.h.b16 %v292
  %v1171 = vunpack.c.l.b16 %v293
  %v1172 = vunpack.c.h.b16 %v293
  %v1173 = vunpack.c.l.b16 %v294
  %v1174 = vunpack.c.h.b16 %v294
  %v1175 = vunpack.c.l.b16 %v295
  %v1176 = vunpack.c.h.b16 %v295
  %v1177 = vunpack.c.l.b16 %v296
  %v1178 = vunpack.c.h.b16 %v296
  %v1179 = vunpack.c.l.b16 %v297
  %v1180 = vunpack.c.h.b16 %v297
  %v1181 = vunpack.c.l.b16 %v298
  %v1182 = vunpack.c.h.b16 %v298
  %v1183 = vunpack.c.l.b16 %v299
  %v1184 = vunpack.c.h.b16 %v299
  %v1185 = vunpack.c.l.b16 %v300
  %v1186 = vunpack.c.h.b16 %v300
  %v1187 = vunpack.c.l.b16 %v301
  %v1188 = vunpack.c.h.b16 %v301
  %v1189 = vunpack.c.l.b16 %v302
  %v1190 = vunpack.c.h.b16 %v302
  %v1191 = vunpack.c.l.b16 %v303
  %v1192 = vunpack.c.h.b16 %v303
  %v1193 = vunpack.c.l.b16 %v304
  %v1194 = vunpack.c.h.b16 %v304
  %v1195 = vunpack.c.l.b16 %v305
  %v1196 = vunpack.c.h.b16 %v305
  %v1197 = vunpack.c.l.b16 %v306
  %v1198 = vunpack.c.h.b16 %v306
  %v1199 = vunpack.c.l.b16 %v307
  %v1200 = vunpack.c.h.b16 %v307
  %v1201 = vunpack.c.l.b16 %v308
  %v1202 = vunpack.c.h.b16 %v308
  %v1203 = vunpack.c.l.b16 %v309
  %v1204 = vunpack.c.h.b16 %v309
  %v1205 = vunpack.c.l.b16 %v310
  %v1206 = vunpack.c.h.b16 %v310
  %v1207 = vpack.c.b16 %v635, %v631
  %v1208 = vpack.c.b16 %v636, %v632
  %v1209 = vpack.c.b16 %v637, %v633
  %v1210 = vpack.c.b16 %v638, %v634
  %v1211 = vpack.c.b16 %v643, %v639
  %v1212 = vpack.c.b16 %v644, %v640
  %v1213 = vpack.c.b16 %v645, %v641
  %v1214 = vpack.c.b16 %v646, %v642
  %v1215 = vpack.c.b16 %v651, %v647
  %v1216 = vpack.c.b16 %v652, %v648
  %v1217 = vpack.c.b16 %v653, %v649
  %v1218 = vpack.c.b16 %v654, %v650
  %v1219 = vpack.c.b16 %v659, %v655
  %v1220 = vpack.c.b16 %v660, %v656
  %v1221 = vpack.c.b16 %v661, %v657
  %v1222 = vpack.c.b16 %v662, %v658
  %v1223 = vpack.c.b16 %v667, %v663
  %v1224 = vpack.c.b16 %v668, %v664
  %v1225 = vpack.c.b16 %v669, %v665
  %v1226 = vpack.c.b16 %v670, %v666
  %v1227 = vpack.c.b16 %v675, %v671
  %v1228 = vpack.c.b16 %v676, %v672
  %v1229 = vpack.c.b16 %v677, %v673
  %v1230 = vpack.c.b16 %v678, %v674
  %v1231 = vpack.c.b16 %v683, %v679
  %v1232 = vpack.c.b16 %v684, %v680
  %v1233 = vpack.c.b16 %v685, %v681
  %v1234 = vpack.c.b16 %v686, %v682
  %v1235 = vpack.c.b16 %v691, %v687
  %v1236 = vpack.c.b16 %v692, %v688
  %v1237 = vpack.c.b16 %v693, %v689
  %v1238 = vpack.c.b16 %v694, %v690
  %v1239 = vpack.c.b16 %v699, %v695
  %v1240 = vpack.c.b16 %v700, %v696
  %v1241 = vpack.c.b16 %v701, %v697
  %v1242 = vpack.c.b16 %v702, %v698
  %v1243 = vpack.c.b16 %v707, %v703
  %v1244 = vpack.c.b16 %v708, %v704
  %v1245 = vpack.c.b16 %v709, %v705
  %v1246 = vpack.c.b16 %v710, %v706
  %v1247 = vpack.c.b16 %v715, %v711
  %v1248 = vpack.c.b16 %v716, %v712
  %v1249 = vpack.c.b16 %v717, %v713
  %v1250 = vpack.c.b16 %v718, %v714
  %v1251 = vpack.c.b16 %v723, %v719
  %v1252 = vpack.c.b16 %v724, %v720
  %v1253 = vpack.c.b16 %v725, %v721
  %v1254 = vpack.c.b16 %v726, %v722
  %v1255 = vpack.c.b16 %v731, %v727
  %v1256 = vpack.c.b16 %v732, %v728
  %v1257 = vpack.c.b16 %v733, %v729
  %v1258 = vpack.c.b16 %v734, %v730
  %v1259 = vpack.c.b16 %v739, %v735
  %v1260 = vpack.c.b16 %v740, %v736
  %v1261 = vpack.c.b16 %v741, %v737
  %v1262 = vpack.c.b16 %v742, %v738
  %v1263 = vpack.c.b16 %v747, %v743
  %v1264 = vpack.c.b16 %v748, %v744
  %v1265 = vpack.c.b16 %v749, %v745
  %v1266 = vpack.c.b16 %v750, %v746
  %v1267 = vpack.c.b16 %v755, %v751
  %v1268 = vpack.c.b16 %v756, %v752
  %v1269 = vpack.c.b16 %v757, %v753
  %v1270 = vpack.c.b16 %v758, %v754
  %v1271 = vpack.c.b16 %v763, %v759
  %v1272 = vpack.c.b16 %v764, %v760
  %v1273 = vpack.c.b16 %v765, %v761
  %v1274 = vpack.c.b16 %v766, %v762
  %v1275 = vpack.c.b16 %v771, %v767
  %v1276 = vpack.c.b16 %v772, %v768
  %v1277 = vpack.c.b16 %v773, %v769
  %v1278 = vpack.c.b16 %v774, %v770
  %v1279 = vpack.c.b16 %v779, %v775
  %v1280 = vpack.c.b16 %v780, %v776
  %v1281 = vpack.c.b16 %v781, %v777
  %v1282 = vpack.c.b16 %v782, %v778
  %v1283 = vpack.c.b16 %v787, %v783
  %v1284 = vpack.c.b16 %v788, %v784
  %v1285 = vpack.c.b16 %v789, %v785
  %v1286 = vpack.c.b16 %v790, %v786
  %v1287 = vpack.c.b16 %v795, %v791
  %v1288 = vpack.c.b16 %v796, %v792
  %v1289 = vpack.c.b16 %v797, %v793
  %v1290 = vpack.c.b16 %v798, %v794
  %v1291 = vpack.c.b16 %v803, %v799
  %v1292 = vpack.c.b16 %v804, %v800
  %v1293 = vpack.c.b16 %v805, %v801
  %v1294 = vpack.c.b16 %v806, %v802
  %v1295 = vpack.c.b16 %v811, %v807
  %v1296 = vpack.c.b16 %v812, %v808
  %v1297 = vpack.c.b16 %v813, %v809
  %v1298 = vpack.c.b16 %v814, %v810
  %v1299 = vpack.c.b16 %v819, %v815
  %v1300 = vpack.c.b16 %v820, %v816
  %v1301 = vpack.c.b16 %v821, %v817
  %v1302 = vpack.c.b16 %v822, %v818
  %v1303 = vpack.c.b16 %v827, %v823
  %v1304 = vpack.c.b16 %v828, %v824
  %v1305 = vpack.c.b16 %v829, %v825
  %v1306 = vpack.c.b16 %v830, %v826
  %v1307 = vpack.c.b16 %v835, %v831
  %v1308 = vpack.c.b16 %v836, %v832
  %v1309 = vpack.c.b16 %v837, %v833
  %v1310 = vpack.c.b16 %v838, %v834
  %v1311 = vpack.c.b16 %v843, %v839
  %v1312 = vpack.c.b16 %v844, %v840
  %v1313 = vpack.c.b16 %v845, %v841
  %v1314 = vpack.c.b16 %v846, %v842
  %v1315 = vpack.c.b16 %v851, %v847
  %v1316 = vpack.c.b16 %v852, %v848
  %v1317 = vpack.c.b16 %v853, %v849
  %v1318 = vpack.c.b16 %v854, %v850
  %v1319 = vpack.c.b16 %v859, %v855
  %v1320 = vpack.c.b16 %v860, %v856
  %v1321 = vpack.c.b16 %v861, %v857
  %v1322 = vpack.c.b16 %v862, %v858
  %v1323 = vpack.c.b16 %v867, %v863
  %v1324 = vpack.c.b16 %v868, %v864
  %v1325 = vpack.c.b16 %v869, %v865
  %v1326 = vpack.c.b16 %v870, %v866
  %v1327 = vpack.c.b16 %v875, %v871
  %v1328 = vpack.c.b16 %v876, %v872
  %v1329 = vpack.c.b16 %v877, %v873
  %v1330 = vpack.c.b16 %v878, %v874
  %v1331 = vpack.c.b16 %v883, %v879
  %v1332 = vpack.c.b16 %v884, %v880
  %v1333 = vpack.c.b16 %v885, %v881
  %v1334 = vpack.c.b16 %v886, %v882
  %v1335 = vpack.c.b16 %v891, %v887
  %v1336 = vpack.c.b16 %v892, %v888
  %v1337 = vpack.c.b16 %v893, %v889
  %v1338 = vpack.c.b16 %v894, %v890
  %v1339 = vpack.c.b16 %v899, %v895
  %v1340 = vpack.c.b16 %v900, %v896
  %v1341 = vpack.c.b16 %v901, %v897
  %v1342 = vpack.c.b16 %v902, %v898
  %v1343 = vpack.c.b16 %v907, %v903
  %v1344 = vpack.c.b16 %v908, %v904
  %v1345 = vpack.c.b16 %v909, %v905
  %v1346 = vpack.c.b16 %v910, %v906
  %v1347 = vpack.c.b16 %v915, %v911
  %v1348 = vpack.c.b16 %v916, %v912
  %v1349 = vpack.c.b16 %v917, %v913
  %v1350 = vpack.c.b16 %v918, %v914
  %v1351 = vpack.c.b16 %v923, %v919
  %v1352 = vpack.c.b16 %v924, %v920
  %v1353 = vpack.c.b16 %v925, %v921
  %v1354 = vpack.c.b16 %v926, %v922
  %v1355 = vpack.c.b16 %v931, %v927
  %v1356 = vpack.c.b16 %v932, %v928
  %v1357 = vpack.c.b16 %v933, %v929
  %v1358 = vpack.c.b16 %v934, %v930
  %v1359 = vpack.c.b16 %v939, %v935
  %v1360 = vpack.c.b16 %v940, %v936
  %v1361 = vpack.c.b16 %v941, %v937
  %v1362 = vpack.c.b16 %v942, %v938
  %v1363 = vpack.c.b16 %v947, %v943
  %v1364 = vpack.c.b16 %v948, %v944
  %v1365 = vpack.c.b16 %v949, %v945
  %v1366 = vpack.c.b16 %v950, %v946
  %v1367 = vpack.c.b16 %v955, %v951
  %v1368 = vpack.c.b16 %v956, %v952
  %v1369 = vpack.c.b16 %v957, %v953
  %v1370 = vpack.c.b16 %v958, %v954
  %v1371 = vpack.c.b16 %v963, %v959
  %v1372 = vpack.c.b16 %v964, %v960
  %v1373 = vpack.c.b16 %v965, %v961
  %v1374 = vpack.c.b16 %v966, %v962
  %v1375 = vpack.c.b16 %v971, %v967
  %v1376 = vpack.c.b16 %v972, %v968
  %v1377 = vpack.c.b16 %v973, %v969
  %v1378 = vpack.c.b16 %v974, %v970
  %v1379 = vpack.c.b16 %v979, %v975
  %v1380 = vpack.c.b16 %v980, %v976
  %v1381 = vpack.c.b16 %v981, %v977
  %v1382 = vpack.c.b16 %v982, %v978
  %v1383 = vpack.c.b16 %v987, %v983
  %v1384 = vpack.c.b16 %v988, %v984
  %v1385 = vpack.c.b16 %v989, %v985
  %v1386 = vpack.c.b16 %v990, %v986
  %v1387 = vpack.c.b16 %v995, %v991
  %v1388 = vpack.c.b16 %v996, %v992
  %v1389 = vpack.c.b16 %v997, %v993
  %v1390 = vpack.c.b16 %v998, %v994
  %v1391 = vpack.c.b16 %v1003, %v999
  %v1392 = vpack.c.b16 %v1004, %v1000
  %v1393 = vpack.c.b16 %v1005, %v1001
  %v1394 = vpack.c.b16 %v1006, %v1002
  %v1395 = vpack.c.b16 %v1011, %v1007
  %v1396 = vpack.c.b16 %v1012, %v1008
  %v1397 = vpack.c.b16 %v1013, %v1009
  %v1398 = vpack.c.b16 %v1014, %v1010
  %v1399 = vpack.c.b16 %v1019, %v1015
  %v1400 = vpack.c.b16 %v1020, %v1016
  %v1401 = vpack.c.b16 %v1021, %v1017
  %v1402 = vpack.c.b16 %v1022, %v1018
  %v1403 = vpack.c.b16 %v1027, %v1023
  %v1404 = vpack.c.b16 %v1028, %v1024
  %v1405 = vpack.c.b16 %v1029, %v1025
  %v1406 = vpack.c.b16 %v1030, %v1026
  %v1407 = vpack.c.b16 %v1035, %v1031
  %v1408 = vpack.c.b16 %v1036, %v1032
  %v1409 = vpack.c.b16 %v1037, %v1033
  %v1410 = vpack.c.b16 %v1038, %v1034
  %v1411 = vpack.c.b16 %v1043, %v1039
  %v1412 = vpack.c.b16 %v1044, %v1040
  %v1413 = vpack.c.b16 %v1045, %v1041
  %v1414 = vpack.c.b16 %v1046, %v1042
  %v1415 = vpack.c.b16 %v1051, %v1047
  %v1416 = vpack.c.b16 %v1052, %v1048
  %v1417 = vpack.c.b16 %v1053, %v1049
  %v1418 = vpack.c.b16 %v1054, %v1050
  %v1419 = vpack.c.b16 %v1059, %v1055
  %v1420 = vpack.c.b16 %v1060, %v1056
  %v1421 = vpack.c.b16 %v1061, %v1057
  %v1422 = vpack.c.b16 %v1062, %v1058
  %v1423 = vpack.c.b16 %v1067, %v1063
  %v1424 = vpack.c.b16 %v1068, %v1064
  %v1425 = vpack.c.b16 %v1069, %v1065
  %v1426 = vpack.c.b16 %v1070, %v1066
  %v1427 = vpack.c.b16 %v1075, %v1071
  %v1428 = vpack.c.b16 %v1076, %v1072
  %v1429 = vpack.c.b16 %v1077, %v1073
  %v1430 = vpack.c.b16 %v1078, %v1074
  %v1431 = vpack.c.b16 %v1083, %v1079
  %v1432 = vpack.c.b16 %v1084, %v1080
  %v1433 = vpack.c.b16 %v1085, %v1081
  %v1434 = vpack.c.b16 %v1086, %v1082
  %v1435 = vpack.c.b16 %v1091, %v1087
  %v1436 = vpack.c.b16 %v1092, %v1088
  %v1437 = vpack.c.b16 %v1093, %v1089
  %v1438 = vpack.c.b16 %v1094, %v1090
  %v1439 = vpack.c.b16 %v1099, %v1095
  %v1440 = vpack.c.b16 %v1100, %v1096
  %v1441 = vpack.c.b16 %v1101, %v1097
  %v1442 = vpack.c.b16 %v1102, %v1098
  %v1443 = vpack.c.b16 %v1107, %v1103
  %v1444 = vpack.c.b16 %v1108, %v1104
  %v1445 = vpack.c.b16 %v1109, %v1105
  %v1446 = vpack.c.b16 %v1110, %v1106
  %v1447 = vpack.c.b16 %v1115, %v1111
  %v1448 = vpack.c.b16 %v1116, %v1112
  %v1449 = vpack.c.b16 %v1117, %v1113
  %v1450 = vpack.c.b16 %v1118, %v1114
  %v1451 = vpack.c.b16 %v1123, %v1119
  %v1452 = vpack.c.b16 %v1124, %v1120
  %v1453 = vpack.c.b16 %v1125, %v1121
  %v1454 = vpack.c.b16 %v1126, %v1122
  %v1455 = vpack.c.b16 %v1131, %v1127
  %v1456 = vpack.c.b16 %v1132, %v1128
  %v1457 = vpack.c.b16 %v1133, %v1129
  %v1458 = vpack.c.b16 %v1134, %v1130
  %v1459 = vpack.c.b16 %v1139, %v1135
  %v1460 = vpack.c.b16 %v1140, %v1136
  %v1461 = vpack.c.b16 %v1141, %v1137
  %v1462 = vpack.c.b16 %v1142, %v1138
  %v1463 = vpack.c.b16 %v1147, %v1143
  %v1464 = vpack.c.b16 %v1148, %v1144
  %v1465 = vpack.c.b16 %v1149, %v1145
  %v1466 = vpack.c.b16 %v1150, %v1146
  %v1467 = vpack.c.b16 %v1155, %v1151
  %v1468 = vpack.c.b16 %v1156, %v1152
  %v1469 = vpack.c.b16 %v1157, %v1153
  %v1470 = vpack.c.b16 %v1158, %v1154
  %v1471 = vpack.c.b16 %v1163, %v1159
  %v1472 = vpack.c.b16 %v1164, %v1160
  %v1473 = vpack.c.b16 %v1165, %v1161
  %v1474 = vpack.c.b16 %v1166, %v1162
  %v1475 = vpack.c.b16 %v1171, %v1167
  %v1476 = vpack.c.b16 %v1172, %v1168
  %v1477 = vpack.c.b16 %v1173, %v1169
  %v1478 = vpack.c.b16 %v1174, %v1170
  %v1479 = vpack.c.b16 %v1179, %v1175
  %v1480 = vpack.c.b16 %v1180, %v1176
  %v1481 = vpack.c.b16 %v1181, %v1177
  %v1482 = vpack.c.b16 %v1182, %v1178
  %v1483 = vpack.c.b16 %v1187, %v1183
  %v1484 = vpack.c.b16 %v1188, %v1184
  %v1485 = vpack.c.b16 %v1189, %v1185
  %v1486 = vpack.c.b16 %v1190, %v1186
  %v1487 = vpack.c.b16 %v1195, %v1191
  %v1488 = vpack.c.b16 %v1196, %v1192
  %v1489 = vpack.c.b16 %v1197, %v1193
  %v1490 = vpack.c.b16 %v1198, %v1194
  %v1491 = vpack.c.b16 %v1203, %v1199
  %v1492 = vpack.c.b16 %v1204, %v1200
  %v1493 = vpack.c.b16 %v1205, %v1201
  %v1494 = vpack.c.b16 %v1206, %v1202
  %1783 = vmatprep.subr.bf16.mxu0 %v1208
  %1784 = vmatpush1.bf16.msra.mxu0 %v1207
  %1785 = vmatprep.subr.bf16.mxu0 %v1212
  %1786 = vmatpush1.bf16.msra.mxu0 %v1211
  %1787 = vmatprep.subr.bf16.mxu0 %v1216
  %1788 = vmatpush1.bf16.msra.mxu0 %v1215
  %1789 = vmatprep.subr.bf16.mxu0 %v1220
  %1790 = vmatpush1.bf16.msra.mxu0 %v1219
  %1791 = vmatprep.subr.bf16.mxu0 %v1224
  %1792 = vmatpush1.bf16.msra.mxu0 %v1223
  %1793 = vmatprep.subr.bf16.mxu0 %v1228
  %1794 = vmatpush1.bf16.msra.mxu0 %v1227
  %1795 = vmatprep.subr.bf16.mxu0 %v1232
  %1796 = vmatpush1.bf16.msra.mxu0 %v1231
  %1797 = vmatprep.subr.bf16.mxu0 %v1236
  %1798 = vmatpush1.bf16.msra.mxu0 %v1235
  %1799 = vmatprep.subr.bf16.mxu0 %v1240
  %1800 = vmatpush1.bf16.msra.mxu0 %v1239
  %1801 = vmatprep.subr.bf16.mxu0 %v1244
  %1802 = vmatpush1.bf16.msra.mxu0 %v1243
  %1803 = vmatprep.subr.bf16.mxu0 %v1248
  %1804 = vmatpush1.bf16.msra.mxu0 %v1247
  %1805 = vmatprep.subr.bf16.mxu0 %v1252
  %1806 = vmatpush1.bf16.msra.mxu0 %v1251
  %1807 = vmatprep.subr.bf16.mxu0 %v1256
  %1808 = vmatpush1.bf16.msra.mxu0 %v1255
  %1809 = vmatprep.subr.bf16.mxu0 %v1260
  %1810 = vmatpush1.bf16.msra.mxu0 %v1259
  %1811 = vmatprep.subr.bf16.mxu0 %v1264
  %1812 = vmatpush1.bf16.msra.mxu0 %v1263
  %1813 = vmatprep.subr.bf16.mxu0 %v1268
  %1814 = vmatpush1.bf16.msra.mxu0 %v1267
  %1815 = vmatprep.mubr.bf16.mxu0 %v326
  %1816 = vmatmul.mubr.bf16.gmra.mrb[0].mxu0 %v325
  %v1817 = vpop.f32.mrb[0].mxu0
  %v1818 = vadd.f32 0.0, %v1817
  %v1819 = vpop.f32.mrb[0].mxu0
  %v1820 = vadd.f32 0.0, %v1819
  %v1821 = vpop.f32.mrb[0].mxu0
  %v1822 = vpop.f32.mrb[0].mxu0
  %1823 = vdwg.mxu0
  %1824 = vmatprep.subr.bf16.mxu0 %v1272
  %1825 = vmatpush1.bf16.msra.mxu0 %v1271
  %1826 = vmatprep.subr.bf16.mxu0 %v1276
  %1827 = vmatpush1.bf16.msra.mxu0 %v1275
  %1828 = vmatprep.subr.bf16.mxu0 %v1280
  %1829 = vmatpush1.bf16.msra.mxu0 %v1279
  %1830 = vmatprep.subr.bf16.mxu0 %v1284
  %1831 = vmatpush1.bf16.msra.mxu0 %v1283
  %1832 = vmatprep.subr.bf16.mxu0 %v1288
  %1833 = vmatpush1.bf16.msra.mxu0 %v1287
  %1834 = vmatprep.subr.bf16.mxu0 %v1292
  %1835 = vmatpush1.bf16.msra.mxu0 %v1291
  %1836 = vmatprep.subr.bf16.mxu0 %v1296
  %1837 = vmatpush1.bf16.msra.mxu0 %v1295
  %1838 = vmatprep.subr.bf16.mxu0 %v1300
  %1839 = vmatpush1.bf16.msra.mxu0 %v1299
  %1840 = vmatprep.subr.bf16.mxu0 %v1304
  %1841 = vmatpush1.bf16.msra.mxu0 %v1303
  %1842 = vmatprep.subr.bf16.mxu0 %v1308
  %1843 = vmatpush1.bf16.msra.mxu0 %v1307
  %1844 = vmatprep.subr.bf16.mxu0 %v1312
  %1845 = vmatpush1.bf16.msra.mxu0 %v1311
  %1846 = vmatprep.subr.bf16.mxu0 %v1316
  %1847 = vmatpush1.bf16.msra.mxu0 %v1315
  %1848 = vmatprep.subr.bf16.mxu0 %v1320
  %1849 = vmatpush1.bf16.msra.mxu0 %v1319
  %1850 = vmatprep.subr.bf16.mxu0 %v1324
  %1851 = vmatpush1.bf16.msra.mxu0 %v1323
  %1852 = vmatprep.subr.bf16.mxu0 %v1328
  %1853 = vmatpush1.bf16.msra.mxu0 %v1327
  %1854 = vmatprep.subr.bf16.mxu0 %v1332
  %1855 = vmatpush1.bf16.msra.mxu0 %v1331
  %1856 = vmatprep.mubr.bf16.mxu0 %v328
  %1857 = vmatmul.mubr.bf16.gmra.mrb[0].mxu0 %v327
  %v1858 = vpop.f32.mrb[0].mxu0
  %v1859 = vadd.f32 %v1818, %v1858
  %v1860 = vpop.f32.mrb[0].mxu0
  %v1861 = vadd.f32 %v1820, %v1860
  %v1862 = vpop.f32.mrb[0].mxu0
  %v1863 = vpop.f32.mrb[0].mxu0
  %1864 = vdwg.mxu0
  %1865 = vmatprep.subr.bf16.mxu0 %v1336
  %1866 = vmatpush1.bf16.msra.mxu0 %v1335
  %1867 = vmatprep.subr.bf16.mxu0 %v1340
  %1868 = vmatpush1.bf16.msra.mxu0 %v1339
  %1869 = vmatprep.subr.bf16.mxu0 %v1344
  %1870 = vmatpush1.bf16.msra.mxu0 %v1343
  %1871 = vmatprep.subr.bf16.mxu0 %v1348
  %1872 = vmatpush1.bf16.msra.mxu0 %v1347
  %1873 = vmatprep.subr.bf16.mxu0 %v1352
  %1874 = vmatpush1.bf16.msra.mxu0 %v1351
  %1875 = vmatprep.subr.bf16.mxu0 %v1356
  %1876 = vmatpush1.bf16.msra.mxu0 %v1355
  %1877 = vmatprep.subr.bf16.mxu0 %v1360
  %1878 = vmatpush1.bf16.msra.mxu0 %v1359
  %1879 = vmatprep.subr.bf16.mxu0 %v1364
  %1880 = vmatpush1.bf16.msra.mxu0 %v1363
  %1881 = vmatprep.subr.bf16.mxu0 %v1368
  %1882 = vmatpush1.bf16.msra.mxu0 %v1367
  %1883 = vmatprep.subr.bf16.mxu0 %v1372
  %1884 = vmatpush1.bf16.msra.mxu0 %v1371
  %1885 = vmatprep.subr.bf16.mxu0 %v1376
  %1886 = vmatpush1.bf16.msra.mxu0 %v1375
  %1887 = vmatprep.subr.bf16.mxu0 %v1380
  %1888 = vmatpush1.bf16.msra.mxu0 %v1379
  %1889 = vmatprep.subr.bf16.mxu0 %v1384
  %1890 = vmatpush1.bf16.msra.mxu0 %v1383
  %1891 = vmatprep.subr.bf16.mxu0 %v1388
  %1892 = vmatpush1.bf16.msra.mxu0 %v1387
  %1893 = vmatprep.subr.bf16.mxu0 %v1392
  %1894 = vmatpush1.bf16.msra.mxu0 %v1391
  %1895 = vmatprep.subr.bf16.mxu0 %v1396
  %1896 = vmatpush1.bf16.msra.mxu0 %v1395
  %1897 = vmatprep.mubr.bf16.mxu0 %v330
  %1898 = vmatmul.mubr.bf16.gmra.mrb[0].mxu0 %v329
  %v1899 = vpop.f32.mrb[0].mxu0
  %v1900 = vadd.f32 %v1859, %v1899
  %v1901 = vpop.f32.mrb[0].mxu0
  %v1902 = vadd.f32 %v1861, %v1901
  %v1903 = vpop.f32.mrb[0].mxu0
  %v1904 = vpop.f32.mrb[0].mxu0
  %1905 = vdwg.mxu0
  %1906 = vmatprep.subr.bf16.mxu0 %v1400
  %1907 = vmatpush1.bf16.msra.mxu0 %v1399
  %1908 = vmatprep.subr.bf16.mxu0 %v1404
  %1909 = vmatpush1.bf16.msra.mxu0 %v1403
  %1910 = vmatprep.subr.bf16.mxu0 %v1408
  %1911 = vmatpush1.bf16.msra.mxu0 %v1407
  %1912 = vmatprep.subr.bf16.mxu0 %v1412
  %1913 = vmatpush1.bf16.msra.mxu0 %v1411
  %1914 = vmatprep.subr.bf16.mxu0 %v1416
  %1915 = vmatpush1.bf16.msra.mxu0 %v1415
  %1916 = vmatprep.subr.bf16.mxu0 %v1420
  %1917 = vmatpush1.bf16.msra.mxu0 %v1419
  %1918 = vmatprep.subr.bf16.mxu0 %v1424
  %1919 = vmatpush1.bf16.msra.mxu0 %v1423
  %1920 = vmatprep.subr.bf16.mxu0 %v1428
  %1921 = vmatpush1.bf16.msra.mxu0 %v1427
  %1922 = vmatprep.subr.bf16.mxu0 %v1432
  %1923 = vmatpush1.bf16.msra.mxu0 %v1431
  %1924 = vmatprep.subr.bf16.mxu0 %v1436
  %1925 = vmatpush1.bf16.msra.mxu0 %v1435
  %1926 = vmatprep.subr.bf16.mxu0 %v1440
  %1927 = vmatpush1.bf16.msra.mxu0 %v1439
  %1928 = vmatprep.subr.bf16.mxu0 %v1444
  %1929 = vmatpush1.bf16.msra.mxu0 %v1443
  %1930 = vmatprep.subr.bf16.mxu0 %v1448
  %1931 = vmatpush1.bf16.msra.mxu0 %v1447
  %1932 = vmatprep.subr.bf16.mxu0 %v1452
  %1933 = vmatpush1.bf16.msra.mxu0 %v1451
  %1934 = vmatprep.subr.bf16.mxu0 %v1456
  %1935 = vmatpush1.bf16.msra.mxu0 %v1455
  %1936 = vmatprep.subr.bf16.mxu0 %v1460
  %1937 = vmatpush1.bf16.msra.mxu0 %v1459
  %1938 = vmatprep.mubr.bf16.mxu0 %v332
  %1939 = vmatmul.mubr.bf16.gmra.mrb[0].mxu0 %v331
  %v1940 = vpop.f32.mrb[0].mxu0
  %v1941 = vadd.f32 %v1900, %v1940
  %v1942 = vpop.f32.mrb[0].mxu0
  %v1943 = vadd.f32 %v1902, %v1942
  %v1944 = vpop.f32.mrb[0].mxu0
  %v1945 = vpop.f32.mrb[0].mxu0
  %1946 = vdwg.mxu0
  %1947 = vmatprep.subr.bf16.mxu0 %v1464
  %1948 = vmatpush1.bf16.msra.mxu0 %v1463
  %1949 = vmatprep.subr.bf16.mxu0 %v1468
  %1950 = vmatpush1.bf16.msra.mxu0 %v1467
  %1951 = vmatprep.subr.bf16.mxu0 %v1472
  %1952 = vmatpush1.bf16.msra.mxu0 %v1471
  %1953 = vmatprep.subr.bf16.mxu0 %v1476
  %1954 = vmatpush1.bf16.msra.mxu0 %v1475
  %1955 = vmatprep.subr.bf16.mxu0 %v1480
  %1956 = vmatpush1.bf16.msra.mxu0 %v1479
  %1957 = vmatprep.subr.bf16.mxu0 %v1484
  %1958 = vmatpush1.bf16.msra.mxu0 %v1483
  %1959 = vmatprep.subr.bf16.mxu0 %v1488
  %1960 = vmatpush1.bf16.msra.mxu0 %v1487
  %1961 = vmatprep.subr.bf16.mxu0 %v1492
  %1962 = vmatpush1.bf16.msra.mxu0 %v1491
  %1963 = vmatprep.subr.bf16.mxu0 0
  %1964 = vmatpush1.bf16.msra.mxu0 0
  %1965 = vmatprep.subr.bf16.mxu0 0
  %1966 = vmatpush1.bf16.msra.mxu0 0
  %1967 = vmatprep.subr.bf16.mxu0 0
  %1968 = vmatpush1.bf16.msra.mxu0 0
  %1969 = vmatprep.subr.bf16.mxu0 0
  %1970 = vmatpush1.bf16.msra.mxu0 0
  %1971 = vmatprep.subr.bf16.mxu0 0
  %1972 = vmatpush1.bf16.msra.mxu0 0
  %1973 = vmatprep.subr.bf16.mxu0 0
  %1974 = vmatpush1.bf16.msra.mxu0 0
  %1975 = vmatprep.subr.bf16.mxu0 0
  %1976 = vmatpush1.bf16.msra.mxu0 0
  %1977 = vmatprep.subr.bf16.mxu0 0
  %1978 = vmatpush1.bf16.msra.mxu0 0
  %1979 = vmatprep.mubr.bf16.mxu0 0
  %1980 = vmatmul.mubr.bf16.gmra.mrb[0].mxu0 %v333
  %v1981 = vpop.f32.mrb[0].mxu0
  %v1982 = vadd.f32 %v1941, %v1981
  %v1983 = vpop.f32.mrb[0].mxu0
  %v1984 = vadd.f32 %v1943, %v1983
  %v1985 = vpop.f32.mrb[0].mxu0
  %v1986 = vpop.f32.mrb[0].mxu0
  %1987 = vdwg.mxu0
  %1988 = vmatprep.subr.bf16.mxu0 %v1210
  %1989 = vmatpush1.bf16.msra.mxu0 %v1209
  %1990 = vmatprep.subr.bf16.mxu0 %v1214
  %1991 = vmatpush1.bf16.msra.mxu0 %v1213
  %1992 = vmatprep.subr.bf16.mxu0 %v1218
  %1993 = vmatpush1.bf16.msra.mxu0 %v1217
  %1994 = vmatprep.subr.bf16.mxu0 %v1222
  %1995 = vmatpush1.bf16.msra.mxu0 %v1221
  %1996 = vmatprep.subr.bf16.mxu0 %v1226
  %1997 = vmatpush1.bf16.msra.mxu0 %v1225
  %1998 = vmatprep.subr.bf16.mxu0 %v1230
  %1999 = vmatpush1.bf16.msra.mxu0 %v1229
  %2000 = vmatprep.subr.bf16.mxu0 %v1234
  %2001 = vmatpush1.bf16.msra.mxu0 %v1233
  %2002 = vmatprep.subr.bf16.mxu0 %v1238
  %2003 = vmatpush1.bf16.msra.mxu0 %v1237
  %2004 = vmatprep.subr.bf16.mxu0 %v1242
  %2005 = vmatpush1.bf16.msra.mxu0 %v1241
  %2006 = vmatprep.subr.bf16.mxu0 %v1246
  %2007 = vmatpush1.bf16.msra.mxu0 %v1245
  %2008 = vmatprep.subr.bf16.mxu0 %v1250
  %2009 = vmatpush1.bf16.msra.mxu0 %v1249
  %2010 = vmatprep.subr.bf16.mxu0 %v1254
  %2011 = vmatpush1.bf16.msra.mxu0 %v1253
  %2012 = vmatprep.subr.bf16.mxu0 %v1258
  %2013 = vmatpush1.bf16.msra.mxu0 %v1257
  %2014 = vmatprep.subr.bf16.mxu0 %v1262
  %2015 = vmatpush1.bf16.msra.mxu0 %v1261
  %2016 = vmatprep.subr.bf16.mxu0 %v1266
  %2017 = vmatpush1.bf16.msra.mxu0 %v1265
  %2018 = vmatprep.subr.bf16.mxu0 %v1270
  %2019 = vmatpush1.bf16.msra.mxu0 %v1269
  %2020 = vmatprep.mubr.bf16.mxu0 %v326
  %2021 = vmatmul.mubr.bf16.gmra.mrb[0].mxu0 %v325
  %v2022 = vpop.f32.mrb[0].mxu0
  %v2023 = vadd.f32 0.0, %v2022
  %v2024 = vpop.f32.mrb[0].mxu0
  %v2025 = vadd.f32 0.0, %v2024
  %v2026 = vpop.f32.mrb[0].mxu0
  %v2027 = vpop.f32.mrb[0].mxu0
  %2028 = vdwg.mxu0
  %2029 = vmatprep.subr.bf16.mxu0 %v1274
  %2030 = vmatpush1.bf16.msra.mxu0 %v1273
  %2031 = vmatprep.subr.bf16.mxu0 %v1278
  %2032 = vmatpush1.bf16.msra.mxu0 %v1277
  %2033 = vmatprep.subr.bf16.mxu0 %v1282
  %2034 = vmatpush1.bf16.msra.mxu0 %v1281
  %2035 = vmatprep.subr.bf16.mxu0 %v1286
  %2036 = vmatpush1.bf16.msra.mxu0 %v1285
  %2037 = vmatprep.subr.bf16.mxu0 %v1290
  %2038 = vmatpush1.bf16.msra.mxu0 %v1289
  %2039 = vmatprep.subr.bf16.mxu0 %v1294
  %2040 = vmatpush1.bf16.msra.mxu0 %v1293
  %2041 = vmatprep.subr.bf16.mxu0 %v1298
  %2042 = vmatpush1.bf16.msra.mxu0 %v1297
  %2043 = vmatprep.subr.bf16.mxu0 %v1302
  %2044 = vmatpush1.bf16.msra.mxu0 %v1301
  %2045 = vmatprep.subr.bf16.mxu0 %v1306
  %2046 = vmatpush1.bf16.msra.mxu0 %v1305
  %2047 = vmatprep.subr.bf16.mxu0 %v1310
  %2048 = vmatpush1.bf16.msra.mxu0 %v1309
  %2049 = vmatprep.subr.bf16.mxu0 %v1314
  %2050 = vmatpush1.bf16.msra.mxu0 %v1313
  %2051 = vmatprep.subr.bf16.mxu0 %v1318
  %2052 = vmatpush1.bf16.msra.mxu0 %v1317
  %2053 = vmatprep.subr.bf16.mxu0 %v1322
  %2054 = vmatpush1.bf16.msra.mxu0 %v1321
  %2055 = vmatprep.subr.bf16.mxu0 %v1326
  %2056 = vmatpush1.bf16.msra.mxu0 %v1325
  %2057 = vmatprep.subr.bf16.mxu0 %v1330
  %2058 = vmatpush1.bf16.msra.mxu0 %v1329
  %2059 = vmatprep.subr.bf16.mxu0 %v1334
  %2060 = vmatpush1.bf16.msra.mxu0 %v1333
  %2061 = vmatprep.mubr.bf16.mxu0 %v328
  %2062 = vmatmul.mubr.bf16.gmra.mrb[0].mxu0 %v327
  %v2063 = vpop.f32.mrb[0].mxu0
  %v2064 = vadd.f32 %v2023, %v2063
  %v2065 = vpop.f32.mrb[0].mxu0
  %v2066 = vadd.f32 %v2025, %v2065
  %v2067 = vpop.f32.mrb[0].mxu0
  %v2068 = vpop.f32.mrb[0].mxu0
  %2069 = vdwg.mxu0
  %2070 = vmatprep.subr.bf16.mxu0 %v1338
  %2071 = vmatpush1.bf16.msra.mxu0 %v1337
  %2072 = vmatprep.subr.bf16.mxu0 %v1342
  %2073 = vmatpush1.bf16.msra.mxu0 %v1341
  %2074 = vmatprep.subr.bf16.mxu0 %v1346
  %2075 = vmatpush1.bf16.msra.mxu0 %v1345
  %2076 = vmatprep.subr.bf16.mxu0 %v1350
  %2077 = vmatpush1.bf16.msra.mxu0 %v1349
  %2078 = vmatprep.subr.bf16.mxu0 %v1354
  %2079 = vmatpush1.bf16.msra.mxu0 %v1353
  %2080 = vmatprep.subr.bf16.mxu0 %v1358
  %2081 = vmatpush1.bf16.msra.mxu0 %v1357
  %2082 = vmatprep.subr.bf16.mxu0 %v1362
  %2083 = vmatpush1.bf16.msra.mxu0 %v1361
  %2084 = vmatprep.subr.bf16.mxu0 %v1366
  %2085 = vmatpush1.bf16.msra.mxu0 %v1365
  %2086 = vmatprep.subr.bf16.mxu0 %v1370
  %2087 = vmatpush1.bf16.msra.mxu0 %v1369
  %2088 = vmatprep.subr.bf16.mxu0 %v1374
  %2089 = vmatpush1.bf16.msra.mxu0 %v1373
  %2090 = vmatprep.subr.bf16.mxu0 %v1378
  %2091 = vmatpush1.bf16.msra.mxu0 %v1377
  %2092 = vmatprep.subr.bf16.mxu0 %v1382
  %2093 = vmatpush1.bf16.msra.mxu0 %v1381
  %2094 = vmatprep.subr.bf16.mxu0 %v1386
  %2095 = vmatpush1.bf16.msra.mxu0 %v1385
  %2096 = vmatprep.subr.bf16.mxu0 %v1390
  %2097 = vmatpush1.bf16.msra.mxu0 %v1389
  %2098 = vmatprep.subr.bf16.mxu0 %v1394
  %2099 = vmatpush1.bf16.msra.mxu0 %v1393
  %2100 = vmatprep.subr.bf16.mxu0 %v1398
  %2101 = vmatpush1.bf16.msra.mxu0 %v1397
  %2102 = vmatprep.mubr.bf16.mxu0 %v330
  %2103 = vmatmul.mubr.bf16.gmra.mrb[0].mxu0 %v329
  %v2104 = vpop.f32.mrb[0].mxu0
  %v2105 = vadd.f32 %v2064, %v2104
  %v2106 = vpop.f32.mrb[0].mxu0
  %v2107 = vadd.f32 %v2066, %v2106
  %v2108 = vpop.f32.mrb[0].mxu0
  %v2109 = vpop.f32.mrb[0].mxu0
  %2110 = vdwg.mxu0
  %2111 = vmatprep.subr.bf16.mxu0 %v1402
  %2112 = vmatpush1.bf16.msra.mxu0 %v1401
  %2113 = vmatprep.subr.bf16.mxu0 %v1406
  %2114 = vmatpush1.bf16.msra.mxu0 %v1405
  %2115 = vmatprep.subr.bf16.mxu0 %v1410
  %2116 = vmatpush1.bf16.msra.mxu0 %v1409
  %2117 = vmatprep.subr.bf16.mxu0 %v1414
  %2118 = vmatpush1.bf16.msra.mxu0 %v1413
  %2119 = vmatprep.subr.bf16.mxu0 %v1418
  %2120 = vmatpush1.bf16.msra.mxu0 %v1417
  %2121 = vmatprep.subr.bf16.mxu0 %v1422
  %2122 = vmatpush1.bf16.msra.mxu0 %v1421
  %2123 = vmatprep.subr.bf16.mxu0 %v1426
  %2124 = vmatpush1.bf16.msra.mxu0 %v1425
  %2125 = vmatprep.subr.bf16.mxu0 %v1430
  %2126 = vmatpush1.bf16.msra.mxu0 %v1429
  %2127 = vmatprep.subr.bf16.mxu0 %v1434
  %2128 = vmatpush1.bf16.msra.mxu0 %v1433
  %2129 = vmatprep.subr.bf16.mxu0 %v1438
  %2130 = vmatpush1.bf16.msra.mxu0 %v1437
  %2131 = vmatprep.subr.bf16.mxu0 %v1442
  %2132 = vmatpush1.bf16.msra.mxu0 %v1441
  %2133 = vmatprep.subr.bf16.mxu0 %v1446
  %2134 = vmatpush1.bf16.msra.mxu0 %v1445
  %2135 = vmatprep.subr.bf16.mxu0 %v1450
  %2136 = vmatpush1.bf16.msra.mxu0 %v1449
  %2137 = vmatprep.subr.bf16.mxu0 %v1454
  %2138 = vmatpush1.bf16.msra.mxu0 %v1453
  %2139 = vmatprep.subr.bf16.mxu0 %v1458
  %2140 = vmatpush1.bf16.msra.mxu0 %v1457
  %2141 = vmatprep.subr.bf16.mxu0 %v1462
  %2142 = vmatpush1.bf16.msra.mxu0 %v1461
  %2143 = vmatprep.mubr.bf16.mxu0 %v332
  %2144 = vmatmul.mubr.bf16.gmra.mrb[0].mxu0 %v331
  %v2145 = vpop.f32.mrb[0].mxu0
  %v2146 = vadd.f32 %v2105, %v2145
  %v2147 = vpop.f32.mrb[0].mxu0
  %v2148 = vadd.f32 %v2107, %v2147
  %v2149 = vpop.f32.mrb[0].mxu0
  %v2150 = vpop.f32.mrb[0].mxu0
  %2151 = vdwg.mxu0
  %2152 = vmatprep.subr.bf16.mxu0 %v1466
  %2153 = vmatpush1.bf16.msra.mxu0 %v1465
  %2154 = vmatprep.subr.bf16.mxu0 %v1470
  %2155 = vmatpush1.bf16.msra.mxu0 %v1469
  %2156 = vmatprep.subr.bf16.mxu0 %v1474
  %2157 = vmatpush1.bf16.msra.mxu0 %v1473
  %2158 = vmatprep.subr.bf16.mxu0 %v1478
  %2159 = vmatpush1.bf16.msra.mxu0 %v1477
  %2160 = vmatprep.subr.bf16.mxu0 %v1482
  %2161 = vmatpush1.bf16.msra.mxu0 %v1481
  %2162 = vmatprep.subr.bf16.mxu0 %v1486
  %2163 = vmatpush1.bf16.msra.mxu0 %v1485
  %2164 = vmatprep.subr.bf16.mxu0 %v1490
  %2165 = vmatpush1.bf16.msra.mxu0 %v1489
  %2166 = vmatprep.subr.bf16.mxu0 %v1494
  %2167 = vmatpush1.bf16.msra.mxu0 %v1493
  %2168 = vmatprep.subr.bf16.mxu0 0
  %2169 = vmatpush1.bf16.msra.mxu0 0
  %2170 = vmatprep.subr.bf16.mxu0 0
  %2171 = vmatpush1.bf16.msra.mxu0 0
  %2172 = vmatprep.subr.bf16.mxu0 0
  %2173 = vmatpush1.bf16.msra.mxu0 0
  %2174 = vmatprep.subr.bf16.mxu0 0
  %2175 = vmatpush1.bf16.msra.mxu0 0
  %2176 = vmatprep.subr.bf16.mxu0 0
  %2177 = vmatpush1.bf16.msra.mxu0 0
  %2178 = vmatprep.subr.bf16.mxu0 0
  %2179 = vmatpush1.bf16.msra.mxu0 0
  %2180 = vmatprep.subr.bf16.mxu0 0
  %2181 = vmatpush1.bf16.msra.mxu0 0
  %2182 = vmatprep.subr.bf16.mxu0 0
  %2183 = vmatpush1.bf16.msra.mxu0 0
  %2184 = vmatprep.mubr.bf16.mxu0 0
  %2185 = vmatmul.mubr.bf16.gmra.mrb[0].mxu0 %v333
  %v2186 = vpop.f32.mrb[0].mxu0
  %v2187 = vadd.f32 %v2146, %v2186
  %v2188 = vpop.f32.mrb[0].mxu0
  %v2189 = vadd.f32 %v2148, %v2188
  %v2190 = vpop.f32.mrb[0].mxu0
  %v2191 = vpop.f32.mrb[0].mxu0
  %2192 = vdwg.mxu0
  %v2193 = vld [vmem:[%s2] sm:$0xf]
  %v2195 = vlaneseq
  %v2196 = vshrl.u32 %v2195, 7
  %v2197 = vsub.s32 0, %v2196
  %v2198 = vrot.slane %v2193, %v2197
  %v2199 = vlaneseq
  %v2200 = vshrl.u32 %v2199, 7
  %v2201 = vsub.s32 1, %v2200
  %v2202 = vrot.slane %v2193, %v2201
  %v2203 = vlaneseq
  %v2204 = vshrl.u32 %v2203, 7
  %v2205 = vsub.s32 2, %v2204
  %v2206 = vrot.slane %v2193, %v2205
  %v2207 = vlaneseq
  %v2208 = vshrl.u32 %v2207, 7
  %v2209 = vsub.s32 3, %v2208
  %v2210 = vrot.slane %v2193, %v2209
  %v2215 = vmul.f32 %v1982, %v2198
  %v2216 = vmul.f32 %v1984, %v2202
  %v2217 = vmul.f32 %v2187, %v2206
  %v2218 = vmul.f32 %v2189, %v2210
  %v2219 = vld [vmem:[%s3] sm:$0xf]
  %v2221 = vlaneseq
  %v2222 = vshrl.u32 %v2221, 7
  %v2223 = vsub.s32 0, %v2222
  %v2224 = vrot.slane %v2219, %v2223
  %v2225 = vlaneseq
  %v2226 = vshrl.u32 %v2225, 7
  %v2227 = vsub.s32 1, %v2226
  %v2228 = vrot.slane %v2219, %v2227
  %v2229 = vlaneseq
  %v2230 = vshrl.u32 %v2229, 7
  %v2231 = vsub.s32 2, %v2230
  %v2232 = vrot.slane %v2219, %v2231
  %v2233 = vlaneseq
  %v2234 = vshrl.u32 %v2233, 7
  %v2235 = vsub.s32 3, %v2234
  %v2236 = vrot.slane %v2219, %v2235
  %v2241 = vadd.f32 %v2215, %v2224
  %v2242 = vadd.f32 %v2216, %v2228
  %v2243 = vadd.f32 %v2217, %v2232
  %v2244 = vadd.f32 %v2218, %v2236
  %v2245 = vmax.f32 %v2241, 0.0
  %v2246 = vmax.f32 %v2242, 0.0
  %v2247 = vmax.f32 %v2243, 0.0
  %v2248 = vmax.f32 %v2244, 0.0
  %2249 = vst [vmem:[%s4] sm:$0xff] %v2245
  %2250 = vst [vmem:[%s4 + $0x8] sm:$0xff] %v2246
  %2251 = vst [vmem:[%s4 + $0x10] sm:$0xff] %v2247
  %2252 = vst [vmem:[%s4 + $0x18] sm:$0xff] %v2248
  // Predicated region
  $region18: #{superpoint_forward.31} parent=0 // pred_check
    _
  $region19: #{superpoint_forward.31} parent=0 // pred_check_branch
    %2254 = sbr.rel (0) target = $region21
  $region20: #{superpoint_forward.31} parent=0 // pred_region
    _
  $region21: #{superpoint_forward.31} parent=0 // pred_fallthru
    _
  // Predicated region
  $region22: #{superpoint_forward.31} parent=0 // pred_check
    _
  $region23: #{superpoint_forward.31} parent=0 // pred_check_branch
    %2256 = sbr.rel (0) target = $region25
  $region24: #{superpoint_forward.31} parent=0 // pred_region
    _
  $region25: #{superpoint_forward.31} parent=0 // pred_fallthru
    _

</llo_original>
